<compile_context>
chip_gen: v5e
topology: v5e:2x2
jax: 0.10.0
libtpu: 0.0.40
codegen_flags: <defaults>
</compile_context>

<pallas_src>
import jax
import jax.numpy as jnp
from jax import lax
from jax.experimental import pallas as pl
from jax.experimental.pallas import tpu as pltpu

# MXU operand dtype: bf16 feeds the v6e/v7x MXU at full rate (f32 accumulation is kept via
# preferred_element_type). Set to jnp.float32 for bit-tight numerics (2e-3 tolerance).
MXU_DTYPE = jnp.bfloat16


def _round_up(x, m):
    return (x + m - 1) // m * m


def _r2d2_fused_kernel(x_ref,
                       w1_ref, c1_ref, w2_ref, c2_ref, w3_ref, c3_ref, w4_ref, c4_ref,
                       out3_ref, out4_ref,
                       lhs1, y1, s1, lhs2, y2, s2, lhs3, y3, lhs4, y4):
    """Fused block1..block4 for one batch tile.

    x_ref      : (bt, H, W, Cin)            network input tile (NHWC, f32)
    w*_ref     : (Kpad, Cout)  bf16/f32     3x3 taps flattened (dh,dw,cin), BN scale folded in
    c*_ref     : (1, Cout)     f32          folded BN + conv bias (added after max-pool)
    out3_ref   : (bt, H/8,  W/8,  C3)       block3 output (LeakyReLU'd)
    out4_ref   : (bt, H/16, W/16, C4)       block4 output (no activation)
    lhs*/y*    : VMEM scratch: im2col slab (H*W, Kpad) and conv result (H*W, Cout)
    s1/s2      : VMEM scratch: per-image pooled activations of blocks 1/2
    """
    bt, H0, W0, C0 = x_ref.shape
    C1 = c1_ref.shape[1]
    C2 = c2_ref.shape[1]
    C3 = c3_ref.shape[1]
    H1, W1 = H0 // 2, W0 // 2
    H2, W2 = H1 // 2, W1 // 2
    H3, W3 = H2 // 2, W2 // 2

    # Padding / boundary positions of the im2col slabs are never stored to, so they must read
    # as zero. Zero them once per grid step (VMEM scratch persists across grid steps).
    for lhs_scr in (lhs1, lhs2, lhs3, lhs4):
        lhs_scr[...] = jnp.zeros_like(lhs_scr)

    def conv_block(b, H, W, Cin, read_row, w_ref, bias_ref, lhs_scr, y_scr,
                   write_row, apply_act):
        """Conv2d(3x3, pad=1) + folded BN + MaxPool2d(2) (+ LeakyReLU) for one image."""
        Ho, Wo = H // 2, W // 2

        # ---- im2col: scatter the 3 column-shifted copies of every input row into the
        #      (H*W, 9*Cin) slab for each of the (<=3) conv rows that use it.  Boundary
        #      taps stay zero (slab pre-zeroed), which implements padding=1. ----
        for r in range(H):
            row = read_row(b, r)                       # (W, Cin) f32
            row_l = row[: W - 1]                       # cols 0..W-2   -> dw = 0 tap (w >= 1)
            row_r = row[1:]                            # cols 1..W-1   -> dw = 2 tap (w <= W-2)
            for dh in range(3):
                h = r + 1 - dh                         # conv row using input row r as tap dh
                if 0 <= h < H:
                    base = h * W
                    lane = dh * 3 * Cin
                    lhs_scr[pl.ds(base + 1, W - 1), pl.ds(lane, Cin)] = row_l
                    lhs_scr[pl.ds(base, W), pl.ds(lane + Cin, Cin)] = row
                    lhs_scr[pl.ds(base, W - 1), pl.ds(lane + 2 * Cin, Cin)] = row_r

        # ---- one MXU matmul for the whole image: (H*W, Kpad) x (Kpad, Cout), f32 accum ----
        y_scr[...] = jnp.dot(lhs_scr[...].astype(MXU_DTYPE), w_ref[...],
                             preferred_element_type=jnp.float32)

        # ---- 2x2 max-pool straight from y_scr (strided sublane reads), then bias
        #      (commutes with max) and LeakyReLU(0.1) ----
        bias = bias_ref[...]                           # (1, Cout) f32
        for i in range(Ho):
            e0 = y_scr[pl.ds((2 * i) * W, Wo, 2), :]
            o0 = y_scr[pl.ds((2 * i) * W + 1, Wo, 2), :]
            e1 = y_scr[pl.ds((2 * i + 1) * W, Wo, 2), :]
            o1 = y_scr[pl.ds((2 * i + 1) * W + 1, Wo, 2), :]
            p = jnp.maximum(jnp.maximum(e0, o0), jnp.maximum(e1, o1)) + bias
            if apply_act:
                p = jnp.where(p > 0, p, 0.1 * p)
            write_row(b, i, p)

    # --- per-block ref plumbing (all static-shape closures) ---
    def read_x(b, r):
        return x_ref[b, r]

    def read_s1(b, r):
        return s1[r]

    def read_s2(b, r):
        return s2[r]

    def read_b3(b, r):
        return out3_ref[b, r]

    def write_s1(b, i, p):
        s1[i] = p

    def write_s2(b, i, p):
        s2[i] = p

    def write_b3(b, i, p):
        out3_ref[b, i] = p

    def write_b4(b, i, p):
        out4_ref[b, 0] = p

    def per_image(b, carry):
        conv_block(b, H0, W0, C0, read_x, w1_ref, c1_ref, lhs1, y1, write_s1, True)
        conv_block(b, H1, W1, C1, read_s1, w2_ref, c2_ref, lhs2, y2, write_s2, True)
        # Dropout(p=0.1 / p=0.3) on blocks 3/4 is identity in eval mode.
        conv_block(b, H2, W2, C2, read_s2, w3_ref, c3_ref, lhs3, y3, write_b3, True)
        conv_block(b, H3, W3, C3, read_b3, w4_ref, c4_ref, lhs4, y4, write_b4, False)
        return carry

    lax.fori_loop(0, bt, per_image, 0)


# ------------------------------- wrapper ---------------------------------------

def _fold_block_params(w33, scale, bias):
    """Fold the eval-mode BN scale into the conv weights and pad K to a multiple of 128."""
    kh, kw, cin, cout = w33.shape
    wmat = (w33 * scale.reshape(1, 1, 1, cout)).reshape(kh * kw * cin, cout)
    kpad = _round_up(kh * kw * cin, 128)
    wmat = jnp.pad(wmat, ((0, kpad - kh * kw * cin), (0, 0)))
    return wmat.astype(MXU_DTYPE), bias.astype(jnp.float32)


def r2d2_embedding_forward(params, x_nchw, *, batch_tile=4):
    """Equivalent of R2D2Embedding_mixup.forward(x, mixup_hidden=False) in eval mode."""
    x = jnp.transpose(x_nchw, (0, 2, 3, 1)).astype(jnp.float32)        # NCHW -> NHWC
    N, H, W, Cin = x.shape
    assert H % 16 == 0 and W % 16 == 0, "spatial must survive four 2x2 max-pools"
    bt = min(batch_tile, N)
    while N % bt:
        bt -= 1

    w1, c1 = _fold_block_params(*params["block1"])
    w2, c2 = _fold_block_params(*params["block2"])
    w3, c3 = _fold_block_params(*params["block3"])
    w4, c4 = _fold_block_params(*params["block4"])
    C1, C2, C3, C4 = w1.shape[1], w2.shape[1], w3.shape[1], w4.shape[1]
    H1, W1 = H // 2, W // 2
    H2, W2 = H // 4, W // 4
    H3, W3 = H // 8, W // 8
    H4, W4 = H // 16, W // 16

    def _full(arr):
        nd = arr.ndim
        return pl.BlockSpec(arr.shape, lambda n, _nd=nd: (0,) * _nd)

    out3, out4 = pl.pallas_call(
        _r2d2_fused_kernel,
        out_shape=(jax.ShapeDtypeStruct((N, H3, W3, C3), jnp.float32),
                   jax.ShapeDtypeStruct((N, H4, W4, C4), jnp.float32)),
        grid_spec=pltpu.PrefetchScalarGridSpec(
            num_scalar_prefetch=0,
            grid=(N // bt,),
            in_specs=[
                pl.BlockSpec((bt, H, W, Cin), lambda n: (n, 0, 0, 0)),
                _full(w1), _full(c1),
                _full(w2), _full(c2),
                _full(w3), _full(c3),
                _full(w4), _full(c4),
            ],
            out_specs=[
                pl.BlockSpec((bt, H3, W3, C3), lambda n: (n, 0, 0, 0)),
                pl.BlockSpec((bt, H4, W4, C4), lambda n: (n, 0, 0, 0)),
            ],
            scratch_shapes=[
                pltpu.VMEM((H * W, w1.shape[0]), jnp.float32),      # lhs1 (im2col)
                pltpu.VMEM((H * W, C1), jnp.float32),               # y1   (conv result)
                pltpu.VMEM((H1, W1, C1), jnp.float32),              # s1   (block1 activations)
                pltpu.VMEM((H1 * W1, w2.shape[0]), jnp.float32),    # lhs2
                pltpu.VMEM((H1 * W1, C2), jnp.float32),             # y2
                pltpu.VMEM((H2, W2, C2), jnp.float32),              # s2
                pltpu.VMEM((H2 * W2, w3.shape[0]), jnp.float32),    # lhs3
                pltpu.VMEM((H2 * W2, C3), jnp.float32),             # y3
                pltpu.VMEM((H3 * W3, w4.shape[0]), jnp.float32),    # lhs4
                pltpu.VMEM((H3 * W3, C4), jnp.float32),             # y4
            ],
        ),
        compiler_params=pltpu.CompilerParams(dimension_semantics=("parallel",)),
    )(x, w1, c1, w2, c2, w3, c3, w4, c4)

    # torch's .view flattens NCHW (channel-major) order
    b3f = jnp.transpose(out3, (0, 3, 1, 2)).reshape(N, -1)
    b4f = jnp.transpose(out4, (0, 3, 1, 2)).reshape(N, -1)
    return jnp.concatenate([b3f, b4f], axis=1)


# ----------------------- parameter setup (deterministic) -----------------------

def _init_block(key, cin, cout, eps=1e-5):
    k = jax.random.split(key, 6)
    w = jax.random.normal(k[0], (3, 3, cin, cout), jnp.float32) / jnp.sqrt(9.0 * cin)
    conv_b = 0.1 * jax.random.normal(k[1], (cout,), jnp.float32)
    # BN stats chosen so activations stay O(1) through the stack (as trained BN would give)
    gamma = 0.9 + 0.2 * jax.random.uniform(k[2], (cout,), jnp.float32)
    beta = 0.1 * jax.random.normal(k[3], (cout,), jnp.float32)
    run_mean = 0.1 * jax.random.normal(k[4], (cout,), jnp.float32)
    run_var = 0.8 + 0.4 * jax.random.uniform(k[5], (cout,), jnp.float32)
    scale = gamma / jnp.sqrt(run_var + eps)                             # fold BN (eval)
    bias = beta + scale * (conv_b - run_mean)                           # fold conv bias too
    return w, scale.reshape(1, cout), bias.reshape(1, cout)


def init_params(key, x_dim=3, h1_dim=16, h2_dim=32, h3_dim=64, z_dim=128):
    ks = jax.random.split(key, 4)
    return {
        "block1": _init_block(ks[0], x_dim, h1_dim),
        "block2": _init_block(ks[1], h1_dim, h2_dim),
        "block3": _init_block(ks[2], h2_dim, h3_dim),
        "block4": _init_block(ks[3], h3_dim, z_dim),
    }


# ------------------------- pure-JAX reference (for check) ----------------------

def _ref_block(x_nhwc, w33, scale, bias, apply_act):
    y = lax.conv_general_dilated(x_nhwc, w33, (1, 1), "SAME",
                                 dimension_numbers=("NHWC", "HWIO", "NHWC"))
    y = y * scale.reshape(1, 1, 1, -1) + bias.reshape(1, 1, 1, -1)
    y = lax.reduce_window(y, -jnp.inf, lax.max, (1, 2, 2, 1), (1, 2, 2, 1), "VALID")
    if apply_act:
        y = jnp.where(y > 0, y, 0.1 * y)
    return y


def r2d2_embedding_ref(params, x_nchw):
    x = jnp.transpose(x_nchw, (0, 2, 3, 1)).astype(jnp.float32)
    b1 = _ref_block(x, *params["block1"], apply_act=True)
    b2 = _ref_block(b1, *params["block2"], apply_act=True)
    b3 = _ref_block(b2, *params["block3"], apply_act=True)
    b4 = _ref_block(b3, *params["block4"], apply_act=False)
    n = x.shape[0]
    b3f = jnp.transpose(b3, (0, 3, 1, 2)).reshape(n, -1)
    b4f = jnp.transpose(b4, (0, 3, 1, 2)).reshape(n, -1)
    return jnp.concatenate([b3f, b4f], axis=1)


if __name__ == "__main__":
    key = jax.random.PRNGKey(0)
    k_param, k_x = jax.random.split(key)

    N, Cin, S = 8, 3, 16
    h1, h2, h3, z = 16, 32, 64, 128
    params = init_params(k_param, x_dim=Cin, h1_dim=h1, h2_dim=h2, h3_dim=h3, z_dim=z)
    x = jax.random.normal(k_x, (N, Cin, S, S), jnp.float32)

    out = jax.block_until_ready(r2d2_embedding_forward(params, x, batch_tile=4))
    ref = jax.block_until_ready(r2d2_embedding_ref(params, x))

    expected_dim = h3 * (S // 8) ** 2 + z * (S // 16) ** 2   # 64*2*2 + 128*1*1 = 384
    assert out.shape == (N, expected_dim), out.shape
    err = float(jnp.max(jnp.abs(out - ref)))
    # bf16 matmul operands (f32 accumulation) need a looser tolerance than pure f32.
    tol = 2e-3 if MXU_DTYPE == jnp.float32 else 5e-2
    assert jnp.allclose(out, ref, rtol=tol, atol=tol), f"max abs err = {err}"
    print("KERNEL_OK")
</pallas_src>

<mosaic_0001>
module attributes {stable_mosaic.version = 11 : i64} {
  func.func @_r2d2_fused_kernel(%arg0: i32, %arg1: memref<4x16x16x3xf32, #tpu.memory_space<vmem>>, %arg2: memref<128x16xbf16, #tpu.memory_space<vmem>>, %arg3: memref<1x16xf32, #tpu.memory_space<vmem>>, %arg4: memref<256x32xbf16, #tpu.memory_space<vmem>>, %arg5: memref<1x32xf32, #tpu.memory_space<vmem>>, %arg6: memref<384x64xbf16, #tpu.memory_space<vmem>>, %arg7: memref<1x64xf32, #tpu.memory_space<vmem>>, %arg8: memref<640x128xbf16, #tpu.memory_space<vmem>>, %arg9: memref<1x128xf32, #tpu.memory_space<vmem>>, %arg10: memref<4x2x2x64xf32, #tpu.memory_space<vmem>>, %arg11: memref<4x1x1x128xf32, #tpu.memory_space<vmem>>, %arg12: memref<256x128xf32, #tpu.memory_space<vmem>>, %arg13: memref<256x16xf32, #tpu.memory_space<vmem>>, %arg14: memref<8x8x16xf32, #tpu.memory_space<vmem>>, %arg15: memref<64x256xf32, #tpu.memory_space<vmem>>, %arg16: memref<64x32xf32, #tpu.memory_space<vmem>>, %arg17: memref<4x4x32xf32, #tpu.memory_space<vmem>>, %arg18: memref<16x384xf32, #tpu.memory_space<vmem>>, %arg19: memref<16x64xf32, #tpu.memory_space<vmem>>, %arg20: memref<4x640xf32, #tpu.memory_space<vmem>>, %arg21: memref<4x128xf32, #tpu.memory_space<vmem>>) attributes {dimension_semantics = [#tpu.dimension_semantics<parallel>], iteration_bounds = array<i64: 2>, scalar_prefetch = 0 : i64, scratch_operands = 10 : i64, tpu.core_type = #tpu.core_type<tc>, window_params = [{transform_indices = @transform_0, window_bounds = array<i64: 4, 16, 16, 3>}, {pipeline_mode = #tpu.pipeline_mode<synchronous>, transform_indices = @transform_1, window_bounds = array<i64: 128, 16>}, {pipeline_mode = #tpu.pipeline_mode<synchronous>, transform_indices = @transform_2, window_bounds = array<i64: 1, 16>}, {pipeline_mode = #tpu.pipeline_mode<synchronous>, transform_indices = @transform_3, window_bounds = array<i64: 256, 32>}, {pipeline_mode = #tpu.pipeline_mode<synchronous>, transform_indices = @transform_4, window_bounds = array<i64: 1, 32>}, {pipeline_mode = #tpu.pipeline_mode<synchronous>, transform_indices = @transform_5, window_bounds = array<i64: 384, 64>}, {pipeline_mode = #tpu.pipeline_mode<synchronous>, transform_indices = @transform_6, window_bounds = array<i64: 1, 64>}, {pipeline_mode = #tpu.pipeline_mode<synchronous>, transform_indices = @transform_7, window_bounds = array<i64: 640, 128>}, {pipeline_mode = #tpu.pipeline_mode<synchronous>, transform_indices = @transform_8, window_bounds = array<i64: 1, 128>}, {transform_indices = @transform_9, window_bounds = array<i64: 4, 2, 2, 64>}, {transform_indices = @transform_10, window_bounds = array<i64: 4, 1, 1, 128>}]} {
    %cst = arith.constant 0.000000e+00 : f32
    %0 = vector.broadcast %cst : f32 to vector<256x128xf32>
    %c0 = arith.constant 0 : index
    %c0_0 = arith.constant 0 : index
    %1 = vector.load %arg12[%c0, %c0_0] : memref<256x128xf32, #tpu.memory_space<vmem>>, vector<256x128xf32>
    tpu.vector_store %arg12[%c0, %c0_0], %0 {strides = array<i32>} : memref<256x128xf32, #tpu.memory_space<vmem>>, vector<256x128xf32>,
    %cst_1 = arith.constant 0.000000e+00 : f32
    %2 = vector.broadcast %cst_1 : f32 to vector<64x256xf32>
    %c0_2 = arith.constant 0 : index
    %c0_3 = arith.constant 0 : index
    %3 = vector.load %arg15[%c0_2, %c0_3] : memref<64x256xf32, #tpu.memory_space<vmem>>, vector<64x256xf32>
    tpu.vector_store %arg15[%c0_2, %c0_3], %2 {strides = array<i32>} : memref<64x256xf32, #tpu.memory_space<vmem>>, vector<64x256xf32>,
    %cst_4 = arith.constant 0.000000e+00 : f32
    %4 = vector.broadcast %cst_4 : f32 to vector<16x384xf32>
    %c0_5 = arith.constant 0 : index
    %c0_6 = arith.constant 0 : index
    %5 = vector.load %arg18[%c0_5, %c0_6] : memref<16x384xf32, #tpu.memory_space<vmem>>, vector<16x384xf32>
    tpu.vector_store %arg18[%c0_5, %c0_6], %4 {strides = array<i32>} : memref<16x384xf32, #tpu.memory_space<vmem>>, vector<16x384xf32>,
    %cst_7 = arith.constant 0.000000e+00 : f32
    %6 = vector.broadcast %cst_7 : f32 to vector<4x640xf32>
    %c0_8 = arith.constant 0 : index
    %c0_9 = arith.constant 0 : index
    %7 = vector.load %arg20[%c0_8, %c0_9] : memref<4x640xf32, #tpu.memory_space<vmem>>, vector<4x640xf32>
    tpu.vector_store %arg20[%c0_8, %c0_9], %6 {strides = array<i32>} : memref<4x640xf32, #tpu.memory_space<vmem>>, vector<4x640xf32>,
    %c0_i32 = arith.constant 0 : i32
    %c4_i32 = arith.constant 4 : i32
    %8 = arith.addi %c0_i32, %c4_i32 : i32
    %c1_i32 = arith.constant 1 : i32
    scf.for %arg22 = %c0_i32 to %8 step %c1_i32  : i32 {
      %9 = arith.index_cast %arg22 : i32 to index
      %c0_11 = arith.constant 0 : index
      %c0_12 = arith.constant 0 : index
      %c0_13 = arith.constant 0 : index
      %10 = vector.load %arg1[%9, %c0_11, %c0_12, %c0_13] : memref<4x16x16x3xf32, #tpu.memory_space<vmem>>, vector<1x1x16x3xf32>
      %11 = vector.shape_cast %10 : vector<1x1x16x3xf32> to vector<16x3xf32>
      %12 = vector.extract_strided_slice %11 {offsets = [0, 0], sizes = [15, 3], strides = [1, 1]} : vector<16x3xf32> to vector<15x3xf32>
      %13 = vector.extract_strided_slice %11 {offsets = [1, 0], sizes = [15, 3], strides = [1, 1]} : vector<16x3xf32> to vector<15x3xf32>
      %c17 = arith.constant 17 : index
      %c0_14 = arith.constant 0 : index
      %14 = vector.load %arg12[%c17, %c0_14] : memref<256x128xf32, #tpu.memory_space<vmem>>, vector<15x3xf32>
      tpu.vector_store %arg12[%c17, %c0_14], %12 {strides = array<i32>} : memref<256x128xf32, #tpu.memory_space<vmem>>, vector<15x3xf32>,
      %c16 = arith.constant 16 : index
      %c3 = arith.constant 3 : index
      %15 = vector.load %arg12[%c16, %c3] : memref<256x128xf32, #tpu.memory_space<vmem>>, vector<16x3xf32>
      tpu.vector_store %arg12[%c16, %c3], %11 {strides = array<i32>} : memref<256x128xf32, #tpu.memory_space<vmem>>, vector<16x3xf32>,
      %c16_15 = arith.constant 16 : index
      %c6 = arith.constant 6 : index
      %16 = vector.load %arg12[%c16_15, %c6] : memref<256x128xf32, #tpu.memory_space<vmem>>, vector<15x3xf32>
      tpu.vector_store %arg12[%c16_15, %c6], %13 {strides = array<i32>} : memref<256x128xf32, #tpu.memory_space<vmem>>, vector<15x3xf32>,
      %c1 = arith.constant 1 : index
      %c9 = arith.constant 9 : index
      %17 = vector.load %arg12[%c1, %c9] : memref<256x128xf32, #tpu.memory_space<vmem>>, vector<15x3xf32>
      tpu.vector_store %arg12[%c1, %c9], %12 {strides = array<i32>} : memref<256x128xf32, #tpu.memory_space<vmem>>, vector<15x3xf32>,
      %c0_16 = arith.constant 0 : index
      %c12 = arith.constant 12 : index
      %18 = vector.load %arg12[%c0_16, %c12] : memref<256x128xf32, #tpu.memory_space<vmem>>, vector<16x3xf32>
      tpu.vector_store %arg12[%c0_16, %c12], %11 {strides = array<i32>} : memref<256x128xf32, #tpu.memory_space<vmem>>, vector<16x3xf32>,
      %c0_17 = arith.constant 0 : index
      %c15 = arith.constant 15 : index
      %19 = vector.load %arg12[%c0_17, %c15] : memref<256x128xf32, #tpu.memory_space<vmem>>, vector<15x3xf32>
      tpu.vector_store %arg12[%c0_17, %c15], %13 {strides = array<i32>} : memref<256x128xf32, #tpu.memory_space<vmem>>, vector<15x3xf32>,
      %20 = arith.index_cast %arg22 : i32 to index
      %c1_18 = arith.constant 1 : index
      %c0_19 = arith.constant 0 : index
      %c0_20 = arith.constant 0 : index
      %21 = vector.load %arg1[%20, %c1_18, %c0_19, %c0_20] : memref<4x16x16x3xf32, #tpu.memory_space<vmem>>, vector<1x1x16x3xf32>
      %22 = vector.shape_cast %21 : vector<1x1x16x3xf32> to vector<16x3xf32>
      %23 = vector.extract_strided_slice %22 {offsets = [0, 0], sizes = [15, 3], strides = [1, 1]} : vector<16x3xf32> to vector<15x3xf32>
      %24 = vector.extract_strided_slice %22 {offsets = [1, 0], sizes = [15, 3], strides = [1, 1]} : vector<16x3xf32> to vector<15x3xf32>
      %c33 = arith.constant 33 : index
      %c0_21 = arith.constant 0 : index
      %25 = vector.load %arg12[%c33, %c0_21] : memref<256x128xf32, #tpu.memory_space<vmem>>, vector<15x3xf32>
      tpu.vector_store %arg12[%c33, %c0_21], %23 {strides = array<i32>} : memref<256x128xf32, #tpu.memory_space<vmem>>, vector<15x3xf32>,
      %c32 = arith.constant 32 : index
      %c3_22 = arith.constant 3 : index
      %26 = vector.load %arg12[%c32, %c3_22] : memref<256x128xf32, #tpu.memory_space<vmem>>, vector<16x3xf32>
      tpu.vector_store %arg12[%c32, %c3_22], %22 {strides = array<i32>} : memref<256x128xf32, #tpu.memory_space<vmem>>, vector<16x3xf32>,
      %c32_23 = arith.constant 32 : index
      %c6_24 = arith.constant 6 : index
      %27 = vector.load %arg12[%c32_23, %c6_24] : memref<256x128xf32, #tpu.memory_space<vmem>>, vector<15x3xf32>
      tpu.vector_store %arg12[%c32_23, %c6_24], %24 {strides = array<i32>} : memref<256x128xf32, #tpu.memory_space<vmem>>, vector<15x3xf32>,
      %c17_25 = arith.constant 17 : index
      %c9_26 = arith.constant 9 : index
      %28 = vector.load %arg12[%c17_25, %c9_26] : memref<256x128xf32, #tpu.memory_space<vmem>>, vector<15x3xf32>
      tpu.vector_store %arg12[%c17_25, %c9_26], %23 {strides = array<i32>} : memref<256x128xf32, #tpu.memory_space<vmem>>, vector<15x3xf32>,
      %c16_27 = arith.constant 16 : index
      %c12_28 = arith.constant 12 : index
      %29 = vector.load %arg12[%c16_27, %c12_28] : memref<256x128xf32, #tpu.memory_space<vmem>>, vector<16x3xf32>
      tpu.vector_store %arg12[%c16_27, %c12_28], %22 {strides = array<i32>} : memref<256x128xf32, #tpu.memory_space<vmem>>, vector<16x3xf32>,
      %c16_29 = arith.constant 16 : index
      %c15_30 = arith.constant 15 : index
      %30 = vector.load %arg12[%c16_29, %c15_30] : memref<256x128xf32, #tpu.memory_space<vmem>>, vector<15x3xf32>
      tpu.vector_store %arg12[%c16_29, %c15_30], %24 {strides = array<i32>} : memref<256x128xf32, #tpu.memory_space<vmem>>, vector<15x3xf32>,
      %c1_31 = arith.constant 1 : index
      %c18 = arith.constant 18 : index
      %31 = vector.load %arg12[%c1_31, %c18] : memref<256x128xf32, #tpu.memory_space<vmem>>, vector<15x3xf32>
      tpu.vector_store %arg12[%c1_31, %c18], %23 {strides = array<i32>} : memref<256x128xf32, #tpu.memory_space<vmem>>, vector<15x3xf32>,
      %c0_32 = arith.constant 0 : index
      %c21 = arith.constant 21 : index
      %32 = vector.load %arg12[%c0_32, %c21] : memref<256x128xf32, #tpu.memory_space<vmem>>, vector<16x3xf32>
      tpu.vector_store %arg12[%c0_32, %c21], %22 {strides = array<i32>} : memref<256x128xf32, #tpu.memory_space<vmem>>, vector<16x3xf32>,
      %c0_33 = arith.constant 0 : index
      %c24 = arith.constant 24 : index
      %33 = vector.load %arg12[%c0_33, %c24] : memref<256x128xf32, #tpu.memory_space<vmem>>, vector<15x3xf32>
      tpu.vector_store %arg12[%c0_33, %c24], %24 {strides = array<i32>} : memref<256x128xf32, #tpu.memory_space<vmem>>, vector<15x3xf32>,
      %34 = arith.index_cast %arg22 : i32 to index
      %c2 = arith.constant 2 : index
      %c0_34 = arith.constant 0 : index
      %c0_35 = arith.constant 0 : index
      %35 = vector.load %arg1[%34, %c2, %c0_34, %c0_35] : memref<4x16x16x3xf32, #tpu.memory_space<vmem>>, vector<1x1x16x3xf32>
      %36 = vector.shape_cast %35 : vector<1x1x16x3xf32> to vector<16x3xf32>
      %37 = vector.extract_strided_slice %36 {offsets = [0, 0], sizes = [15, 3], strides = [1, 1]} : vector<16x3xf32> to vector<15x3xf32>
      %38 = vector.extract_strided_slice %36 {offsets = [1, 0], sizes = [15, 3], strides = [1, 1]} : vector<16x3xf32> to vector<15x3xf32>
      %c49 = arith.constant 49 : index
      %c0_36 = arith.constant 0 : index
      %39 = vector.load %arg12[%c49, %c0_36] : memref<256x128xf32, #tpu.memory_space<vmem>>, vector<15x3xf32>
      tpu.vector_store %arg12[%c49, %c0_36], %37 {strides = array<i32>} : memref<256x128xf32, #tpu.memory_space<vmem>>, vector<15x3xf32>,
      %c48 = arith.constant 48 : index
      %c3_37 = arith.constant 3 : index
      %40 = vector.load %arg12[%c48, %c3_37] : memref<256x128xf32, #tpu.memory_space<vmem>>, vector<16x3xf32>
      tpu.vector_store %arg12[%c48, %c3_37], %36 {strides = array<i32>} : memref<256x128xf32, #tpu.memory_space<vmem>>, vector<16x3xf32>,
      %c48_38 = arith.constant 48 : index
      %c6_39 = arith.constant 6 : index
      %41 = vector.load %arg12[%c48_38, %c6_39] : memref<256x128xf32, #tpu.memory_space<vmem>>, vector<15x3xf32>
      tpu.vector_store %arg12[%c48_38, %c6_39], %38 {strides = array<i32>} : memref<256x128xf32, #tpu.memory_space<vmem>>, vector<15x3xf32>,
      %c33_40 = arith.constant 33 : index
      %c9_41 = arith.constant 9 : index
      %42 = vector.load %arg12[%c33_40, %c9_41] : memref<256x128xf32, #tpu.memory_space<vmem>>, vector<15x3xf32>
      tpu.vector_store %arg12[%c33_40, %c9_41], %37 {strides = array<i32>} : memref<256x128xf32, #tpu.memory_space<vmem>>, vector<15x3xf32>,
      %c32_42 = arith.constant 32 : index
      %c12_43 = arith.constant 12 : index
      %43 = vector.load %arg12[%c32_42, %c12_43] : memref<256x128xf32, #tpu.memory_space<vmem>>, vector<16x3xf32>
      tpu.vector_store %arg12[%c32_42, %c12_43], %36 {strides = array<i32>} : memref<256x128xf32, #tpu.memory_space<vmem>>, vector<16x3xf32>,
      %c32_44 = arith.constant 32 : index
      %c15_45 = arith.constant 15 : index
      %44 = vector.load %arg12[%c32_44, %c15_45] : memref<256x128xf32, #tpu.memory_space<vmem>>, vector<15x3xf32>
      tpu.vector_store %arg12[%c32_44, %c15_45], %38 {strides = array<i32>} : memref<256x128xf32, #tpu.memory_space<vmem>>, vector<15x3xf32>,
      %c17_46 = arith.constant 17 : index
      %c18_47 = arith.constant 18 : index
      %45 = vector.load %arg12[%c17_46, %c18_47] : memref<256x128xf32, #tpu.memory_space<vmem>>, vector<15x3xf32>
      tpu.vector_store %arg12[%c17_46, %c18_47], %37 {strides = array<i32>} : memref<256x128xf32, #tpu.memory_space<vmem>>, vector<15x3xf32>,
      %c16_48 = arith.constant 16 : index
      %c21_49 = arith.constant 21 : index
      %46 = vector.load %arg12[%c16_48, %c21_49] : memref<256x128xf32, #tpu.memory_space<vmem>>, vector<16x3xf32>
      tpu.vector_store %arg12[%c16_48, %c21_49], %36 {strides = array<i32>} : memref<256x128xf32, #tpu.memory_space<vmem>>, vector<16x3xf32>,
      %c16_50 = arith.constant 16 : index
      %c24_51 = arith.constant 24 : index
      %47 = vector.load %arg12[%c16_50, %c24_51] : memref<256x128xf32, #tpu.memory_space<vmem>>, vector<15x3xf32>
      tpu.vector_store %arg12[%c16_50, %c24_51], %38 {strides = array<i32>} : memref<256x128xf32, #tpu.memory_space<vmem>>, vector<15x3xf32>,
      %48 = arith.index_cast %arg22 : i32 to index
      %c3_52 = arith.constant 3 : index
      %c0_53 = arith.constant 0 : index
      %c0_54 = arith.constant 0 : index
      %49 = vector.load %arg1[%48, %c3_52, %c0_53, %c0_54] : memref<4x16x16x3xf32, #tpu.memory_space<vmem>>, vector<1x1x16x3xf32>
      %50 = vector.shape_cast %49 : vector<1x1x16x3xf32> to vector<16x3xf32>
      %51 = vector.extract_strided_slice %50 {offsets = [0, 0], sizes = [15, 3], strides = [1, 1]} : vector<16x3xf32> to vector<15x3xf32>
      %52 = vector.extract_strided_slice %50 {offsets = [1, 0], sizes = [15, 3], strides = [1, 1]} : vector<16x3xf32> to vector<15x3xf32>
      %c65 = arith.constant 65 : index
      %c0_55 = arith.constant 0 : index
      %53 = vector.load %arg12[%c65, %c0_55] : memref<256x128xf32, #tpu.memory_space<vmem>>, vector<15x3xf32>
      tpu.vector_store %arg12[%c65, %c0_55], %51 {strides = array<i32>} : memref<256x128xf32, #tpu.memory_space<vmem>>, vector<15x3xf32>,
      %c64 = arith.constant 64 : index
      %c3_56 = arith.constant 3 : index
      %54 = vector.load %arg12[%c64, %c3_56] : memref<256x128xf32, #tpu.memory_space<vmem>>, vector<16x3xf32>
      tpu.vector_store %arg12[%c64, %c3_56], %50 {strides = array<i32>} : memref<256x128xf32, #tpu.memory_space<vmem>>, vector<16x3xf32>,
      %c64_57 = arith.constant 64 : index
      %c6_58 = arith.constant 6 : index
      %55 = vector.load %arg12[%c64_57, %c6_58] : memref<256x128xf32, #tpu.memory_space<vmem>>, vector<15x3xf32>
      tpu.vector_store %arg12[%c64_57, %c6_58], %52 {strides = array<i32>} : memref<256x128xf32, #tpu.memory_space<vmem>>, vector<15x3xf32>,
      %c49_59 = arith.constant 49 : index
      %c9_60 = arith.constant 9 : index
      %56 = vector.load %arg12[%c49_59, %c9_60] : memref<256x128xf32, #tpu.memory_space<vmem>>, vector<15x3xf32>
      tpu.vector_store %arg12[%c49_59, %c9_60], %51 {strides = array<i32>} : memref<256x128xf32, #tpu.memory_space<vmem>>, vector<15x3xf32>,
      %c48_61 = arith.constant 48 : index
      %c12_62 = arith.constant 12 : index
      %57 = vector.load %arg12[%c48_61, %c12_62] : memref<256x128xf32, #tpu.memory_space<vmem>>, vector<16x3xf32>
      tpu.vector_store %arg12[%c48_61, %c12_62], %50 {strides = array<i32>} : memref<256x128xf32, #tpu.memory_space<vmem>>, vector<16x3xf32>,
      %c48_63 = arith.constant 48 : index
      %c15_64 = arith.constant 15 : index
      %58 = vector.load %arg12[%c48_63, %c15_64] : memref<256x128xf32, #tpu.memory_space<vmem>>, vector<15x3xf32>
      tpu.vector_store %arg12[%c48_63, %c15_64], %52 {strides = array<i32>} : memref<256x128xf32, #tpu.memory_space<vmem>>, vector<15x3xf32>,
      %c33_65 = arith.constant 33 : index
      %c18_66 = arith.constant 18 : index
      %59 = vector.load %arg12[%c33_65, %c18_66] : memref<256x128xf32, #tpu.memory_space<vmem>>, vector<15x3xf32>
      tpu.vector_store %arg12[%c33_65, %c18_66], %51 {strides = array<i32>} : memref<256x128xf32, #tpu.memory_space<vmem>>, vector<15x3xf32>,
      %c32_67 = arith.constant 32 : index
      %c21_68 = arith.constant 21 : index
      %60 = vector.load %arg12[%c32_67, %c21_68] : memref<256x128xf32, #tpu.memory_space<vmem>>, vector<16x3xf32>
      tpu.vector_store %arg12[%c32_67, %c21_68], %50 {strides = array<i32>} : memref<256x128xf32, #tpu.memory_space<vmem>>, vector<16x3xf32>,
      %c32_69 = arith.constant 32 : index
      %c24_70 = arith.constant 24 : index
      %61 = vector.load %arg12[%c32_69, %c24_70] : memref<256x128xf32, #tpu.memory_space<vmem>>, vector<15x3xf32>
      tpu.vector_store %arg12[%c32_69, %c24_70], %52 {strides = array<i32>} : memref<256x128xf32, #tpu.memory_space<vmem>>, vector<15x3xf32>,
      %62 = arith.index_cast %arg22 : i32 to index
      %c4 = arith.constant 4 : index
      %c0_71 = arith.constant 0 : index
      %c0_72 = arith.constant 0 : index
      %63 = vector.load %arg1[%62, %c4, %c0_71, %c0_72] : memref<4x16x16x3xf32, #tpu.memory_space<vmem>>, vector<1x1x16x3xf32>
      %64 = vector.shape_cast %63 : vector<1x1x16x3xf32> to vector<16x3xf32>
      %65 = vector.extract_strided_slice %64 {offsets = [0, 0], sizes = [15, 3], strides = [1, 1]} : vector<16x3xf32> to vector<15x3xf32>
      %66 = vector.extract_strided_slice %64 {offsets = [1, 0], sizes = [15, 3], strides = [1, 1]} : vector<16x3xf32> to vector<15x3xf32>
      %c81 = arith.constant 81 : index
      %c0_73 = arith.constant 0 : index
      %67 = vector.load %arg12[%c81, %c0_73] : memref<256x128xf32, #tpu.memory_space<vmem>>, vector<15x3xf32>
      tpu.vector_store %arg12[%c81, %c0_73], %65 {strides = array<i32>} : memref<256x128xf32, #tpu.memory_space<vmem>>, vector<15x3xf32>,
      %c80 = arith.constant 80 : index
      %c3_74 = arith.constant 3 : index
      %68 = vector.load %arg12[%c80, %c3_74] : memref<256x128xf32, #tpu.memory_space<vmem>>, vector<16x3xf32>
      tpu.vector_store %arg12[%c80, %c3_74], %64 {strides = array<i32>} : memref<256x128xf32, #tpu.memory_space<vmem>>, vector<16x3xf32>,
      %c80_75 = arith.constant 80 : index
      %c6_76 = arith.constant 6 : index
      %69 = vector.load %arg12[%c80_75, %c6_76] : memref<256x128xf32, #tpu.memory_space<vmem>>, vector<15x3xf32>
      tpu.vector_store %arg12[%c80_75, %c6_76], %66 {strides = array<i32>} : memref<256x128xf32, #tpu.memory_space<vmem>>, vector<15x3xf32>,
      %c65_77 = arith.constant 65 : index
      %c9_78 = arith.constant 9 : index
      %70 = vector.load %arg12[%c65_77, %c9_78] : memref<256x128xf32, #tpu.memory_space<vmem>>, vector<15x3xf32>
      tpu.vector_store %arg12[%c65_77, %c9_78], %65 {strides = array<i32>} : memref<256x128xf32, #tpu.memory_space<vmem>>, vector<15x3xf32>,
      %c64_79 = arith.constant 64 : index
      %c12_80 = arith.constant 12 : index
      %71 = vector.load %arg12[%c64_79, %c12_80] : memref<256x128xf32, #tpu.memory_space<vmem>>, vector<16x3xf32>
      tpu.vector_store %arg12[%c64_79, %c12_80], %64 {strides = array<i32>} : memref<256x128xf32, #tpu.memory_space<vmem>>, vector<16x3xf32>,
      %c64_81 = arith.constant 64 : index
      %c15_82 = arith.constant 15 : index
      %72 = vector.load %arg12[%c64_81, %c15_82] : memref<256x128xf32, #tpu.memory_space<vmem>>, vector<15x3xf32>
      tpu.vector_store %arg12[%c64_81, %c15_82], %66 {strides = array<i32>} : memref<256x128xf32, #tpu.memory_space<vmem>>, vector<15x3xf32>,
      %c49_83 = arith.constant 49 : index
      %c18_84 = arith.constant 18 : index
      %73 = vector.load %arg12[%c49_83, %c18_84] : memref<256x128xf32, #tpu.memory_space<vmem>>, vector<15x3xf32>
      tpu.vector_store %arg12[%c49_83, %c18_84], %65 {strides = array<i32>} : memref<256x128xf32, #tpu.memory_space<vmem>>, vector<15x3xf32>,
      %c48_85 = arith.constant 48 : index
      %c21_86 = arith.constant 21 : index
      %74 = vector.load %arg12[%c48_85, %c21_86] : memref<256x128xf32, #tpu.memory_space<vmem>>, vector<16x3xf32>
      tpu.vector_store %arg12[%c48_85, %c21_86], %64 {strides = array<i32>} : memref<256x128xf32, #tpu.memory_space<vmem>>, vector<16x3xf32>,
      %c48_87 = arith.constant 48 : index
      %c24_88 = arith.constant 24 : index
      %75 = vector.load %arg12[%c48_87, %c24_88] : memref<256x128xf32, #tpu.memory_space<vmem>>, vector<15x3xf32>
      tpu.vector_store %arg12[%c48_87, %c24_88], %66 {strides = array<i32>} : memref<256x128xf32, #tpu.memory_space<vmem>>, vector<15x3xf32>,
      %76 = arith.index_cast %arg22 : i32 to index
      %c5 = arith.constant 5 : index
      %c0_89 = arith.constant 0 : index
      %c0_90 = arith.constant 0 : index
      %77 = vector.load %arg1[%76, %c5, %c0_89, %c0_90] : memref<4x16x16x3xf32, #tpu.memory_space<vmem>>, vector<1x1x16x3xf32>
      %78 = vector.shape_cast %77 : vector<1x1x16x3xf32> to vector<16x3xf32>
      %79 = vector.extract_strided_slice %78 {offsets = [0, 0], sizes = [15, 3], strides = [1, 1]} : vector<16x3xf32> to vector<15x3xf32>
      %80 = vector.extract_strided_slice %78 {offsets = [1, 0], sizes = [15, 3], strides = [1, 1]} : vector<16x3xf32> to vector<15x3xf32>
      %c97 = arith.constant 97 : index
      %c0_91 = arith.constant 0 : index
      %81 = vector.load %arg12[%c97, %c0_91] : memref<256x128xf32, #tpu.memory_space<vmem>>, vector<15x3xf32>
      tpu.vector_store %arg12[%c97, %c0_91], %79 {strides = array<i32>} : memref<256x128xf32, #tpu.memory_space<vmem>>, vector<15x3xf32>,
      %c96 = arith.constant 96 : index
      %c3_92 = arith.constant 3 : index
      %82 = vector.load %arg12[%c96, %c3_92] : memref<256x128xf32, #tpu.memory_space<vmem>>, vector<16x3xf32>
      tpu.vector_store %arg12[%c96, %c3_92], %78 {strides = array<i32>} : memref<256x128xf32, #tpu.memory_space<vmem>>, vector<16x3xf32>,
      %c96_93 = arith.constant 96 : index
      %c6_94 = arith.constant 6 : index
      %83 = vector.load %arg12[%c96_93, %c6_94] : memref<256x128xf32, #tpu.memory_space<vmem>>, vector<15x3xf32>
      tpu.vector_store %arg12[%c96_93, %c6_94], %80 {strides = array<i32>} : memref<256x128xf32, #tpu.memory_space<vmem>>, vector<15x3xf32>,
      %c81_95 = arith.constant 81 : index
      %c9_96 = arith.constant 9 : index
      %84 = vector.load %arg12[%c81_95, %c9_96] : memref<256x128xf32, #tpu.memory_space<vmem>>, vector<15x3xf32>
      tpu.vector_store %arg12[%c81_95, %c9_96], %79 {strides = array<i32>} : memref<256x128xf32, #tpu.memory_space<vmem>>, vector<15x3xf32>,
      %c80_97 = arith.constant 80 : index
      %c12_98 = arith.constant 12 : index
      %85 = vector.load %arg12[%c80_97, %c12_98] : memref<256x128xf32, #tpu.memory_space<vmem>>, vector<16x3xf32>
      tpu.vector_store %arg12[%c80_97, %c12_98], %78 {strides = array<i32>} : memref<256x128xf32, #tpu.memory_space<vmem>>, vector<16x3xf32>,
      %c80_99 = arith.constant 80 : index
      %c15_100 = arith.constant 15 : index
      %86 = vector.load %arg12[%c80_99, %c15_100] : memref<256x128xf32, #tpu.memory_space<vmem>>, vector<15x3xf32>
      tpu.vector_store %arg12[%c80_99, %c15_100], %80 {strides = array<i32>} : memref<256x128xf32, #tpu.memory_space<vmem>>, vector<15x3xf32>,
      %c65_101 = arith.constant 65 : index
      %c18_102 = arith.constant 18 : index
      %87 = vector.load %arg12[%c65_101, %c18_102] : memref<256x128xf32, #tpu.memory_space<vmem>>, vector<15x3xf32>
      tpu.vector_store %arg12[%c65_101, %c18_102], %79 {strides = array<i32>} : memref<256x128xf32, #tpu.memory_space<vmem>>, vector<15x3xf32>,
      %c64_103 = arith.constant 64 : index
      %c21_104 = arith.constant 21 : index
      %88 = vector.load %arg12[%c64_103, %c21_104] : memref<256x128xf32, #tpu.memory_space<vmem>>, vector<16x3xf32>
      tpu.vector_store %arg12[%c64_103, %c21_104], %78 {strides = array<i32>} : memref<256x128xf32, #tpu.memory_space<vmem>>, vector<16x3xf32>,
      %c64_105 = arith.constant 64 : index
      %c24_106 = arith.constant 24 : index
      %89 = vector.load %arg12[%c64_105, %c24_106] : memref<256x128xf32, #tpu.memory_space<vmem>>, vector<15x3xf32>
      tpu.vector_store %arg12[%c64_105, %c24_106], %80 {strides = array<i32>} : memref<256x128xf32, #tpu.memory_space<vmem>>, vector<15x3xf32>,
      %90 = arith.index_cast %arg22 : i32 to index
      %c6_107 = arith.constant 6 : index
      %c0_108 = arith.constant 0 : index
      %c0_109 = arith.constant 0 : index
      %91 = vector.load %arg1[%90, %c6_107, %c0_108, %c0_109] : memref<4x16x16x3xf32, #tpu.memory_space<vmem>>, vector<1x1x16x3xf32>
      %92 = vector.shape_cast %91 : vector<1x1x16x3xf32> to vector<16x3xf32>
      %93 = vector.extract_strided_slice %92 {offsets = [0, 0], sizes = [15, 3], strides = [1, 1]} : vector<16x3xf32> to vector<15x3xf32>
      %94 = vector.extract_strided_slice %92 {offsets = [1, 0], sizes = [15, 3], strides = [1, 1]} : vector<16x3xf32> to vector<15x3xf32>
      %c113 = arith.constant 113 : index
      %c0_110 = arith.constant 0 : index
      %95 = vector.load %arg12[%c113, %c0_110] : memref<256x128xf32, #tpu.memory_space<vmem>>, vector<15x3xf32>
      tpu.vector_store %arg12[%c113, %c0_110], %93 {strides = array<i32>} : memref<256x128xf32, #tpu.memory_space<vmem>>, vector<15x3xf32>,
      %c112 = arith.constant 112 : index
      %c3_111 = arith.constant 3 : index
      %96 = vector.load %arg12[%c112, %c3_111] : memref<256x128xf32, #tpu.memory_space<vmem>>, vector<16x3xf32>
      tpu.vector_store %arg12[%c112, %c3_111], %92 {strides = array<i32>} : memref<256x128xf32, #tpu.memory_space<vmem>>, vector<16x3xf32>,
      %c112_112 = arith.constant 112 : index
      %c6_113 = arith.constant 6 : index
      %97 = vector.load %arg12[%c112_112, %c6_113] : memref<256x128xf32, #tpu.memory_space<vmem>>, vector<15x3xf32>
      tpu.vector_store %arg12[%c112_112, %c6_113], %94 {strides = array<i32>} : memref<256x128xf32, #tpu.memory_space<vmem>>, vector<15x3xf32>,
      %c97_114 = arith.constant 97 : index
      %c9_115 = arith.constant 9 : index
      %98 = vector.load %arg12[%c97_114, %c9_115] : memref<256x128xf32, #tpu.memory_space<vmem>>, vector<15x3xf32>
      tpu.vector_store %arg12[%c97_114, %c9_115], %93 {strides = array<i32>} : memref<256x128xf32, #tpu.memory_space<vmem>>, vector<15x3xf32>,
      %c96_116 = arith.constant 96 : index
      %c12_117 = arith.constant 12 : index
      %99 = vector.load %arg12[%c96_116, %c12_117] : memref<256x128xf32, #tpu.memory_space<vmem>>, vector<16x3xf32>
      tpu.vector_store %arg12[%c96_116, %c12_117], %92 {strides = array<i32>} : memref<256x128xf32, #tpu.memory_space<vmem>>, vector<16x3xf32>,
      %c96_118 = arith.constant 96 : index
      %c15_119 = arith.constant 15 : index
      %100 = vector.load %arg12[%c96_118, %c15_119] : memref<256x128xf32, #tpu.memory_space<vmem>>, vector<15x3xf32>
      tpu.vector_store %arg12[%c96_118, %c15_119], %94 {strides = array<i32>} : memref<256x128xf32, #tpu.memory_space<vmem>>, vector<15x3xf32>,
      %c81_120 = arith.constant 81 : index
      %c18_121 = arith.constant 18 : index
      %101 = vector.load %arg12[%c81_120, %c18_121] : memref<256x128xf32, #tpu.memory_space<vmem>>, vector<15x3xf32>
      tpu.vector_store %arg12[%c81_120, %c18_121], %93 {strides = array<i32>} : memref<256x128xf32, #tpu.memory_space<vmem>>, vector<15x3xf32>,
      %c80_122 = arith.constant 80 : index
      %c21_123 = arith.constant 21 : index
      %102 = vector.load %arg12[%c80_122, %c21_123] : memref<256x128xf32, #tpu.memory_space<vmem>>, vector<16x3xf32>
      tpu.vector_store %arg12[%c80_122, %c21_123], %92 {strides = array<i32>} : memref<256x128xf32, #tpu.memory_space<vmem>>, vector<16x3xf32>,
      %c80_124 = arith.constant 80 : index
      %c24_125 = arith.constant 24 : index
      %103 = vector.load %arg12[%c80_124, %c24_125] : memref<256x128xf32, #tpu.memory_space<vmem>>, vector<15x3xf32>
      tpu.vector_store %arg12[%c80_124, %c24_125], %94 {strides = array<i32>} : memref<256x128xf32, #tpu.memory_space<vmem>>, vector<15x3xf32>,
      %104 = arith.index_cast %arg22 : i32 to index
      %c7 = arith.constant 7 : index
      %c0_126 = arith.constant 0 : index
      %c0_127 = arith.constant 0 : index
      %105 = vector.load %arg1[%104, %c7, %c0_126, %c0_127] : memref<4x16x16x3xf32, #tpu.memory_space<vmem>>, vector<1x1x16x3xf32>
      %106 = vector.shape_cast %105 : vector<1x1x16x3xf32> to vector<16x3xf32>
      %107 = vector.extract_strided_slice %106 {offsets = [0, 0], sizes = [15, 3], strides = [1, 1]} : vector<16x3xf32> to vector<15x3xf32>
      %108 = vector.extract_strided_slice %106 {offsets = [1, 0], sizes = [15, 3], strides = [1, 1]} : vector<16x3xf32> to vector<15x3xf32>
      %c129 = arith.constant 129 : index
      %c0_128 = arith.constant 0 : index
      %109 = vector.load %arg12[%c129, %c0_128] : memref<256x128xf32, #tpu.memory_space<vmem>>, vector<15x3xf32>
      tpu.vector_store %arg12[%c129, %c0_128], %107 {strides = array<i32>} : memref<256x128xf32, #tpu.memory_space<vmem>>, vector<15x3xf32>,
      %c128 = arith.constant 128 : index
      %c3_129 = arith.constant 3 : index
      %110 = vector.load %arg12[%c128, %c3_129] : memref<256x128xf32, #tpu.memory_space<vmem>>, vector<16x3xf32>
      tpu.vector_store %arg12[%c128, %c3_129], %106 {strides = array<i32>} : memref<256x128xf32, #tpu.memory_space<vmem>>, vector<16x3xf32>,
      %c128_130 = arith.constant 128 : index
      %c6_131 = arith.constant 6 : index
      %111 = vector.load %arg12[%c128_130, %c6_131] : memref<256x128xf32, #tpu.memory_space<vmem>>, vector<15x3xf32>
      tpu.vector_store %arg12[%c128_130, %c6_131], %108 {strides = array<i32>} : memref<256x128xf32, #tpu.memory_space<vmem>>, vector<15x3xf32>,
      %c113_132 = arith.constant 113 : index
      %c9_133 = arith.constant 9 : index
      %112 = vector.load %arg12[%c113_132, %c9_133] : memref<256x128xf32, #tpu.memory_space<vmem>>, vector<15x3xf32>
      tpu.vector_store %arg12[%c113_132, %c9_133], %107 {strides = array<i32>} : memref<256x128xf32, #tpu.memory_space<vmem>>, vector<15x3xf32>,
      %c112_134 = arith.constant 112 : index
      %c12_135 = arith.constant 12 : index
      %113 = vector.load %arg12[%c112_134, %c12_135] : memref<256x128xf32, #tpu.memory_space<vmem>>, vector<16x3xf32>
      tpu.vector_store %arg12[%c112_134, %c12_135], %106 {strides = array<i32>} : memref<256x128xf32, #tpu.memory_space<vmem>>, vector<16x3xf32>,
      %c112_136 = arith.constant 112 : index
      %c15_137 = arith.constant 15 : index
      %114 = vector.load %arg12[%c112_136, %c15_137] : memref<256x128xf32, #tpu.memory_space<vmem>>, vector<15x3xf32>
      tpu.vector_store %arg12[%c112_136, %c15_137], %108 {strides = array<i32>} : memref<256x128xf32, #tpu.memory_space<vmem>>, vector<15x3xf32>,
      %c97_138 = arith.constant 97 : index
      %c18_139 = arith.constant 18 : index
      %115 = vector.load %arg12[%c97_138, %c18_139] : memref<256x128xf32, #tpu.memory_space<vmem>>, vector<15x3xf32>
      tpu.vector_store %arg12[%c97_138, %c18_139], %107 {strides = array<i32>} : memref<256x128xf32, #tpu.memory_space<vmem>>, vector<15x3xf32>,
      %c96_140 = arith.constant 96 : index
      %c21_141 = arith.constant 21 : index
      %116 = vector.load %arg12[%c96_140, %c21_141] : memref<256x128xf32, #tpu.memory_space<vmem>>, vector<16x3xf32>
      tpu.vector_store %arg12[%c96_140, %c21_141], %106 {strides = array<i32>} : memref<256x128xf32, #tpu.memory_space<vmem>>, vector<16x3xf32>,
      %c96_142 = arith.constant 96 : index
      %c24_143 = arith.constant 24 : index
      %117 = vector.load %arg12[%c96_142, %c24_143] : memref<256x128xf32, #tpu.memory_space<vmem>>, vector<15x3xf32>
      tpu.vector_store %arg12[%c96_142, %c24_143], %108 {strides = array<i32>} : memref<256x128xf32, #tpu.memory_space<vmem>>, vector<15x3xf32>,
      %118 = arith.index_cast %arg22 : i32 to index
      %c8 = arith.constant 8 : index
      %c0_144 = arith.constant 0 : index
      %c0_145 = arith.constant 0 : index
      %119 = vector.load %arg1[%118, %c8, %c0_144, %c0_145] : memref<4x16x16x3xf32, #tpu.memory_space<vmem>>, vector<1x1x16x3xf32>
      %120 = vector.shape_cast %119 : vector<1x1x16x3xf32> to vector<16x3xf32>
      %121 = vector.extract_strided_slice %120 {offsets = [0, 0], sizes = [15, 3], strides = [1, 1]} : vector<16x3xf32> to vector<15x3xf32>
      %122 = vector.extract_strided_slice %120 {offsets = [1, 0], sizes = [15, 3], strides = [1, 1]} : vector<16x3xf32> to vector<15x3xf32>
      %c145 = arith.constant 145 : index
      %c0_146 = arith.constant 0 : index
      %123 = vector.load %arg12[%c145, %c0_146] : memref<256x128xf32, #tpu.memory_space<vmem>>, vector<15x3xf32>
      tpu.vector_store %arg12[%c145, %c0_146], %121 {strides = array<i32>} : memref<256x128xf32, #tpu.memory_space<vmem>>, vector<15x3xf32>,
      %c144 = arith.constant 144 : index
      %c3_147 = arith.constant 3 : index
      %124 = vector.load %arg12[%c144, %c3_147] : memref<256x128xf32, #tpu.memory_space<vmem>>, vector<16x3xf32>
      tpu.vector_store %arg12[%c144, %c3_147], %120 {strides = array<i32>} : memref<256x128xf32, #tpu.memory_space<vmem>>, vector<16x3xf32>,
      %c144_148 = arith.constant 144 : index
      %c6_149 = arith.constant 6 : index
      %125 = vector.load %arg12[%c144_148, %c6_149] : memref<256x128xf32, #tpu.memory_space<vmem>>, vector<15x3xf32>
      tpu.vector_store %arg12[%c144_148, %c6_149], %122 {strides = array<i32>} : memref<256x128xf32, #tpu.memory_space<vmem>>, vector<15x3xf32>,
      %c129_150 = arith.constant 129 : index
      %c9_151 = arith.constant 9 : index
      %126 = vector.load %arg12[%c129_150, %c9_151] : memref<256x128xf32, #tpu.memory_space<vmem>>, vector<15x3xf32>
      tpu.vector_store %arg12[%c129_150, %c9_151], %121 {strides = array<i32>} : memref<256x128xf32, #tpu.memory_space<vmem>>, vector<15x3xf32>,
      %c128_152 = arith.constant 128 : index
      %c12_153 = arith.constant 12 : index
      %127 = vector.load %arg12[%c128_152, %c12_153] : memref<256x128xf32, #tpu.memory_space<vmem>>, vector<16x3xf32>
      tpu.vector_store %arg12[%c128_152, %c12_153], %120 {strides = array<i32>} : memref<256x128xf32, #tpu.memory_space<vmem>>, vector<16x3xf32>,
      %c128_154 = arith.constant 128 : index
      %c15_155 = arith.constant 15 : index
      %128 = vector.load %arg12[%c128_154, %c15_155] : memref<256x128xf32, #tpu.memory_space<vmem>>, vector<15x3xf32>
      tpu.vector_store %arg12[%c128_154, %c15_155], %122 {strides = array<i32>} : memref<256x128xf32, #tpu.memory_space<vmem>>, vector<15x3xf32>,
      %c113_156 = arith.constant 113 : index
      %c18_157 = arith.constant 18 : index
      %129 = vector.load %arg12[%c113_156, %c18_157] : memref<256x128xf32, #tpu.memory_space<vmem>>, vector<15x3xf32>
      tpu.vector_store %arg12[%c113_156, %c18_157], %121 {strides = array<i32>} : memref<256x128xf32, #tpu.memory_space<vmem>>, vector<15x3xf32>,
      %c112_158 = arith.constant 112 : index
      %c21_159 = arith.constant 21 : index
      %130 = vector.load %arg12[%c112_158, %c21_159] : memref<256x128xf32, #tpu.memory_space<vmem>>, vector<16x3xf32>
      tpu.vector_store %arg12[%c112_158, %c21_159], %120 {strides = array<i32>} : memref<256x128xf32, #tpu.memory_space<vmem>>, vector<16x3xf32>,
      %c112_160 = arith.constant 112 : index
      %c24_161 = arith.constant 24 : index
      %131 = vector.load %arg12[%c112_160, %c24_161] : memref<256x128xf32, #tpu.memory_space<vmem>>, vector<15x3xf32>
      tpu.vector_store %arg12[%c112_160, %c24_161], %122 {strides = array<i32>} : memref<256x128xf32, #tpu.memory_space<vmem>>, vector<15x3xf32>,
      %132 = arith.index_cast %arg22 : i32 to index
      %c9_162 = arith.constant 9 : index
      %c0_163 = arith.constant 0 : index
      %c0_164 = arith.constant 0 : index
      %133 = vector.load %arg1[%132, %c9_162, %c0_163, %c0_164] : memref<4x16x16x3xf32, #tpu.memory_space<vmem>>, vector<1x1x16x3xf32>
      %134 = vector.shape_cast %133 : vector<1x1x16x3xf32> to vector<16x3xf32>
      %135 = vector.extract_strided_slice %134 {offsets = [0, 0], sizes = [15, 3], strides = [1, 1]} : vector<16x3xf32> to vector<15x3xf32>
      %136 = vector.extract_strided_slice %134 {offsets = [1, 0], sizes = [15, 3], strides = [1, 1]} : vector<16x3xf32> to vector<15x3xf32>
      %c161 = arith.constant 161 : index
      %c0_165 = arith.constant 0 : index
      %137 = vector.load %arg12[%c161, %c0_165] : memref<256x128xf32, #tpu.memory_space<vmem>>, vector<15x3xf32>
      tpu.vector_store %arg12[%c161, %c0_165], %135 {strides = array<i32>} : memref<256x128xf32, #tpu.memory_space<vmem>>, vector<15x3xf32>,
      %c160 = arith.constant 160 : index
      %c3_166 = arith.constant 3 : index
      %138 = vector.load %arg12[%c160, %c3_166] : memref<256x128xf32, #tpu.memory_space<vmem>>, vector<16x3xf32>
      tpu.vector_store %arg12[%c160, %c3_166], %134 {strides = array<i32>} : memref<256x128xf32, #tpu.memory_space<vmem>>, vector<16x3xf32>,
      %c160_167 = arith.constant 160 : index
      %c6_168 = arith.constant 6 : index
      %139 = vector.load %arg12[%c160_167, %c6_168] : memref<256x128xf32, #tpu.memory_space<vmem>>, vector<15x3xf32>
      tpu.vector_store %arg12[%c160_167, %c6_168], %136 {strides = array<i32>} : memref<256x128xf32, #tpu.memory_space<vmem>>, vector<15x3xf32>,
      %c145_169 = arith.constant 145 : index
      %c9_170 = arith.constant 9 : index
      %140 = vector.load %arg12[%c145_169, %c9_170] : memref<256x128xf32, #tpu.memory_space<vmem>>, vector<15x3xf32>
      tpu.vector_store %arg12[%c145_169, %c9_170], %135 {strides = array<i32>} : memref<256x128xf32, #tpu.memory_space<vmem>>, vector<15x3xf32>,
      %c144_171 = arith.constant 144 : index
      %c12_172 = arith.constant 12 : index
      %141 = vector.load %arg12[%c144_171, %c12_172] : memref<256x128xf32, #tpu.memory_space<vmem>>, vector<16x3xf32>
      tpu.vector_store %arg12[%c144_171, %c12_172], %134 {strides = array<i32>} : memref<256x128xf32, #tpu.memory_space<vmem>>, vector<16x3xf32>,
      %c144_173 = arith.constant 144 : index
      %c15_174 = arith.constant 15 : index
      %142 = vector.load %arg12[%c144_173, %c15_174] : memref<256x128xf32, #tpu.memory_space<vmem>>, vector<15x3xf32>
      tpu.vector_store %arg12[%c144_173, %c15_174], %136 {strides = array<i32>} : memref<256x128xf32, #tpu.memory_space<vmem>>, vector<15x3xf32>,
      %c129_175 = arith.constant 129 : index
      %c18_176 = arith.constant 18 : index
      %143 = vector.load %arg12[%c129_175, %c18_176] : memref<256x128xf32, #tpu.memory_space<vmem>>, vector<15x3xf32>
      tpu.vector_store %arg12[%c129_175, %c18_176], %135 {strides = array<i32>} : memref<256x128xf32, #tpu.memory_space<vmem>>, vector<15x3xf32>,
      %c128_177 = arith.constant 128 : index
      %c21_178 = arith.constant 21 : index
      %144 = vector.load %arg12[%c128_177, %c21_178] : memref<256x128xf32, #tpu.memory_space<vmem>>, vector<16x3xf32>
      tpu.vector_store %arg12[%c128_177, %c21_178], %134 {strides = array<i32>} : memref<256x128xf32, #tpu.memory_space<vmem>>, vector<16x3xf32>,
      %c128_179 = arith.constant 128 : index
      %c24_180 = arith.constant 24 : index
      %145 = vector.load %arg12[%c128_179, %c24_180] : memref<256x128xf32, #tpu.memory_space<vmem>>, vector<15x3xf32>
      tpu.vector_store %arg12[%c128_179, %c24_180], %136 {strides = array<i32>} : memref<256x128xf32, #tpu.memory_space<vmem>>, vector<15x3xf32>,
      %146 = arith.index_cast %arg22 : i32 to index
      %c10 = arith.constant 10 : index
      %c0_181 = arith.constant 0 : index
      %c0_182 = arith.constant 0 : index
      %147 = vector.load %arg1[%146, %c10, %c0_181, %c0_182] : memref<4x16x16x3xf32, #tpu.memory_space<vmem>>, vector<1x1x16x3xf32>
      %148 = vector.shape_cast %147 : vector<1x1x16x3xf32> to vector<16x3xf32>
      %149 = vector.extract_strided_slice %148 {offsets = [0, 0], sizes = [15, 3], strides = [1, 1]} : vector<16x3xf32> to vector<15x3xf32>
      %150 = vector.extract_strided_slice %148 {offsets = [1, 0], sizes = [15, 3], strides = [1, 1]} : vector<16x3xf32> to vector<15x3xf32>
      %c177 = arith.constant 177 : index
      %c0_183 = arith.constant 0 : index
      %151 = vector.load %arg12[%c177, %c0_183] : memref<256x128xf32, #tpu.memory_space<vmem>>, vector<15x3xf32>
      tpu.vector_store %arg12[%c177, %c0_183], %149 {strides = array<i32>} : memref<256x128xf32, #tpu.memory_space<vmem>>, vector<15x3xf32>,
      %c176 = arith.constant 176 : index
      %c3_184 = arith.constant 3 : index
      %152 = vector.load %arg12[%c176, %c3_184] : memref<256x128xf32, #tpu.memory_space<vmem>>, vector<16x3xf32>
      tpu.vector_store %arg12[%c176, %c3_184], %148 {strides = array<i32>} : memref<256x128xf32, #tpu.memory_space<vmem>>, vector<16x3xf32>,
      %c176_185 = arith.constant 176 : index
      %c6_186 = arith.constant 6 : index
      %153 = vector.load %arg12[%c176_185, %c6_186] : memref<256x128xf32, #tpu.memory_space<vmem>>, vector<15x3xf32>
      tpu.vector_store %arg12[%c176_185, %c6_186], %150 {strides = array<i32>} : memref<256x128xf32, #tpu.memory_space<vmem>>, vector<15x3xf32>,
      %c161_187 = arith.constant 161 : index
      %c9_188 = arith.constant 9 : index
      %154 = vector.load %arg12[%c161_187, %c9_188] : memref<256x128xf32, #tpu.memory_space<vmem>>, vector<15x3xf32>
      tpu.vector_store %arg12[%c161_187, %c9_188], %149 {strides = array<i32>} : memref<256x128xf32, #tpu.memory_space<vmem>>, vector<15x3xf32>,
      %c160_189 = arith.constant 160 : index
      %c12_190 = arith.constant 12 : index
      %155 = vector.load %arg12[%c160_189, %c12_190] : memref<256x128xf32, #tpu.memory_space<vmem>>, vector<16x3xf32>
      tpu.vector_store %arg12[%c160_189, %c12_190], %148 {strides = array<i32>} : memref<256x128xf32, #tpu.memory_space<vmem>>, vector<16x3xf32>,
      %c160_191 = arith.constant 160 : index
      %c15_192 = arith.constant 15 : index
      %156 = vector.load %arg12[%c160_191, %c15_192] : memref<256x128xf32, #tpu.memory_space<vmem>>, vector<15x3xf32>
      tpu.vector_store %arg12[%c160_191, %c15_192], %150 {strides = array<i32>} : memref<256x128xf32, #tpu.memory_space<vmem>>, vector<15x3xf32>,
      %c145_193 = arith.constant 145 : index
      %c18_194 = arith.constant 18 : index
      %157 = vector.load %arg12[%c145_193, %c18_194] : memref<256x128xf32, #tpu.memory_space<vmem>>, vector<15x3xf32>
      tpu.vector_store %arg12[%c145_193, %c18_194], %149 {strides = array<i32>} : memref<256x128xf32, #tpu.memory_space<vmem>>, vector<15x3xf32>,
      %c144_195 = arith.constant 144 : index
      %c21_196 = arith.constant 21 : index
      %158 = vector.load %arg12[%c144_195, %c21_196] : memref<256x128xf32, #tpu.memory_space<vmem>>, vector<16x3xf32>
      tpu.vector_store %arg12[%c144_195, %c21_196], %148 {strides = array<i32>} : memref<256x128xf32, #tpu.memory_space<vmem>>, vector<16x3xf32>,
      %c144_197 = arith.constant 144 : index
      %c24_198 = arith.constant 24 : index
      %159 = vector.load %arg12[%c144_197, %c24_198] : memref<256x128xf32, #tpu.memory_space<vmem>>, vector<15x3xf32>
      tpu.vector_store %arg12[%c144_197, %c24_198], %150 {strides = array<i32>} : memref<256x128xf32, #tpu.memory_space<vmem>>, vector<15x3xf32>,
      %160 = arith.index_cast %arg22 : i32 to index
      %c11 = arith.constant 11 : index
      %c0_199 = arith.constant 0 : index
      %c0_200 = arith.constant 0 : index
      %161 = vector.load %arg1[%160, %c11, %c0_199, %c0_200] : memref<4x16x16x3xf32, #tpu.memory_space<vmem>>, vector<1x1x16x3xf32>
      %162 = vector.shape_cast %161 : vector<1x1x16x3xf32> to vector<16x3xf32>
      %163 = vector.extract_strided_slice %162 {offsets = [0, 0], sizes = [15, 3], strides = [1, 1]} : vector<16x3xf32> to vector<15x3xf32>
      %164 = vector.extract_strided_slice %162 {offsets = [1, 0], sizes = [15, 3], strides = [1, 1]} : vector<16x3xf32> to vector<15x3xf32>
      %c193 = arith.constant 193 : index
      %c0_201 = arith.constant 0 : index
      %165 = vector.load %arg12[%c193, %c0_201] : memref<256x128xf32, #tpu.memory_space<vmem>>, vector<15x3xf32>
      tpu.vector_store %arg12[%c193, %c0_201], %163 {strides = array<i32>} : memref<256x128xf32, #tpu.memory_space<vmem>>, vector<15x3xf32>,
      %c192 = arith.constant 192 : index
      %c3_202 = arith.constant 3 : index
      %166 = vector.load %arg12[%c192, %c3_202] : memref<256x128xf32, #tpu.memory_space<vmem>>, vector<16x3xf32>
      tpu.vector_store %arg12[%c192, %c3_202], %162 {strides = array<i32>} : memref<256x128xf32, #tpu.memory_space<vmem>>, vector<16x3xf32>,
      %c192_203 = arith.constant 192 : index
      %c6_204 = arith.constant 6 : index
      %167 = vector.load %arg12[%c192_203, %c6_204] : memref<256x128xf32, #tpu.memory_space<vmem>>, vector<15x3xf32>
      tpu.vector_store %arg12[%c192_203, %c6_204], %164 {strides = array<i32>} : memref<256x128xf32, #tpu.memory_space<vmem>>, vector<15x3xf32>,
      %c177_205 = arith.constant 177 : index
      %c9_206 = arith.constant 9 : index
      %168 = vector.load %arg12[%c177_205, %c9_206] : memref<256x128xf32, #tpu.memory_space<vmem>>, vector<15x3xf32>
      tpu.vector_store %arg12[%c177_205, %c9_206], %163 {strides = array<i32>} : memref<256x128xf32, #tpu.memory_space<vmem>>, vector<15x3xf32>,
      %c176_207 = arith.constant 176 : index
      %c12_208 = arith.constant 12 : index
      %169 = vector.load %arg12[%c176_207, %c12_208] : memref<256x128xf32, #tpu.memory_space<vmem>>, vector<16x3xf32>
      tpu.vector_store %arg12[%c176_207, %c12_208], %162 {strides = array<i32>} : memref<256x128xf32, #tpu.memory_space<vmem>>, vector<16x3xf32>,
      %c176_209 = arith.constant 176 : index
      %c15_210 = arith.constant 15 : index
      %170 = vector.load %arg12[%c176_209, %c15_210] : memref<256x128xf32, #tpu.memory_space<vmem>>, vector<15x3xf32>
      tpu.vector_store %arg12[%c176_209, %c15_210], %164 {strides = array<i32>} : memref<256x128xf32, #tpu.memory_space<vmem>>, vector<15x3xf32>,
      %c161_211 = arith.constant 161 : index
      %c18_212 = arith.constant 18 : index
      %171 = vector.load %arg12[%c161_211, %c18_212] : memref<256x128xf32, #tpu.memory_space<vmem>>, vector<15x3xf32>
      tpu.vector_store %arg12[%c161_211, %c18_212], %163 {strides = array<i32>} : memref<256x128xf32, #tpu.memory_space<vmem>>, vector<15x3xf32>,
      %c160_213 = arith.constant 160 : index
      %c21_214 = arith.constant 21 : index
      %172 = vector.load %arg12[%c160_213, %c21_214] : memref<256x128xf32, #tpu.memory_space<vmem>>, vector<16x3xf32>
      tpu.vector_store %arg12[%c160_213, %c21_214], %162 {strides = array<i32>} : memref<256x128xf32, #tpu.memory_space<vmem>>, vector<16x3xf32>,
      %c160_215 = arith.constant 160 : index
      %c24_216 = arith.constant 24 : index
      %173 = vector.load %arg12[%c160_215, %c24_216] : memref<256x128xf32, #tpu.memory_space<vmem>>, vector<15x3xf32>
      tpu.vector_store %arg12[%c160_215, %c24_216], %164 {strides = array<i32>} : memref<256x128xf32, #tpu.memory_space<vmem>>, vector<15x3xf32>,
      %174 = arith.index_cast %arg22 : i32 to index
      %c12_217 = arith.constant 12 : index
      %c0_218 = arith.constant 0 : index
      %c0_219 = arith.constant 0 : index
      %175 = vector.load %arg1[%174, %c12_217, %c0_218, %c0_219] : memref<4x16x16x3xf32, #tpu.memory_space<vmem>>, vector<1x1x16x3xf32>
      %176 = vector.shape_cast %175 : vector<1x1x16x3xf32> to vector<16x3xf32>
      %177 = vector.extract_strided_slice %176 {offsets = [0, 0], sizes = [15, 3], strides = [1, 1]} : vector<16x3xf32> to vector<15x3xf32>
      %178 = vector.extract_strided_slice %176 {offsets = [1, 0], sizes = [15, 3], strides = [1, 1]} : vector<16x3xf32> to vector<15x3xf32>
      %c209 = arith.constant 209 : index
      %c0_220 = arith.constant 0 : index
      %179 = vector.load %arg12[%c209, %c0_220] : memref<256x128xf32, #tpu.memory_space<vmem>>, vector<15x3xf32>
      tpu.vector_store %arg12[%c209, %c0_220], %177 {strides = array<i32>} : memref<256x128xf32, #tpu.memory_space<vmem>>, vector<15x3xf32>,
      %c208 = arith.constant 208 : index
      %c3_221 = arith.constant 3 : index
      %180 = vector.load %arg12[%c208, %c3_221] : memref<256x128xf32, #tpu.memory_space<vmem>>, vector<16x3xf32>
      tpu.vector_store %arg12[%c208, %c3_221], %176 {strides = array<i32>} : memref<256x128xf32, #tpu.memory_space<vmem>>, vector<16x3xf32>,
      %c208_222 = arith.constant 208 : index
      %c6_223 = arith.constant 6 : index
      %181 = vector.load %arg12[%c208_222, %c6_223] : memref<256x128xf32, #tpu.memory_space<vmem>>, vector<15x3xf32>
      tpu.vector_store %arg12[%c208_222, %c6_223], %178 {strides = array<i32>} : memref<256x128xf32, #tpu.memory_space<vmem>>, vector<15x3xf32>,
      %c193_224 = arith.constant 193 : index
      %c9_225 = arith.constant 9 : index
      %182 = vector.load %arg12[%c193_224, %c9_225] : memref<256x128xf32, #tpu.memory_space<vmem>>, vector<15x3xf32>
      tpu.vector_store %arg12[%c193_224, %c9_225], %177 {strides = array<i32>} : memref<256x128xf32, #tpu.memory_space<vmem>>, vector<15x3xf32>,
      %c192_226 = arith.constant 192 : index
      %c12_227 = arith.constant 12 : index
      %183 = vector.load %arg12[%c192_226, %c12_227] : memref<256x128xf32, #tpu.memory_space<vmem>>, vector<16x3xf32>
      tpu.vector_store %arg12[%c192_226, %c12_227], %176 {strides = array<i32>} : memref<256x128xf32, #tpu.memory_space<vmem>>, vector<16x3xf32>,
      %c192_228 = arith.constant 192 : index
      %c15_229 = arith.constant 15 : index
      %184 = vector.load %arg12[%c192_228, %c15_229] : memref<256x128xf32, #tpu.memory_space<vmem>>, vector<15x3xf32>
      tpu.vector_store %arg12[%c192_228, %c15_229], %178 {strides = array<i32>} : memref<256x128xf32, #tpu.memory_space<vmem>>, vector<15x3xf32>,
      %c177_230 = arith.constant 177 : index
      %c18_231 = arith.constant 18 : index
      %185 = vector.load %arg12[%c177_230, %c18_231] : memref<256x128xf32, #tpu.memory_space<vmem>>, vector<15x3xf32>
      tpu.vector_store %arg12[%c177_230, %c18_231], %177 {strides = array<i32>} : memref<256x128xf32, #tpu.memory_space<vmem>>, vector<15x3xf32>,
      %c176_232 = arith.constant 176 : index
      %c21_233 = arith.constant 21 : index
      %186 = vector.load %arg12[%c176_232, %c21_233] : memref<256x128xf32, #tpu.memory_space<vmem>>, vector<16x3xf32>
      tpu.vector_store %arg12[%c176_232, %c21_233], %176 {strides = array<i32>} : memref<256x128xf32, #tpu.memory_space<vmem>>, vector<16x3xf32>,
      %c176_234 = arith.constant 176 : index
      %c24_235 = arith.constant 24 : index
      %187 = vector.load %arg12[%c176_234, %c24_235] : memref<256x128xf32, #tpu.memory_space<vmem>>, vector<15x3xf32>
      tpu.vector_store %arg12[%c176_234, %c24_235], %178 {strides = array<i32>} : memref<256x128xf32, #tpu.memory_space<vmem>>, vector<15x3xf32>,
      %188 = arith.index_cast %arg22 : i32 to index
      %c13 = arith.constant 13 : index
      %c0_236 = arith.constant 0 : index
      %c0_237 = arith.constant 0 : index
      %189 = vector.load %arg1[%188, %c13, %c0_236, %c0_237] : memref<4x16x16x3xf32, #tpu.memory_space<vmem>>, vector<1x1x16x3xf32>
      %190 = vector.shape_cast %189 : vector<1x1x16x3xf32> to vector<16x3xf32>
      %191 = vector.extract_strided_slice %190 {offsets = [0, 0], sizes = [15, 3], strides = [1, 1]} : vector<16x3xf32> to vector<15x3xf32>
      %192 = vector.extract_strided_slice %190 {offsets = [1, 0], sizes = [15, 3], strides = [1, 1]} : vector<16x3xf32> to vector<15x3xf32>
      %c225 = arith.constant 225 : index
      %c0_238 = arith.constant 0 : index
      %193 = vector.load %arg12[%c225, %c0_238] : memref<256x128xf32, #tpu.memory_space<vmem>>, vector<15x3xf32>
      tpu.vector_store %arg12[%c225, %c0_238], %191 {strides = array<i32>} : memref<256x128xf32, #tpu.memory_space<vmem>>, vector<15x3xf32>,
      %c224 = arith.constant 224 : index
      %c3_239 = arith.constant 3 : index
      %194 = vector.load %arg12[%c224, %c3_239] : memref<256x128xf32, #tpu.memory_space<vmem>>, vector<16x3xf32>
      tpu.vector_store %arg12[%c224, %c3_239], %190 {strides = array<i32>} : memref<256x128xf32, #tpu.memory_space<vmem>>, vector<16x3xf32>,
      %c224_240 = arith.constant 224 : index
      %c6_241 = arith.constant 6 : index
      %195 = vector.load %arg12[%c224_240, %c6_241] : memref<256x128xf32, #tpu.memory_space<vmem>>, vector<15x3xf32>
      tpu.vector_store %arg12[%c224_240, %c6_241], %192 {strides = array<i32>} : memref<256x128xf32, #tpu.memory_space<vmem>>, vector<15x3xf32>,
      %c209_242 = arith.constant 209 : index
      %c9_243 = arith.constant 9 : index
      %196 = vector.load %arg12[%c209_242, %c9_243] : memref<256x128xf32, #tpu.memory_space<vmem>>, vector<15x3xf32>
      tpu.vector_store %arg12[%c209_242, %c9_243], %191 {strides = array<i32>} : memref<256x128xf32, #tpu.memory_space<vmem>>, vector<15x3xf32>,
      %c208_244 = arith.constant 208 : index
      %c12_245 = arith.constant 12 : index
      %197 = vector.load %arg12[%c208_244, %c12_245] : memref<256x128xf32, #tpu.memory_space<vmem>>, vector<16x3xf32>
      tpu.vector_store %arg12[%c208_244, %c12_245], %190 {strides = array<i32>} : memref<256x128xf32, #tpu.memory_space<vmem>>, vector<16x3xf32>,
      %c208_246 = arith.constant 208 : index
      %c15_247 = arith.constant 15 : index
      %198 = vector.load %arg12[%c208_246, %c15_247] : memref<256x128xf32, #tpu.memory_space<vmem>>, vector<15x3xf32>
      tpu.vector_store %arg12[%c208_246, %c15_247], %192 {strides = array<i32>} : memref<256x128xf32, #tpu.memory_space<vmem>>, vector<15x3xf32>,
      %c193_248 = arith.constant 193 : index
      %c18_249 = arith.constant 18 : index
      %199 = vector.load %arg12[%c193_248, %c18_249] : memref<256x128xf32, #tpu.memory_space<vmem>>, vector<15x3xf32>
      tpu.vector_store %arg12[%c193_248, %c18_249], %191 {strides = array<i32>} : memref<256x128xf32, #tpu.memory_space<vmem>>, vector<15x3xf32>,
      %c192_250 = arith.constant 192 : index
      %c21_251 = arith.constant 21 : index
      %200 = vector.load %arg12[%c192_250, %c21_251] : memref<256x128xf32, #tpu.memory_space<vmem>>, vector<16x3xf32>
      tpu.vector_store %arg12[%c192_250, %c21_251], %190 {strides = array<i32>} : memref<256x128xf32, #tpu.memory_space<vmem>>, vector<16x3xf32>,
      %c192_252 = arith.constant 192 : index
      %c24_253 = arith.constant 24 : index
      %201 = vector.load %arg12[%c192_252, %c24_253] : memref<256x128xf32, #tpu.memory_space<vmem>>, vector<15x3xf32>
      tpu.vector_store %arg12[%c192_252, %c24_253], %192 {strides = array<i32>} : memref<256x128xf32, #tpu.memory_space<vmem>>, vector<15x3xf32>,
      %202 = arith.index_cast %arg22 : i32 to index
      %c14 = arith.constant 14 : index
      %c0_254 = arith.constant 0 : index
      %c0_255 = arith.constant 0 : index
      %203 = vector.load %arg1[%202, %c14, %c0_254, %c0_255] : memref<4x16x16x3xf32, #tpu.memory_space<vmem>>, vector<1x1x16x3xf32>
      %204 = vector.shape_cast %203 : vector<1x1x16x3xf32> to vector<16x3xf32>
      %205 = vector.extract_strided_slice %204 {offsets = [0, 0], sizes = [15, 3], strides = [1, 1]} : vector<16x3xf32> to vector<15x3xf32>
      %206 = vector.extract_strided_slice %204 {offsets = [1, 0], sizes = [15, 3], strides = [1, 1]} : vector<16x3xf32> to vector<15x3xf32>
      %c241 = arith.constant 241 : index
      %c0_256 = arith.constant 0 : index
      %207 = vector.load %arg12[%c241, %c0_256] : memref<256x128xf32, #tpu.memory_space<vmem>>, vector<15x3xf32>
      tpu.vector_store %arg12[%c241, %c0_256], %205 {strides = array<i32>} : memref<256x128xf32, #tpu.memory_space<vmem>>, vector<15x3xf32>,
      %c240 = arith.constant 240 : index
      %c3_257 = arith.constant 3 : index
      %208 = vector.load %arg12[%c240, %c3_257] : memref<256x128xf32, #tpu.memory_space<vmem>>, vector<16x3xf32>
      tpu.vector_store %arg12[%c240, %c3_257], %204 {strides = array<i32>} : memref<256x128xf32, #tpu.memory_space<vmem>>, vector<16x3xf32>,
      %c240_258 = arith.constant 240 : index
      %c6_259 = arith.constant 6 : index
      %209 = vector.load %arg12[%c240_258, %c6_259] : memref<256x128xf32, #tpu.memory_space<vmem>>, vector<15x3xf32>
      tpu.vector_store %arg12[%c240_258, %c6_259], %206 {strides = array<i32>} : memref<256x128xf32, #tpu.memory_space<vmem>>, vector<15x3xf32>,
      %c225_260 = arith.constant 225 : index
      %c9_261 = arith.constant 9 : index
      %210 = vector.load %arg12[%c225_260, %c9_261] : memref<256x128xf32, #tpu.memory_space<vmem>>, vector<15x3xf32>
      tpu.vector_store %arg12[%c225_260, %c9_261], %205 {strides = array<i32>} : memref<256x128xf32, #tpu.memory_space<vmem>>, vector<15x3xf32>,
      %c224_262 = arith.constant 224 : index
      %c12_263 = arith.constant 12 : index
      %211 = vector.load %arg12[%c224_262, %c12_263] : memref<256x128xf32, #tpu.memory_space<vmem>>, vector<16x3xf32>
      tpu.vector_store %arg12[%c224_262, %c12_263], %204 {strides = array<i32>} : memref<256x128xf32, #tpu.memory_space<vmem>>, vector<16x3xf32>,
      %c224_264 = arith.constant 224 : index
      %c15_265 = arith.constant 15 : index
      %212 = vector.load %arg12[%c224_264, %c15_265] : memref<256x128xf32, #tpu.memory_space<vmem>>, vector<15x3xf32>
      tpu.vector_store %arg12[%c224_264, %c15_265], %206 {strides = array<i32>} : memref<256x128xf32, #tpu.memory_space<vmem>>, vector<15x3xf32>,
      %c209_266 = arith.constant 209 : index
      %c18_267 = arith.constant 18 : index
      %213 = vector.load %arg12[%c209_266, %c18_267] : memref<256x128xf32, #tpu.memory_space<vmem>>, vector<15x3xf32>
      tpu.vector_store %arg12[%c209_266, %c18_267], %205 {strides = array<i32>} : memref<256x128xf32, #tpu.memory_space<vmem>>, vector<15x3xf32>,
      %c208_268 = arith.constant 208 : index
      %c21_269 = arith.constant 21 : index
      %214 = vector.load %arg12[%c208_268, %c21_269] : memref<256x128xf32, #tpu.memory_space<vmem>>, vector<16x3xf32>
      tpu.vector_store %arg12[%c208_268, %c21_269], %204 {strides = array<i32>} : memref<256x128xf32, #tpu.memory_space<vmem>>, vector<16x3xf32>,
      %c208_270 = arith.constant 208 : index
      %c24_271 = arith.constant 24 : index
      %215 = vector.load %arg12[%c208_270, %c24_271] : memref<256x128xf32, #tpu.memory_space<vmem>>, vector<15x3xf32>
      tpu.vector_store %arg12[%c208_270, %c24_271], %206 {strides = array<i32>} : memref<256x128xf32, #tpu.memory_space<vmem>>, vector<15x3xf32>,
      %216 = arith.index_cast %arg22 : i32 to index
      %c15_272 = arith.constant 15 : index
      %c0_273 = arith.constant 0 : index
      %c0_274 = arith.constant 0 : index
      %217 = vector.load %arg1[%216, %c15_272, %c0_273, %c0_274] : memref<4x16x16x3xf32, #tpu.memory_space<vmem>>, vector<1x1x16x3xf32>
      %218 = vector.shape_cast %217 : vector<1x1x16x3xf32> to vector<16x3xf32>
      %219 = vector.extract_strided_slice %218 {offsets = [0, 0], sizes = [15, 3], strides = [1, 1]} : vector<16x3xf32> to vector<15x3xf32>
      %220 = vector.extract_strided_slice %218 {offsets = [1, 0], sizes = [15, 3], strides = [1, 1]} : vector<16x3xf32> to vector<15x3xf32>
      %c241_275 = arith.constant 241 : index
      %c9_276 = arith.constant 9 : index
      %221 = vector.load %arg12[%c241_275, %c9_276] : memref<256x128xf32, #tpu.memory_space<vmem>>, vector<15x3xf32>
      tpu.vector_store %arg12[%c241_275, %c9_276], %219 {strides = array<i32>} : memref<256x128xf32, #tpu.memory_space<vmem>>, vector<15x3xf32>,
      %c240_277 = arith.constant 240 : index
      %c12_278 = arith.constant 12 : index
      %222 = vector.load %arg12[%c240_277, %c12_278] : memref<256x128xf32, #tpu.memory_space<vmem>>, vector<16x3xf32>
      tpu.vector_store %arg12[%c240_277, %c12_278], %218 {strides = array<i32>} : memref<256x128xf32, #tpu.memory_space<vmem>>, vector<16x3xf32>,
      %c240_279 = arith.constant 240 : index
      %c15_280 = arith.constant 15 : index
      %223 = vector.load %arg12[%c240_279, %c15_280] : memref<256x128xf32, #tpu.memory_space<vmem>>, vector<15x3xf32>
      tpu.vector_store %arg12[%c240_279, %c15_280], %220 {strides = array<i32>} : memref<256x128xf32, #tpu.memory_space<vmem>>, vector<15x3xf32>,
      %c225_281 = arith.constant 225 : index
      %c18_282 = arith.constant 18 : index
      %224 = vector.load %arg12[%c225_281, %c18_282] : memref<256x128xf32, #tpu.memory_space<vmem>>, vector<15x3xf32>
      tpu.vector_store %arg12[%c225_281, %c18_282], %219 {strides = array<i32>} : memref<256x128xf32, #tpu.memory_space<vmem>>, vector<15x3xf32>,
      %c224_283 = arith.constant 224 : index
      %c21_284 = arith.constant 21 : index
      %225 = vector.load %arg12[%c224_283, %c21_284] : memref<256x128xf32, #tpu.memory_space<vmem>>, vector<16x3xf32>
      tpu.vector_store %arg12[%c224_283, %c21_284], %218 {strides = array<i32>} : memref<256x128xf32, #tpu.memory_space<vmem>>, vector<16x3xf32>,
      %c224_285 = arith.constant 224 : index
      %c24_286 = arith.constant 24 : index
      %226 = vector.load %arg12[%c224_285, %c24_286] : memref<256x128xf32, #tpu.memory_space<vmem>>, vector<15x3xf32>
      tpu.vector_store %arg12[%c224_285, %c24_286], %220 {strides = array<i32>} : memref<256x128xf32, #tpu.memory_space<vmem>>, vector<15x3xf32>,
      %c0_287 = arith.constant 0 : index
      %c0_288 = arith.constant 0 : index
      %227 = vector.load %arg12[%c0_287, %c0_288] : memref<256x128xf32, #tpu.memory_space<vmem>>, vector<256x128xf32>
      %228 = arith.truncf %227 : vector<256x128xf32> to vector<256x128xbf16>
      %c0_289 = arith.constant 0 : index
      %c0_290 = arith.constant 0 : index
      %229 = vector.load %arg2[%c0_289, %c0_290] : memref<128x16xbf16, #tpu.memory_space<vmem>>, vector<128x16xbf16>
      %cst_291 = arith.constant dense<0.000000e+00> : vector<256x16xf32>
      %230 = tpu.matmul %228, %229, %cst_291 {dimension_numbers = #tpu.dot_dimension_numbers<[1], [0], [0], [1], [0, 0, 1, 1], [], []>} : vector<256x128xbf16>, vector<128x16xbf16>, vector<256x16xf32> -> vector<256x16xf32>
      %c0_292 = arith.constant 0 : index
      %c0_293 = arith.constant 0 : index
      %231 = vector.load %arg13[%c0_292, %c0_293] : memref<256x16xf32, #tpu.memory_space<vmem>>, vector<256x16xf32>
      tpu.vector_store %arg13[%c0_292, %c0_293], %230 {strides = array<i32>} : memref<256x16xf32, #tpu.memory_space<vmem>>, vector<256x16xf32>,
      %c0_294 = arith.constant 0 : index
      %c0_295 = arith.constant 0 : index
      %232 = vector.load %arg3[%c0_294, %c0_295] : memref<1x16xf32, #tpu.memory_space<vmem>>, vector<1x16xf32>
      %c0_296 = arith.constant 0 : index
      %c0_297 = arith.constant 0 : index
      %233 = tpu.strided_load %arg13[%c0_296, %c0_297] {strides = array<i32: 2, 1>} : memref<256x16xf32, #tpu.memory_space<vmem>>, vector<8x16xf32>
      %c1_298 = arith.constant 1 : index
      %c0_299 = arith.constant 0 : index
      %234 = tpu.strided_load %arg13[%c1_298, %c0_299] {strides = array<i32: 2, 1>} : memref<256x16xf32, #tpu.memory_space<vmem>>, vector<8x16xf32>
      %c16_300 = arith.constant 16 : index
      %c0_301 = arith.constant 0 : index
      %235 = tpu.strided_load %arg13[%c16_300, %c0_301] {strides = array<i32: 2, 1>} : memref<256x16xf32, #tpu.memory_space<vmem>>, vector<8x16xf32>
      %c17_302 = arith.constant 17 : index
      %c0_303 = arith.constant 0 : index
      %236 = tpu.strided_load %arg13[%c17_302, %c0_303] {strides = array<i32: 2, 1>} : memref<256x16xf32, #tpu.memory_space<vmem>>, vector<8x16xf32>
      %237 = arith.maximumf %233, %234 : vector<8x16xf32>
      %238 = arith.maximumf %235, %236 : vector<8x16xf32>
      %239 = arith.maximumf %237, %238 : vector<8x16xf32>
      %240 = vector.broadcast %232 : vector<1x16xf32> to vector<8x16xf32>
      %241 = arith.addf %239, %240 : vector<8x16xf32>
      %cst_304 = arith.constant 0.000000e+00 : f32
      %242 = vector.broadcast %cst_304 : f32 to vector<8x16xf32>
      %243 = arith.cmpf ogt, %241, %242 : vector<8x16xf32>
      %cst_305 = arith.constant 1.000000e-01 : f32
      %244 = vector.broadcast %cst_305 : f32 to vector<8x16xf32>
      %245 = arith.mulf %244, %241 : vector<8x16xf32>
      %246 = arith.select %243, %241, %245 : vector<8x16xi1>, vector<8x16xf32>
      %c0_306 = arith.constant 0 : index
      %c0_307 = arith.constant 0 : index
      %c0_308 = arith.constant 0 : index
      %247 = vector.load %arg14[%c0_306, %c0_307, %c0_308] : memref<8x8x16xf32, #tpu.memory_space<vmem>>, vector<1x8x16xf32>
      %248 = vector.shape_cast %247 : vector<1x8x16xf32> to vector<8x16xf32>
      %249 = vector.shape_cast %246 : vector<8x16xf32> to vector<1x8x16xf32>
      tpu.vector_store %arg14[%c0_306, %c0_307, %c0_308], %249 {strides = array<i32>} : memref<8x8x16xf32, #tpu.memory_space<vmem>>, vector<1x8x16xf32>,
      %c32_309 = arith.constant 32 : index
      %c0_310 = arith.constant 0 : index
      %250 = tpu.strided_load %arg13[%c32_309, %c0_310] {strides = array<i32: 2, 1>} : memref<256x16xf32, #tpu.memory_space<vmem>>, vector<8x16xf32>
      %c33_311 = arith.constant 33 : index
      %c0_312 = arith.constant 0 : index
      %251 = tpu.strided_load %arg13[%c33_311, %c0_312] {strides = array<i32: 2, 1>} : memref<256x16xf32, #tpu.memory_space<vmem>>, vector<8x16xf32>
      %c48_313 = arith.constant 48 : index
      %c0_314 = arith.constant 0 : index
      %252 = tpu.strided_load %arg13[%c48_313, %c0_314] {strides = array<i32: 2, 1>} : memref<256x16xf32, #tpu.memory_space<vmem>>, vector<8x16xf32>
      %c49_315 = arith.constant 49 : index
      %c0_316 = arith.constant 0 : index
      %253 = tpu.strided_load %arg13[%c49_315, %c0_316] {strides = array<i32: 2, 1>} : memref<256x16xf32, #tpu.memory_space<vmem>>, vector<8x16xf32>
      %254 = arith.maximumf %250, %251 : vector<8x16xf32>
      %255 = arith.maximumf %252, %253 : vector<8x16xf32>
      %256 = arith.maximumf %254, %255 : vector<8x16xf32>
      %257 = vector.broadcast %232 : vector<1x16xf32> to vector<8x16xf32>
      %258 = arith.addf %256, %257 : vector<8x16xf32>
      %cst_317 = arith.constant 0.000000e+00 : f32
      %259 = vector.broadcast %cst_317 : f32 to vector<8x16xf32>
      %260 = arith.cmpf ogt, %258, %259 : vector<8x16xf32>
      %cst_318 = arith.constant 1.000000e-01 : f32
      %261 = vector.broadcast %cst_318 : f32 to vector<8x16xf32>
      %262 = arith.mulf %261, %258 : vector<8x16xf32>
      %263 = arith.select %260, %258, %262 : vector<8x16xi1>, vector<8x16xf32>
      %c1_319 = arith.constant 1 : index
      %c0_320 = arith.constant 0 : index
      %c0_321 = arith.constant 0 : index
      %264 = vector.load %arg14[%c1_319, %c0_320, %c0_321] : memref<8x8x16xf32, #tpu.memory_space<vmem>>, vector<1x8x16xf32>
      %265 = vector.shape_cast %264 : vector<1x8x16xf32> to vector<8x16xf32>
      %266 = vector.shape_cast %263 : vector<8x16xf32> to vector<1x8x16xf32>
      tpu.vector_store %arg14[%c1_319, %c0_320, %c0_321], %266 {strides = array<i32>} : memref<8x8x16xf32, #tpu.memory_space<vmem>>, vector<1x8x16xf32>,
      %c64_322 = arith.constant 64 : index
      %c0_323 = arith.constant 0 : index
      %267 = tpu.strided_load %arg13[%c64_322, %c0_323] {strides = array<i32: 2, 1>} : memref<256x16xf32, #tpu.memory_space<vmem>>, vector<8x16xf32>
      %c65_324 = arith.constant 65 : index
      %c0_325 = arith.constant 0 : index
      %268 = tpu.strided_load %arg13[%c65_324, %c0_325] {strides = array<i32: 2, 1>} : memref<256x16xf32, #tpu.memory_space<vmem>>, vector<8x16xf32>
      %c80_326 = arith.constant 80 : index
      %c0_327 = arith.constant 0 : index
      %269 = tpu.strided_load %arg13[%c80_326, %c0_327] {strides = array<i32: 2, 1>} : memref<256x16xf32, #tpu.memory_space<vmem>>, vector<8x16xf32>
      %c81_328 = arith.constant 81 : index
      %c0_329 = arith.constant 0 : index
      %270 = tpu.strided_load %arg13[%c81_328, %c0_329] {strides = array<i32: 2, 1>} : memref<256x16xf32, #tpu.memory_space<vmem>>, vector<8x16xf32>
      %271 = arith.maximumf %267, %268 : vector<8x16xf32>
      %272 = arith.maximumf %269, %270 : vector<8x16xf32>
      %273 = arith.maximumf %271, %272 : vector<8x16xf32>
      %274 = vector.broadcast %232 : vector<1x16xf32> to vector<8x16xf32>
      %275 = arith.addf %273, %274 : vector<8x16xf32>
      %cst_330 = arith.constant 0.000000e+00 : f32
      %276 = vector.broadcast %cst_330 : f32 to vector<8x16xf32>
      %277 = arith.cmpf ogt, %275, %276 : vector<8x16xf32>
      %cst_331 = arith.constant 1.000000e-01 : f32
      %278 = vector.broadcast %cst_331 : f32 to vector<8x16xf32>
      %279 = arith.mulf %278, %275 : vector<8x16xf32>
      %280 = arith.select %277, %275, %279 : vector<8x16xi1>, vector<8x16xf32>
      %c2_332 = arith.constant 2 : index
      %c0_333 = arith.constant 0 : index
      %c0_334 = arith.constant 0 : index
      %281 = vector.load %arg14[%c2_332, %c0_333, %c0_334] : memref<8x8x16xf32, #tpu.memory_space<vmem>>, vector<1x8x16xf32>
      %282 = vector.shape_cast %281 : vector<1x8x16xf32> to vector<8x16xf32>
      %283 = vector.shape_cast %280 : vector<8x16xf32> to vector<1x8x16xf32>
      tpu.vector_store %arg14[%c2_332, %c0_333, %c0_334], %283 {strides = array<i32>} : memref<8x8x16xf32, #tpu.memory_space<vmem>>, vector<1x8x16xf32>,
      %c96_335 = arith.constant 96 : index
      %c0_336 = arith.constant 0 : index
      %284 = tpu.strided_load %arg13[%c96_335, %c0_336] {strides = array<i32: 2, 1>} : memref<256x16xf32, #tpu.memory_space<vmem>>, vector<8x16xf32>
      %c97_337 = arith.constant 97 : index
      %c0_338 = arith.constant 0 : index
      %285 = tpu.strided_load %arg13[%c97_337, %c0_338] {strides = array<i32: 2, 1>} : memref<256x16xf32, #tpu.memory_space<vmem>>, vector<8x16xf32>
      %c112_339 = arith.constant 112 : index
      %c0_340 = arith.constant 0 : index
      %286 = tpu.strided_load %arg13[%c112_339, %c0_340] {strides = array<i32: 2, 1>} : memref<256x16xf32, #tpu.memory_space<vmem>>, vector<8x16xf32>
      %c113_341 = arith.constant 113 : index
      %c0_342 = arith.constant 0 : index
      %287 = tpu.strided_load %arg13[%c113_341, %c0_342] {strides = array<i32: 2, 1>} : memref<256x16xf32, #tpu.memory_space<vmem>>, vector<8x16xf32>
      %288 = arith.maximumf %284, %285 : vector<8x16xf32>
      %289 = arith.maximumf %286, %287 : vector<8x16xf32>
      %290 = arith.maximumf %288, %289 : vector<8x16xf32>
      %291 = vector.broadcast %232 : vector<1x16xf32> to vector<8x16xf32>
      %292 = arith.addf %290, %291 : vector<8x16xf32>
      %cst_343 = arith.constant 0.000000e+00 : f32
      %293 = vector.broadcast %cst_343 : f32 to vector<8x16xf32>
      %294 = arith.cmpf ogt, %292, %293 : vector<8x16xf32>
      %cst_344 = arith.constant 1.000000e-01 : f32
      %295 = vector.broadcast %cst_344 : f32 to vector<8x16xf32>
      %296 = arith.mulf %295, %292 : vector<8x16xf32>
      %297 = arith.select %294, %292, %296 : vector<8x16xi1>, vector<8x16xf32>
      %c3_345 = arith.constant 3 : index
      %c0_346 = arith.constant 0 : index
      %c0_347 = arith.constant 0 : index
      %298 = vector.load %arg14[%c3_345, %c0_346, %c0_347] : memref<8x8x16xf32, #tpu.memory_space<vmem>>, vector<1x8x16xf32>
      %299 = vector.shape_cast %298 : vector<1x8x16xf32> to vector<8x16xf32>
      %300 = vector.shape_cast %297 : vector<8x16xf32> to vector<1x8x16xf32>
      tpu.vector_store %arg14[%c3_345, %c0_346, %c0_347], %300 {strides = array<i32>} : memref<8x8x16xf32, #tpu.memory_space<vmem>>, vector<1x8x16xf32>,
      %c128_348 = arith.constant 128 : index
      %c0_349 = arith.constant 0 : index
      %301 = tpu.strided_load %arg13[%c128_348, %c0_349] {strides = array<i32: 2, 1>} : memref<256x16xf32, #tpu.memory_space<vmem>>, vector<8x16xf32>
      %c129_350 = arith.constant 129 : index
      %c0_351 = arith.constant 0 : index
      %302 = tpu.strided_load %arg13[%c129_350, %c0_351] {strides = array<i32: 2, 1>} : memref<256x16xf32, #tpu.memory_space<vmem>>, vector<8x16xf32>
      %c144_352 = arith.constant 144 : index
      %c0_353 = arith.constant 0 : index
      %303 = tpu.strided_load %arg13[%c144_352, %c0_353] {strides = array<i32: 2, 1>} : memref<256x16xf32, #tpu.memory_space<vmem>>, vector<8x16xf32>
      %c145_354 = arith.constant 145 : index
      %c0_355 = arith.constant 0 : index
      %304 = tpu.strided_load %arg13[%c145_354, %c0_355] {strides = array<i32: 2, 1>} : memref<256x16xf32, #tpu.memory_space<vmem>>, vector<8x16xf32>
      %305 = arith.maximumf %301, %302 : vector<8x16xf32>
      %306 = arith.maximumf %303, %304 : vector<8x16xf32>
      %307 = arith.maximumf %305, %306 : vector<8x16xf32>
      %308 = vector.broadcast %232 : vector<1x16xf32> to vector<8x16xf32>
      %309 = arith.addf %307, %308 : vector<8x16xf32>
      %cst_356 = arith.constant 0.000000e+00 : f32
      %310 = vector.broadcast %cst_356 : f32 to vector<8x16xf32>
      %311 = arith.cmpf ogt, %309, %310 : vector<8x16xf32>
      %cst_357 = arith.constant 1.000000e-01 : f32
      %312 = vector.broadcast %cst_357 : f32 to vector<8x16xf32>
      %313 = arith.mulf %312, %309 : vector<8x16xf32>
      %314 = arith.select %311, %309, %313 : vector<8x16xi1>, vector<8x16xf32>
      %c4_358 = arith.constant 4 : index
      %c0_359 = arith.constant 0 : index
      %c0_360 = arith.constant 0 : index
      %315 = vector.load %arg14[%c4_358, %c0_359, %c0_360] : memref<8x8x16xf32, #tpu.memory_space<vmem>>, vector<1x8x16xf32>
      %316 = vector.shape_cast %315 : vector<1x8x16xf32> to vector<8x16xf32>
      %317 = vector.shape_cast %314 : vector<8x16xf32> to vector<1x8x16xf32>
      tpu.vector_store %arg14[%c4_358, %c0_359, %c0_360], %317 {strides = array<i32>} : memref<8x8x16xf32, #tpu.memory_space<vmem>>, vector<1x8x16xf32>,
      %c160_361 = arith.constant 160 : index
      %c0_362 = arith.constant 0 : index
      %318 = tpu.strided_load %arg13[%c160_361, %c0_362] {strides = array<i32: 2, 1>} : memref<256x16xf32, #tpu.memory_space<vmem>>, vector<8x16xf32>
      %c161_363 = arith.constant 161 : index
      %c0_364 = arith.constant 0 : index
      %319 = tpu.strided_load %arg13[%c161_363, %c0_364] {strides = array<i32: 2, 1>} : memref<256x16xf32, #tpu.memory_space<vmem>>, vector<8x16xf32>
      %c176_365 = arith.constant 176 : index
      %c0_366 = arith.constant 0 : index
      %320 = tpu.strided_load %arg13[%c176_365, %c0_366] {strides = array<i32: 2, 1>} : memref<256x16xf32, #tpu.memory_space<vmem>>, vector<8x16xf32>
      %c177_367 = arith.constant 177 : index
      %c0_368 = arith.constant 0 : index
      %321 = tpu.strided_load %arg13[%c177_367, %c0_368] {strides = array<i32: 2, 1>} : memref<256x16xf32, #tpu.memory_space<vmem>>, vector<8x16xf32>
      %322 = arith.maximumf %318, %319 : vector<8x16xf32>
      %323 = arith.maximumf %320, %321 : vector<8x16xf32>
      %324 = arith.maximumf %322, %323 : vector<8x16xf32>
      %325 = vector.broadcast %232 : vector<1x16xf32> to vector<8x16xf32>
      %326 = arith.addf %324, %325 : vector<8x16xf32>
      %cst_369 = arith.constant 0.000000e+00 : f32
      %327 = vector.broadcast %cst_369 : f32 to vector<8x16xf32>
      %328 = arith.cmpf ogt, %326, %327 : vector<8x16xf32>
      %cst_370 = arith.constant 1.000000e-01 : f32
      %329 = vector.broadcast %cst_370 : f32 to vector<8x16xf32>
      %330 = arith.mulf %329, %326 : vector<8x16xf32>
      %331 = arith.select %328, %326, %330 : vector<8x16xi1>, vector<8x16xf32>
      %c5_371 = arith.constant 5 : index
      %c0_372 = arith.constant 0 : index
      %c0_373 = arith.constant 0 : index
      %332 = vector.load %arg14[%c5_371, %c0_372, %c0_373] : memref<8x8x16xf32, #tpu.memory_space<vmem>>, vector<1x8x16xf32>
      %333 = vector.shape_cast %332 : vector<1x8x16xf32> to vector<8x16xf32>
      %334 = vector.shape_cast %331 : vector<8x16xf32> to vector<1x8x16xf32>
      tpu.vector_store %arg14[%c5_371, %c0_372, %c0_373], %334 {strides = array<i32>} : memref<8x8x16xf32, #tpu.memory_space<vmem>>, vector<1x8x16xf32>,
      %c192_374 = arith.constant 192 : index
      %c0_375 = arith.constant 0 : index
      %335 = tpu.strided_load %arg13[%c192_374, %c0_375] {strides = array<i32: 2, 1>} : memref<256x16xf32, #tpu.memory_space<vmem>>, vector<8x16xf32>
      %c193_376 = arith.constant 193 : index
      %c0_377 = arith.constant 0 : index
      %336 = tpu.strided_load %arg13[%c193_376, %c0_377] {strides = array<i32: 2, 1>} : memref<256x16xf32, #tpu.memory_space<vmem>>, vector<8x16xf32>
      %c208_378 = arith.constant 208 : index
      %c0_379 = arith.constant 0 : index
      %337 = tpu.strided_load %arg13[%c208_378, %c0_379] {strides = array<i32: 2, 1>} : memref<256x16xf32, #tpu.memory_space<vmem>>, vector<8x16xf32>
      %c209_380 = arith.constant 209 : index
      %c0_381 = arith.constant 0 : index
      %338 = tpu.strided_load %arg13[%c209_380, %c0_381] {strides = array<i32: 2, 1>} : memref<256x16xf32, #tpu.memory_space<vmem>>, vector<8x16xf32>
      %339 = arith.maximumf %335, %336 : vector<8x16xf32>
      %340 = arith.maximumf %337, %338 : vector<8x16xf32>
      %341 = arith.maximumf %339, %340 : vector<8x16xf32>
      %342 = vector.broadcast %232 : vector<1x16xf32> to vector<8x16xf32>
      %343 = arith.addf %341, %342 : vector<8x16xf32>
      %cst_382 = arith.constant 0.000000e+00 : f32
      %344 = vector.broadcast %cst_382 : f32 to vector<8x16xf32>
      %345 = arith.cmpf ogt, %343, %344 : vector<8x16xf32>
      %cst_383 = arith.constant 1.000000e-01 : f32
      %346 = vector.broadcast %cst_383 : f32 to vector<8x16xf32>
      %347 = arith.mulf %346, %343 : vector<8x16xf32>
      %348 = arith.select %345, %343, %347 : vector<8x16xi1>, vector<8x16xf32>
      %c6_384 = arith.constant 6 : index
      %c0_385 = arith.constant 0 : index
      %c0_386 = arith.constant 0 : index
      %349 = vector.load %arg14[%c6_384, %c0_385, %c0_386] : memref<8x8x16xf32, #tpu.memory_space<vmem>>, vector<1x8x16xf32>
      %350 = vector.shape_cast %349 : vector<1x8x16xf32> to vector<8x16xf32>
      %351 = vector.shape_cast %348 : vector<8x16xf32> to vector<1x8x16xf32>
      tpu.vector_store %arg14[%c6_384, %c0_385, %c0_386], %351 {strides = array<i32>} : memref<8x8x16xf32, #tpu.memory_space<vmem>>, vector<1x8x16xf32>,
      %c224_387 = arith.constant 224 : index
      %c0_388 = arith.constant 0 : index
      %352 = tpu.strided_load %arg13[%c224_387, %c0_388] {strides = array<i32: 2, 1>} : memref<256x16xf32, #tpu.memory_space<vmem>>, vector<8x16xf32>
      %c225_389 = arith.constant 225 : index
      %c0_390 = arith.constant 0 : index
      %353 = tpu.strided_load %arg13[%c225_389, %c0_390] {strides = array<i32: 2, 1>} : memref<256x16xf32, #tpu.memory_space<vmem>>, vector<8x16xf32>
      %c240_391 = arith.constant 240 : index
      %c0_392 = arith.constant 0 : index
      %354 = tpu.strided_load %arg13[%c240_391, %c0_392] {strides = array<i32: 2, 1>} : memref<256x16xf32, #tpu.memory_space<vmem>>, vector<8x16xf32>
      %c241_393 = arith.constant 241 : index
      %c0_394 = arith.constant 0 : index
      %355 = tpu.strided_load %arg13[%c241_393, %c0_394] {strides = array<i32: 2, 1>} : memref<256x16xf32, #tpu.memory_space<vmem>>, vector<8x16xf32>
      %356 = arith.maximumf %352, %353 : vector<8x16xf32>
      %357 = arith.maximumf %354, %355 : vector<8x16xf32>
      %358 = arith.maximumf %356, %357 : vector<8x16xf32>
      %359 = vector.broadcast %232 : vector<1x16xf32> to vector<8x16xf32>
      %360 = arith.addf %358, %359 : vector<8x16xf32>
      %cst_395 = arith.constant 0.000000e+00 : f32
      %361 = vector.broadcast %cst_395 : f32 to vector<8x16xf32>
      %362 = arith.cmpf ogt, %360, %361 : vector<8x16xf32>
      %cst_396 = arith.constant 1.000000e-01 : f32
      %363 = vector.broadcast %cst_396 : f32 to vector<8x16xf32>
      %364 = arith.mulf %363, %360 : vector<8x16xf32>
      %365 = arith.select %362, %360, %364 : vector<8x16xi1>, vector<8x16xf32>
      %c7_397 = arith.constant 7 : index
      %c0_398 = arith.constant 0 : index
      %c0_399 = arith.constant 0 : index
      %366 = vector.load %arg14[%c7_397, %c0_398, %c0_399] : memref<8x8x16xf32, #tpu.memory_space<vmem>>, vector<1x8x16xf32>
      %367 = vector.shape_cast %366 : vector<1x8x16xf32> to vector<8x16xf32>
      %368 = vector.shape_cast %365 : vector<8x16xf32> to vector<1x8x16xf32>
      tpu.vector_store %arg14[%c7_397, %c0_398, %c0_399], %368 {strides = array<i32>} : memref<8x8x16xf32, #tpu.memory_space<vmem>>, vector<1x8x16xf32>,
      %c0_400 = arith.constant 0 : index
      %c0_401 = arith.constant 0 : index
      %c0_402 = arith.constant 0 : index
      %369 = vector.load %arg14[%c0_400, %c0_401, %c0_402] : memref<8x8x16xf32, #tpu.memory_space<vmem>>, vector<1x8x16xf32>
      %370 = vector.shape_cast %369 : vector<1x8x16xf32> to vector<8x16xf32>
      %371 = vector.extract_strided_slice %370 {offsets = [0, 0], sizes = [7, 16], strides = [1, 1]} : vector<8x16xf32> to vector<7x16xf32>
      %372 = vector.extract_strided_slice %370 {offsets = [1, 0], sizes = [7, 16], strides = [1, 1]} : vector<8x16xf32> to vector<7x16xf32>
      %c9_403 = arith.constant 9 : index
      %c0_404 = arith.constant 0 : index
      %373 = vector.load %arg15[%c9_403, %c0_404] : memref<64x256xf32, #tpu.memory_space<vmem>>, vector<7x16xf32>
      tpu.vector_store %arg15[%c9_403, %c0_404], %371 {strides = array<i32>} : memref<64x256xf32, #tpu.memory_space<vmem>>, vector<7x16xf32>,
      %c8_405 = arith.constant 8 : index
      %c16_406 = arith.constant 16 : index
      %374 = vector.load %arg15[%c8_405, %c16_406] : memref<64x256xf32, #tpu.memory_space<vmem>>, vector<8x16xf32>
      tpu.vector_store %arg15[%c8_405, %c16_406], %370 {strides = array<i32>} : memref<64x256xf32, #tpu.memory_space<vmem>>, vector<8x16xf32>,
      %c8_407 = arith.constant 8 : index
      %c32_408 = arith.constant 32 : index
      %375 = vector.load %arg15[%c8_407, %c32_408] : memref<64x256xf32, #tpu.memory_space<vmem>>, vector<7x16xf32>
      tpu.vector_store %arg15[%c8_407, %c32_408], %372 {strides = array<i32>} : memref<64x256xf32, #tpu.memory_space<vmem>>, vector<7x16xf32>,
      %c1_409 = arith.constant 1 : index
      %c48_410 = arith.constant 48 : index
      %376 = vector.load %arg15[%c1_409, %c48_410] : memref<64x256xf32, #tpu.memory_space<vmem>>, vector<7x16xf32>
      tpu.vector_store %arg15[%c1_409, %c48_410], %371 {strides = array<i32>} : memref<64x256xf32, #tpu.memory_space<vmem>>, vector<7x16xf32>,
      %c0_411 = arith.constant 0 : index
      %c64_412 = arith.constant 64 : index
      %377 = vector.load %arg15[%c0_411, %c64_412] : memref<64x256xf32, #tpu.memory_space<vmem>>, vector<8x16xf32>
      tpu.vector_store %arg15[%c0_411, %c64_412], %370 {strides = array<i32>} : memref<64x256xf32, #tpu.memory_space<vmem>>, vector<8x16xf32>,
      %c0_413 = arith.constant 0 : index
      %c80_414 = arith.constant 80 : index
      %378 = vector.load %arg15[%c0_413, %c80_414] : memref<64x256xf32, #tpu.memory_space<vmem>>, vector<7x16xf32>
      tpu.vector_store %arg15[%c0_413, %c80_414], %372 {strides = array<i32>} : memref<64x256xf32, #tpu.memory_space<vmem>>, vector<7x16xf32>,
      %c1_415 = arith.constant 1 : index
      %c0_416 = arith.constant 0 : index
      %c0_417 = arith.constant 0 : index
      %379 = vector.load %arg14[%c1_415, %c0_416, %c0_417] : memref<8x8x16xf32, #tpu.memory_space<vmem>>, vector<1x8x16xf32>
      %380 = vector.shape_cast %379 : vector<1x8x16xf32> to vector<8x16xf32>
      %381 = vector.extract_strided_slice %380 {offsets = [0, 0], sizes = [7, 16], strides = [1, 1]} : vector<8x16xf32> to vector<7x16xf32>
      %382 = vector.extract_strided_slice %380 {offsets = [1, 0], sizes = [7, 16], strides = [1, 1]} : vector<8x16xf32> to vector<7x16xf32>
      %c17_418 = arith.constant 17 : index
      %c0_419 = arith.constant 0 : index
      %383 = vector.load %arg15[%c17_418, %c0_419] : memref<64x256xf32, #tpu.memory_space<vmem>>, vector<7x16xf32>
      tpu.vector_store %arg15[%c17_418, %c0_419], %381 {strides = array<i32>} : memref<64x256xf32, #tpu.memory_space<vmem>>, vector<7x16xf32>,
      %c16_420 = arith.constant 16 : index
      %c16_421 = arith.constant 16 : index
      %384 = vector.load %arg15[%c16_420, %c16_421] : memref<64x256xf32, #tpu.memory_space<vmem>>, vector<8x16xf32>
      tpu.vector_store %arg15[%c16_420, %c16_421], %380 {strides = array<i32>} : memref<64x256xf32, #tpu.memory_space<vmem>>, vector<8x16xf32>,
      %c16_422 = arith.constant 16 : index
      %c32_423 = arith.constant 32 : index
      %385 = vector.load %arg15[%c16_422, %c32_423] : memref<64x256xf32, #tpu.memory_space<vmem>>, vector<7x16xf32>
      tpu.vector_store %arg15[%c16_422, %c32_423], %382 {strides = array<i32>} : memref<64x256xf32, #tpu.memory_space<vmem>>, vector<7x16xf32>,
      %c9_424 = arith.constant 9 : index
      %c48_425 = arith.constant 48 : index
      %386 = vector.load %arg15[%c9_424, %c48_425] : memref<64x256xf32, #tpu.memory_space<vmem>>, vector<7x16xf32>
      tpu.vector_store %arg15[%c9_424, %c48_425], %381 {strides = array<i32>} : memref<64x256xf32, #tpu.memory_space<vmem>>, vector<7x16xf32>,
      %c8_426 = arith.constant 8 : index
      %c64_427 = arith.constant 64 : index
      %387 = vector.load %arg15[%c8_426, %c64_427] : memref<64x256xf32, #tpu.memory_space<vmem>>, vector<8x16xf32>
      tpu.vector_store %arg15[%c8_426, %c64_427], %380 {strides = array<i32>} : memref<64x256xf32, #tpu.memory_space<vmem>>, vector<8x16xf32>,
      %c8_428 = arith.constant 8 : index
      %c80_429 = arith.constant 80 : index
      %388 = vector.load %arg15[%c8_428, %c80_429] : memref<64x256xf32, #tpu.memory_space<vmem>>, vector<7x16xf32>
      tpu.vector_store %arg15[%c8_428, %c80_429], %382 {strides = array<i32>} : memref<64x256xf32, #tpu.memory_space<vmem>>, vector<7x16xf32>,
      %c1_430 = arith.constant 1 : index
      %c96_431 = arith.constant 96 : index
      %389 = vector.load %arg15[%c1_430, %c96_431] : memref<64x256xf32, #tpu.memory_space<vmem>>, vector<7x16xf32>
      tpu.vector_store %arg15[%c1_430, %c96_431], %381 {strides = array<i32>} : memref<64x256xf32, #tpu.memory_space<vmem>>, vector<7x16xf32>,
      %c0_432 = arith.constant 0 : index
      %c112_433 = arith.constant 112 : index
      %390 = vector.load %arg15[%c0_432, %c112_433] : memref<64x256xf32, #tpu.memory_space<vmem>>, vector<8x16xf32>
      tpu.vector_store %arg15[%c0_432, %c112_433], %380 {strides = array<i32>} : memref<64x256xf32, #tpu.memory_space<vmem>>, vector<8x16xf32>,
      %c0_434 = arith.constant 0 : index
      %c128_435 = arith.constant 128 : index
      %391 = vector.load %arg15[%c0_434, %c128_435] : memref<64x256xf32, #tpu.memory_space<vmem>>, vector<7x16xf32>
      tpu.vector_store %arg15[%c0_434, %c128_435], %382 {strides = array<i32>} : memref<64x256xf32, #tpu.memory_space<vmem>>, vector<7x16xf32>,
      %c2_436 = arith.constant 2 : index
      %c0_437 = arith.constant 0 : index
      %c0_438 = arith.constant 0 : index
      %392 = vector.load %arg14[%c2_436, %c0_437, %c0_438] : memref<8x8x16xf32, #tpu.memory_space<vmem>>, vector<1x8x16xf32>
      %393 = vector.shape_cast %392 : vector<1x8x16xf32> to vector<8x16xf32>
      %394 = vector.extract_strided_slice %393 {offsets = [0, 0], sizes = [7, 16], strides = [1, 1]} : vector<8x16xf32> to vector<7x16xf32>
      %395 = vector.extract_strided_slice %393 {offsets = [1, 0], sizes = [7, 16], strides = [1, 1]} : vector<8x16xf32> to vector<7x16xf32>
      %c25 = arith.constant 25 : index
      %c0_439 = arith.constant 0 : index
      %396 = vector.load %arg15[%c25, %c0_439] : memref<64x256xf32, #tpu.memory_space<vmem>>, vector<7x16xf32>
      tpu.vector_store %arg15[%c25, %c0_439], %394 {strides = array<i32>} : memref<64x256xf32, #tpu.memory_space<vmem>>, vector<7x16xf32>,
      %c24_440 = arith.constant 24 : index
      %c16_441 = arith.constant 16 : index
      %397 = vector.load %arg15[%c24_440, %c16_441] : memref<64x256xf32, #tpu.memory_space<vmem>>, vector<8x16xf32>
      tpu.vector_store %arg15[%c24_440, %c16_441], %393 {strides = array<i32>} : memref<64x256xf32, #tpu.memory_space<vmem>>, vector<8x16xf32>,
      %c24_442 = arith.constant 24 : index
      %c32_443 = arith.constant 32 : index
      %398 = vector.load %arg15[%c24_442, %c32_443] : memref<64x256xf32, #tpu.memory_space<vmem>>, vector<7x16xf32>
      tpu.vector_store %arg15[%c24_442, %c32_443], %395 {strides = array<i32>} : memref<64x256xf32, #tpu.memory_space<vmem>>, vector<7x16xf32>,
      %c17_444 = arith.constant 17 : index
      %c48_445 = arith.constant 48 : index
      %399 = vector.load %arg15[%c17_444, %c48_445] : memref<64x256xf32, #tpu.memory_space<vmem>>, vector<7x16xf32>
      tpu.vector_store %arg15[%c17_444, %c48_445], %394 {strides = array<i32>} : memref<64x256xf32, #tpu.memory_space<vmem>>, vector<7x16xf32>,
      %c16_446 = arith.constant 16 : index
      %c64_447 = arith.constant 64 : index
      %400 = vector.load %arg15[%c16_446, %c64_447] : memref<64x256xf32, #tpu.memory_space<vmem>>, vector<8x16xf32>
      tpu.vector_store %arg15[%c16_446, %c64_447], %393 {strides = array<i32>} : memref<64x256xf32, #tpu.memory_space<vmem>>, vector<8x16xf32>,
      %c16_448 = arith.constant 16 : index
      %c80_449 = arith.constant 80 : index
      %401 = vector.load %arg15[%c16_448, %c80_449] : memref<64x256xf32, #tpu.memory_space<vmem>>, vector<7x16xf32>
      tpu.vector_store %arg15[%c16_448, %c80_449], %395 {strides = array<i32>} : memref<64x256xf32, #tpu.memory_space<vmem>>, vector<7x16xf32>,
      %c9_450 = arith.constant 9 : index
      %c96_451 = arith.constant 96 : index
      %402 = vector.load %arg15[%c9_450, %c96_451] : memref<64x256xf32, #tpu.memory_space<vmem>>, vector<7x16xf32>
      tpu.vector_store %arg15[%c9_450, %c96_451], %394 {strides = array<i32>} : memref<64x256xf32, #tpu.memory_space<vmem>>, vector<7x16xf32>,
      %c8_452 = arith.constant 8 : index
      %c112_453 = arith.constant 112 : index
      %403 = vector.load %arg15[%c8_452, %c112_453] : memref<64x256xf32, #tpu.memory_space<vmem>>, vector<8x16xf32>
      tpu.vector_store %arg15[%c8_452, %c112_453], %393 {strides = array<i32>} : memref<64x256xf32, #tpu.memory_space<vmem>>, vector<8x16xf32>,
      %c8_454 = arith.constant 8 : index
      %c128_455 = arith.constant 128 : index
      %404 = vector.load %arg15[%c8_454, %c128_455] : memref<64x256xf32, #tpu.memory_space<vmem>>, vector<7x16xf32>
      tpu.vector_store %arg15[%c8_454, %c128_455], %395 {strides = array<i32>} : memref<64x256xf32, #tpu.memory_space<vmem>>, vector<7x16xf32>,
      %c3_456 = arith.constant 3 : index
      %c0_457 = arith.constant 0 : index
      %c0_458 = arith.constant 0 : index
      %405 = vector.load %arg14[%c3_456, %c0_457, %c0_458] : memref<8x8x16xf32, #tpu.memory_space<vmem>>, vector<1x8x16xf32>
      %406 = vector.shape_cast %405 : vector<1x8x16xf32> to vector<8x16xf32>
      %407 = vector.extract_strided_slice %406 {offsets = [0, 0], sizes = [7, 16], strides = [1, 1]} : vector<8x16xf32> to vector<7x16xf32>
      %408 = vector.extract_strided_slice %406 {offsets = [1, 0], sizes = [7, 16], strides = [1, 1]} : vector<8x16xf32> to vector<7x16xf32>
      %c33_459 = arith.constant 33 : index
      %c0_460 = arith.constant 0 : index
      %409 = vector.load %arg15[%c33_459, %c0_460] : memref<64x256xf32, #tpu.memory_space<vmem>>, vector<7x16xf32>
      tpu.vector_store %arg15[%c33_459, %c0_460], %407 {strides = array<i32>} : memref<64x256xf32, #tpu.memory_space<vmem>>, vector<7x16xf32>,
      %c32_461 = arith.constant 32 : index
      %c16_462 = arith.constant 16 : index
      %410 = vector.load %arg15[%c32_461, %c16_462] : memref<64x256xf32, #tpu.memory_space<vmem>>, vector<8x16xf32>
      tpu.vector_store %arg15[%c32_461, %c16_462], %406 {strides = array<i32>} : memref<64x256xf32, #tpu.memory_space<vmem>>, vector<8x16xf32>,
      %c32_463 = arith.constant 32 : index
      %c32_464 = arith.constant 32 : index
      %411 = vector.load %arg15[%c32_463, %c32_464] : memref<64x256xf32, #tpu.memory_space<vmem>>, vector<7x16xf32>
      tpu.vector_store %arg15[%c32_463, %c32_464], %408 {strides = array<i32>} : memref<64x256xf32, #tpu.memory_space<vmem>>, vector<7x16xf32>,
      %c25_465 = arith.constant 25 : index
      %c48_466 = arith.constant 48 : index
      %412 = vector.load %arg15[%c25_465, %c48_466] : memref<64x256xf32, #tpu.memory_space<vmem>>, vector<7x16xf32>
      tpu.vector_store %arg15[%c25_465, %c48_466], %407 {strides = array<i32>} : memref<64x256xf32, #tpu.memory_space<vmem>>, vector<7x16xf32>,
      %c24_467 = arith.constant 24 : index
      %c64_468 = arith.constant 64 : index
      %413 = vector.load %arg15[%c24_467, %c64_468] : memref<64x256xf32, #tpu.memory_space<vmem>>, vector<8x16xf32>
      tpu.vector_store %arg15[%c24_467, %c64_468], %406 {strides = array<i32>} : memref<64x256xf32, #tpu.memory_space<vmem>>, vector<8x16xf32>,
      %c24_469 = arith.constant 24 : index
      %c80_470 = arith.constant 80 : index
      %414 = vector.load %arg15[%c24_469, %c80_470] : memref<64x256xf32, #tpu.memory_space<vmem>>, vector<7x16xf32>
      tpu.vector_store %arg15[%c24_469, %c80_470], %408 {strides = array<i32>} : memref<64x256xf32, #tpu.memory_space<vmem>>, vector<7x16xf32>,
      %c17_471 = arith.constant 17 : index
      %c96_472 = arith.constant 96 : index
      %415 = vector.load %arg15[%c17_471, %c96_472] : memref<64x256xf32, #tpu.memory_space<vmem>>, vector<7x16xf32>
      tpu.vector_store %arg15[%c17_471, %c96_472], %407 {strides = array<i32>} : memref<64x256xf32, #tpu.memory_space<vmem>>, vector<7x16xf32>,
      %c16_473 = arith.constant 16 : index
      %c112_474 = arith.constant 112 : index
      %416 = vector.load %arg15[%c16_473, %c112_474] : memref<64x256xf32, #tpu.memory_space<vmem>>, vector<8x16xf32>
      tpu.vector_store %arg15[%c16_473, %c112_474], %406 {strides = array<i32>} : memref<64x256xf32, #tpu.memory_space<vmem>>, vector<8x16xf32>,
      %c16_475 = arith.constant 16 : index
      %c128_476 = arith.constant 128 : index
      %417 = vector.load %arg15[%c16_475, %c128_476] : memref<64x256xf32, #tpu.memory_space<vmem>>, vector<7x16xf32>
      tpu.vector_store %arg15[%c16_475, %c128_476], %408 {strides = array<i32>} : memref<64x256xf32, #tpu.memory_space<vmem>>, vector<7x16xf32>,
      %c4_477 = arith.constant 4 : index
      %c0_478 = arith.constant 0 : index
      %c0_479 = arith.constant 0 : index
      %418 = vector.load %arg14[%c4_477, %c0_478, %c0_479] : memref<8x8x16xf32, #tpu.memory_space<vmem>>, vector<1x8x16xf32>
      %419 = vector.shape_cast %418 : vector<1x8x16xf32> to vector<8x16xf32>
      %420 = vector.extract_strided_slice %419 {offsets = [0, 0], sizes = [7, 16], strides = [1, 1]} : vector<8x16xf32> to vector<7x16xf32>
      %421 = vector.extract_strided_slice %419 {offsets = [1, 0], sizes = [7, 16], strides = [1, 1]} : vector<8x16xf32> to vector<7x16xf32>
      %c41 = arith.constant 41 : index
      %c0_480 = arith.constant 0 : index
      %422 = vector.load %arg15[%c41, %c0_480] : memref<64x256xf32, #tpu.memory_space<vmem>>, vector<7x16xf32>
      tpu.vector_store %arg15[%c41, %c0_480], %420 {strides = array<i32>} : memref<64x256xf32, #tpu.memory_space<vmem>>, vector<7x16xf32>,
      %c40 = arith.constant 40 : index
      %c16_481 = arith.constant 16 : index
      %423 = vector.load %arg15[%c40, %c16_481] : memref<64x256xf32, #tpu.memory_space<vmem>>, vector<8x16xf32>
      tpu.vector_store %arg15[%c40, %c16_481], %419 {strides = array<i32>} : memref<64x256xf32, #tpu.memory_space<vmem>>, vector<8x16xf32>,
      %c40_482 = arith.constant 40 : index
      %c32_483 = arith.constant 32 : index
      %424 = vector.load %arg15[%c40_482, %c32_483] : memref<64x256xf32, #tpu.memory_space<vmem>>, vector<7x16xf32>
      tpu.vector_store %arg15[%c40_482, %c32_483], %421 {strides = array<i32>} : memref<64x256xf32, #tpu.memory_space<vmem>>, vector<7x16xf32>,
      %c33_484 = arith.constant 33 : index
      %c48_485 = arith.constant 48 : index
      %425 = vector.load %arg15[%c33_484, %c48_485] : memref<64x256xf32, #tpu.memory_space<vmem>>, vector<7x16xf32>
      tpu.vector_store %arg15[%c33_484, %c48_485], %420 {strides = array<i32>} : memref<64x256xf32, #tpu.memory_space<vmem>>, vector<7x16xf32>,
      %c32_486 = arith.constant 32 : index
      %c64_487 = arith.constant 64 : index
      %426 = vector.load %arg15[%c32_486, %c64_487] : memref<64x256xf32, #tpu.memory_space<vmem>>, vector<8x16xf32>
      tpu.vector_store %arg15[%c32_486, %c64_487], %419 {strides = array<i32>} : memref<64x256xf32, #tpu.memory_space<vmem>>, vector<8x16xf32>,
      %c32_488 = arith.constant 32 : index
      %c80_489 = arith.constant 80 : index
      %427 = vector.load %arg15[%c32_488, %c80_489] : memref<64x256xf32, #tpu.memory_space<vmem>>, vector<7x16xf32>
      tpu.vector_store %arg15[%c32_488, %c80_489], %421 {strides = array<i32>} : memref<64x256xf32, #tpu.memory_space<vmem>>, vector<7x16xf32>,
      %c25_490 = arith.constant 25 : index
      %c96_491 = arith.constant 96 : index
      %428 = vector.load %arg15[%c25_490, %c96_491] : memref<64x256xf32, #tpu.memory_space<vmem>>, vector<7x16xf32>
      tpu.vector_store %arg15[%c25_490, %c96_491], %420 {strides = array<i32>} : memref<64x256xf32, #tpu.memory_space<vmem>>, vector<7x16xf32>,
      %c24_492 = arith.constant 24 : index
      %c112_493 = arith.constant 112 : index
      %429 = vector.load %arg15[%c24_492, %c112_493] : memref<64x256xf32, #tpu.memory_space<vmem>>, vector<8x16xf32>
      tpu.vector_store %arg15[%c24_492, %c112_493], %419 {strides = array<i32>} : memref<64x256xf32, #tpu.memory_space<vmem>>, vector<8x16xf32>,
      %c24_494 = arith.constant 24 : index
      %c128_495 = arith.constant 128 : index
      %430 = vector.load %arg15[%c24_494, %c128_495] : memref<64x256xf32, #tpu.memory_space<vmem>>, vector<7x16xf32>
      tpu.vector_store %arg15[%c24_494, %c128_495], %421 {strides = array<i32>} : memref<64x256xf32, #tpu.memory_space<vmem>>, vector<7x16xf32>,
      %c5_496 = arith.constant 5 : index
      %c0_497 = arith.constant 0 : index
      %c0_498 = arith.constant 0 : index
      %431 = vector.load %arg14[%c5_496, %c0_497, %c0_498] : memref<8x8x16xf32, #tpu.memory_space<vmem>>, vector<1x8x16xf32>
      %432 = vector.shape_cast %431 : vector<1x8x16xf32> to vector<8x16xf32>
      %433 = vector.extract_strided_slice %432 {offsets = [0, 0], sizes = [7, 16], strides = [1, 1]} : vector<8x16xf32> to vector<7x16xf32>
      %434 = vector.extract_strided_slice %432 {offsets = [1, 0], sizes = [7, 16], strides = [1, 1]} : vector<8x16xf32> to vector<7x16xf32>
      %c49_499 = arith.constant 49 : index
      %c0_500 = arith.constant 0 : index
      %435 = vector.load %arg15[%c49_499, %c0_500] : memref<64x256xf32, #tpu.memory_space<vmem>>, vector<7x16xf32>
      tpu.vector_store %arg15[%c49_499, %c0_500], %433 {strides = array<i32>} : memref<64x256xf32, #tpu.memory_space<vmem>>, vector<7x16xf32>,
      %c48_501 = arith.constant 48 : index
      %c16_502 = arith.constant 16 : index
      %436 = vector.load %arg15[%c48_501, %c16_502] : memref<64x256xf32, #tpu.memory_space<vmem>>, vector<8x16xf32>
      tpu.vector_store %arg15[%c48_501, %c16_502], %432 {strides = array<i32>} : memref<64x256xf32, #tpu.memory_space<vmem>>, vector<8x16xf32>,
      %c48_503 = arith.constant 48 : index
      %c32_504 = arith.constant 32 : index
      %437 = vector.load %arg15[%c48_503, %c32_504] : memref<64x256xf32, #tpu.memory_space<vmem>>, vector<7x16xf32>
      tpu.vector_store %arg15[%c48_503, %c32_504], %434 {strides = array<i32>} : memref<64x256xf32, #tpu.memory_space<vmem>>, vector<7x16xf32>,
      %c41_505 = arith.constant 41 : index
      %c48_506 = arith.constant 48 : index
      %438 = vector.load %arg15[%c41_505, %c48_506] : memref<64x256xf32, #tpu.memory_space<vmem>>, vector<7x16xf32>
      tpu.vector_store %arg15[%c41_505, %c48_506], %433 {strides = array<i32>} : memref<64x256xf32, #tpu.memory_space<vmem>>, vector<7x16xf32>,
      %c40_507 = arith.constant 40 : index
      %c64_508 = arith.constant 64 : index
      %439 = vector.load %arg15[%c40_507, %c64_508] : memref<64x256xf32, #tpu.memory_space<vmem>>, vector<8x16xf32>
      tpu.vector_store %arg15[%c40_507, %c64_508], %432 {strides = array<i32>} : memref<64x256xf32, #tpu.memory_space<vmem>>, vector<8x16xf32>,
      %c40_509 = arith.constant 40 : index
      %c80_510 = arith.constant 80 : index
      %440 = vector.load %arg15[%c40_509, %c80_510] : memref<64x256xf32, #tpu.memory_space<vmem>>, vector<7x16xf32>
      tpu.vector_store %arg15[%c40_509, %c80_510], %434 {strides = array<i32>} : memref<64x256xf32, #tpu.memory_space<vmem>>, vector<7x16xf32>,
      %c33_511 = arith.constant 33 : index
      %c96_512 = arith.constant 96 : index
      %441 = vector.load %arg15[%c33_511, %c96_512] : memref<64x256xf32, #tpu.memory_space<vmem>>, vector<7x16xf32>
      tpu.vector_store %arg15[%c33_511, %c96_512], %433 {strides = array<i32>} : memref<64x256xf32, #tpu.memory_space<vmem>>, vector<7x16xf32>,
      %c32_513 = arith.constant 32 : index
      %c112_514 = arith.constant 112 : index
      %442 = vector.load %arg15[%c32_513, %c112_514] : memref<64x256xf32, #tpu.memory_space<vmem>>, vector<8x16xf32>
      tpu.vector_store %arg15[%c32_513, %c112_514], %432 {strides = array<i32>} : memref<64x256xf32, #tpu.memory_space<vmem>>, vector<8x16xf32>,
      %c32_515 = arith.constant 32 : index
      %c128_516 = arith.constant 128 : index
      %443 = vector.load %arg15[%c32_515, %c128_516] : memref<64x256xf32, #tpu.memory_space<vmem>>, vector<7x16xf32>
      tpu.vector_store %arg15[%c32_515, %c128_516], %434 {strides = array<i32>} : memref<64x256xf32, #tpu.memory_space<vmem>>, vector<7x16xf32>,
      %c6_517 = arith.constant 6 : index
      %c0_518 = arith.constant 0 : index
      %c0_519 = arith.constant 0 : index
      %444 = vector.load %arg14[%c6_517, %c0_518, %c0_519] : memref<8x8x16xf32, #tpu.memory_space<vmem>>, vector<1x8x16xf32>
      %445 = vector.shape_cast %444 : vector<1x8x16xf32> to vector<8x16xf32>
      %446 = vector.extract_strided_slice %445 {offsets = [0, 0], sizes = [7, 16], strides = [1, 1]} : vector<8x16xf32> to vector<7x16xf32>
      %447 = vector.extract_strided_slice %445 {offsets = [1, 0], sizes = [7, 16], strides = [1, 1]} : vector<8x16xf32> to vector<7x16xf32>
      %c57 = arith.constant 57 : index
      %c0_520 = arith.constant 0 : index
      %448 = vector.load %arg15[%c57, %c0_520] : memref<64x256xf32, #tpu.memory_space<vmem>>, vector<7x16xf32>
      tpu.vector_store %arg15[%c57, %c0_520], %446 {strides = array<i32>} : memref<64x256xf32, #tpu.memory_space<vmem>>, vector<7x16xf32>,
      %c56 = arith.constant 56 : index
      %c16_521 = arith.constant 16 : index
      %449 = vector.load %arg15[%c56, %c16_521] : memref<64x256xf32, #tpu.memory_space<vmem>>, vector<8x16xf32>
      tpu.vector_store %arg15[%c56, %c16_521], %445 {strides = array<i32>} : memref<64x256xf32, #tpu.memory_space<vmem>>, vector<8x16xf32>,
      %c56_522 = arith.constant 56 : index
      %c32_523 = arith.constant 32 : index
      %450 = vector.load %arg15[%c56_522, %c32_523] : memref<64x256xf32, #tpu.memory_space<vmem>>, vector<7x16xf32>
      tpu.vector_store %arg15[%c56_522, %c32_523], %447 {strides = array<i32>} : memref<64x256xf32, #tpu.memory_space<vmem>>, vector<7x16xf32>,
      %c49_524 = arith.constant 49 : index
      %c48_525 = arith.constant 48 : index
      %451 = vector.load %arg15[%c49_524, %c48_525] : memref<64x256xf32, #tpu.memory_space<vmem>>, vector<7x16xf32>
      tpu.vector_store %arg15[%c49_524, %c48_525], %446 {strides = array<i32>} : memref<64x256xf32, #tpu.memory_space<vmem>>, vector<7x16xf32>,
      %c48_526 = arith.constant 48 : index
      %c64_527 = arith.constant 64 : index
      %452 = vector.load %arg15[%c48_526, %c64_527] : memref<64x256xf32, #tpu.memory_space<vmem>>, vector<8x16xf32>
      tpu.vector_store %arg15[%c48_526, %c64_527], %445 {strides = array<i32>} : memref<64x256xf32, #tpu.memory_space<vmem>>, vector<8x16xf32>,
      %c48_528 = arith.constant 48 : index
      %c80_529 = arith.constant 80 : index
      %453 = vector.load %arg15[%c48_528, %c80_529] : memref<64x256xf32, #tpu.memory_space<vmem>>, vector<7x16xf32>
      tpu.vector_store %arg15[%c48_528, %c80_529], %447 {strides = array<i32>} : memref<64x256xf32, #tpu.memory_space<vmem>>, vector<7x16xf32>,
      %c41_530 = arith.constant 41 : index
      %c96_531 = arith.constant 96 : index
      %454 = vector.load %arg15[%c41_530, %c96_531] : memref<64x256xf32, #tpu.memory_space<vmem>>, vector<7x16xf32>
      tpu.vector_store %arg15[%c41_530, %c96_531], %446 {strides = array<i32>} : memref<64x256xf32, #tpu.memory_space<vmem>>, vector<7x16xf32>,
      %c40_532 = arith.constant 40 : index
      %c112_533 = arith.constant 112 : index
      %455 = vector.load %arg15[%c40_532, %c112_533] : memref<64x256xf32, #tpu.memory_space<vmem>>, vector<8x16xf32>
      tpu.vector_store %arg15[%c40_532, %c112_533], %445 {strides = array<i32>} : memref<64x256xf32, #tpu.memory_space<vmem>>, vector<8x16xf32>,
      %c40_534 = arith.constant 40 : index
      %c128_535 = arith.constant 128 : index
      %456 = vector.load %arg15[%c40_534, %c128_535] : memref<64x256xf32, #tpu.memory_space<vmem>>, vector<7x16xf32>
      tpu.vector_store %arg15[%c40_534, %c128_535], %447 {strides = array<i32>} : memref<64x256xf32, #tpu.memory_space<vmem>>, vector<7x16xf32>,
      %c7_536 = arith.constant 7 : index
      %c0_537 = arith.constant 0 : index
      %c0_538 = arith.constant 0 : index
      %457 = vector.load %arg14[%c7_536, %c0_537, %c0_538] : memref<8x8x16xf32, #tpu.memory_space<vmem>>, vector<1x8x16xf32>
      %458 = vector.shape_cast %457 : vector<1x8x16xf32> to vector<8x16xf32>
      %459 = vector.extract_strided_slice %458 {offsets = [0, 0], sizes = [7, 16], strides = [1, 1]} : vector<8x16xf32> to vector<7x16xf32>
      %460 = vector.extract_strided_slice %458 {offsets = [1, 0], sizes = [7, 16], strides = [1, 1]} : vector<8x16xf32> to vector<7x16xf32>
      %c57_539 = arith.constant 57 : index
      %c48_540 = arith.constant 48 : index
      %461 = vector.load %arg15[%c57_539, %c48_540] : memref<64x256xf32, #tpu.memory_space<vmem>>, vector<7x16xf32>
      tpu.vector_store %arg15[%c57_539, %c48_540], %459 {strides = array<i32>} : memref<64x256xf32, #tpu.memory_space<vmem>>, vector<7x16xf32>,
      %c56_541 = arith.constant 56 : index
      %c64_542 = arith.constant 64 : index
      %462 = vector.load %arg15[%c56_541, %c64_542] : memref<64x256xf32, #tpu.memory_space<vmem>>, vector<8x16xf32>
      tpu.vector_store %arg15[%c56_541, %c64_542], %458 {strides = array<i32>} : memref<64x256xf32, #tpu.memory_space<vmem>>, vector<8x16xf32>,
      %c56_543 = arith.constant 56 : index
      %c80_544 = arith.constant 80 : index
      %463 = vector.load %arg15[%c56_543, %c80_544] : memref<64x256xf32, #tpu.memory_space<vmem>>, vector<7x16xf32>
      tpu.vector_store %arg15[%c56_543, %c80_544], %460 {strides = array<i32>} : memref<64x256xf32, #tpu.memory_space<vmem>>, vector<7x16xf32>,
      %c49_545 = arith.constant 49 : index
      %c96_546 = arith.constant 96 : index
      %464 = vector.load %arg15[%c49_545, %c96_546] : memref<64x256xf32, #tpu.memory_space<vmem>>, vector<7x16xf32>
      tpu.vector_store %arg15[%c49_545, %c96_546], %459 {strides = array<i32>} : memref<64x256xf32, #tpu.memory_space<vmem>>, vector<7x16xf32>,
      %c48_547 = arith.constant 48 : index
      %c112_548 = arith.constant 112 : index
      %465 = vector.load %arg15[%c48_547, %c112_548] : memref<64x256xf32, #tpu.memory_space<vmem>>, vector<8x16xf32>
      tpu.vector_store %arg15[%c48_547, %c112_548], %458 {strides = array<i32>} : memref<64x256xf32, #tpu.memory_space<vmem>>, vector<8x16xf32>,
      %c48_549 = arith.constant 48 : index
      %c128_550 = arith.constant 128 : index
      %466 = vector.load %arg15[%c48_549, %c128_550] : memref<64x256xf32, #tpu.memory_space<vmem>>, vector<7x16xf32>
      tpu.vector_store %arg15[%c48_549, %c128_550], %460 {strides = array<i32>} : memref<64x256xf32, #tpu.memory_space<vmem>>, vector<7x16xf32>,
      %c0_551 = arith.constant 0 : index
      %c0_552 = arith.constant 0 : index
      %467 = vector.load %arg15[%c0_551, %c0_552] : memref<64x256xf32, #tpu.memory_space<vmem>>, vector<64x256xf32>
      %468 = arith.truncf %467 : vector<64x256xf32> to vector<64x256xbf16>
      %c0_553 = arith.constant 0 : index
      %c0_554 = arith.constant 0 : index
      %469 = vector.load %arg4[%c0_553, %c0_554] : memref<256x32xbf16, #tpu.memory_space<vmem>>, vector<256x32xbf16>
      %cst_555 = arith.constant dense<0.000000e+00> : vector<64x32xf32>
      %470 = tpu.matmul %468, %469, %cst_555 {dimension_numbers = #tpu.dot_dimension_numbers<[1], [0], [0], [1], [0, 0, 1, 1], [], []>} : vector<64x256xbf16>, vector<256x32xbf16>, vector<64x32xf32> -> vector<64x32xf32>
      %c0_556 = arith.constant 0 : index
      %c0_557 = arith.constant 0 : index
      %471 = vector.load %arg16[%c0_556, %c0_557] : memref<64x32xf32, #tpu.memory_space<vmem>>, vector<64x32xf32>
      tpu.vector_store %arg16[%c0_556, %c0_557], %470 {strides = array<i32>} : memref<64x32xf32, #tpu.memory_space<vmem>>, vector<64x32xf32>,
      %c0_558 = arith.constant 0 : index
      %c0_559 = arith.constant 0 : index
      %472 = vector.load %arg5[%c0_558, %c0_559] : memref<1x32xf32, #tpu.memory_space<vmem>>, vector<1x32xf32>
      %c0_560 = arith.constant 0 : index
      %c0_561 = arith.constant 0 : index
      %473 = tpu.strided_load %arg16[%c0_560, %c0_561] {strides = array<i32: 2, 1>} : memref<64x32xf32, #tpu.memory_space<vmem>>, vector<4x32xf32>
      %c1_562 = arith.constant 1 : index
      %c0_563 = arith.constant 0 : index
      %474 = tpu.strided_load %arg16[%c1_562, %c0_563] {strides = array<i32: 2, 1>} : memref<64x32xf32, #tpu.memory_space<vmem>>, vector<4x32xf32>
      %c8_564 = arith.constant 8 : index
      %c0_565 = arith.constant 0 : index
      %475 = tpu.strided_load %arg16[%c8_564, %c0_565] {strides = array<i32: 2, 1>} : memref<64x32xf32, #tpu.memory_space<vmem>>, vector<4x32xf32>
      %c9_566 = arith.constant 9 : index
      %c0_567 = arith.constant 0 : index
      %476 = tpu.strided_load %arg16[%c9_566, %c0_567] {strides = array<i32: 2, 1>} : memref<64x32xf32, #tpu.memory_space<vmem>>, vector<4x32xf32>
      %477 = arith.maximumf %473, %474 : vector<4x32xf32>
      %478 = arith.maximumf %475, %476 : vector<4x32xf32>
      %479 = arith.maximumf %477, %478 : vector<4x32xf32>
      %480 = vector.broadcast %472 : vector<1x32xf32> to vector<4x32xf32>
      %481 = arith.addf %479, %480 : vector<4x32xf32>
      %cst_568 = arith.constant 0.000000e+00 : f32
      %482 = vector.broadcast %cst_568 : f32 to vector<4x32xf32>
      %483 = arith.cmpf ogt, %481, %482 : vector<4x32xf32>
      %cst_569 = arith.constant 1.000000e-01 : f32
      %484 = vector.broadcast %cst_569 : f32 to vector<4x32xf32>
      %485 = arith.mulf %484, %481 : vector<4x32xf32>
      %486 = arith.select %483, %481, %485 : vector<4x32xi1>, vector<4x32xf32>
      %c0_570 = arith.constant 0 : index
      %c0_571 = arith.constant 0 : index
      %c0_572 = arith.constant 0 : index
      %487 = vector.load %arg17[%c0_570, %c0_571, %c0_572] : memref<4x4x32xf32, #tpu.memory_space<vmem>>, vector<1x4x32xf32>
      %488 = vector.shape_cast %487 : vector<1x4x32xf32> to vector<4x32xf32>
      %489 = vector.shape_cast %486 : vector<4x32xf32> to vector<1x4x32xf32>
      tpu.vector_store %arg17[%c0_570, %c0_571, %c0_572], %489 {strides = array<i32>} : memref<4x4x32xf32, #tpu.memory_space<vmem>>, vector<1x4x32xf32>,
      %c16_573 = arith.constant 16 : index
      %c0_574 = arith.constant 0 : index
      %490 = tpu.strided_load %arg16[%c16_573, %c0_574] {strides = array<i32: 2, 1>} : memref<64x32xf32, #tpu.memory_space<vmem>>, vector<4x32xf32>
      %c17_575 = arith.constant 17 : index
      %c0_576 = arith.constant 0 : index
      %491 = tpu.strided_load %arg16[%c17_575, %c0_576] {strides = array<i32: 2, 1>} : memref<64x32xf32, #tpu.memory_space<vmem>>, vector<4x32xf32>
      %c24_577 = arith.constant 24 : index
      %c0_578 = arith.constant 0 : index
      %492 = tpu.strided_load %arg16[%c24_577, %c0_578] {strides = array<i32: 2, 1>} : memref<64x32xf32, #tpu.memory_space<vmem>>, vector<4x32xf32>
      %c25_579 = arith.constant 25 : index
      %c0_580 = arith.constant 0 : index
      %493 = tpu.strided_load %arg16[%c25_579, %c0_580] {strides = array<i32: 2, 1>} : memref<64x32xf32, #tpu.memory_space<vmem>>, vector<4x32xf32>
      %494 = arith.maximumf %490, %491 : vector<4x32xf32>
      %495 = arith.maximumf %492, %493 : vector<4x32xf32>
      %496 = arith.maximumf %494, %495 : vector<4x32xf32>
      %497 = vector.broadcast %472 : vector<1x32xf32> to vector<4x32xf32>
      %498 = arith.addf %496, %497 : vector<4x32xf32>
      %cst_581 = arith.constant 0.000000e+00 : f32
      %499 = vector.broadcast %cst_581 : f32 to vector<4x32xf32>
      %500 = arith.cmpf ogt, %498, %499 : vector<4x32xf32>
      %cst_582 = arith.constant 1.000000e-01 : f32
      %501 = vector.broadcast %cst_582 : f32 to vector<4x32xf32>
      %502 = arith.mulf %501, %498 : vector<4x32xf32>
      %503 = arith.select %500, %498, %502 : vector<4x32xi1>, vector<4x32xf32>
      %c1_583 = arith.constant 1 : index
      %c0_584 = arith.constant 0 : index
      %c0_585 = arith.constant 0 : index
      %504 = vector.load %arg17[%c1_583, %c0_584, %c0_585] : memref<4x4x32xf32, #tpu.memory_space<vmem>>, vector<1x4x32xf32>
      %505 = vector.shape_cast %504 : vector<1x4x32xf32> to vector<4x32xf32>
      %506 = vector.shape_cast %503 : vector<4x32xf32> to vector<1x4x32xf32>
      tpu.vector_store %arg17[%c1_583, %c0_584, %c0_585], %506 {strides = array<i32>} : memref<4x4x32xf32, #tpu.memory_space<vmem>>, vector<1x4x32xf32>,
      %c32_586 = arith.constant 32 : index
      %c0_587 = arith.constant 0 : index
      %507 = tpu.strided_load %arg16[%c32_586, %c0_587] {strides = array<i32: 2, 1>} : memref<64x32xf32, #tpu.memory_space<vmem>>, vector<4x32xf32>
      %c33_588 = arith.constant 33 : index
      %c0_589 = arith.constant 0 : index
      %508 = tpu.strided_load %arg16[%c33_588, %c0_589] {strides = array<i32: 2, 1>} : memref<64x32xf32, #tpu.memory_space<vmem>>, vector<4x32xf32>
      %c40_590 = arith.constant 40 : index
      %c0_591 = arith.constant 0 : index
      %509 = tpu.strided_load %arg16[%c40_590, %c0_591] {strides = array<i32: 2, 1>} : memref<64x32xf32, #tpu.memory_space<vmem>>, vector<4x32xf32>
      %c41_592 = arith.constant 41 : index
      %c0_593 = arith.constant 0 : index
      %510 = tpu.strided_load %arg16[%c41_592, %c0_593] {strides = array<i32: 2, 1>} : memref<64x32xf32, #tpu.memory_space<vmem>>, vector<4x32xf32>
      %511 = arith.maximumf %507, %508 : vector<4x32xf32>
      %512 = arith.maximumf %509, %510 : vector<4x32xf32>
      %513 = arith.maximumf %511, %512 : vector<4x32xf32>
      %514 = vector.broadcast %472 : vector<1x32xf32> to vector<4x32xf32>
      %515 = arith.addf %513, %514 : vector<4x32xf32>
      %cst_594 = arith.constant 0.000000e+00 : f32
      %516 = vector.broadcast %cst_594 : f32 to vector<4x32xf32>
      %517 = arith.cmpf ogt, %515, %516 : vector<4x32xf32>
      %cst_595 = arith.constant 1.000000e-01 : f32
      %518 = vector.broadcast %cst_595 : f32 to vector<4x32xf32>
      %519 = arith.mulf %518, %515 : vector<4x32xf32>
      %520 = arith.select %517, %515, %519 : vector<4x32xi1>, vector<4x32xf32>
      %c2_596 = arith.constant 2 : index
      %c0_597 = arith.constant 0 : index
      %c0_598 = arith.constant 0 : index
      %521 = vector.load %arg17[%c2_596, %c0_597, %c0_598] : memref<4x4x32xf32, #tpu.memory_space<vmem>>, vector<1x4x32xf32>
      %522 = vector.shape_cast %521 : vector<1x4x32xf32> to vector<4x32xf32>
      %523 = vector.shape_cast %520 : vector<4x32xf32> to vector<1x4x32xf32>
      tpu.vector_store %arg17[%c2_596, %c0_597, %c0_598], %523 {strides = array<i32>} : memref<4x4x32xf32, #tpu.memory_space<vmem>>, vector<1x4x32xf32>,
      %c48_599 = arith.constant 48 : index
      %c0_600 = arith.constant 0 : index
      %524 = tpu.strided_load %arg16[%c48_599, %c0_600] {strides = array<i32: 2, 1>} : memref<64x32xf32, #tpu.memory_space<vmem>>, vector<4x32xf32>
      %c49_601 = arith.constant 49 : index
      %c0_602 = arith.constant 0 : index
      %525 = tpu.strided_load %arg16[%c49_601, %c0_602] {strides = array<i32: 2, 1>} : memref<64x32xf32, #tpu.memory_space<vmem>>, vector<4x32xf32>
      %c56_603 = arith.constant 56 : index
      %c0_604 = arith.constant 0 : index
      %526 = tpu.strided_load %arg16[%c56_603, %c0_604] {strides = array<i32: 2, 1>} : memref<64x32xf32, #tpu.memory_space<vmem>>, vector<4x32xf32>
      %c57_605 = arith.constant 57 : index
      %c0_606 = arith.constant 0 : index
      %527 = tpu.strided_load %arg16[%c57_605, %c0_606] {strides = array<i32: 2, 1>} : memref<64x32xf32, #tpu.memory_space<vmem>>, vector<4x32xf32>
      %528 = arith.maximumf %524, %525 : vector<4x32xf32>
      %529 = arith.maximumf %526, %527 : vector<4x32xf32>
      %530 = arith.maximumf %528, %529 : vector<4x32xf32>
      %531 = vector.broadcast %472 : vector<1x32xf32> to vector<4x32xf32>
      %532 = arith.addf %530, %531 : vector<4x32xf32>
      %cst_607 = arith.constant 0.000000e+00 : f32
      %533 = vector.broadcast %cst_607 : f32 to vector<4x32xf32>
      %534 = arith.cmpf ogt, %532, %533 : vector<4x32xf32>
      %cst_608 = arith.constant 1.000000e-01 : f32
      %535 = vector.broadcast %cst_608 : f32 to vector<4x32xf32>
      %536 = arith.mulf %535, %532 : vector<4x32xf32>
      %537 = arith.select %534, %532, %536 : vector<4x32xi1>, vector<4x32xf32>
      %c3_609 = arith.constant 3 : index
      %c0_610 = arith.constant 0 : index
      %c0_611 = arith.constant 0 : index
      %538 = vector.load %arg17[%c3_609, %c0_610, %c0_611] : memref<4x4x32xf32, #tpu.memory_space<vmem>>, vector<1x4x32xf32>
      %539 = vector.shape_cast %538 : vector<1x4x32xf32> to vector<4x32xf32>
      %540 = vector.shape_cast %537 : vector<4x32xf32> to vector<1x4x32xf32>
      tpu.vector_store %arg17[%c3_609, %c0_610, %c0_611], %540 {strides = array<i32>} : memref<4x4x32xf32, #tpu.memory_space<vmem>>, vector<1x4x32xf32>,
      %c0_612 = arith.constant 0 : index
      %c0_613 = arith.constant 0 : index
      %c0_614 = arith.constant 0 : index
      %541 = vector.load %arg17[%c0_612, %c0_613, %c0_614] : memref<4x4x32xf32, #tpu.memory_space<vmem>>, vector<1x4x32xf32>
      %542 = vector.shape_cast %541 : vector<1x4x32xf32> to vector<4x32xf32>
      %543 = vector.extract_strided_slice %542 {offsets = [0, 0], sizes = [3, 32], strides = [1, 1]} : vector<4x32xf32> to vector<3x32xf32>
      %544 = vector.extract_strided_slice %542 {offsets = [1, 0], sizes = [3, 32], strides = [1, 1]} : vector<4x32xf32> to vector<3x32xf32>
      %c5_615 = arith.constant 5 : index
      %c0_616 = arith.constant 0 : index
      %545 = vector.load %arg18[%c5_615, %c0_616] : memref<16x384xf32, #tpu.memory_space<vmem>>, vector<3x32xf32>
      tpu.vector_store %arg18[%c5_615, %c0_616], %543 {strides = array<i32>} : memref<16x384xf32, #tpu.memory_space<vmem>>, vector<3x32xf32>,
      %c4_617 = arith.constant 4 : index
      %c32_618 = arith.constant 32 : index
      %546 = vector.load %arg18[%c4_617, %c32_618] : memref<16x384xf32, #tpu.memory_space<vmem>>, vector<4x32xf32>
      tpu.vector_store %arg18[%c4_617, %c32_618], %542 {strides = array<i32>} : memref<16x384xf32, #tpu.memory_space<vmem>>, vector<4x32xf32>,
      %c4_619 = arith.constant 4 : index
      %c64_620 = arith.constant 64 : index
      %547 = vector.load %arg18[%c4_619, %c64_620] : memref<16x384xf32, #tpu.memory_space<vmem>>, vector<3x32xf32>
      tpu.vector_store %arg18[%c4_619, %c64_620], %544 {strides = array<i32>} : memref<16x384xf32, #tpu.memory_space<vmem>>, vector<3x32xf32>,
      %c1_621 = arith.constant 1 : index
      %c96_622 = arith.constant 96 : index
      %548 = vector.load %arg18[%c1_621, %c96_622] : memref<16x384xf32, #tpu.memory_space<vmem>>, vector<3x32xf32>
      tpu.vector_store %arg18[%c1_621, %c96_622], %543 {strides = array<i32>} : memref<16x384xf32, #tpu.memory_space<vmem>>, vector<3x32xf32>,
      %c0_623 = arith.constant 0 : index
      %c128_624 = arith.constant 128 : index
      %549 = vector.load %arg18[%c0_623, %c128_624] : memref<16x384xf32, #tpu.memory_space<vmem>>, vector<4x32xf32>
      tpu.vector_store %arg18[%c0_623, %c128_624], %542 {strides = array<i32>} : memref<16x384xf32, #tpu.memory_space<vmem>>, vector<4x32xf32>,
      %c0_625 = arith.constant 0 : index
      %c160_626 = arith.constant 160 : index
      %550 = vector.load %arg18[%c0_625, %c160_626] : memref<16x384xf32, #tpu.memory_space<vmem>>, vector<3x32xf32>
      tpu.vector_store %arg18[%c0_625, %c160_626], %544 {strides = array<i32>} : memref<16x384xf32, #tpu.memory_space<vmem>>, vector<3x32xf32>,
      %c1_627 = arith.constant 1 : index
      %c0_628 = arith.constant 0 : index
      %c0_629 = arith.constant 0 : index
      %551 = vector.load %arg17[%c1_627, %c0_628, %c0_629] : memref<4x4x32xf32, #tpu.memory_space<vmem>>, vector<1x4x32xf32>
      %552 = vector.shape_cast %551 : vector<1x4x32xf32> to vector<4x32xf32>
      %553 = vector.extract_strided_slice %552 {offsets = [0, 0], sizes = [3, 32], strides = [1, 1]} : vector<4x32xf32> to vector<3x32xf32>
      %554 = vector.extract_strided_slice %552 {offsets = [1, 0], sizes = [3, 32], strides = [1, 1]} : vector<4x32xf32> to vector<3x32xf32>
      %c9_630 = arith.constant 9 : index
      %c0_631 = arith.constant 0 : index
      %555 = vector.load %arg18[%c9_630, %c0_631] : memref<16x384xf32, #tpu.memory_space<vmem>>, vector<3x32xf32>
      tpu.vector_store %arg18[%c9_630, %c0_631], %553 {strides = array<i32>} : memref<16x384xf32, #tpu.memory_space<vmem>>, vector<3x32xf32>,
      %c8_632 = arith.constant 8 : index
      %c32_633 = arith.constant 32 : index
      %556 = vector.load %arg18[%c8_632, %c32_633] : memref<16x384xf32, #tpu.memory_space<vmem>>, vector<4x32xf32>
      tpu.vector_store %arg18[%c8_632, %c32_633], %552 {strides = array<i32>} : memref<16x384xf32, #tpu.memory_space<vmem>>, vector<4x32xf32>,
      %c8_634 = arith.constant 8 : index
      %c64_635 = arith.constant 64 : index
      %557 = vector.load %arg18[%c8_634, %c64_635] : memref<16x384xf32, #tpu.memory_space<vmem>>, vector<3x32xf32>
      tpu.vector_store %arg18[%c8_634, %c64_635], %554 {strides = array<i32>} : memref<16x384xf32, #tpu.memory_space<vmem>>, vector<3x32xf32>,
      %c5_636 = arith.constant 5 : index
      %c96_637 = arith.constant 96 : index
      %558 = vector.load %arg18[%c5_636, %c96_637] : memref<16x384xf32, #tpu.memory_space<vmem>>, vector<3x32xf32>
      tpu.vector_store %arg18[%c5_636, %c96_637], %553 {strides = array<i32>} : memref<16x384xf32, #tpu.memory_space<vmem>>, vector<3x32xf32>,
      %c4_638 = arith.constant 4 : index
      %c128_639 = arith.constant 128 : index
      %559 = vector.load %arg18[%c4_638, %c128_639] : memref<16x384xf32, #tpu.memory_space<vmem>>, vector<4x32xf32>
      tpu.vector_store %arg18[%c4_638, %c128_639], %552 {strides = array<i32>} : memref<16x384xf32, #tpu.memory_space<vmem>>, vector<4x32xf32>,
      %c4_640 = arith.constant 4 : index
      %c160_641 = arith.constant 160 : index
      %560 = vector.load %arg18[%c4_640, %c160_641] : memref<16x384xf32, #tpu.memory_space<vmem>>, vector<3x32xf32>
      tpu.vector_store %arg18[%c4_640, %c160_641], %554 {strides = array<i32>} : memref<16x384xf32, #tpu.memory_space<vmem>>, vector<3x32xf32>,
      %c1_642 = arith.constant 1 : index
      %c192_643 = arith.constant 192 : index
      %561 = vector.load %arg18[%c1_642, %c192_643] : memref<16x384xf32, #tpu.memory_space<vmem>>, vector<3x32xf32>
      tpu.vector_store %arg18[%c1_642, %c192_643], %553 {strides = array<i32>} : memref<16x384xf32, #tpu.memory_space<vmem>>, vector<3x32xf32>,
      %c0_644 = arith.constant 0 : index
      %c224_645 = arith.constant 224 : index
      %562 = vector.load %arg18[%c0_644, %c224_645] : memref<16x384xf32, #tpu.memory_space<vmem>>, vector<4x32xf32>
      tpu.vector_store %arg18[%c0_644, %c224_645], %552 {strides = array<i32>} : memref<16x384xf32, #tpu.memory_space<vmem>>, vector<4x32xf32>,
      %c0_646 = arith.constant 0 : index
      %c256 = arith.constant 256 : index
      %563 = vector.load %arg18[%c0_646, %c256] : memref<16x384xf32, #tpu.memory_space<vmem>>, vector<3x32xf32>
      tpu.vector_store %arg18[%c0_646, %c256], %554 {strides = array<i32>} : memref<16x384xf32, #tpu.memory_space<vmem>>, vector<3x32xf32>,
      %c2_647 = arith.constant 2 : index
      %c0_648 = arith.constant 0 : index
      %c0_649 = arith.constant 0 : index
      %564 = vector.load %arg17[%c2_647, %c0_648, %c0_649] : memref<4x4x32xf32, #tpu.memory_space<vmem>>, vector<1x4x32xf32>
      %565 = vector.shape_cast %564 : vector<1x4x32xf32> to vector<4x32xf32>
      %566 = vector.extract_strided_slice %565 {offsets = [0, 0], sizes = [3, 32], strides = [1, 1]} : vector<4x32xf32> to vector<3x32xf32>
      %567 = vector.extract_strided_slice %565 {offsets = [1, 0], sizes = [3, 32], strides = [1, 1]} : vector<4x32xf32> to vector<3x32xf32>
      %c13_650 = arith.constant 13 : index
      %c0_651 = arith.constant 0 : index
      %568 = vector.load %arg18[%c13_650, %c0_651] : memref<16x384xf32, #tpu.memory_space<vmem>>, vector<3x32xf32>
      tpu.vector_store %arg18[%c13_650, %c0_651], %566 {strides = array<i32>} : memref<16x384xf32, #tpu.memory_space<vmem>>, vector<3x32xf32>,
      %c12_652 = arith.constant 12 : index
      %c32_653 = arith.constant 32 : index
      %569 = vector.load %arg18[%c12_652, %c32_653] : memref<16x384xf32, #tpu.memory_space<vmem>>, vector<4x32xf32>
      tpu.vector_store %arg18[%c12_652, %c32_653], %565 {strides = array<i32>} : memref<16x384xf32, #tpu.memory_space<vmem>>, vector<4x32xf32>,
      %c12_654 = arith.constant 12 : index
      %c64_655 = arith.constant 64 : index
      %570 = vector.load %arg18[%c12_654, %c64_655] : memref<16x384xf32, #tpu.memory_space<vmem>>, vector<3x32xf32>
      tpu.vector_store %arg18[%c12_654, %c64_655], %567 {strides = array<i32>} : memref<16x384xf32, #tpu.memory_space<vmem>>, vector<3x32xf32>,
      %c9_656 = arith.constant 9 : index
      %c96_657 = arith.constant 96 : index
      %571 = vector.load %arg18[%c9_656, %c96_657] : memref<16x384xf32, #tpu.memory_space<vmem>>, vector<3x32xf32>
      tpu.vector_store %arg18[%c9_656, %c96_657], %566 {strides = array<i32>} : memref<16x384xf32, #tpu.memory_space<vmem>>, vector<3x32xf32>,
      %c8_658 = arith.constant 8 : index
      %c128_659 = arith.constant 128 : index
      %572 = vector.load %arg18[%c8_658, %c128_659] : memref<16x384xf32, #tpu.memory_space<vmem>>, vector<4x32xf32>
      tpu.vector_store %arg18[%c8_658, %c128_659], %565 {strides = array<i32>} : memref<16x384xf32, #tpu.memory_space<vmem>>, vector<4x32xf32>,
      %c8_660 = arith.constant 8 : index
      %c160_661 = arith.constant 160 : index
      %573 = vector.load %arg18[%c8_660, %c160_661] : memref<16x384xf32, #tpu.memory_space<vmem>>, vector<3x32xf32>
      tpu.vector_store %arg18[%c8_660, %c160_661], %567 {strides = array<i32>} : memref<16x384xf32, #tpu.memory_space<vmem>>, vector<3x32xf32>,
      %c5_662 = arith.constant 5 : index
      %c192_663 = arith.constant 192 : index
      %574 = vector.load %arg18[%c5_662, %c192_663] : memref<16x384xf32, #tpu.memory_space<vmem>>, vector<3x32xf32>
      tpu.vector_store %arg18[%c5_662, %c192_663], %566 {strides = array<i32>} : memref<16x384xf32, #tpu.memory_space<vmem>>, vector<3x32xf32>,
      %c4_664 = arith.constant 4 : index
      %c224_665 = arith.constant 224 : index
      %575 = vector.load %arg18[%c4_664, %c224_665] : memref<16x384xf32, #tpu.memory_space<vmem>>, vector<4x32xf32>
      tpu.vector_store %arg18[%c4_664, %c224_665], %565 {strides = array<i32>} : memref<16x384xf32, #tpu.memory_space<vmem>>, vector<4x32xf32>,
      %c4_666 = arith.constant 4 : index
      %c256_667 = arith.constant 256 : index
      %576 = vector.load %arg18[%c4_666, %c256_667] : memref<16x384xf32, #tpu.memory_space<vmem>>, vector<3x32xf32>
      tpu.vector_store %arg18[%c4_666, %c256_667], %567 {strides = array<i32>} : memref<16x384xf32, #tpu.memory_space<vmem>>, vector<3x32xf32>,
      %c3_668 = arith.constant 3 : index
      %c0_669 = arith.constant 0 : index
      %c0_670 = arith.constant 0 : index
      %577 = vector.load %arg17[%c3_668, %c0_669, %c0_670] : memref<4x4x32xf32, #tpu.memory_space<vmem>>, vector<1x4x32xf32>
      %578 = vector.shape_cast %577 : vector<1x4x32xf32> to vector<4x32xf32>
      %579 = vector.extract_strided_slice %578 {offsets = [0, 0], sizes = [3, 32], strides = [1, 1]} : vector<4x32xf32> to vector<3x32xf32>
      %580 = vector.extract_strided_slice %578 {offsets = [1, 0], sizes = [3, 32], strides = [1, 1]} : vector<4x32xf32> to vector<3x32xf32>
      %c13_671 = arith.constant 13 : index
      %c96_672 = arith.constant 96 : index
      %581 = vector.load %arg18[%c13_671, %c96_672] : memref<16x384xf32, #tpu.memory_space<vmem>>, vector<3x32xf32>
      tpu.vector_store %arg18[%c13_671, %c96_672], %579 {strides = array<i32>} : memref<16x384xf32, #tpu.memory_space<vmem>>, vector<3x32xf32>,
      %c12_673 = arith.constant 12 : index
      %c128_674 = arith.constant 128 : index
      %582 = vector.load %arg18[%c12_673, %c128_674] : memref<16x384xf32, #tpu.memory_space<vmem>>, vector<4x32xf32>
      tpu.vector_store %arg18[%c12_673, %c128_674], %578 {strides = array<i32>} : memref<16x384xf32, #tpu.memory_space<vmem>>, vector<4x32xf32>,
      %c12_675 = arith.constant 12 : index
      %c160_676 = arith.constant 160 : index
      %583 = vector.load %arg18[%c12_675, %c160_676] : memref<16x384xf32, #tpu.memory_space<vmem>>, vector<3x32xf32>
      tpu.vector_store %arg18[%c12_675, %c160_676], %580 {strides = array<i32>} : memref<16x384xf32, #tpu.memory_space<vmem>>, vector<3x32xf32>,
      %c9_677 = arith.constant 9 : index
      %c192_678 = arith.constant 192 : index
      %584 = vector.load %arg18[%c9_677, %c192_678] : memref<16x384xf32, #tpu.memory_space<vmem>>, vector<3x32xf32>
      tpu.vector_store %arg18[%c9_677, %c192_678], %579 {strides = array<i32>} : memref<16x384xf32, #tpu.memory_space<vmem>>, vector<3x32xf32>,
      %c8_679 = arith.constant 8 : index
      %c224_680 = arith.constant 224 : index
      %585 = vector.load %arg18[%c8_679, %c224_680] : memref<16x384xf32, #tpu.memory_space<vmem>>, vector<4x32xf32>
      tpu.vector_store %arg18[%c8_679, %c224_680], %578 {strides = array<i32>} : memref<16x384xf32, #tpu.memory_space<vmem>>, vector<4x32xf32>,
      %c8_681 = arith.constant 8 : index
      %c256_682 = arith.constant 256 : index
      %586 = vector.load %arg18[%c8_681, %c256_682] : memref<16x384xf32, #tpu.memory_space<vmem>>, vector<3x32xf32>
      tpu.vector_store %arg18[%c8_681, %c256_682], %580 {strides = array<i32>} : memref<16x384xf32, #tpu.memory_space<vmem>>, vector<3x32xf32>,
      %c0_683 = arith.constant 0 : index
      %c0_684 = arith.constant 0 : index
      %587 = vector.load %arg18[%c0_683, %c0_684] : memref<16x384xf32, #tpu.memory_space<vmem>>, vector<16x384xf32>
      %588 = arith.truncf %587 : vector<16x384xf32> to vector<16x384xbf16>
      %c0_685 = arith.constant 0 : index
      %c0_686 = arith.constant 0 : index
      %589 = vector.load %arg6[%c0_685, %c0_686] : memref<384x64xbf16, #tpu.memory_space<vmem>>, vector<384x64xbf16>
      %cst_687 = arith.constant dense<0.000000e+00> : vector<16x64xf32>
      %590 = tpu.matmul %588, %589, %cst_687 {dimension_numbers = #tpu.dot_dimension_numbers<[1], [0], [0], [1], [0, 0, 1, 1], [], []>} : vector<16x384xbf16>, vector<384x64xbf16>, vector<16x64xf32> -> vector<16x64xf32>
      %c0_688 = arith.constant 0 : index
      %c0_689 = arith.constant 0 : index
      %591 = vector.load %arg19[%c0_688, %c0_689] : memref<16x64xf32, #tpu.memory_space<vmem>>, vector<16x64xf32>
      tpu.vector_store %arg19[%c0_688, %c0_689], %590 {strides = array<i32>} : memref<16x64xf32, #tpu.memory_space<vmem>>, vector<16x64xf32>,
      %c0_690 = arith.constant 0 : index
      %c0_691 = arith.constant 0 : index
      %592 = vector.load %arg7[%c0_690, %c0_691] : memref<1x64xf32, #tpu.memory_space<vmem>>, vector<1x64xf32>
      %c0_692 = arith.constant 0 : index
      %c0_693 = arith.constant 0 : index
      %593 = tpu.strided_load %arg19[%c0_692, %c0_693] {strides = array<i32: 2, 1>} : memref<16x64xf32, #tpu.memory_space<vmem>>, vector<2x64xf32>
      %c1_694 = arith.constant 1 : index
      %c0_695 = arith.constant 0 : index
      %594 = tpu.strided_load %arg19[%c1_694, %c0_695] {strides = array<i32: 2, 1>} : memref<16x64xf32, #tpu.memory_space<vmem>>, vector<2x64xf32>
      %c4_696 = arith.constant 4 : index
      %c0_697 = arith.constant 0 : index
      %595 = tpu.strided_load %arg19[%c4_696, %c0_697] {strides = array<i32: 2, 1>} : memref<16x64xf32, #tpu.memory_space<vmem>>, vector<2x64xf32>
      %c5_698 = arith.constant 5 : index
      %c0_699 = arith.constant 0 : index
      %596 = tpu.strided_load %arg19[%c5_698, %c0_699] {strides = array<i32: 2, 1>} : memref<16x64xf32, #tpu.memory_space<vmem>>, vector<2x64xf32>
      %597 = arith.maximumf %593, %594 : vector<2x64xf32>
      %598 = arith.maximumf %595, %596 : vector<2x64xf32>
      %599 = arith.maximumf %597, %598 : vector<2x64xf32>
      %600 = vector.broadcast %592 : vector<1x64xf32> to vector<2x64xf32>
      %601 = arith.addf %599, %600 : vector<2x64xf32>
      %cst_700 = arith.constant 0.000000e+00 : f32
      %602 = vector.broadcast %cst_700 : f32 to vector<2x64xf32>
      %603 = arith.cmpf ogt, %601, %602 : vector<2x64xf32>
      %cst_701 = arith.constant 1.000000e-01 : f32
      %604 = vector.broadcast %cst_701 : f32 to vector<2x64xf32>
      %605 = arith.mulf %604, %601 : vector<2x64xf32>
      %606 = arith.select %603, %601, %605 : vector<2x64xi1>, vector<2x64xf32>
      %607 = arith.index_cast %arg22 : i32 to index
      %c0_702 = arith.constant 0 : index
      %c0_703 = arith.constant 0 : index
      %c0_704 = arith.constant 0 : index
      %608 = vector.load %arg10[%607, %c0_702, %c0_703, %c0_704] : memref<4x2x2x64xf32, #tpu.memory_space<vmem>>, vector<1x1x2x64xf32>
      %609 = vector.shape_cast %608 : vector<1x1x2x64xf32> to vector<2x64xf32>
      %610 = vector.shape_cast %606 : vector<2x64xf32> to vector<1x1x2x64xf32>
      tpu.vector_store %arg10[%607, %c0_702, %c0_703, %c0_704], %610 {strides = array<i32>} : memref<4x2x2x64xf32, #tpu.memory_space<vmem>>, vector<1x1x2x64xf32>,
      %c8_705 = arith.constant 8 : index
      %c0_706 = arith.constant 0 : index
      %611 = tpu.strided_load %arg19[%c8_705, %c0_706] {strides = array<i32: 2, 1>} : memref<16x64xf32, #tpu.memory_space<vmem>>, vector<2x64xf32>
      %c9_707 = arith.constant 9 : index
      %c0_708 = arith.constant 0 : index
      %612 = tpu.strided_load %arg19[%c9_707, %c0_708] {strides = array<i32: 2, 1>} : memref<16x64xf32, #tpu.memory_space<vmem>>, vector<2x64xf32>
      %c12_709 = arith.constant 12 : index
      %c0_710 = arith.constant 0 : index
      %613 = tpu.strided_load %arg19[%c12_709, %c0_710] {strides = array<i32: 2, 1>} : memref<16x64xf32, #tpu.memory_space<vmem>>, vector<2x64xf32>
      %c13_711 = arith.constant 13 : index
      %c0_712 = arith.constant 0 : index
      %614 = tpu.strided_load %arg19[%c13_711, %c0_712] {strides = array<i32: 2, 1>} : memref<16x64xf32, #tpu.memory_space<vmem>>, vector<2x64xf32>
      %615 = arith.maximumf %611, %612 : vector<2x64xf32>
      %616 = arith.maximumf %613, %614 : vector<2x64xf32>
      %617 = arith.maximumf %615, %616 : vector<2x64xf32>
      %618 = vector.broadcast %592 : vector<1x64xf32> to vector<2x64xf32>
      %619 = arith.addf %617, %618 : vector<2x64xf32>
      %cst_713 = arith.constant 0.000000e+00 : f32
      %620 = vector.broadcast %cst_713 : f32 to vector<2x64xf32>
      %621 = arith.cmpf ogt, %619, %620 : vector<2x64xf32>
      %cst_714 = arith.constant 1.000000e-01 : f32
      %622 = vector.broadcast %cst_714 : f32 to vector<2x64xf32>
      %623 = arith.mulf %622, %619 : vector<2x64xf32>
      %624 = arith.select %621, %619, %623 : vector<2x64xi1>, vector<2x64xf32>
      %625 = arith.index_cast %arg22 : i32 to index
      %c1_715 = arith.constant 1 : index
      %c0_716 = arith.constant 0 : index
      %c0_717 = arith.constant 0 : index
      %626 = vector.load %arg10[%625, %c1_715, %c0_716, %c0_717] : memref<4x2x2x64xf32, #tpu.memory_space<vmem>>, vector<1x1x2x64xf32>
      %627 = vector.shape_cast %626 : vector<1x1x2x64xf32> to vector<2x64xf32>
      %628 = vector.shape_cast %624 : vector<2x64xf32> to vector<1x1x2x64xf32>
      tpu.vector_store %arg10[%625, %c1_715, %c0_716, %c0_717], %628 {strides = array<i32>} : memref<4x2x2x64xf32, #tpu.memory_space<vmem>>, vector<1x1x2x64xf32>,
      %629 = arith.index_cast %arg22 : i32 to index
      %c0_718 = arith.constant 0 : index
      %c0_719 = arith.constant 0 : index
      %c0_720 = arith.constant 0 : index
      %630 = vector.load %arg10[%629, %c0_718, %c0_719, %c0_720] : memref<4x2x2x64xf32, #tpu.memory_space<vmem>>, vector<1x1x2x64xf32>
      %631 = vector.shape_cast %630 : vector<1x1x2x64xf32> to vector<2x64xf32>
      %632 = vector.extract_strided_slice %631 {offsets = [0, 0], sizes = [1, 64], strides = [1, 1]} : vector<2x64xf32> to vector<1x64xf32>
      %633 = vector.extract_strided_slice %631 {offsets = [1, 0], sizes = [1, 64], strides = [1, 1]} : vector<2x64xf32> to vector<1x64xf32>
      %c3_721 = arith.constant 3 : index
      %c0_722 = arith.constant 0 : index
      %634 = vector.load %arg20[%c3_721, %c0_722] : memref<4x640xf32, #tpu.memory_space<vmem>>, vector<1x64xf32>
      tpu.vector_store %arg20[%c3_721, %c0_722], %632 {strides = array<i32>} : memref<4x640xf32, #tpu.memory_space<vmem>>, vector<1x64xf32>,
      %c2_723 = arith.constant 2 : index
      %c64_724 = arith.constant 64 : index
      %635 = vector.load %arg20[%c2_723, %c64_724] : memref<4x640xf32, #tpu.memory_space<vmem>>, vector<2x64xf32>
      tpu.vector_store %arg20[%c2_723, %c64_724], %631 {strides = array<i32>} : memref<4x640xf32, #tpu.memory_space<vmem>>, vector<2x64xf32>,
      %c2_725 = arith.constant 2 : index
      %c128_726 = arith.constant 128 : index
      %636 = vector.load %arg20[%c2_725, %c128_726] : memref<4x640xf32, #tpu.memory_space<vmem>>, vector<1x64xf32>
      tpu.vector_store %arg20[%c2_725, %c128_726], %633 {strides = array<i32>} : memref<4x640xf32, #tpu.memory_space<vmem>>, vector<1x64xf32>,
      %c1_727 = arith.constant 1 : index
      %c192_728 = arith.constant 192 : index
      %637 = vector.load %arg20[%c1_727, %c192_728] : memref<4x640xf32, #tpu.memory_space<vmem>>, vector<1x64xf32>
      tpu.vector_store %arg20[%c1_727, %c192_728], %632 {strides = array<i32>} : memref<4x640xf32, #tpu.memory_space<vmem>>, vector<1x64xf32>,
      %c0_729 = arith.constant 0 : index
      %c256_730 = arith.constant 256 : index
      %638 = vector.load %arg20[%c0_729, %c256_730] : memref<4x640xf32, #tpu.memory_space<vmem>>, vector<2x64xf32>
      tpu.vector_store %arg20[%c0_729, %c256_730], %631 {strides = array<i32>} : memref<4x640xf32, #tpu.memory_space<vmem>>, vector<2x64xf32>,
      %c0_731 = arith.constant 0 : index
      %c320 = arith.constant 320 : index
      %639 = vector.load %arg20[%c0_731, %c320] : memref<4x640xf32, #tpu.memory_space<vmem>>, vector<1x64xf32>
      tpu.vector_store %arg20[%c0_731, %c320], %633 {strides = array<i32>} : memref<4x640xf32, #tpu.memory_space<vmem>>, vector<1x64xf32>,
      %640 = arith.index_cast %arg22 : i32 to index
      %c1_732 = arith.constant 1 : index
      %c0_733 = arith.constant 0 : index
      %c0_734 = arith.constant 0 : index
      %641 = vector.load %arg10[%640, %c1_732, %c0_733, %c0_734] : memref<4x2x2x64xf32, #tpu.memory_space<vmem>>, vector<1x1x2x64xf32>
      %642 = vector.shape_cast %641 : vector<1x1x2x64xf32> to vector<2x64xf32>
      %643 = vector.extract_strided_slice %642 {offsets = [0, 0], sizes = [1, 64], strides = [1, 1]} : vector<2x64xf32> to vector<1x64xf32>
      %644 = vector.extract_strided_slice %642 {offsets = [1, 0], sizes = [1, 64], strides = [1, 1]} : vector<2x64xf32> to vector<1x64xf32>
      %c3_735 = arith.constant 3 : index
      %c192_736 = arith.constant 192 : index
      %645 = vector.load %arg20[%c3_735, %c192_736] : memref<4x640xf32, #tpu.memory_space<vmem>>, vector<1x64xf32>
      tpu.vector_store %arg20[%c3_735, %c192_736], %643 {strides = array<i32>} : memref<4x640xf32, #tpu.memory_space<vmem>>, vector<1x64xf32>,
      %c2_737 = arith.constant 2 : index
      %c256_738 = arith.constant 256 : index
      %646 = vector.load %arg20[%c2_737, %c256_738] : memref<4x640xf32, #tpu.memory_space<vmem>>, vector<2x64xf32>
      tpu.vector_store %arg20[%c2_737, %c256_738], %642 {strides = array<i32>} : memref<4x640xf32, #tpu.memory_space<vmem>>, vector<2x64xf32>,
      %c2_739 = arith.constant 2 : index
      %c320_740 = arith.constant 320 : index
      %647 = vector.load %arg20[%c2_739, %c320_740] : memref<4x640xf32, #tpu.memory_space<vmem>>, vector<1x64xf32>
      tpu.vector_store %arg20[%c2_739, %c320_740], %644 {strides = array<i32>} : memref<4x640xf32, #tpu.memory_space<vmem>>, vector<1x64xf32>,
      %c1_741 = arith.constant 1 : index
      %c384 = arith.constant 384 : index
      %648 = vector.load %arg20[%c1_741, %c384] : memref<4x640xf32, #tpu.memory_space<vmem>>, vector<1x64xf32>
      tpu.vector_store %arg20[%c1_741, %c384], %643 {strides = array<i32>} : memref<4x640xf32, #tpu.memory_space<vmem>>, vector<1x64xf32>,
      %c0_742 = arith.constant 0 : index
      %c448 = arith.constant 448 : index
      %649 = vector.load %arg20[%c0_742, %c448] : memref<4x640xf32, #tpu.memory_space<vmem>>, vector<2x64xf32>
      tpu.vector_store %arg20[%c0_742, %c448], %642 {strides = array<i32>} : memref<4x640xf32, #tpu.memory_space<vmem>>, vector<2x64xf32>,
      %c0_743 = arith.constant 0 : index
      %c512 = arith.constant 512 : index
      %650 = vector.load %arg20[%c0_743, %c512] : memref<4x640xf32, #tpu.memory_space<vmem>>, vector<1x64xf32>
      tpu.vector_store %arg20[%c0_743, %c512], %644 {strides = array<i32>} : memref<4x640xf32, #tpu.memory_space<vmem>>, vector<1x64xf32>,
      %c0_744 = arith.constant 0 : index
      %c0_745 = arith.constant 0 : index
      %651 = vector.load %arg20[%c0_744, %c0_745] : memref<4x640xf32, #tpu.memory_space<vmem>>, vector<4x640xf32>
      %652 = arith.truncf %651 : vector<4x640xf32> to vector<4x640xbf16>
      %c0_746 = arith.constant 0 : index
      %c0_747 = arith.constant 0 : index
      %653 = vector.load %arg8[%c0_746, %c0_747] : memref<640x128xbf16, #tpu.memory_space<vmem>>, vector<640x128xbf16>
      %cst_748 = arith.constant dense<0.000000e+00> : vector<4x128xf32>
      %654 = tpu.matmul %652, %653, %cst_748 {dimension_numbers = #tpu.dot_dimension_numbers<[1], [0], [0], [1], [0, 0, 1, 1], [], []>} : vector<4x640xbf16>, vector<640x128xbf16>, vector<4x128xf32> -> vector<4x128xf32>
      %c0_749 = arith.constant 0 : index
      %c0_750 = arith.constant 0 : index
      %655 = vector.load %arg21[%c0_749, %c0_750] : memref<4x128xf32, #tpu.memory_space<vmem>>, vector<4x128xf32>
      tpu.vector_store %arg21[%c0_749, %c0_750], %654 {strides = array<i32>} : memref<4x128xf32, #tpu.memory_space<vmem>>, vector<4x128xf32>,
      %c0_751 = arith.constant 0 : index
      %c0_752 = arith.constant 0 : index
      %656 = vector.load %arg9[%c0_751, %c0_752] : memref<1x128xf32, #tpu.memory_space<vmem>>, vector<1x128xf32>
      %c0_753 = arith.constant 0 : index
      %c0_754 = arith.constant 0 : index
      %657 = tpu.strided_load %arg21[%c0_753, %c0_754] {strides = array<i32: 2, 1>} : memref<4x128xf32, #tpu.memory_space<vmem>>, vector<1x128xf32>
      %c1_755 = arith.constant 1 : index
      %c0_756 = arith.constant 0 : index
      %658 = tpu.strided_load %arg21[%c1_755, %c0_756] {strides = array<i32: 2, 1>} : memref<4x128xf32, #tpu.memory_space<vmem>>, vector<1x128xf32>
      %c2_757 = arith.constant 2 : index
      %c0_758 = arith.constant 0 : index
      %659 = tpu.strided_load %arg21[%c2_757, %c0_758] {strides = array<i32: 2, 1>} : memref<4x128xf32, #tpu.memory_space<vmem>>, vector<1x128xf32>
      %c3_759 = arith.constant 3 : index
      %c0_760 = arith.constant 0 : index
      %660 = tpu.strided_load %arg21[%c3_759, %c0_760] {strides = array<i32: 2, 1>} : memref<4x128xf32, #tpu.memory_space<vmem>>, vector<1x128xf32>
      %661 = arith.maximumf %657, %658 : vector<1x128xf32>
      %662 = arith.maximumf %659, %660 : vector<1x128xf32>
      %663 = arith.maximumf %661, %662 : vector<1x128xf32>
      %664 = arith.addf %663, %656 : vector<1x128xf32>
      %665 = arith.index_cast %arg22 : i32 to index
      %c0_761 = arith.constant 0 : index
      %c0_762 = arith.constant 0 : index
      %c0_763 = arith.constant 0 : index
      %666 = vector.load %arg11[%665, %c0_761, %c0_762, %c0_763] : memref<4x1x1x128xf32, #tpu.memory_space<vmem>>, vector<1x1x1x128xf32>
      %667 = vector.shape_cast %666 : vector<1x1x1x128xf32> to vector<1x128xf32>
      %668 = vector.shape_cast %664 : vector<1x128xf32> to vector<1x1x1x128xf32>
      tpu.vector_store %arg11[%665, %c0_761, %c0_762, %c0_763], %668 {strides = array<i32>} : memref<4x1x1x128xf32, #tpu.memory_space<vmem>>, vector<1x1x1x128xf32>,
    }
    %c4_i32_10 = arith.constant 4 : i32
    return
  }
  func.func @transform_0(%arg0: i32) -> (i32, i32, i32, i32) {
    %c0_i32 = arith.constant 0 : i32
    %c0_i32_0 = arith.constant 0 : i32
    %c0_i32_1 = arith.constant 0 : i32
    %c0_i32_2 = arith.constant 0 : i32
    return %arg0, %c0_i32, %c0_i32_0, %c0_i32_1 : i32, i32, i32, i32
  }
  func.func @transform_1(%arg0: i32) -> (i32, i32) {
    %c0_i32 = arith.constant 0 : i32
    %c0_i32_0 = arith.constant 0 : i32
    %c0_i32_1 = arith.constant 0 : i32
    return %c0_i32, %c0_i32_0 : i32, i32
  }
  func.func @transform_2(%arg0: i32) -> (i32, i32) {
    %c0_i32 = arith.constant 0 : i32
    %c0_i32_0 = arith.constant 0 : i32
    %c0_i32_1 = arith.constant 0 : i32
    return %c0_i32, %c0_i32_0 : i32, i32
  }
  func.func @transform_3(%arg0: i32) -> (i32, i32) {
    %c0_i32 = arith.constant 0 : i32
    %c0_i32_0 = arith.constant 0 : i32
    %c0_i32_1 = arith.constant 0 : i32
    return %c0_i32, %c0_i32_0 : i32, i32
  }
  func.func @transform_4(%arg0: i32) -> (i32, i32) {
    %c0_i32 = arith.constant 0 : i32
    %c0_i32_0 = arith.constant 0 : i32
    %c0_i32_1 = arith.constant 0 : i32
    return %c0_i32, %c0_i32_0 : i32, i32
  }
  func.func @transform_5(%arg0: i32) -> (i32, i32) {
    %c0_i32 = arith.constant 0 : i32
    %c0_i32_0 = arith.constant 0 : i32
    %c0_i32_1 = arith.constant 0 : i32
    return %c0_i32, %c0_i32_0 : i32, i32
  }
  func.func @transform_6(%arg0: i32) -> (i32, i32) {
    %c0_i32 = arith.constant 0 : i32
    %c0_i32_0 = arith.constant 0 : i32
    %c0_i32_1 = arith.constant 0 : i32
    return %c0_i32, %c0_i32_0 : i32, i32
  }
  func.func @transform_7(%arg0: i32) -> (i32, i32) {
    %c0_i32 = arith.constant 0 : i32
    %c0_i32_0 = arith.constant 0 : i32
    %c0_i32_1 = arith.constant 0 : i32
    return %c0_i32, %c0_i32_0 : i32, i32
  }
  func.func @transform_8(%arg0: i32) -> (i32, i32) {
    %c0_i32 = arith.constant 0 : i32
    %c0_i32_0 = arith.constant 0 : i32
    %c0_i32_1 = arith.constant 0 : i32
    return %c0_i32, %c0_i32_0 : i32, i32
  }
  func.func @transform_9(%arg0: i32) -> (i32, i32, i32, i32) {
    %c0_i32 = arith.constant 0 : i32
    %c0_i32_0 = arith.constant 0 : i32
    %c0_i32_1 = arith.constant 0 : i32
    %c0_i32_2 = arith.constant 0 : i32
    return %arg0, %c0_i32, %c0_i32_0, %c0_i32_1 : i32, i32, i32, i32
  }
  func.func @transform_10(%arg0: i32) -> (i32, i32, i32, i32) {
    %c0_i32 = arith.constant 0 : i32
    %c0_i32_0 = arith.constant 0 : i32
    %c0_i32_1 = arith.constant 0 : i32
    %c0_i32_2 = arith.constant 0 : i32
    return %arg0, %c0_i32, %c0_i32_0, %c0_i32_1 : i32, i32, i32, i32
  }
}

</mosaic_0001>

<llo_original>
// kernel: tpu_custom_call.1
$region0: #{tpu_custom_call.1}
  #allocation0 [shape = 'u32[]', space=smem, size = 0x4, offset = 0x4, fixed_abs, tag = 'smem constant byte address 0x4 - core index']
  #allocation1 [shape = 'u32[72,128]{1,0:T(1,128)}', space=vmem, size = 0x9000, scoped, tag = 'internal scratch']
  #allocation2 [shape = 'f32[256,128]{1,0:T(8,128)}', space=vmem, size = 0x20000, scoped, tag = 'scratch operand']
  #allocation3 [shape = 'f32[256,16]{1,0:T(8,128)}', space=vmem, size = 0x20000, scoped, tag = 'scratch operand']
  #allocation4 [shape = 'f32[8,8,16]{2,1,0:T(8,128)}', space=vmem, size = 0x8000, scoped, tag = 'scratch operand']
  #allocation5 [shape = 'f32[64,256]{1,0:T(8,128)}', space=vmem, size = 0x10000, scoped, tag = 'scratch operand']
  #allocation6 [shape = 'f32[64,32]{1,0:T(8,128)}', space=vmem, size = 0x8000, scoped, tag = 'scratch operand']
  #allocation7 [shape = 'f32[4,4,32]{2,1,0:T(4,128)}', space=vmem, size = 0x2000, scoped, tag = 'scratch operand']
  #allocation8 [shape = 'f32[16,384]{1,0:T(8,128)}', space=vmem, size = 0x6000, scoped, tag = 'scratch operand']
  #allocation9 [shape = 'f32[16,64]{1,0:T(8,128)}', space=vmem, size = 0x2000, scoped, tag = 'scratch operand']
  #allocation10 [shape = 'f32[4,640]{1,0:T(4,128)}', space=vmem, size = 0x2800, scoped, tag = 'scratch operand']
  #allocation11 [shape = 'f32[4,128]{1,0:T(4,128)}', space=vmem, size = 0x800, scoped, tag = 'scratch operand']
  %s0 = inlined_call_operand.vmem [shape: f32[8,16,16,3], index: 0, kind: input, shape index: {}]
  %s1 = inlined_call_operand.vmem [shape: bf16[128,16], index: 1, kind: input, shape index: {}]
  %s2 = inlined_call_operand.vmem [shape: f32[1,16], index: 2, kind: input, shape index: {}]
  %s3 = inlined_call_operand.vmem [shape: bf16[256,32], index: 3, kind: input, shape index: {}]
  %s4 = inlined_call_operand.vmem [shape: f32[1,32], index: 4, kind: input, shape index: {}]
  %s5 = inlined_call_operand.vmem [shape: bf16[384,64], index: 5, kind: input, shape index: {}]
  %s6 = inlined_call_operand.vmem [shape: f32[1,64], index: 6, kind: input, shape index: {}]
  %s7 = inlined_call_operand.vmem [shape: bf16[640,128], index: 7, kind: input, shape index: {}]
  %s8 = inlined_call_operand.vmem [shape: f32[1,128], index: 8, kind: input, shape index: {}]
  %s9 = inlined_call_operand.hbm [shape: f32[8,2,2,64], index: 9, kind: output, shape index: {0}]
  %s10 = inlined_call_operand.hbm [shape: f32[8,1,1,128], index: 10, kind: output, shape index: {1}]
  %11 = xla_tuple %s9, %s10
  %s12 = sld [smem:[#allocation0]]
  $region84: #{tpu_custom_call.1} parent=0
    _
  %s14 = ssub.s32 1, %s12
  %s15 = scalar_select 0, %s14, %s12
  $region1: #{tpu_custom_call.1} parent=0
    #allocation12 [shape = 'u8[16384]{0}', space=vmem, size = 0x4000, scoped, tag = 'output window, operand 0']
    #allocation13 [shape = 's32[2]{0}', space=sflag, size = 0x8, scoped, tag = 'scoped memory for tpu_custom_call.1']
    #allocation14 [shape = 'u8[4096]{0}', space=vmem, size = 0x1000, scoped, tag = 'output window, operand 1']
    #allocation15 [shape = 's32[2]{0}', space=sflag, size = 0x8, scoped, tag = 'scoped memory for tpu_custom_call.1']
    %16 = vsyncpa [#allocation13], 0
    %s17 = scalar_lea.sflag [#allocation13], 1
    %18 = vsyncpa %s17, 0
    %19 = vsyncpa [#allocation15], 0
    %s20 = scalar_lea.sflag [#allocation15], 1
    %21 = vsyncpa %s20, 0
    loop: start=0, step=1, limit=4
    $region2: #{tpu_custom_call.1} parent=1 // loop_pre_header
      _
    $region3: #{tpu_custom_call.1} parent=1 // loop_header
      %s23 = sphi 0, %s27
      %p24 = scmp.ge.s32.totalorder %s23, 4
      %s33 = sphi 0, %s35
      %s36 = sphi 0, %s33
      %s37 = sphi 0, %s36
      %s53 = sphi 0, %s37
      %s57 = sphi 0, %s57
      %s59 = sphi 0, %s57
      %s60 = sphi 0, %s59
      %s74 = sphi 0, %s60
      %s78 = sphi 0, %s78
      %s80 = sphi 0, %s78
      %s81 = sphi 0, %s80
      %s95 = sphi 0, %s81
      %s99 = sphi 0, %s99
      %s101 = sphi 0, %s99
      %s102 = sphi 0, %s101
      %s116 = sphi 0, %s102
      %s120 = sphi 0, %s120
      %s122 = sphi 0, %s120
      %s123 = sphi 0, %s122
      %s137 = sphi 0, %s123
      %s141 = sphi 0, %s141
      %s143 = sphi 0, %s141
      %s144 = sphi 0, %s143
      %s158 = sphi 0, %s144
      %s162 = sphi 0, %s162
      %s164 = sphi 0, %s162
      %s165 = sphi 0, %s164
      %s179 = sphi 0, %s165
      %s183 = sphi 0, %s183
      %s185 = sphi 0, %s183
      %s186 = sphi 0, %s185
      %s200 = sphi 0, %s186
      %s204 = sphi 0, %s204
      %s206 = sphi 0, %s204
      %s207 = sphi 0, %s206
      %s221 = sphi 0, %s207
      %s227 = sphi 0, %s229
      %s230 = sphi 0, %s227
      %s231 = sphi 0, %s230
      %s247 = sphi 0, %s231
      %s253 = sphi 0, %s255
      %s256 = sphi 0, %s253
      %s257 = sphi 0, %s256
      %s273 = sphi 0, %s257
    $region4: #{tpu_custom_call.1} parent=1 // loop_header_branch
      %26 = sbr.rel (%p24) target = $region8
    $region5: #{tpu_custom_call.1} parent=1 // loop_body
      %s28 = ssub.s32 %s23, 1
      %s29 = ssub.s32 %s23, 2
      %s30 = sadd.s32 %s23, 1
      %s31 = ssub.s32 %s23, %s30
      %p32 = scmp.eq.s32.totalorder %s31, 0
      %s34 = sadd.s32 %s33, 1
      %s35 = scalar_select %p32, %s33, %s34
      %p38 = pneg %p32
      %p39 = scmp.eq.s32.totalorder %s23, 1
      %p40 = por %p38, %p39
      %p41 = scmp.ne.s32.totalorder %s33, %s36
      %p42 = scmp.eq.s32.totalorder %s23, 0
      %p43 = por %p41, %p42
      %p44 = scmp.ne.s32.totalorder %s33, %s36
      %p45 = scmp.eq.s32.totalorder %s28, 1
      %p46 = por %p44, %p45
      %p47 = scmp.ne.s32.totalorder %s36, %s37
      %p48 = scmp.eq.s32.totalorder %s28, 0
      %p49 = por %p47, %p48
      %p50 = scmp.ne.s32.totalorder %s36, %s37
      %p51 = scmp.eq.s32.totalorder %s29, 1
      %p52 = por %p50, %p51
      %p54 = scmp.ne.s32.totalorder %s37, %s53
      %p55 = scmp.eq.s32.totalorder %s29, 0
      %p56 = por %p54, %p55
      %s58 = sadd.s32 %s57, 1
      %p61 = scmp.eq.s32.totalorder %s23, 1
      %p62 = scmp.ne.s32.totalorder %s57, %s59
      %p63 = scmp.eq.s32.totalorder %s23, 0
      %p64 = por %p62, %p63
      %p65 = scmp.ne.s32.totalorder %s57, %s59
      %p66 = scmp.eq.s32.totalorder %s28, 1
      %p67 = por %p65, %p66
      %p68 = scmp.ne.s32.totalorder %s59, %s60
      %p69 = scmp.eq.s32.totalorder %s28, 0
      %p70 = por %p68, %p69
      %p71 = scmp.ne.s32.totalorder %s59, %s60
      %p72 = scmp.eq.s32.totalorder %s29, 1
      %p73 = por %p71, %p72
      %p75 = scmp.ne.s32.totalorder %s60, %s74
      %p76 = scmp.eq.s32.totalorder %s29, 0
      %p77 = por %p75, %p76
      %s79 = sadd.s32 %s78, 1
      %p82 = scmp.eq.s32.totalorder %s23, 1
      %p83 = scmp.ne.s32.totalorder %s78, %s80
      %p84 = scmp.eq.s32.totalorder %s23, 0
      %p85 = por %p83, %p84
      %p86 = scmp.ne.s32.totalorder %s78, %s80
      %p87 = scmp.eq.s32.totalorder %s28, 1
      %p88 = por %p86, %p87
      %p89 = scmp.ne.s32.totalorder %s80, %s81
      %p90 = scmp.eq.s32.totalorder %s28, 0
      %p91 = por %p89, %p90
      %p92 = scmp.ne.s32.totalorder %s80, %s81
      %p93 = scmp.eq.s32.totalorder %s29, 1
      %p94 = por %p92, %p93
      %p96 = scmp.ne.s32.totalorder %s81, %s95
      %p97 = scmp.eq.s32.totalorder %s29, 0
      %p98 = por %p96, %p97
      %s100 = sadd.s32 %s99, 1
      %p103 = scmp.eq.s32.totalorder %s23, 1
      %p104 = scmp.ne.s32.totalorder %s99, %s101
      %p105 = scmp.eq.s32.totalorder %s23, 0
      %p106 = por %p104, %p105
      %p107 = scmp.ne.s32.totalorder %s99, %s101
      %p108 = scmp.eq.s32.totalorder %s28, 1
      %p109 = por %p107, %p108
      %p110 = scmp.ne.s32.totalorder %s101, %s102
      %p111 = scmp.eq.s32.totalorder %s28, 0
      %p112 = por %p110, %p111
      %p113 = scmp.ne.s32.totalorder %s101, %s102
      %p114 = scmp.eq.s32.totalorder %s29, 1
      %p115 = por %p113, %p114
      %p117 = scmp.ne.s32.totalorder %s102, %s116
      %p118 = scmp.eq.s32.totalorder %s29, 0
      %p119 = por %p117, %p118
      %s121 = sadd.s32 %s120, 1
      %p124 = scmp.eq.s32.totalorder %s23, 1
      %p125 = scmp.ne.s32.totalorder %s120, %s122
      %p126 = scmp.eq.s32.totalorder %s23, 0
      %p127 = por %p125, %p126
      %p128 = scmp.ne.s32.totalorder %s120, %s122
      %p129 = scmp.eq.s32.totalorder %s28, 1
      %p130 = por %p128, %p129
      %p131 = scmp.ne.s32.totalorder %s122, %s123
      %p132 = scmp.eq.s32.totalorder %s28, 0
      %p133 = por %p131, %p132
      %p134 = scmp.ne.s32.totalorder %s122, %s123
      %p135 = scmp.eq.s32.totalorder %s29, 1
      %p136 = por %p134, %p135
      %p138 = scmp.ne.s32.totalorder %s123, %s137
      %p139 = scmp.eq.s32.totalorder %s29, 0
      %p140 = por %p138, %p139
      %s142 = sadd.s32 %s141, 1
      %p145 = scmp.eq.s32.totalorder %s23, 1
      %p146 = scmp.ne.s32.totalorder %s141, %s143
      %p147 = scmp.eq.s32.totalorder %s23, 0
      %p148 = por %p146, %p147
      %p149 = scmp.ne.s32.totalorder %s141, %s143
      %p150 = scmp.eq.s32.totalorder %s28, 1
      %p151 = por %p149, %p150
      %p152 = scmp.ne.s32.totalorder %s143, %s144
      %p153 = scmp.eq.s32.totalorder %s28, 0
      %p154 = por %p152, %p153
      %p155 = scmp.ne.s32.totalorder %s143, %s144
      %p156 = scmp.eq.s32.totalorder %s29, 1
      %p157 = por %p155, %p156
      %p159 = scmp.ne.s32.totalorder %s144, %s158
      %p160 = scmp.eq.s32.totalorder %s29, 0
      %p161 = por %p159, %p160
      %s163 = sadd.s32 %s162, 1
      %p166 = scmp.eq.s32.totalorder %s23, 1
      %p167 = scmp.ne.s32.totalorder %s162, %s164
      %p168 = scmp.eq.s32.totalorder %s23, 0
      %p169 = por %p167, %p168
      %p170 = scmp.ne.s32.totalorder %s162, %s164
      %p171 = scmp.eq.s32.totalorder %s28, 1
      %p172 = por %p170, %p171
      %p173 = scmp.ne.s32.totalorder %s164, %s165
      %p174 = scmp.eq.s32.totalorder %s28, 0
      %p175 = por %p173, %p174
      %p176 = scmp.ne.s32.totalorder %s164, %s165
      %p177 = scmp.eq.s32.totalorder %s29, 1
      %p178 = por %p176, %p177
      %p180 = scmp.ne.s32.totalorder %s165, %s179
      %p181 = scmp.eq.s32.totalorder %s29, 0
      %p182 = por %p180, %p181
      %s184 = sadd.s32 %s183, 1
      %p187 = scmp.eq.s32.totalorder %s23, 1
      %p188 = scmp.ne.s32.totalorder %s183, %s185
      %p189 = scmp.eq.s32.totalorder %s23, 0
      %p190 = por %p188, %p189
      %p191 = scmp.ne.s32.totalorder %s183, %s185
      %p192 = scmp.eq.s32.totalorder %s28, 1
      %p193 = por %p191, %p192
      %p194 = scmp.ne.s32.totalorder %s185, %s186
      %p195 = scmp.eq.s32.totalorder %s28, 0
      %p196 = por %p194, %p195
      %p197 = scmp.ne.s32.totalorder %s185, %s186
      %p198 = scmp.eq.s32.totalorder %s29, 1
      %p199 = por %p197, %p198
      %p201 = scmp.ne.s32.totalorder %s186, %s200
      %p202 = scmp.eq.s32.totalorder %s29, 0
      %p203 = por %p201, %p202
      %s205 = sadd.s32 %s204, 1
      %p208 = scmp.eq.s32.totalorder %s23, 1
      %p209 = scmp.ne.s32.totalorder %s204, %s206
      %p210 = scmp.eq.s32.totalorder %s23, 0
      %p211 = por %p209, %p210
      %p212 = scmp.ne.s32.totalorder %s204, %s206
      %p213 = scmp.eq.s32.totalorder %s28, 1
      %p214 = por %p212, %p213
      %p215 = scmp.ne.s32.totalorder %s206, %s207
      %p216 = scmp.eq.s32.totalorder %s28, 0
      %p217 = por %p215, %p216
      %p218 = scmp.ne.s32.totalorder %s206, %s207
      %p219 = scmp.eq.s32.totalorder %s29, 1
      %p220 = por %p218, %p219
      %p222 = scmp.ne.s32.totalorder %s207, %s221
      %p223 = scmp.eq.s32.totalorder %s29, 0
      %p224 = por %p222, %p223
      %s225 = ssub.s32 %s23, %s30
      %p226 = scmp.eq.s32.totalorder %s225, 0
      %s228 = sadd.s32 %s227, 1
      %s229 = scalar_select %p226, %s227, %s228
      %p232 = pneg %p226
      %p233 = scmp.eq.s32.totalorder %s23, 1
      %p234 = por %p232, %p233
      %p235 = scmp.ne.s32.totalorder %s227, %s230
      %p236 = scmp.eq.s32.totalorder %s23, 0
      %p237 = por %p235, %p236
      %p238 = scmp.ne.s32.totalorder %s227, %s230
      %p239 = scmp.eq.s32.totalorder %s28, 1
      %p240 = por %p238, %p239
      %p241 = scmp.ne.s32.totalorder %s230, %s231
      %p242 = scmp.eq.s32.totalorder %s28, 0
      %p243 = por %p241, %p242
      %p244 = scmp.ne.s32.totalorder %s230, %s231
      %p245 = scmp.eq.s32.totalorder %s29, 1
      %p246 = por %p244, %p245
      %p248 = scmp.ne.s32.totalorder %s231, %s247
      %p249 = scmp.eq.s32.totalorder %s29, 0
      %p250 = por %p248, %p249
      %s251 = ssub.s32 %s23, %s30
      %p252 = scmp.eq.s32.totalorder %s251, 0
      %s254 = sadd.s32 %s253, 1
      %s255 = scalar_select %p252, %s253, %s254
      %p258 = pneg %p252
      %p259 = scmp.eq.s32.totalorder %s23, 1
      %p260 = por %p258, %p259
      %p261 = scmp.ne.s32.totalorder %s253, %s256
      %p262 = scmp.eq.s32.totalorder %s23, 0
      %p263 = por %p261, %p262
      %p264 = scmp.ne.s32.totalorder %s253, %s256
      %p265 = scmp.eq.s32.totalorder %s28, 1
      %p266 = por %p264, %p265
      %p267 = scmp.ne.s32.totalorder %s256, %s257
      %p268 = scmp.eq.s32.totalorder %s28, 0
      %p269 = por %p267, %p268
      %p270 = scmp.ne.s32.totalorder %s256, %s257
      %p271 = scmp.eq.s32.totalorder %s29, 1
      %p272 = por %p270, %p271
      %p274 = scmp.ne.s32.totalorder %s257, %s273
      %p275 = scmp.eq.s32.totalorder %s29, 0
      %p276 = por %p274, %p275
      %p277 = scmp.le.s32.totalorder 1, %s23
      %p278 = scmp.lt.s32.totalorder %s23, 3
      %p279 = pnand %p277, %p278
      %p280 = pneg %p279
      // Predicated region
      $region9: #{tpu_custom_call.1} parent=5 // pred_check
        _
      $region10: #{tpu_custom_call.1} parent=5 // pred_check_branch
        %282 = sbr.rel (%p279) target = $region12
      $region11: #{tpu_custom_call.1} parent=5 // pred_region
        %s283 = ssub.s32 %s23, 1
        // Predicated region
        $region13: #{tpu_custom_call.1} parent=11 // pred_check
          %p284 = pneg %p70
        $region14: #{tpu_custom_call.1} parent=11 // pred_check_branch
          %286 = sbr.rel (%p284) target = $region16
        $region15: #{tpu_custom_call.1} parent=11 // pred_region
          _
        $region16: #{tpu_custom_call.1} parent=11 // pred_fallthru
          _
        // Predicated region
        $region17: #{tpu_custom_call.1} parent=11 // pred_check
          %p287 = pneg %p91
        $region18: #{tpu_custom_call.1} parent=11 // pred_check_branch
          %289 = sbr.rel (%p287) target = $region20
        $region19: #{tpu_custom_call.1} parent=11 // pred_region
          _
        $region20: #{tpu_custom_call.1} parent=11 // pred_fallthru
          _
        // Predicated region
        $region21: #{tpu_custom_call.1} parent=11 // pred_check
          %p290 = pneg %p112
        $region22: #{tpu_custom_call.1} parent=11 // pred_check_branch
          %292 = sbr.rel (%p290) target = $region24
        $region23: #{tpu_custom_call.1} parent=11 // pred_region
          _
        $region24: #{tpu_custom_call.1} parent=11 // pred_fallthru
          _
        // Predicated region
        $region25: #{tpu_custom_call.1} parent=11 // pred_check
          %p293 = pneg %p133
        $region26: #{tpu_custom_call.1} parent=11 // pred_check_branch
          %295 = sbr.rel (%p293) target = $region28
        $region27: #{tpu_custom_call.1} parent=11 // pred_region
          _
        $region28: #{tpu_custom_call.1} parent=11 // pred_fallthru
          _
        // Predicated region
        $region29: #{tpu_custom_call.1} parent=11 // pred_check
          %p296 = pneg %p154
        $region30: #{tpu_custom_call.1} parent=11 // pred_check_branch
          %298 = sbr.rel (%p296) target = $region32
        $region31: #{tpu_custom_call.1} parent=11 // pred_region
          _
        $region32: #{tpu_custom_call.1} parent=11 // pred_fallthru
          _
        // Predicated region
        $region33: #{tpu_custom_call.1} parent=11 // pred_check
          %p299 = pneg %p175
        $region34: #{tpu_custom_call.1} parent=11 // pred_check_branch
          %301 = sbr.rel (%p299) target = $region36
        $region35: #{tpu_custom_call.1} parent=11 // pred_region
          _
        $region36: #{tpu_custom_call.1} parent=11 // pred_fallthru
          _
        // Predicated region
        $region37: #{tpu_custom_call.1} parent=11 // pred_check
          %p302 = pneg %p196
        $region38: #{tpu_custom_call.1} parent=11 // pred_check_branch
          %304 = sbr.rel (%p302) target = $region40
        $region39: #{tpu_custom_call.1} parent=11 // pred_region
          _
        $region40: #{tpu_custom_call.1} parent=11 // pred_fallthru
          _
        // Predicated region
        $region41: #{tpu_custom_call.1} parent=11 // pred_check
          %p305 = pneg %p217
        $region42: #{tpu_custom_call.1} parent=11 // pred_check_branch
          %307 = sbr.rel (%p305) target = $region44
        $region43: #{tpu_custom_call.1} parent=11 // pred_region
          _
        $region44: #{tpu_custom_call.1} parent=11 // pred_fallthru
          _
      $region12: #{tpu_custom_call.1} parent=5 // pred_fallthru
        _
      %p308 = scmp.lt.s32.totalorder %s23, 2
      // Predicated region
      $region45: #{tpu_custom_call.1} parent=5 // pred_check
        %p309 = pneg %p308
      $region46: #{tpu_custom_call.1} parent=5 // pred_check_branch
        %311 = sbr.rel (%p309) target = $region48
      $region47: #{tpu_custom_call.1} parent=5 // pred_region
        // Predicated region
        $region49: #{tpu_custom_call.1} parent=47 // pred_check
          %p312 = pneg %p43
        $region50: #{tpu_custom_call.1} parent=47 // pred_check_branch
          %314 = sbr.rel (%p312) target = $region52
        $region51: #{tpu_custom_call.1} parent=47 // pred_region
          %s315 = smul.u32 4, %s23
          %p316 = scmp.lt.s32.totalorder %s315, 7
          %s317 = scalar_select %p316, %s315, 7
          %s318 = smul.addr %s317, 32
          %s319 = smul.addr %s318, 8
          %s320 = scalar_lea.vmem %s0, %s319
          %s321 = smul.u32 4, %s23
        $region52: #{tpu_custom_call.1} parent=47 // pred_fallthru
          _
      $region48: #{tpu_custom_call.1} parent=5 // pred_fallthru
        _
      %p322 = scmp.le.s32.totalorder 1, %s23
      %p323 = scmp.lt.s32.totalorder %s23, 3
      %p324 = pnand %p322, %p323
      %p325 = pneg %p324
      // Predicated region
      $region53: #{tpu_custom_call.1} parent=5 // pred_check
        _
      $region54: #{tpu_custom_call.1} parent=5 // pred_check_branch
        %327 = sbr.rel (%p324) target = $region56
      $region55: #{tpu_custom_call.1} parent=5 // pred_region
        %s328 = ssub.s32 %s23, 1
        %s329 = smul.u32 4, %s28
        %p330 = scmp.lt.s32.totalorder %s329, 7
        %s331 = scalar_select %p330, %s329, 7
        %s332 = smul.addr %s331, 32
        %s333 = smul.addr %s332, 8
        %s334 = scalar_lea.vmem %s0, %s333
        %p335 = pneg %p49
        %p336 = pneg %p46
        %p337 = pneg %p70
        %p338 = pneg %p67
        %p339 = pneg %p91
        %p340 = pneg %p88
        %p341 = pneg %p112
        %p342 = pneg %p109
        %p343 = pneg %p133
        %p344 = pneg %p130
        %p345 = pneg %p154
        %p346 = pneg %p151
        %p347 = pneg %p175
        %p348 = pneg %p172
        %p349 = pneg %p196
        %p350 = pneg %p193
        %p351 = pneg %p217
        %p352 = pneg %p214
        %p353 = pneg %p243
        %p354 = pneg %p240
        %s355 = sand.u32 %s230, 1
        %s356 = scalar_lea.sflag [#allocation13], %s355
        %s357 = sand.u32 %s230, 1
        %s358 = smul.addr %s357, 16
        %s359 = scalar_lea.vmem [#allocation12], %s358
        %p360 = pneg %p269
        %p361 = pneg %p266
        %s362 = sand.u32 %s256, 1
        %s363 = scalar_lea.sflag [#allocation15], %s362
        %s364 = sand.u32 %s256, 1
        %s365 = smul.addr %s364, 4
        %s366 = scalar_lea.vmem [#allocation14], %s365
        %s367 = smul.u32 4, %s28
        %p368 = scmp.lt.s32.totalorder %s367, 7
        %s369 = scalar_select %p368, %s367, 7
        %s370 = smul.addr %s369, 32
        %s371 = smul.addr %s370, 8
        %s372 = scalar_lea.vmem %s0, %s371
        %s373 = smul.u32 4, %s28
        %s374 = smul.u32 4, %s28
        %s375 = smul.u32 4, %s28
        %376 = vst [vmem:[#allocation2] sm:$0xff] 0.0
        %377 = vst [vmem:[#allocation2 + $0x8] sm:$0xff] 0.0
        %378 = vst [vmem:[#allocation2 + $0x10] sm:$0xff] 0.0
        %379 = vst [vmem:[#allocation2 + $0x18] sm:$0xff] 0.0
        %380 = vst [vmem:[#allocation2 + $0x20] sm:$0xff] 0.0
        %381 = vst [vmem:[#allocation2 + $0x28] sm:$0xff] 0.0
        %382 = vst [vmem:[#allocation2 + $0x30] sm:$0xff] 0.0
        %383 = vst [vmem:[#allocation2 + $0x38] sm:$0xff] 0.0
        %384 = vst [vmem:[#allocation2 + $0x40] sm:$0xff] 0.0
        %385 = vst [vmem:[#allocation2 + $0x48] sm:$0xff] 0.0
        %386 = vst [vmem:[#allocation2 + $0x50] sm:$0xff] 0.0
        %387 = vst [vmem:[#allocation2 + $0x58] sm:$0xff] 0.0
        %388 = vst [vmem:[#allocation2 + $0x60] sm:$0xff] 0.0
        %389 = vst [vmem:[#allocation2 + $0x68] sm:$0xff] 0.0
        %390 = vst [vmem:[#allocation2 + $0x70] sm:$0xff] 0.0
        %391 = vst [vmem:[#allocation2 + $0x78] sm:$0xff] 0.0
        %392 = vst [vmem:[#allocation2 + $0x80] sm:$0xff] 0.0
        %393 = vst [vmem:[#allocation2 + $0x88] sm:$0xff] 0.0
        %394 = vst [vmem:[#allocation2 + $0x90] sm:$0xff] 0.0
        %395 = vst [vmem:[#allocation2 + $0x98] sm:$0xff] 0.0
        %396 = vst [vmem:[#allocation2 + $0xa0] sm:$0xff] 0.0
        %397 = vst [vmem:[#allocation2 + $0xa8] sm:$0xff] 0.0
        %398 = vst [vmem:[#allocation2 + $0xb0] sm:$0xff] 0.0
        %399 = vst [vmem:[#allocation2 + $0xb8] sm:$0xff] 0.0
        %400 = vst [vmem:[#allocation2 + $0xc0] sm:$0xff] 0.0
        %401 = vst [vmem:[#allocation2 + $0xc8] sm:$0xff] 0.0
        %402 = vst [vmem:[#allocation2 + $0xd0] sm:$0xff] 0.0
        %403 = vst [vmem:[#allocation2 + $0xd8] sm:$0xff] 0.0
        %404 = vst [vmem:[#allocation2 + $0xe0] sm:$0xff] 0.0
        %405 = vst [vmem:[#allocation2 + $0xe8] sm:$0xff] 0.0
        %406 = vst [vmem:[#allocation2 + $0xf0] sm:$0xff] 0.0
        %407 = vst [vmem:[#allocation2 + $0xf8] sm:$0xff] 0.0
        %408 = vst [vmem:[#allocation5] sm:$0xff] 0.0
        %409 = vst [vmem:[#allocation5 + $0x8] sm:$0xff] 0.0
        %410 = vst [vmem:[#allocation5 + $0x10] sm:$0xff] 0.0
        %411 = vst [vmem:[#allocation5 + $0x18] sm:$0xff] 0.0
        %412 = vst [vmem:[#allocation5 + $0x20] sm:$0xff] 0.0
        %413 = vst [vmem:[#allocation5 + $0x28] sm:$0xff] 0.0
        %414 = vst [vmem:[#allocation5 + $0x30] sm:$0xff] 0.0
        %415 = vst [vmem:[#allocation5 + $0x38] sm:$0xff] 0.0
        %416 = vst [vmem:[#allocation5 + $0x40] sm:$0xff] 0.0
        %417 = vst [vmem:[#allocation5 + $0x48] sm:$0xff] 0.0
        %418 = vst [vmem:[#allocation5 + $0x50] sm:$0xff] 0.0
        %419 = vst [vmem:[#allocation5 + $0x58] sm:$0xff] 0.0
        %420 = vst [vmem:[#allocation5 + $0x60] sm:$0xff] 0.0
        %421 = vst [vmem:[#allocation5 + $0x68] sm:$0xff] 0.0
        %422 = vst [vmem:[#allocation5 + $0x70] sm:$0xff] 0.0
        %423 = vst [vmem:[#allocation5 + $0x78] sm:$0xff] 0.0
        %424 = vst [vmem:[#allocation8] sm:$0xff] 0.0
        %425 = vst [vmem:[#allocation8 + $0x8] sm:$0xff] 0.0
        %426 = vst [vmem:[#allocation8 + $0x10] sm:$0xff] 0.0
        %427 = vst [vmem:[#allocation8 + $0x18] sm:$0xff] 0.0
        %428 = vst [vmem:[#allocation8 + $0x20] sm:$0xff] 0.0
        %429 = vst [vmem:[#allocation8 + $0x28] sm:$0xff] 0.0
        %430 = vst [vmem:[#allocation10] sm:$0xff] 0.0
        %431 = vst [vmem:[#allocation10 + $0x8] sm:$0xff] 0.0
        %432 = vst [vmem:[#allocation10 + $0x10] sm:$0xf] 0.0
        loop: start=0, step=1, limit=4
        $region57: #{tpu_custom_call.1} parent=55 // loop_pre_header
          _
        $region58: #{tpu_custom_call.1} parent=55 // loop_header
          %s434 = sphi 0, %s438
          %p435 = scmp.ge.s32.totalorder %s434, 4
        $region59: #{tpu_custom_call.1} parent=55 // loop_header_branch
          %437 = sbr.rel (%p435) target = $region63
        $region60: #{tpu_custom_call.1} parent=55 // loop_body
          %s439 = smul.u32 %s434, 256
          %s440 = scalar_lea.vmem %s372, %s439
          %v441 = vld [vmem:[%s440] sm:$0xff]
          %v442 = vld [vmem:[%s440 + $0x8] sm:$0xff]
          %vm443 = vcmask 23552
          %444 = vst.msk [vmem:[#allocation2 + $0x11] sm:$0xff] %vm443, %v441
          %vm445 = vcmask 22528
          %446 = vst.msk [vmem:[#allocation2 + $0x19] sm:$0x7f] %vm445, %v442
          %449 = vrot.lane.b32.xlu0 %v441, 3
          %v450 = vpop.permute.xlu0 %449
          %451 = vrot.lane.b32.xlu0 %v442, 3
          %v452 = vpop.permute.xlu0 %451
          %vm455 = vcmask 48152
          %456 = vst.msk [vmem:[#allocation2 + $0x10] sm:$0xff] %vm455, %v450
          %457 = vst.msk [vmem:[#allocation2 + $0x18] sm:$0xff] %vm455, %v452
          %458 = vrot.lane.b32.xlu0 %v441, 6
          %v459 = vpop.permute.xlu0 %458
          %460 = vrot.lane.b32.xlu0 %v442, 6
          %v461 = vpop.permute.xlu0 %460
          %vm464 = vcmask 72753
          %465 = vst.msk [vmem:[#allocation2 + $0xf] sm:$0xfe] %vm464, %v459
          %vm466 = vcmask 72752
          %467 = vst.msk [vmem:[#allocation2 + $0x17] sm:$0xff] %vm466, %v461
          %468 = vrot.lane.b32.xlu0 %v441, 9
          %v469 = vpop.permute.xlu0 %468
          %470 = vrot.lane.b32.xlu0 %v442, 9
          %v471 = vpop.permute.xlu0 %470
          %vm474 = vcmask 97352
          %475 = vst.msk [vmem:[#allocation2 + $0x1] sm:$0xff] %vm474, %v469
          %vm476 = vcmask 96328
          %477 = vst.msk [vmem:[#allocation2 + $0x9] sm:$0x7f] %vm476, %v471
          %478 = vrot.lane.b32.xlu0 %v441, 12
          %v479 = vpop.permute.xlu0 %478
          %480 = vrot.lane.b32.xlu0 %v442, 12
          %v481 = vpop.permute.xlu0 %480
          %vm484 = vcmask 121952
          %485 = vst.msk [vmem:[#allocation2] sm:$0xff] %vm484, %v479
          %486 = vst.msk [vmem:[#allocation2 + $0x8] sm:$0xff] %vm484, %v481
          %487 = vrot.lane.b32.xlu0 %v441, 15
          %v488 = vpop.permute.xlu0 %487
          %489 = vrot.lane.b32.xlu0 %v442, 15
          %v490 = vpop.permute.xlu0 %489
          %vm493 = vcmask 146553
          %494 = vst.msk [vmem:[#allocation2 - $0x1] sm:$0xfe] %vm493, %v488
          %vm495 = vcmask 146552
          %496 = vst.msk [vmem:[#allocation2 + $0x7] sm:$0xff] %vm495, %v490
          %s497 = sadd.s32 16, %s439
          %s498 = scalar_lea.vmem %s372, %s497
          %v499 = vld [vmem:[%s498] sm:$0xff]
          %v500 = vld [vmem:[%s498 + $0x8] sm:$0xff]
          %501 = vst.msk [vmem:[#allocation2 + $0x21] sm:$0xff] %vm443, %v499
          %502 = vst.msk [vmem:[#allocation2 + $0x29] sm:$0x7f] %vm445, %v500
          %505 = vrot.lane.b32.xlu0 %v499, 3
          %v506 = vpop.permute.xlu0 %505
          %507 = vrot.lane.b32.xlu0 %v500, 3
          %v508 = vpop.permute.xlu0 %507
          %511 = vst.msk [vmem:[#allocation2 + $0x20] sm:$0xff] %vm455, %v506
          %512 = vst.msk [vmem:[#allocation2 + $0x28] sm:$0xff] %vm455, %v508
          %513 = vrot.lane.b32.xlu0 %v499, 6
          %v514 = vpop.permute.xlu0 %513
          %515 = vrot.lane.b32.xlu0 %v500, 6
          %v516 = vpop.permute.xlu0 %515
          %519 = vst.msk [vmem:[#allocation2 + $0x1f] sm:$0xfe] %vm464, %v514
          %520 = vst.msk [vmem:[#allocation2 + $0x27] sm:$0xff] %vm466, %v516
          %521 = vrot.lane.b32.xlu0 %v499, 9
          %v522 = vpop.permute.xlu0 %521
          %523 = vrot.lane.b32.xlu0 %v500, 9
          %v524 = vpop.permute.xlu0 %523
          %527 = vst.msk [vmem:[#allocation2 + $0x11] sm:$0xff] %vm474, %v522
          %528 = vst.msk [vmem:[#allocation2 + $0x19] sm:$0x7f] %vm476, %v524
          %529 = vrot.lane.b32.xlu0 %v499, 12
          %v530 = vpop.permute.xlu0 %529
          %531 = vrot.lane.b32.xlu0 %v500, 12
          %v532 = vpop.permute.xlu0 %531
          %535 = vst.msk [vmem:[#allocation2 + $0x10] sm:$0xff] %vm484, %v530
          %536 = vst.msk [vmem:[#allocation2 + $0x18] sm:$0xff] %vm484, %v532
          %537 = vrot.lane.b32.xlu0 %v499, 15
          %v538 = vpop.permute.xlu0 %537
          %539 = vrot.lane.b32.xlu0 %v500, 15
          %v540 = vpop.permute.xlu0 %539
          %543 = vst.msk [vmem:[#allocation2 + $0xf] sm:$0xfe] %vm493, %v538
          %544 = vst.msk [vmem:[#allocation2 + $0x17] sm:$0xff] %vm495, %v540
          %545 = vrot.lane.b32.xlu0 %v499, 18
          %v546 = vpop.permute.xlu0 %545
          %547 = vrot.lane.b32.xlu0 %v500, 18
          %v548 = vpop.permute.xlu0 %547
          %vm551 = vcmask 171152
          %552 = vst.msk [vmem:[#allocation2 + $0x1] sm:$0xff] %vm551, %v546
          %vm553 = vcmask 170128
          %554 = vst.msk [vmem:[#allocation2 + $0x9] sm:$0x7f] %vm553, %v548
          %555 = vrot.lane.b32.xlu0 %v499, 21
          %v556 = vpop.permute.xlu0 %555
          %557 = vrot.lane.b32.xlu0 %v500, 21
          %v558 = vpop.permute.xlu0 %557
          %vm561 = vcmask 195752
          %562 = vst.msk [vmem:[#allocation2] sm:$0xff] %vm561, %v556
          %563 = vst.msk [vmem:[#allocation2 + $0x8] sm:$0xff] %vm561, %v558
          %564 = vrot.lane.b32.xlu0 %v499, 24
          %v565 = vpop.permute.xlu0 %564
          %566 = vrot.lane.b32.xlu0 %v500, 24
          %v567 = vpop.permute.xlu0 %566
          %vm570 = vcmask 220353
          %571 = vst.msk [vmem:[#allocation2 - $0x1] sm:$0xfe] %vm570, %v565
          %vm572 = vcmask 220352
          %573 = vst.msk [vmem:[#allocation2 + $0x7] sm:$0xff] %vm572, %v567
          %s574 = sadd.s32 32, %s439
          %s575 = scalar_lea.vmem %s372, %s574
          %v576 = vld [vmem:[%s575] sm:$0xff]
          %v577 = vld [vmem:[%s575 + $0x8] sm:$0xff]
          %578 = vst.msk [vmem:[#allocation2 + $0x31] sm:$0xff] %vm443, %v576
          %579 = vst.msk [vmem:[#allocation2 + $0x39] sm:$0x7f] %vm445, %v577
          %582 = vrot.lane.b32.xlu0 %v576, 3
          %v583 = vpop.permute.xlu0 %582
          %584 = vrot.lane.b32.xlu0 %v577, 3
          %v585 = vpop.permute.xlu0 %584
          %588 = vst.msk [vmem:[#allocation2 + $0x30] sm:$0xff] %vm455, %v583
          %589 = vst.msk [vmem:[#allocation2 + $0x38] sm:$0xff] %vm455, %v585
          %590 = vrot.lane.b32.xlu0 %v576, 6
          %v591 = vpop.permute.xlu0 %590
          %592 = vrot.lane.b32.xlu0 %v577, 6
          %v593 = vpop.permute.xlu0 %592
          %596 = vst.msk [vmem:[#allocation2 + $0x2f] sm:$0xfe] %vm464, %v591
          %597 = vst.msk [vmem:[#allocation2 + $0x37] sm:$0xff] %vm466, %v593
          %598 = vrot.lane.b32.xlu0 %v576, 9
          %v599 = vpop.permute.xlu0 %598
          %600 = vrot.lane.b32.xlu0 %v577, 9
          %v601 = vpop.permute.xlu0 %600
          %604 = vst.msk [vmem:[#allocation2 + $0x21] sm:$0xff] %vm474, %v599
          %605 = vst.msk [vmem:[#allocation2 + $0x29] sm:$0x7f] %vm476, %v601
          %606 = vrot.lane.b32.xlu0 %v576, 12
          %v607 = vpop.permute.xlu0 %606
          %608 = vrot.lane.b32.xlu0 %v577, 12
          %v609 = vpop.permute.xlu0 %608
          %612 = vst.msk [vmem:[#allocation2 + $0x20] sm:$0xff] %vm484, %v607
          %613 = vst.msk [vmem:[#allocation2 + $0x28] sm:$0xff] %vm484, %v609
          %614 = vrot.lane.b32.xlu0 %v576, 15
          %v615 = vpop.permute.xlu0 %614
          %616 = vrot.lane.b32.xlu0 %v577, 15
          %v617 = vpop.permute.xlu0 %616
          %620 = vst.msk [vmem:[#allocation2 + $0x1f] sm:$0xfe] %vm493, %v615
          %621 = vst.msk [vmem:[#allocation2 + $0x27] sm:$0xff] %vm495, %v617
          %622 = vrot.lane.b32.xlu0 %v576, 18
          %v623 = vpop.permute.xlu0 %622
          %624 = vrot.lane.b32.xlu0 %v577, 18
          %v625 = vpop.permute.xlu0 %624
          %628 = vst.msk [vmem:[#allocation2 + $0x11] sm:$0xff] %vm551, %v623
          %629 = vst.msk [vmem:[#allocation2 + $0x19] sm:$0x7f] %vm553, %v625
          %630 = vrot.lane.b32.xlu0 %v576, 21
          %v631 = vpop.permute.xlu0 %630
          %632 = vrot.lane.b32.xlu0 %v577, 21
          %v633 = vpop.permute.xlu0 %632
          %636 = vst.msk [vmem:[#allocation2 + $0x10] sm:$0xff] %vm561, %v631
          %637 = vst.msk [vmem:[#allocation2 + $0x18] sm:$0xff] %vm561, %v633
          %638 = vrot.lane.b32.xlu0 %v576, 24
          %v639 = vpop.permute.xlu0 %638
          %640 = vrot.lane.b32.xlu0 %v577, 24
          %v641 = vpop.permute.xlu0 %640
          %644 = vst.msk [vmem:[#allocation2 + $0xf] sm:$0xfe] %vm570, %v639
          %645 = vst.msk [vmem:[#allocation2 + $0x17] sm:$0xff] %vm572, %v641
          %s646 = sadd.s32 48, %s439
          %s647 = scalar_lea.vmem %s372, %s646
          %v648 = vld [vmem:[%s647] sm:$0xff]
          %v649 = vld [vmem:[%s647 + $0x8] sm:$0xff]
          %650 = vst.msk [vmem:[#allocation2 + $0x41] sm:$0xff] %vm443, %v648
          %651 = vst.msk [vmem:[#allocation2 + $0x49] sm:$0x7f] %vm445, %v649
          %654 = vrot.lane.b32.xlu0 %v648, 3
          %v655 = vpop.permute.xlu0 %654
          %656 = vrot.lane.b32.xlu0 %v649, 3
          %v657 = vpop.permute.xlu0 %656
          %660 = vst.msk [vmem:[#allocation2 + $0x40] sm:$0xff] %vm455, %v655
          %661 = vst.msk [vmem:[#allocation2 + $0x48] sm:$0xff] %vm455, %v657
          %662 = vrot.lane.b32.xlu0 %v648, 6
          %v663 = vpop.permute.xlu0 %662
          %664 = vrot.lane.b32.xlu0 %v649, 6
          %v665 = vpop.permute.xlu0 %664
          %668 = vst.msk [vmem:[#allocation2 + $0x3f] sm:$0xfe] %vm464, %v663
          %669 = vst.msk [vmem:[#allocation2 + $0x47] sm:$0xff] %vm466, %v665
          %670 = vrot.lane.b32.xlu0 %v648, 9
          %v671 = vpop.permute.xlu0 %670
          %672 = vrot.lane.b32.xlu0 %v649, 9
          %v673 = vpop.permute.xlu0 %672
          %676 = vst.msk [vmem:[#allocation2 + $0x31] sm:$0xff] %vm474, %v671
          %677 = vst.msk [vmem:[#allocation2 + $0x39] sm:$0x7f] %vm476, %v673
          %678 = vrot.lane.b32.xlu0 %v648, 12
          %v679 = vpop.permute.xlu0 %678
          %680 = vrot.lane.b32.xlu0 %v649, 12
          %v681 = vpop.permute.xlu0 %680
          %684 = vst.msk [vmem:[#allocation2 + $0x30] sm:$0xff] %vm484, %v679
          %685 = vst.msk [vmem:[#allocation2 + $0x38] sm:$0xff] %vm484, %v681
          %686 = vrot.lane.b32.xlu0 %v648, 15
          %v687 = vpop.permute.xlu0 %686
          %688 = vrot.lane.b32.xlu0 %v649, 15
          %v689 = vpop.permute.xlu0 %688
          %692 = vst.msk [vmem:[#allocation2 + $0x2f] sm:$0xfe] %vm493, %v687
          %693 = vst.msk [vmem:[#allocation2 + $0x37] sm:$0xff] %vm495, %v689
          %694 = vrot.lane.b32.xlu0 %v648, 18
          %v695 = vpop.permute.xlu0 %694
          %696 = vrot.lane.b32.xlu0 %v649, 18
          %v697 = vpop.permute.xlu0 %696
          %700 = vst.msk [vmem:[#allocation2 + $0x21] sm:$0xff] %vm551, %v695
          %701 = vst.msk [vmem:[#allocation2 + $0x29] sm:$0x7f] %vm553, %v697
          %702 = vrot.lane.b32.xlu0 %v648, 21
          %v703 = vpop.permute.xlu0 %702
          %704 = vrot.lane.b32.xlu0 %v649, 21
          %v705 = vpop.permute.xlu0 %704
          %708 = vst.msk [vmem:[#allocation2 + $0x20] sm:$0xff] %vm561, %v703
          %709 = vst.msk [vmem:[#allocation2 + $0x28] sm:$0xff] %vm561, %v705
          %710 = vrot.lane.b32.xlu0 %v648, 24
          %v711 = vpop.permute.xlu0 %710
          %712 = vrot.lane.b32.xlu0 %v649, 24
          %v713 = vpop.permute.xlu0 %712
          %716 = vst.msk [vmem:[#allocation2 + $0x1f] sm:$0xfe] %vm570, %v711
          %717 = vst.msk [vmem:[#allocation2 + $0x27] sm:$0xff] %vm572, %v713
          %s718 = sadd.s32 64, %s439
          %s719 = scalar_lea.vmem %s372, %s718
          %v720 = vld [vmem:[%s719] sm:$0xff]
          %v721 = vld [vmem:[%s719 + $0x8] sm:$0xff]
          %722 = vst.msk [vmem:[#allocation2 + $0x51] sm:$0xff] %vm443, %v720
          %723 = vst.msk [vmem:[#allocation2 + $0x59] sm:$0x7f] %vm445, %v721
          %726 = vrot.lane.b32.xlu0 %v720, 3
          %v727 = vpop.permute.xlu0 %726
          %728 = vrot.lane.b32.xlu0 %v721, 3
          %v729 = vpop.permute.xlu0 %728
          %732 = vst.msk [vmem:[#allocation2 + $0x50] sm:$0xff] %vm455, %v727
          %733 = vst.msk [vmem:[#allocation2 + $0x58] sm:$0xff] %vm455, %v729
          %734 = vrot.lane.b32.xlu0 %v720, 6
          %v735 = vpop.permute.xlu0 %734
          %736 = vrot.lane.b32.xlu0 %v721, 6
          %v737 = vpop.permute.xlu0 %736
          %740 = vst.msk [vmem:[#allocation2 + $0x4f] sm:$0xfe] %vm464, %v735
          %741 = vst.msk [vmem:[#allocation2 + $0x57] sm:$0xff] %vm466, %v737
          %742 = vrot.lane.b32.xlu0 %v720, 9
          %v743 = vpop.permute.xlu0 %742
          %744 = vrot.lane.b32.xlu0 %v721, 9
          %v745 = vpop.permute.xlu0 %744
          %748 = vst.msk [vmem:[#allocation2 + $0x41] sm:$0xff] %vm474, %v743
          %749 = vst.msk [vmem:[#allocation2 + $0x49] sm:$0x7f] %vm476, %v745
          %750 = vrot.lane.b32.xlu0 %v720, 12
          %v751 = vpop.permute.xlu0 %750
          %752 = vrot.lane.b32.xlu0 %v721, 12
          %v753 = vpop.permute.xlu0 %752
          %756 = vst.msk [vmem:[#allocation2 + $0x40] sm:$0xff] %vm484, %v751
          %757 = vst.msk [vmem:[#allocation2 + $0x48] sm:$0xff] %vm484, %v753
          %758 = vrot.lane.b32.xlu0 %v720, 15
          %v759 = vpop.permute.xlu0 %758
          %760 = vrot.lane.b32.xlu0 %v721, 15
          %v761 = vpop.permute.xlu0 %760
          %764 = vst.msk [vmem:[#allocation2 + $0x3f] sm:$0xfe] %vm493, %v759
          %765 = vst.msk [vmem:[#allocation2 + $0x47] sm:$0xff] %vm495, %v761
          %766 = vrot.lane.b32.xlu0 %v720, 18
          %v767 = vpop.permute.xlu0 %766
          %768 = vrot.lane.b32.xlu0 %v721, 18
          %v769 = vpop.permute.xlu0 %768
          %772 = vst.msk [vmem:[#allocation2 + $0x31] sm:$0xff] %vm551, %v767
          %773 = vst.msk [vmem:[#allocation2 + $0x39] sm:$0x7f] %vm553, %v769
          %774 = vrot.lane.b32.xlu0 %v720, 21
          %v775 = vpop.permute.xlu0 %774
          %776 = vrot.lane.b32.xlu0 %v721, 21
          %v777 = vpop.permute.xlu0 %776
          %780 = vst.msk [vmem:[#allocation2 + $0x30] sm:$0xff] %vm561, %v775
          %781 = vst.msk [vmem:[#allocation2 + $0x38] sm:$0xff] %vm561, %v777
          %782 = vrot.lane.b32.xlu0 %v720, 24
          %v783 = vpop.permute.xlu0 %782
          %784 = vrot.lane.b32.xlu0 %v721, 24
          %v785 = vpop.permute.xlu0 %784
          %788 = vst.msk [vmem:[#allocation2 + $0x2f] sm:$0xfe] %vm570, %v783
          %789 = vst.msk [vmem:[#allocation2 + $0x37] sm:$0xff] %vm572, %v785
          %s790 = sadd.s32 80, %s439
          %s791 = scalar_lea.vmem %s372, %s790
          %v792 = vld [vmem:[%s791] sm:$0xff]
          %v793 = vld [vmem:[%s791 + $0x8] sm:$0xff]
          %794 = vst.msk [vmem:[#allocation2 + $0x61] sm:$0xff] %vm443, %v792
          %795 = vst.msk [vmem:[#allocation2 + $0x69] sm:$0x7f] %vm445, %v793
          %798 = vrot.lane.b32.xlu0 %v792, 3
          %v799 = vpop.permute.xlu0 %798
          %800 = vrot.lane.b32.xlu0 %v793, 3
          %v801 = vpop.permute.xlu0 %800
          %804 = vst.msk [vmem:[#allocation2 + $0x60] sm:$0xff] %vm455, %v799
          %805 = vst.msk [vmem:[#allocation2 + $0x68] sm:$0xff] %vm455, %v801
          %806 = vrot.lane.b32.xlu0 %v792, 6
          %v807 = vpop.permute.xlu0 %806
          %808 = vrot.lane.b32.xlu0 %v793, 6
          %v809 = vpop.permute.xlu0 %808
          %812 = vst.msk [vmem:[#allocation2 + $0x5f] sm:$0xfe] %vm464, %v807
          %813 = vst.msk [vmem:[#allocation2 + $0x67] sm:$0xff] %vm466, %v809
          %814 = vrot.lane.b32.xlu0 %v792, 9
          %v815 = vpop.permute.xlu0 %814
          %816 = vrot.lane.b32.xlu0 %v793, 9
          %v817 = vpop.permute.xlu0 %816
          %820 = vst.msk [vmem:[#allocation2 + $0x51] sm:$0xff] %vm474, %v815
          %821 = vst.msk [vmem:[#allocation2 + $0x59] sm:$0x7f] %vm476, %v817
          %822 = vrot.lane.b32.xlu0 %v792, 12
          %v823 = vpop.permute.xlu0 %822
          %824 = vrot.lane.b32.xlu0 %v793, 12
          %v825 = vpop.permute.xlu0 %824
          %828 = vst.msk [vmem:[#allocation2 + $0x50] sm:$0xff] %vm484, %v823
          %829 = vst.msk [vmem:[#allocation2 + $0x58] sm:$0xff] %vm484, %v825
          %830 = vrot.lane.b32.xlu0 %v792, 15
          %v831 = vpop.permute.xlu0 %830
          %832 = vrot.lane.b32.xlu0 %v793, 15
          %v833 = vpop.permute.xlu0 %832
          %836 = vst.msk [vmem:[#allocation2 + $0x4f] sm:$0xfe] %vm493, %v831
          %837 = vst.msk [vmem:[#allocation2 + $0x57] sm:$0xff] %vm495, %v833
          %838 = vrot.lane.b32.xlu0 %v792, 18
          %v839 = vpop.permute.xlu0 %838
          %840 = vrot.lane.b32.xlu0 %v793, 18
          %v841 = vpop.permute.xlu0 %840
          %844 = vst.msk [vmem:[#allocation2 + $0x41] sm:$0xff] %vm551, %v839
          %845 = vst.msk [vmem:[#allocation2 + $0x49] sm:$0x7f] %vm553, %v841
          %846 = vrot.lane.b32.xlu0 %v792, 21
          %v847 = vpop.permute.xlu0 %846
          %848 = vrot.lane.b32.xlu0 %v793, 21
          %v849 = vpop.permute.xlu0 %848
          %852 = vst.msk [vmem:[#allocation2 + $0x40] sm:$0xff] %vm561, %v847
          %853 = vst.msk [vmem:[#allocation2 + $0x48] sm:$0xff] %vm561, %v849
          %854 = vrot.lane.b32.xlu0 %v792, 24
          %v855 = vpop.permute.xlu0 %854
          %856 = vrot.lane.b32.xlu0 %v793, 24
          %v857 = vpop.permute.xlu0 %856
          %860 = vst.msk [vmem:[#allocation2 + $0x3f] sm:$0xfe] %vm570, %v855
          %861 = vst.msk [vmem:[#allocation2 + $0x47] sm:$0xff] %vm572, %v857
          %s862 = sadd.s32 96, %s439
          %s863 = scalar_lea.vmem %s372, %s862
          %v864 = vld [vmem:[%s863] sm:$0xff]
          %v865 = vld [vmem:[%s863 + $0x8] sm:$0xff]
          %866 = vst.msk [vmem:[#allocation2 + $0x71] sm:$0xff] %vm443, %v864
          %867 = vst.msk [vmem:[#allocation2 + $0x79] sm:$0x7f] %vm445, %v865
          %870 = vrot.lane.b32.xlu0 %v864, 3
          %v871 = vpop.permute.xlu0 %870
          %872 = vrot.lane.b32.xlu0 %v865, 3
          %v873 = vpop.permute.xlu0 %872
          %876 = vst.msk [vmem:[#allocation2 + $0x70] sm:$0xff] %vm455, %v871
          %877 = vst.msk [vmem:[#allocation2 + $0x78] sm:$0xff] %vm455, %v873
          %878 = vrot.lane.b32.xlu0 %v864, 6
          %v879 = vpop.permute.xlu0 %878
          %880 = vrot.lane.b32.xlu0 %v865, 6
          %v881 = vpop.permute.xlu0 %880
          %884 = vst.msk [vmem:[#allocation2 + $0x6f] sm:$0xfe] %vm464, %v879
          %885 = vst.msk [vmem:[#allocation2 + $0x77] sm:$0xff] %vm466, %v881
          %886 = vrot.lane.b32.xlu0 %v864, 9
          %v887 = vpop.permute.xlu0 %886
          %888 = vrot.lane.b32.xlu0 %v865, 9
          %v889 = vpop.permute.xlu0 %888
          %892 = vst.msk [vmem:[#allocation2 + $0x61] sm:$0xff] %vm474, %v887
          %893 = vst.msk [vmem:[#allocation2 + $0x69] sm:$0x7f] %vm476, %v889
          %894 = vrot.lane.b32.xlu0 %v864, 12
          %v895 = vpop.permute.xlu0 %894
          %896 = vrot.lane.b32.xlu0 %v865, 12
          %v897 = vpop.permute.xlu0 %896
          %900 = vst.msk [vmem:[#allocation2 + $0x60] sm:$0xff] %vm484, %v895
          %901 = vst.msk [vmem:[#allocation2 + $0x68] sm:$0xff] %vm484, %v897
          %902 = vrot.lane.b32.xlu0 %v864, 15
          %v903 = vpop.permute.xlu0 %902
          %904 = vrot.lane.b32.xlu0 %v865, 15
          %v905 = vpop.permute.xlu0 %904
          %908 = vst.msk [vmem:[#allocation2 + $0x5f] sm:$0xfe] %vm493, %v903
          %909 = vst.msk [vmem:[#allocation2 + $0x67] sm:$0xff] %vm495, %v905
          %910 = vrot.lane.b32.xlu0 %v864, 18
          %v911 = vpop.permute.xlu0 %910
          %912 = vrot.lane.b32.xlu0 %v865, 18
          %v913 = vpop.permute.xlu0 %912
          %916 = vst.msk [vmem:[#allocation2 + $0x51] sm:$0xff] %vm551, %v911
          %917 = vst.msk [vmem:[#allocation2 + $0x59] sm:$0x7f] %vm553, %v913
          %918 = vrot.lane.b32.xlu0 %v864, 21
          %v919 = vpop.permute.xlu0 %918
          %920 = vrot.lane.b32.xlu0 %v865, 21
          %v921 = vpop.permute.xlu0 %920
          %924 = vst.msk [vmem:[#allocation2 + $0x50] sm:$0xff] %vm561, %v919
          %925 = vst.msk [vmem:[#allocation2 + $0x58] sm:$0xff] %vm561, %v921
          %926 = vrot.lane.b32.xlu0 %v864, 24
          %v927 = vpop.permute.xlu0 %926
          %928 = vrot.lane.b32.xlu0 %v865, 24
          %v929 = vpop.permute.xlu0 %928
          %932 = vst.msk [vmem:[#allocation2 + $0x4f] sm:$0xfe] %vm570, %v927
          %933 = vst.msk [vmem:[#allocation2 + $0x57] sm:$0xff] %vm572, %v929
          %s934 = sadd.s32 112, %s439
          %s935 = scalar_lea.vmem %s372, %s934
          %v936 = vld [vmem:[%s935] sm:$0xff]
          %v937 = vld [vmem:[%s935 + $0x8] sm:$0xff]
          %938 = vst.msk [vmem:[#allocation2 + $0x81] sm:$0xff] %vm443, %v936
          %939 = vst.msk [vmem:[#allocation2 + $0x89] sm:$0x7f] %vm445, %v937
          %942 = vrot.lane.b32.xlu0 %v936, 3
          %v943 = vpop.permute.xlu0 %942
          %944 = vrot.lane.b32.xlu0 %v937, 3
          %v945 = vpop.permute.xlu0 %944
          %948 = vst.msk [vmem:[#allocation2 + $0x80] sm:$0xff] %vm455, %v943
          %949 = vst.msk [vmem:[#allocation2 + $0x88] sm:$0xff] %vm455, %v945
          %950 = vrot.lane.b32.xlu0 %v936, 6
          %v951 = vpop.permute.xlu0 %950
          %952 = vrot.lane.b32.xlu0 %v937, 6
          %v953 = vpop.permute.xlu0 %952
          %956 = vst.msk [vmem:[#allocation2 + $0x7f] sm:$0xfe] %vm464, %v951
          %957 = vst.msk [vmem:[#allocation2 + $0x87] sm:$0xff] %vm466, %v953
          %958 = vrot.lane.b32.xlu0 %v936, 9
          %v959 = vpop.permute.xlu0 %958
          %960 = vrot.lane.b32.xlu0 %v937, 9
          %v961 = vpop.permute.xlu0 %960
          %964 = vst.msk [vmem:[#allocation2 + $0x71] sm:$0xff] %vm474, %v959
          %965 = vst.msk [vmem:[#allocation2 + $0x79] sm:$0x7f] %vm476, %v961
          %966 = vrot.lane.b32.xlu0 %v936, 12
          %v967 = vpop.permute.xlu0 %966
          %968 = vrot.lane.b32.xlu0 %v937, 12
          %v969 = vpop.permute.xlu0 %968
          %972 = vst.msk [vmem:[#allocation2 + $0x70] sm:$0xff] %vm484, %v967
          %973 = vst.msk [vmem:[#allocation2 + $0x78] sm:$0xff] %vm484, %v969
          %974 = vrot.lane.b32.xlu0 %v936, 15
          %v975 = vpop.permute.xlu0 %974
          %976 = vrot.lane.b32.xlu0 %v937, 15
          %v977 = vpop.permute.xlu0 %976
          %980 = vst.msk [vmem:[#allocation2 + $0x6f] sm:$0xfe] %vm493, %v975
          %981 = vst.msk [vmem:[#allocation2 + $0x77] sm:$0xff] %vm495, %v977
          %982 = vrot.lane.b32.xlu0 %v936, 18
          %v983 = vpop.permute.xlu0 %982
          %984 = vrot.lane.b32.xlu0 %v937, 18
          %v985 = vpop.permute.xlu0 %984
          %988 = vst.msk [vmem:[#allocation2 + $0x61] sm:$0xff] %vm551, %v983
          %989 = vst.msk [vmem:[#allocation2 + $0x69] sm:$0x7f] %vm553, %v985
          %990 = vrot.lane.b32.xlu0 %v936, 21
          %v991 = vpop.permute.xlu0 %990
          %992 = vrot.lane.b32.xlu0 %v937, 21
          %v993 = vpop.permute.xlu0 %992
          %996 = vst.msk [vmem:[#allocation2 + $0x60] sm:$0xff] %vm561, %v991
          %997 = vst.msk [vmem:[#allocation2 + $0x68] sm:$0xff] %vm561, %v993
          %998 = vrot.lane.b32.xlu0 %v936, 24
          %v999 = vpop.permute.xlu0 %998
          %1000 = vrot.lane.b32.xlu0 %v937, 24
          %v1001 = vpop.permute.xlu0 %1000
          %1004 = vst.msk [vmem:[#allocation2 + $0x5f] sm:$0xfe] %vm570, %v999
          %1005 = vst.msk [vmem:[#allocation2 + $0x67] sm:$0xff] %vm572, %v1001
          %s1006 = sadd.s32 128, %s439
          %s1007 = scalar_lea.vmem %s372, %s1006
          %v1008 = vld [vmem:[%s1007] sm:$0xff]
          %v1009 = vld [vmem:[%s1007 + $0x8] sm:$0xff]
          %1010 = vst.msk [vmem:[#allocation2 + $0x91] sm:$0xff] %vm443, %v1008
          %1011 = vst.msk [vmem:[#allocation2 + $0x99] sm:$0x7f] %vm445, %v1009
          %1014 = vrot.lane.b32.xlu0 %v1008, 3
          %v1015 = vpop.permute.xlu0 %1014
          %1016 = vrot.lane.b32.xlu0 %v1009, 3
          %v1017 = vpop.permute.xlu0 %1016
          %1020 = vst.msk [vmem:[#allocation2 + $0x90] sm:$0xff] %vm455, %v1015
          %1021 = vst.msk [vmem:[#allocation2 + $0x98] sm:$0xff] %vm455, %v1017
          %1022 = vrot.lane.b32.xlu0 %v1008, 6
          %v1023 = vpop.permute.xlu0 %1022
          %1024 = vrot.lane.b32.xlu0 %v1009, 6
          %v1025 = vpop.permute.xlu0 %1024
          %1028 = vst.msk [vmem:[#allocation2 + $0x8f] sm:$0xfe] %vm464, %v1023
          %1029 = vst.msk [vmem:[#allocation2 + $0x97] sm:$0xff] %vm466, %v1025
          %1030 = vrot.lane.b32.xlu0 %v1008, 9
          %v1031 = vpop.permute.xlu0 %1030
          %1032 = vrot.lane.b32.xlu0 %v1009, 9
          %v1033 = vpop.permute.xlu0 %1032
          %1036 = vst.msk [vmem:[#allocation2 + $0x81] sm:$0xff] %vm474, %v1031
          %1037 = vst.msk [vmem:[#allocation2 + $0x89] sm:$0x7f] %vm476, %v1033
          %1038 = vrot.lane.b32.xlu0 %v1008, 12
          %v1039 = vpop.permute.xlu0 %1038
          %1040 = vrot.lane.b32.xlu0 %v1009, 12
          %v1041 = vpop.permute.xlu0 %1040
          %1044 = vst.msk [vmem:[#allocation2 + $0x80] sm:$0xff] %vm484, %v1039
          %1045 = vst.msk [vmem:[#allocation2 + $0x88] sm:$0xff] %vm484, %v1041
          %1046 = vrot.lane.b32.xlu0 %v1008, 15
          %v1047 = vpop.permute.xlu0 %1046
          %1048 = vrot.lane.b32.xlu0 %v1009, 15
          %v1049 = vpop.permute.xlu0 %1048
          %1052 = vst.msk [vmem:[#allocation2 + $0x7f] sm:$0xfe] %vm493, %v1047
          %1053 = vst.msk [vmem:[#allocation2 + $0x87] sm:$0xff] %vm495, %v1049
          %1054 = vrot.lane.b32.xlu0 %v1008, 18
          %v1055 = vpop.permute.xlu0 %1054
          %1056 = vrot.lane.b32.xlu0 %v1009, 18
          %v1057 = vpop.permute.xlu0 %1056
          %1060 = vst.msk [vmem:[#allocation2 + $0x71] sm:$0xff] %vm551, %v1055
          %1061 = vst.msk [vmem:[#allocation2 + $0x79] sm:$0x7f] %vm553, %v1057
          %1062 = vrot.lane.b32.xlu0 %v1008, 21
          %v1063 = vpop.permute.xlu0 %1062
          %1064 = vrot.lane.b32.xlu0 %v1009, 21
          %v1065 = vpop.permute.xlu0 %1064
          %1068 = vst.msk [vmem:[#allocation2 + $0x70] sm:$0xff] %vm561, %v1063
          %1069 = vst.msk [vmem:[#allocation2 + $0x78] sm:$0xff] %vm561, %v1065
          %1070 = vrot.lane.b32.xlu0 %v1008, 24
          %v1071 = vpop.permute.xlu0 %1070
          %1072 = vrot.lane.b32.xlu0 %v1009, 24
          %v1073 = vpop.permute.xlu0 %1072
          %1076 = vst.msk [vmem:[#allocation2 + $0x6f] sm:$0xfe] %vm570, %v1071
          %1077 = vst.msk [vmem:[#allocation2 + $0x77] sm:$0xff] %vm572, %v1073
          %s1078 = sadd.s32 144, %s439
          %s1079 = scalar_lea.vmem %s372, %s1078
          %v1080 = vld [vmem:[%s1079] sm:$0xff]
          %v1081 = vld [vmem:[%s1079 + $0x8] sm:$0xff]
          %1082 = vst.msk [vmem:[#allocation2 + $0xa1] sm:$0xff] %vm443, %v1080
          %1083 = vst.msk [vmem:[#allocation2 + $0xa9] sm:$0x7f] %vm445, %v1081
          %1086 = vrot.lane.b32.xlu0 %v1080, 3
          %v1087 = vpop.permute.xlu0 %1086
          %1088 = vrot.lane.b32.xlu0 %v1081, 3
          %v1089 = vpop.permute.xlu0 %1088
          %1092 = vst.msk [vmem:[#allocation2 + $0xa0] sm:$0xff] %vm455, %v1087
          %1093 = vst.msk [vmem:[#allocation2 + $0xa8] sm:$0xff] %vm455, %v1089
          %1094 = vrot.lane.b32.xlu0 %v1080, 6
          %v1095 = vpop.permute.xlu0 %1094
          %1096 = vrot.lane.b32.xlu0 %v1081, 6
          %v1097 = vpop.permute.xlu0 %1096
          %1100 = vst.msk [vmem:[#allocation2 + $0x9f] sm:$0xfe] %vm464, %v1095
          %1101 = vst.msk [vmem:[#allocation2 + $0xa7] sm:$0xff] %vm466, %v1097
          %1102 = vrot.lane.b32.xlu0 %v1080, 9
          %v1103 = vpop.permute.xlu0 %1102
          %1104 = vrot.lane.b32.xlu0 %v1081, 9
          %v1105 = vpop.permute.xlu0 %1104
          %1108 = vst.msk [vmem:[#allocation2 + $0x91] sm:$0xff] %vm474, %v1103
          %1109 = vst.msk [vmem:[#allocation2 + $0x99] sm:$0x7f] %vm476, %v1105
          %1110 = vrot.lane.b32.xlu0 %v1080, 12
          %v1111 = vpop.permute.xlu0 %1110
          %1112 = vrot.lane.b32.xlu0 %v1081, 12
          %v1113 = vpop.permute.xlu0 %1112
          %1116 = vst.msk [vmem:[#allocation2 + $0x90] sm:$0xff] %vm484, %v1111
          %1117 = vst.msk [vmem:[#allocation2 + $0x98] sm:$0xff] %vm484, %v1113
          %1118 = vrot.lane.b32.xlu0 %v1080, 15
          %v1119 = vpop.permute.xlu0 %1118
          %1120 = vrot.lane.b32.xlu0 %v1081, 15
          %v1121 = vpop.permute.xlu0 %1120
          %1124 = vst.msk [vmem:[#allocation2 + $0x8f] sm:$0xfe] %vm493, %v1119
          %1125 = vst.msk [vmem:[#allocation2 + $0x97] sm:$0xff] %vm495, %v1121
          %1126 = vrot.lane.b32.xlu0 %v1080, 18
          %v1127 = vpop.permute.xlu0 %1126
          %1128 = vrot.lane.b32.xlu0 %v1081, 18
          %v1129 = vpop.permute.xlu0 %1128
          %1132 = vst.msk [vmem:[#allocation2 + $0x81] sm:$0xff] %vm551, %v1127
          %1133 = vst.msk [vmem:[#allocation2 + $0x89] sm:$0x7f] %vm553, %v1129
          %1134 = vrot.lane.b32.xlu0 %v1080, 21
          %v1135 = vpop.permute.xlu0 %1134
          %1136 = vrot.lane.b32.xlu0 %v1081, 21
          %v1137 = vpop.permute.xlu0 %1136
          %1140 = vst.msk [vmem:[#allocation2 + $0x80] sm:$0xff] %vm561, %v1135
          %1141 = vst.msk [vmem:[#allocation2 + $0x88] sm:$0xff] %vm561, %v1137
          %1142 = vrot.lane.b32.xlu0 %v1080, 24
          %v1143 = vpop.permute.xlu0 %1142
          %1144 = vrot.lane.b32.xlu0 %v1081, 24
          %v1145 = vpop.permute.xlu0 %1144
          %1148 = vst.msk [vmem:[#allocation2 + $0x7f] sm:$0xfe] %vm570, %v1143
          %1149 = vst.msk [vmem:[#allocation2 + $0x87] sm:$0xff] %vm572, %v1145
          %s1150 = sadd.s32 160, %s439
          %s1151 = scalar_lea.vmem %s372, %s1150
          %v1152 = vld [vmem:[%s1151] sm:$0xff]
          %v1153 = vld [vmem:[%s1151 + $0x8] sm:$0xff]
          %1154 = vst.msk [vmem:[#allocation2 + $0xb1] sm:$0xff] %vm443, %v1152
          %1155 = vst.msk [vmem:[#allocation2 + $0xb9] sm:$0x7f] %vm445, %v1153
          %1158 = vrot.lane.b32.xlu0 %v1152, 3
          %v1159 = vpop.permute.xlu0 %1158
          %1160 = vrot.lane.b32.xlu0 %v1153, 3
          %v1161 = vpop.permute.xlu0 %1160
          %1164 = vst.msk [vmem:[#allocation2 + $0xb0] sm:$0xff] %vm455, %v1159
          %1165 = vst.msk [vmem:[#allocation2 + $0xb8] sm:$0xff] %vm455, %v1161
          %1166 = vrot.lane.b32.xlu0 %v1152, 6
          %v1167 = vpop.permute.xlu0 %1166
          %1168 = vrot.lane.b32.xlu0 %v1153, 6
          %v1169 = vpop.permute.xlu0 %1168
          %1172 = vst.msk [vmem:[#allocation2 + $0xaf] sm:$0xfe] %vm464, %v1167
          %1173 = vst.msk [vmem:[#allocation2 + $0xb7] sm:$0xff] %vm466, %v1169
          %1174 = vrot.lane.b32.xlu0 %v1152, 9
          %v1175 = vpop.permute.xlu0 %1174
          %1176 = vrot.lane.b32.xlu0 %v1153, 9
          %v1177 = vpop.permute.xlu0 %1176
          %1180 = vst.msk [vmem:[#allocation2 + $0xa1] sm:$0xff] %vm474, %v1175
          %1181 = vst.msk [vmem:[#allocation2 + $0xa9] sm:$0x7f] %vm476, %v1177
          %1182 = vrot.lane.b32.xlu0 %v1152, 12
          %v1183 = vpop.permute.xlu0 %1182
          %1184 = vrot.lane.b32.xlu0 %v1153, 12
          %v1185 = vpop.permute.xlu0 %1184
          %1188 = vst.msk [vmem:[#allocation2 + $0xa0] sm:$0xff] %vm484, %v1183
          %1189 = vst.msk [vmem:[#allocation2 + $0xa8] sm:$0xff] %vm484, %v1185
          %1190 = vrot.lane.b32.xlu0 %v1152, 15
          %v1191 = vpop.permute.xlu0 %1190
          %1192 = vrot.lane.b32.xlu0 %v1153, 15
          %v1193 = vpop.permute.xlu0 %1192
          %1196 = vst.msk [vmem:[#allocation2 + $0x9f] sm:$0xfe] %vm493, %v1191
          %1197 = vst.msk [vmem:[#allocation2 + $0xa7] sm:$0xff] %vm495, %v1193
          %1198 = vrot.lane.b32.xlu0 %v1152, 18
          %v1199 = vpop.permute.xlu0 %1198
          %1200 = vrot.lane.b32.xlu0 %v1153, 18
          %v1201 = vpop.permute.xlu0 %1200
          %1204 = vst.msk [vmem:[#allocation2 + $0x91] sm:$0xff] %vm551, %v1199
          %1205 = vst.msk [vmem:[#allocation2 + $0x99] sm:$0x7f] %vm553, %v1201
          %1206 = vrot.lane.b32.xlu0 %v1152, 21
          %v1207 = vpop.permute.xlu0 %1206
          %1208 = vrot.lane.b32.xlu0 %v1153, 21
          %v1209 = vpop.permute.xlu0 %1208
          %1212 = vst.msk [vmem:[#allocation2 + $0x90] sm:$0xff] %vm561, %v1207
          %1213 = vst.msk [vmem:[#allocation2 + $0x98] sm:$0xff] %vm561, %v1209
          %1214 = vrot.lane.b32.xlu0 %v1152, 24
          %v1215 = vpop.permute.xlu0 %1214
          %1216 = vrot.lane.b32.xlu0 %v1153, 24
          %v1217 = vpop.permute.xlu0 %1216
          %1220 = vst.msk [vmem:[#allocation2 + $0x8f] sm:$0xfe] %vm570, %v1215
          %1221 = vst.msk [vmem:[#allocation2 + $0x97] sm:$0xff] %vm572, %v1217
          %s1222 = sadd.s32 176, %s439
          %s1223 = scalar_lea.vmem %s372, %s1222
          %v1224 = vld [vmem:[%s1223] sm:$0xff]
          %v1225 = vld [vmem:[%s1223 + $0x8] sm:$0xff]
          %1226 = vst.msk [vmem:[#allocation2 + $0xc1] sm:$0xff] %vm443, %v1224
          %1227 = vst.msk [vmem:[#allocation2 + $0xc9] sm:$0x7f] %vm445, %v1225
          %1230 = vrot.lane.b32.xlu0 %v1224, 3
          %v1231 = vpop.permute.xlu0 %1230
          %1232 = vrot.lane.b32.xlu0 %v1225, 3
          %v1233 = vpop.permute.xlu0 %1232
          %1236 = vst.msk [vmem:[#allocation2 + $0xc0] sm:$0xff] %vm455, %v1231
          %1237 = vst.msk [vmem:[#allocation2 + $0xc8] sm:$0xff] %vm455, %v1233
          %1238 = vrot.lane.b32.xlu0 %v1224, 6
          %v1239 = vpop.permute.xlu0 %1238
          %1240 = vrot.lane.b32.xlu0 %v1225, 6
          %v1241 = vpop.permute.xlu0 %1240
          %1244 = vst.msk [vmem:[#allocation2 + $0xbf] sm:$0xfe] %vm464, %v1239
          %1245 = vst.msk [vmem:[#allocation2 + $0xc7] sm:$0xff] %vm466, %v1241
          %1246 = vrot.lane.b32.xlu0 %v1224, 9
          %v1247 = vpop.permute.xlu0 %1246
          %1248 = vrot.lane.b32.xlu0 %v1225, 9
          %v1249 = vpop.permute.xlu0 %1248
          %1252 = vst.msk [vmem:[#allocation2 + $0xb1] sm:$0xff] %vm474, %v1247
          %1253 = vst.msk [vmem:[#allocation2 + $0xb9] sm:$0x7f] %vm476, %v1249
          %1254 = vrot.lane.b32.xlu0 %v1224, 12
          %v1255 = vpop.permute.xlu0 %1254
          %1256 = vrot.lane.b32.xlu0 %v1225, 12
          %v1257 = vpop.permute.xlu0 %1256
          %1260 = vst.msk [vmem:[#allocation2 + $0xb0] sm:$0xff] %vm484, %v1255
          %1261 = vst.msk [vmem:[#allocation2 + $0xb8] sm:$0xff] %vm484, %v1257
          %1262 = vrot.lane.b32.xlu0 %v1224, 15
          %v1263 = vpop.permute.xlu0 %1262
          %1264 = vrot.lane.b32.xlu0 %v1225, 15
          %v1265 = vpop.permute.xlu0 %1264
          %1268 = vst.msk [vmem:[#allocation2 + $0xaf] sm:$0xfe] %vm493, %v1263
          %1269 = vst.msk [vmem:[#allocation2 + $0xb7] sm:$0xff] %vm495, %v1265
          %1270 = vrot.lane.b32.xlu0 %v1224, 18
          %v1271 = vpop.permute.xlu0 %1270
          %1272 = vrot.lane.b32.xlu0 %v1225, 18
          %v1273 = vpop.permute.xlu0 %1272
          %1276 = vst.msk [vmem:[#allocation2 + $0xa1] sm:$0xff] %vm551, %v1271
          %1277 = vst.msk [vmem:[#allocation2 + $0xa9] sm:$0x7f] %vm553, %v1273
          %1278 = vrot.lane.b32.xlu0 %v1224, 21
          %v1279 = vpop.permute.xlu0 %1278
          %1280 = vrot.lane.b32.xlu0 %v1225, 21
          %v1281 = vpop.permute.xlu0 %1280
          %1284 = vst.msk [vmem:[#allocation2 + $0xa0] sm:$0xff] %vm561, %v1279
          %1285 = vst.msk [vmem:[#allocation2 + $0xa8] sm:$0xff] %vm561, %v1281
          %1286 = vrot.lane.b32.xlu0 %v1224, 24
          %v1287 = vpop.permute.xlu0 %1286
          %1288 = vrot.lane.b32.xlu0 %v1225, 24
          %v1289 = vpop.permute.xlu0 %1288
          %1292 = vst.msk [vmem:[#allocation2 + $0x9f] sm:$0xfe] %vm570, %v1287
          %1293 = vst.msk [vmem:[#allocation2 + $0xa7] sm:$0xff] %vm572, %v1289
          %s1294 = sadd.s32 192, %s439
          %s1295 = scalar_lea.vmem %s372, %s1294
          %v1296 = vld [vmem:[%s1295] sm:$0xff]
          %v1297 = vld [vmem:[%s1295 + $0x8] sm:$0xff]
          %1298 = vst.msk [vmem:[#allocation2 + $0xd1] sm:$0xff] %vm443, %v1296
          %1299 = vst.msk [vmem:[#allocation2 + $0xd9] sm:$0x7f] %vm445, %v1297
          %1302 = vrot.lane.b32.xlu0 %v1296, 3
          %v1303 = vpop.permute.xlu0 %1302
          %1304 = vrot.lane.b32.xlu0 %v1297, 3
          %v1305 = vpop.permute.xlu0 %1304
          %1308 = vst.msk [vmem:[#allocation2 + $0xd0] sm:$0xff] %vm455, %v1303
          %1309 = vst.msk [vmem:[#allocation2 + $0xd8] sm:$0xff] %vm455, %v1305
          %1310 = vrot.lane.b32.xlu0 %v1296, 6
          %v1311 = vpop.permute.xlu0 %1310
          %1312 = vrot.lane.b32.xlu0 %v1297, 6
          %v1313 = vpop.permute.xlu0 %1312
          %1316 = vst.msk [vmem:[#allocation2 + $0xcf] sm:$0xfe] %vm464, %v1311
          %1317 = vst.msk [vmem:[#allocation2 + $0xd7] sm:$0xff] %vm466, %v1313
          %1318 = vrot.lane.b32.xlu0 %v1296, 9
          %v1319 = vpop.permute.xlu0 %1318
          %1320 = vrot.lane.b32.xlu0 %v1297, 9
          %v1321 = vpop.permute.xlu0 %1320
          %1324 = vst.msk [vmem:[#allocation2 + $0xc1] sm:$0xff] %vm474, %v1319
          %1325 = vst.msk [vmem:[#allocation2 + $0xc9] sm:$0x7f] %vm476, %v1321
          %1326 = vrot.lane.b32.xlu0 %v1296, 12
          %v1327 = vpop.permute.xlu0 %1326
          %1328 = vrot.lane.b32.xlu0 %v1297, 12
          %v1329 = vpop.permute.xlu0 %1328
          %1332 = vst.msk [vmem:[#allocation2 + $0xc0] sm:$0xff] %vm484, %v1327
          %1333 = vst.msk [vmem:[#allocation2 + $0xc8] sm:$0xff] %vm484, %v1329
          %1334 = vrot.lane.b32.xlu0 %v1296, 15
          %v1335 = vpop.permute.xlu0 %1334
          %1336 = vrot.lane.b32.xlu0 %v1297, 15
          %v1337 = vpop.permute.xlu0 %1336
          %1340 = vst.msk [vmem:[#allocation2 + $0xbf] sm:$0xfe] %vm493, %v1335
          %1341 = vst.msk [vmem:[#allocation2 + $0xc7] sm:$0xff] %vm495, %v1337
          %1342 = vrot.lane.b32.xlu0 %v1296, 18
          %v1343 = vpop.permute.xlu0 %1342
          %1344 = vrot.lane.b32.xlu0 %v1297, 18
          %v1345 = vpop.permute.xlu0 %1344
          %1348 = vst.msk [vmem:[#allocation2 + $0xb1] sm:$0xff] %vm551, %v1343
          %1349 = vst.msk [vmem:[#allocation2 + $0xb9] sm:$0x7f] %vm553, %v1345
          %1350 = vrot.lane.b32.xlu0 %v1296, 21
          %v1351 = vpop.permute.xlu0 %1350
          %1352 = vrot.lane.b32.xlu0 %v1297, 21
          %v1353 = vpop.permute.xlu0 %1352
          %1356 = vst.msk [vmem:[#allocation2 + $0xb0] sm:$0xff] %vm561, %v1351
          %1357 = vst.msk [vmem:[#allocation2 + $0xb8] sm:$0xff] %vm561, %v1353
          %1358 = vrot.lane.b32.xlu0 %v1296, 24
          %v1359 = vpop.permute.xlu0 %1358
          %1360 = vrot.lane.b32.xlu0 %v1297, 24
          %v1361 = vpop.permute.xlu0 %1360
          %1364 = vst.msk [vmem:[#allocation2 + $0xaf] sm:$0xfe] %vm570, %v1359
          %1365 = vst.msk [vmem:[#allocation2 + $0xb7] sm:$0xff] %vm572, %v1361
          %s1366 = sadd.s32 208, %s439
          %s1367 = scalar_lea.vmem %s372, %s1366
          %v1368 = vld [vmem:[%s1367] sm:$0xff]
          %v1369 = vld [vmem:[%s1367 + $0x8] sm:$0xff]
          %1370 = vst.msk [vmem:[#allocation2 + $0xe1] sm:$0xff] %vm443, %v1368
          %1371 = vst.msk [vmem:[#allocation2 + $0xe9] sm:$0x7f] %vm445, %v1369
          %1374 = vrot.lane.b32.xlu0 %v1368, 3
          %v1375 = vpop.permute.xlu0 %1374
          %1376 = vrot.lane.b32.xlu0 %v1369, 3
          %v1377 = vpop.permute.xlu0 %1376
          %1380 = vst.msk [vmem:[#allocation2 + $0xe0] sm:$0xff] %vm455, %v1375
          %1381 = vst.msk [vmem:[#allocation2 + $0xe8] sm:$0xff] %vm455, %v1377
          %1382 = vrot.lane.b32.xlu0 %v1368, 6
          %v1383 = vpop.permute.xlu0 %1382
          %1384 = vrot.lane.b32.xlu0 %v1369, 6
          %v1385 = vpop.permute.xlu0 %1384
          %1388 = vst.msk [vmem:[#allocation2 + $0xdf] sm:$0xfe] %vm464, %v1383
          %1389 = vst.msk [vmem:[#allocation2 + $0xe7] sm:$0xff] %vm466, %v1385
          %1390 = vrot.lane.b32.xlu0 %v1368, 9
          %v1391 = vpop.permute.xlu0 %1390
          %1392 = vrot.lane.b32.xlu0 %v1369, 9
          %v1393 = vpop.permute.xlu0 %1392
          %1396 = vst.msk [vmem:[#allocation2 + $0xd1] sm:$0xff] %vm474, %v1391
          %1397 = vst.msk [vmem:[#allocation2 + $0xd9] sm:$0x7f] %vm476, %v1393
          %1398 = vrot.lane.b32.xlu0 %v1368, 12
          %v1399 = vpop.permute.xlu0 %1398
          %1400 = vrot.lane.b32.xlu0 %v1369, 12
          %v1401 = vpop.permute.xlu0 %1400
          %1404 = vst.msk [vmem:[#allocation2 + $0xd0] sm:$0xff] %vm484, %v1399
          %1405 = vst.msk [vmem:[#allocation2 + $0xd8] sm:$0xff] %vm484, %v1401
          %1406 = vrot.lane.b32.xlu0 %v1368, 15
          %v1407 = vpop.permute.xlu0 %1406
          %1408 = vrot.lane.b32.xlu0 %v1369, 15
          %v1409 = vpop.permute.xlu0 %1408
          %1412 = vst.msk [vmem:[#allocation2 + $0xcf] sm:$0xfe] %vm493, %v1407
          %1413 = vst.msk [vmem:[#allocation2 + $0xd7] sm:$0xff] %vm495, %v1409
          %1414 = vrot.lane.b32.xlu0 %v1368, 18
          %v1415 = vpop.permute.xlu0 %1414
          %1416 = vrot.lane.b32.xlu0 %v1369, 18
          %v1417 = vpop.permute.xlu0 %1416
          %1420 = vst.msk [vmem:[#allocation2 + $0xc1] sm:$0xff] %vm551, %v1415
          %1421 = vst.msk [vmem:[#allocation2 + $0xc9] sm:$0x7f] %vm553, %v1417
          %1422 = vrot.lane.b32.xlu0 %v1368, 21
          %v1423 = vpop.permute.xlu0 %1422
          %1424 = vrot.lane.b32.xlu0 %v1369, 21
          %v1425 = vpop.permute.xlu0 %1424
          %1428 = vst.msk [vmem:[#allocation2 + $0xc0] sm:$0xff] %vm561, %v1423
          %1429 = vst.msk [vmem:[#allocation2 + $0xc8] sm:$0xff] %vm561, %v1425
          %1430 = vrot.lane.b32.xlu0 %v1368, 24
          %v1431 = vpop.permute.xlu0 %1430
          %1432 = vrot.lane.b32.xlu0 %v1369, 24
          %v1433 = vpop.permute.xlu0 %1432
          %1436 = vst.msk [vmem:[#allocation2 + $0xbf] sm:$0xfe] %vm570, %v1431
          %1437 = vst.msk [vmem:[#allocation2 + $0xc7] sm:$0xff] %vm572, %v1433
          %s1438 = sadd.s32 224, %s439
          %s1439 = scalar_lea.vmem %s372, %s1438
          %v1440 = vld [vmem:[%s1439] sm:$0xff]
          %v1441 = vld [vmem:[%s1439 + $0x8] sm:$0xff]
          %1442 = vst.msk [vmem:[#allocation2 + $0xf1] sm:$0xff] %vm443, %v1440
          %1443 = vst.msk [vmem:[#allocation2 + $0xf9] sm:$0x7f] %vm445, %v1441
          %1446 = vrot.lane.b32.xlu0 %v1440, 3
          %v1447 = vpop.permute.xlu0 %1446
          %1448 = vrot.lane.b32.xlu0 %v1441, 3
          %v1449 = vpop.permute.xlu0 %1448
          %1452 = vst.msk [vmem:[#allocation2 + $0xf0] sm:$0xff] %vm455, %v1447
          %1453 = vst.msk [vmem:[#allocation2 + $0xf8] sm:$0xff] %vm455, %v1449
          %1454 = vrot.lane.b32.xlu0 %v1440, 6
          %v1455 = vpop.permute.xlu0 %1454
          %1456 = vrot.lane.b32.xlu0 %v1441, 6
          %v1457 = vpop.permute.xlu0 %1456
          %1460 = vst.msk [vmem:[#allocation2 + $0xef] sm:$0xfe] %vm464, %v1455
          %1461 = vst.msk [vmem:[#allocation2 + $0xf7] sm:$0xff] %vm466, %v1457
          %1462 = vrot.lane.b32.xlu0 %v1440, 9
          %v1463 = vpop.permute.xlu0 %1462
          %1464 = vrot.lane.b32.xlu0 %v1441, 9
          %v1465 = vpop.permute.xlu0 %1464
          %1468 = vst.msk [vmem:[#allocation2 + $0xe1] sm:$0xff] %vm474, %v1463
          %1469 = vst.msk [vmem:[#allocation2 + $0xe9] sm:$0x7f] %vm476, %v1465
          %1470 = vrot.lane.b32.xlu0 %v1440, 12
          %v1471 = vpop.permute.xlu0 %1470
          %1472 = vrot.lane.b32.xlu0 %v1441, 12
          %v1473 = vpop.permute.xlu0 %1472
          %1476 = vst.msk [vmem:[#allocation2 + $0xe0] sm:$0xff] %vm484, %v1471
          %1477 = vst.msk [vmem:[#allocation2 + $0xe8] sm:$0xff] %vm484, %v1473
          %1478 = vrot.lane.b32.xlu0 %v1440, 15
          %v1479 = vpop.permute.xlu0 %1478
          %1480 = vrot.lane.b32.xlu0 %v1441, 15
          %v1481 = vpop.permute.xlu0 %1480
          %1484 = vst.msk [vmem:[#allocation2 + $0xdf] sm:$0xfe] %vm493, %v1479
          %1485 = vst.msk [vmem:[#allocation2 + $0xe7] sm:$0xff] %vm495, %v1481
          %1486 = vrot.lane.b32.xlu0 %v1440, 18
          %v1487 = vpop.permute.xlu0 %1486
          %1488 = vrot.lane.b32.xlu0 %v1441, 18
          %v1489 = vpop.permute.xlu0 %1488
          %1492 = vst.msk [vmem:[#allocation2 + $0xd1] sm:$0xff] %vm551, %v1487
          %1493 = vst.msk [vmem:[#allocation2 + $0xd9] sm:$0x7f] %vm553, %v1489
          %1494 = vrot.lane.b32.xlu0 %v1440, 21
          %v1495 = vpop.permute.xlu0 %1494
          %1496 = vrot.lane.b32.xlu0 %v1441, 21
          %v1497 = vpop.permute.xlu0 %1496
          %1500 = vst.msk [vmem:[#allocation2 + $0xd0] sm:$0xff] %vm561, %v1495
          %1501 = vst.msk [vmem:[#allocation2 + $0xd8] sm:$0xff] %vm561, %v1497
          %1502 = vrot.lane.b32.xlu0 %v1440, 24
          %v1503 = vpop.permute.xlu0 %1502
          %1504 = vrot.lane.b32.xlu0 %v1441, 24
          %v1505 = vpop.permute.xlu0 %1504
          %1508 = vst.msk [vmem:[#allocation2 + $0xcf] sm:$0xfe] %vm570, %v1503
          %1509 = vst.msk [vmem:[#allocation2 + $0xd7] sm:$0xff] %vm572, %v1505
          %s1510 = sadd.s32 240, %s439
          %s1511 = scalar_lea.vmem %s372, %s1510
          %v1512 = vld [vmem:[%s1511] sm:$0xff]
          %v1513 = vld [vmem:[%s1511 + $0x8] sm:$0xff]
          %1516 = vrot.lane.b32.xlu0 %v1512, 9
          %v1517 = vpop.permute.xlu0 %1516
          %1518 = vrot.lane.b32.xlu0 %v1513, 9
          %v1519 = vpop.permute.xlu0 %1518
          %1522 = vst.msk [vmem:[#allocation2 + $0xf1] sm:$0xff] %vm474, %v1517
          %1523 = vst.msk [vmem:[#allocation2 + $0xf9] sm:$0x7f] %vm476, %v1519
          %1524 = vrot.lane.b32.xlu0 %v1512, 12
          %v1525 = vpop.permute.xlu0 %1524
          %1526 = vrot.lane.b32.xlu0 %v1513, 12
          %v1527 = vpop.permute.xlu0 %1526
          %1530 = vst.msk [vmem:[#allocation2 + $0xf0] sm:$0xff] %vm484, %v1525
          %1531 = vst.msk [vmem:[#allocation2 + $0xf8] sm:$0xff] %vm484, %v1527
          %1532 = vrot.lane.b32.xlu0 %v1512, 15
          %v1533 = vpop.permute.xlu0 %1532
          %1534 = vrot.lane.b32.xlu0 %v1513, 15
          %v1535 = vpop.permute.xlu0 %1534
          %1538 = vst.msk [vmem:[#allocation2 + $0xef] sm:$0xfe] %vm493, %v1533
          %1539 = vst.msk [vmem:[#allocation2 + $0xf7] sm:$0xff] %vm495, %v1535
          %1540 = vrot.lane.b32.xlu0 %v1512, 18
          %v1541 = vpop.permute.xlu0 %1540
          %1542 = vrot.lane.b32.xlu0 %v1513, 18
          %v1543 = vpop.permute.xlu0 %1542
          %1546 = vst.msk [vmem:[#allocation2 + $0xe1] sm:$0xff] %vm551, %v1541
          %1547 = vst.msk [vmem:[#allocation2 + $0xe9] sm:$0x7f] %vm553, %v1543
          %1548 = vrot.lane.b32.xlu0 %v1512, 21
          %v1549 = vpop.permute.xlu0 %1548
          %1550 = vrot.lane.b32.xlu0 %v1513, 21
          %v1551 = vpop.permute.xlu0 %1550
          %1554 = vst.msk [vmem:[#allocation2 + $0xe0] sm:$0xff] %vm561, %v1549
          %1555 = vst.msk [vmem:[#allocation2 + $0xe8] sm:$0xff] %vm561, %v1551
          %1556 = vrot.lane.b32.xlu0 %v1512, 24
          %v1557 = vpop.permute.xlu0 %1556
          %1558 = vrot.lane.b32.xlu0 %v1513, 24
          %v1559 = vpop.permute.xlu0 %1558
          %1562 = vst.msk [vmem:[#allocation2 + $0xdf] sm:$0xfe] %vm570, %v1557
          %1563 = vst.msk [vmem:[#allocation2 + $0xe7] sm:$0xff] %vm572, %v1559
          %v1564 = vld [vmem:[#allocation2] sm:$0xff]
          %v1565 = vld [vmem:[#allocation2 + $0x8] sm:$0xff]
          %v1566 = vld [vmem:[#allocation2 + $0x10] sm:$0xff]
          %v1567 = vld [vmem:[#allocation2 + $0x18] sm:$0xff]
          %v1568 = vld [vmem:[#allocation2 + $0x20] sm:$0xff]
          %v1569 = vld [vmem:[#allocation2 + $0x28] sm:$0xff]
          %v1570 = vld [vmem:[#allocation2 + $0x30] sm:$0xff]
          %v1571 = vld [vmem:[#allocation2 + $0x38] sm:$0xff]
          %v1572 = vld [vmem:[#allocation2 + $0x40] sm:$0xff]
          %v1573 = vld [vmem:[#allocation2 + $0x48] sm:$0xff]
          %v1574 = vld [vmem:[#allocation2 + $0x50] sm:$0xff]
          %v1575 = vld [vmem:[#allocation2 + $0x58] sm:$0xff]
          %v1576 = vld [vmem:[#allocation2 + $0x60] sm:$0xff]
          %v1577 = vld [vmem:[#allocation2 + $0x68] sm:$0xff]
          %v1578 = vld [vmem:[#allocation2 + $0x70] sm:$0xff]
          %v1579 = vld [vmem:[#allocation2 + $0x78] sm:$0xff]
          %v1580 = vld [vmem:[#allocation2 + $0x80] sm:$0xff]
          %v1581 = vld [vmem:[#allocation2 + $0x88] sm:$0xff]
          %v1582 = vld [vmem:[#allocation2 + $0x90] sm:$0xff]
          %v1583 = vld [vmem:[#allocation2 + $0x98] sm:$0xff]
          %v1584 = vld [vmem:[#allocation2 + $0xa0] sm:$0xff]
          %v1585 = vld [vmem:[#allocation2 + $0xa8] sm:$0xff]
          %v1586 = vld [vmem:[#allocation2 + $0xb0] sm:$0xff]
          %v1587 = vld [vmem:[#allocation2 + $0xb8] sm:$0xff]
          %v1588 = vld [vmem:[#allocation2 + $0xc0] sm:$0xff]
          %v1589 = vld [vmem:[#allocation2 + $0xc8] sm:$0xff]
          %v1590 = vld [vmem:[#allocation2 + $0xd0] sm:$0xff]
          %v1591 = vld [vmem:[#allocation2 + $0xd8] sm:$0xff]
          %v1592 = vld [vmem:[#allocation2 + $0xe0] sm:$0xff]
          %v1593 = vld [vmem:[#allocation2 + $0xe8] sm:$0xff]
          %v1594 = vld [vmem:[#allocation2 + $0xf0] sm:$0xff]
          %v1595 = vld [vmem:[#allocation2 + $0xf8] sm:$0xff]
          %v1596 = vpack.c.bf16 %v1565, %v1564
          %v1597 = vpack.c.bf16 %v1567, %v1566
          %v1598 = vpack.c.bf16 %v1569, %v1568
          %v1599 = vpack.c.bf16 %v1571, %v1570
          %v1600 = vpack.c.bf16 %v1573, %v1572
          %v1601 = vpack.c.bf16 %v1575, %v1574
          %v1602 = vpack.c.bf16 %v1577, %v1576
          %v1603 = vpack.c.bf16 %v1579, %v1578
          %v1604 = vpack.c.bf16 %v1581, %v1580
          %v1605 = vpack.c.bf16 %v1583, %v1582
          %v1606 = vpack.c.bf16 %v1585, %v1584
          %v1607 = vpack.c.bf16 %v1587, %v1586
          %v1608 = vpack.c.bf16 %v1589, %v1588
          %v1609 = vpack.c.bf16 %v1591, %v1590
          %v1610 = vpack.c.bf16 %v1593, %v1592
          %v1611 = vpack.c.bf16 %v1595, %v1594
          %v1612 = vld [vmem:[%s1] sm:$0xf]
          %v1613 = vld [vmem:[%s1 + $0x4] sm:$0xf]
          %v1614 = vld [vmem:[%s1 + $0x8] sm:$0xf]
          %v1615 = vld [vmem:[%s1 + $0xc] sm:$0xf]
          %v1616 = vld [vmem:[%s1 + $0x10] sm:$0xf]
          %v1617 = vld [vmem:[%s1 + $0x14] sm:$0xf]
          %v1618 = vld [vmem:[%s1 + $0x18] sm:$0xf]
          %v1619 = vld [vmem:[%s1 + $0x1c] sm:$0xf]
          %v1620 = vld [vmem:[%s1 + $0x20] sm:$0xf]
          %v1621 = vld [vmem:[%s1 + $0x24] sm:$0xf]
          %v1622 = vld [vmem:[%s1 + $0x28] sm:$0xf]
          %v1623 = vld [vmem:[%s1 + $0x2c] sm:$0xf]
          %v1624 = vld [vmem:[%s1 + $0x30] sm:$0xf]
          %v1625 = vld [vmem:[%s1 + $0x34] sm:$0xf]
          %v1626 = vld [vmem:[%s1 + $0x38] sm:$0xf]
          %v1627 = vld [vmem:[%s1 + $0x3c] sm:$0xf]
          %v1644 = vunpack.c.l.b16 %v1612
          %v1645 = vunpack.c.l.b16 %v1613
          %v1646 = vunpack.c.l.b16 %v1614
          %v1647 = vunpack.c.l.b16 %v1615
          %v1648 = vunpack.c.l.b16 %v1616
          %v1649 = vunpack.c.l.b16 %v1617
          %v1650 = vunpack.c.l.b16 %v1618
          %v1651 = vunpack.c.l.b16 %v1619
          %v1652 = vunpack.c.l.b16 %v1620
          %v1653 = vunpack.c.l.b16 %v1621
          %v1654 = vunpack.c.l.b16 %v1622
          %v1655 = vunpack.c.l.b16 %v1623
          %v1656 = vunpack.c.l.b16 %v1624
          %v1657 = vunpack.c.l.b16 %v1625
          %v1658 = vunpack.c.l.b16 %v1626
          %v1659 = vunpack.c.l.b16 %v1627
          %v1660 = vpack.c.b16 %v1645, %v1644
          %v1661 = vpack.c.b16 %v1647, %v1646
          %v1662 = vpack.c.b16 %v1649, %v1648
          %v1663 = vpack.c.b16 %v1651, %v1650
          %v1664 = vpack.c.b16 %v1653, %v1652
          %v1665 = vpack.c.b16 %v1655, %v1654
          %v1666 = vpack.c.b16 %v1657, %v1656
          %v1667 = vpack.c.b16 %v1659, %v1658
          %1676 = vmatpush.bf16.msra.mxu0 %v1667
          %1677 = vmatpush.bf16.msra.mxu0 %v1666
          %1678 = vmatpush.bf16.msra.mxu0 %v1665
          %1679 = vmatpush.bf16.msra.mxu0 %v1664
          %1680 = vmatpush.bf16.msra.mxu0 %v1663
          %1681 = vmatpush.bf16.msra.mxu0 %v1662
          %1682 = vmatpush.bf16.msra.mxu0 %v1661
          %1683 = vmatpush.bf16.msra.mxu0 %v1660
          %1684 = vmatmul.bf16.gmra.mxu0 %v1596
          %v1685 = vpop.f32.mrf.mxu0
          %v1686 = vadd.f32 0.0, %v1685
          %v1687 = vpop.f32.mrf.mxu0
          %v1688 = vadd.f32 0.0, %v1687
          %1689 = vmatmul.bf16.gmra.mxu0 %v1597
          %v1690 = vpop.f32.mrf.mxu0
          %v1691 = vadd.f32 0.0, %v1690
          %v1692 = vpop.f32.mrf.mxu0
          %v1693 = vadd.f32 0.0, %v1692
          %1694 = vmatmul.bf16.gmra.mxu0 %v1598
          %v1695 = vpop.f32.mrf.mxu0
          %v1696 = vadd.f32 0.0, %v1695
          %v1697 = vpop.f32.mrf.mxu0
          %v1698 = vadd.f32 0.0, %v1697
          %1699 = vmatmul.bf16.gmra.mxu0 %v1599
          %v1700 = vpop.f32.mrf.mxu0
          %v1701 = vadd.f32 0.0, %v1700
          %v1702 = vpop.f32.mrf.mxu0
          %v1703 = vadd.f32 0.0, %v1702
          %1704 = vmatmul.bf16.gmra.mxu0 %v1600
          %v1705 = vpop.f32.mrf.mxu0
          %v1706 = vadd.f32 0.0, %v1705
          %v1707 = vpop.f32.mrf.mxu0
          %v1708 = vadd.f32 0.0, %v1707
          %1709 = vmatmul.bf16.gmra.mxu0 %v1601
          %v1710 = vpop.f32.mrf.mxu0
          %v1711 = vadd.f32 0.0, %v1710
          %v1712 = vpop.f32.mrf.mxu0
          %v1713 = vadd.f32 0.0, %v1712
          %1714 = vmatmul.bf16.gmra.mxu0 %v1602
          %v1715 = vpop.f32.mrf.mxu0
          %v1716 = vadd.f32 0.0, %v1715
          %v1717 = vpop.f32.mrf.mxu0
          %v1718 = vadd.f32 0.0, %v1717
          %1719 = vmatmul.bf16.gmra.mxu0 %v1603
          %v1720 = vpop.f32.mrf.mxu0
          %v1721 = vadd.f32 0.0, %v1720
          %v1722 = vpop.f32.mrf.mxu0
          %v1723 = vadd.f32 0.0, %v1722
          %1724 = vmatmul.bf16.gmra.mxu0 %v1604
          %v1725 = vpop.f32.mrf.mxu0
          %v1726 = vadd.f32 0.0, %v1725
          %v1727 = vpop.f32.mrf.mxu0
          %v1728 = vadd.f32 0.0, %v1727
          %1729 = vmatmul.bf16.gmra.mxu0 %v1605
          %v1730 = vpop.f32.mrf.mxu0
          %v1731 = vadd.f32 0.0, %v1730
          %v1732 = vpop.f32.mrf.mxu0
          %v1733 = vadd.f32 0.0, %v1732
          %1734 = vmatmul.bf16.gmra.mxu0 %v1606
          %v1735 = vpop.f32.mrf.mxu0
          %v1736 = vadd.f32 0.0, %v1735
          %v1737 = vpop.f32.mrf.mxu0
          %v1738 = vadd.f32 0.0, %v1737
          %1739 = vmatmul.bf16.gmra.mxu0 %v1607
          %v1740 = vpop.f32.mrf.mxu0
          %v1741 = vadd.f32 0.0, %v1740
          %v1742 = vpop.f32.mrf.mxu0
          %v1743 = vadd.f32 0.0, %v1742
          %1744 = vmatmul.bf16.gmra.mxu0 %v1608
          %v1745 = vpop.f32.mrf.mxu0
          %v1746 = vadd.f32 0.0, %v1745
          %v1747 = vpop.f32.mrf.mxu0
          %v1748 = vadd.f32 0.0, %v1747
          %1749 = vmatmul.bf16.gmra.mxu0 %v1609
          %v1750 = vpop.f32.mrf.mxu0
          %v1751 = vadd.f32 0.0, %v1750
          %v1752 = vpop.f32.mrf.mxu0
          %v1753 = vadd.f32 0.0, %v1752
          %1754 = vmatmul.bf16.gmra.mxu0 %v1610
          %v1755 = vpop.f32.mrf.mxu0
          %v1756 = vadd.f32 0.0, %v1755
          %v1757 = vpop.f32.mrf.mxu0
          %v1758 = vadd.f32 0.0, %v1757
          %1759 = vmatmul.bf16.gmra.mxu0 %v1611
          %v1760 = vpop.f32.mrf.mxu0
          %v1761 = vadd.f32 0.0, %v1760
          %v1762 = vpop.f32.mrf.mxu0
          %v1763 = vadd.f32 0.0, %v1762
          %1764 = vdwg.mxu0
          %vm1765 = vcmask 130048
          %1766 = vst.msk [vmem:[#allocation3] sm:$0xff] %vm1765, %v1686
          %1767 = vst.msk [vmem:[#allocation3 + $0x8] sm:$0xff] %vm1765, %v1688
          %1768 = vst.msk [vmem:[#allocation3 + $0x10] sm:$0xff] %vm1765, %v1691
          %1769 = vst.msk [vmem:[#allocation3 + $0x18] sm:$0xff] %vm1765, %v1693
          %1770 = vst.msk [vmem:[#allocation3 + $0x20] sm:$0xff] %vm1765, %v1696
          %1771 = vst.msk [vmem:[#allocation3 + $0x28] sm:$0xff] %vm1765, %v1698
          %1772 = vst.msk [vmem:[#allocation3 + $0x30] sm:$0xff] %vm1765, %v1701
          %1773 = vst.msk [vmem:[#allocation3 + $0x38] sm:$0xff] %vm1765, %v1703
          %1774 = vst.msk [vmem:[#allocation3 + $0x40] sm:$0xff] %vm1765, %v1706
          %1775 = vst.msk [vmem:[#allocation3 + $0x48] sm:$0xff] %vm1765, %v1708
          %1776 = vst.msk [vmem:[#allocation3 + $0x50] sm:$0xff] %vm1765, %v1711
          %1777 = vst.msk [vmem:[#allocation3 + $0x58] sm:$0xff] %vm1765, %v1713
          %1778 = vst.msk [vmem:[#allocation3 + $0x60] sm:$0xff] %vm1765, %v1716
          %1779 = vst.msk [vmem:[#allocation3 + $0x68] sm:$0xff] %vm1765, %v1718
          %1780 = vst.msk [vmem:[#allocation3 + $0x70] sm:$0xff] %vm1765, %v1721
          %1781 = vst.msk [vmem:[#allocation3 + $0x78] sm:$0xff] %vm1765, %v1723
          %1782 = vst.msk [vmem:[#allocation3 + $0x80] sm:$0xff] %vm1765, %v1726
          %1783 = vst.msk [vmem:[#allocation3 + $0x88] sm:$0xff] %vm1765, %v1728
          %1784 = vst.msk [vmem:[#allocation3 + $0x90] sm:$0xff] %vm1765, %v1731
          %1785 = vst.msk [vmem:[#allocation3 + $0x98] sm:$0xff] %vm1765, %v1733
          %1786 = vst.msk [vmem:[#allocation3 + $0xa0] sm:$0xff] %vm1765, %v1736
          %1787 = vst.msk [vmem:[#allocation3 + $0xa8] sm:$0xff] %vm1765, %v1738
          %1788 = vst.msk [vmem:[#allocation3 + $0xb0] sm:$0xff] %vm1765, %v1741
          %1789 = vst.msk [vmem:[#allocation3 + $0xb8] sm:$0xff] %vm1765, %v1743
          %1790 = vst.msk [vmem:[#allocation3 + $0xc0] sm:$0xff] %vm1765, %v1746
          %1791 = vst.msk [vmem:[#allocation3 + $0xc8] sm:$0xff] %vm1765, %v1748
          %1792 = vst.msk [vmem:[#allocation3 + $0xd0] sm:$0xff] %vm1765, %v1751
          %1793 = vst.msk [vmem:[#allocation3 + $0xd8] sm:$0xff] %vm1765, %v1753
          %1794 = vst.msk [vmem:[#allocation3 + $0xe0] sm:$0xff] %vm1765, %v1756
          %1795 = vst.msk [vmem:[#allocation3 + $0xe8] sm:$0xff] %vm1765, %v1758
          %1796 = vst.msk [vmem:[#allocation3 + $0xf0] sm:$0xff] %vm1765, %v1761
          %1797 = vst.msk [vmem:[#allocation3 + $0xf8] sm:$0xff] %vm1765, %v1763
          %v1798 = vld [vmem:[%s2] sm:$0x1]
          %v1799 = vld [vmem:[#allocation3] ss:$2 sm:$0xff]
          %s1800 = scalar_lea.vmem [#allocation3], 1
          %v1801 = vld [vmem:[%s1800] ss:$2 sm:$0xff]
          %s1802 = scalar_lea.vmem [#allocation3], 16
          %v1803 = vld [vmem:[%s1802] ss:$2 sm:$0xff]
          %s1804 = scalar_lea.vmem [#allocation3], 17
          %v1805 = vld [vmem:[%s1804] ss:$2 sm:$0xff]
          %v1806 = vmax.f32 %v1799, %v1801
          %v1807 = vmax.f32 %v1803, %v1805
          %v1808 = vmax.f32 %v1806, %v1807
          %v1810 = vperm.slane %v1798, 0
          %v1812 = vadd.f32 %v1808, %v1810
          %vm1813 = vcmp.gt.f32.partialorder %v1812, 0.0
          %v1814 = vmul.f32 %v1812, 0.1
          %v1815 = vsel %vm1813, %v1812, %v1814
          %1816 = vst.msk [vmem:[#allocation4] sm:$0xff] %vm1765, %v1815
          %s1817 = scalar_lea.vmem [#allocation3], 32
          %v1818 = vld [vmem:[%s1817] ss:$2 sm:$0xff]
          %s1819 = scalar_lea.vmem [#allocation3], 33
          %v1820 = vld [vmem:[%s1819] ss:$2 sm:$0xff]
          %s1821 = scalar_lea.vmem [#allocation3], 48
          %v1822 = vld [vmem:[%s1821] ss:$2 sm:$0xff]
          %s1823 = scalar_lea.vmem [#allocation3], 49
          %v1824 = vld [vmem:[%s1823] ss:$2 sm:$0xff]
          %v1825 = vmax.f32 %v1818, %v1820
          %v1826 = vmax.f32 %v1822, %v1824
          %v1827 = vmax.f32 %v1825, %v1826
          %v1828 = vadd.f32 %v1827, %v1810
          %vm1829 = vcmp.gt.f32.partialorder %v1828, 0.0
          %v1830 = vmul.f32 %v1828, 0.1
          %v1831 = vsel %vm1829, %v1828, %v1830
          %s1832 = scalar_lea.vmem [#allocation4], 8
          %1833 = vst.msk [vmem:[%s1832] sm:$0xff] %vm1765, %v1831
          %s1834 = scalar_lea.vmem [#allocation3], 64
          %v1835 = vld [vmem:[%s1834] ss:$2 sm:$0xff]
          %s1836 = scalar_lea.vmem [#allocation3], 65
          %v1837 = vld [vmem:[%s1836] ss:$2 sm:$0xff]
          %s1838 = scalar_lea.vmem [#allocation3], 80
          %v1839 = vld [vmem:[%s1838] ss:$2 sm:$0xff]
          %s1840 = scalar_lea.vmem [#allocation3], 81
          %v1841 = vld [vmem:[%s1840] ss:$2 sm:$0xff]
          %v1842 = vmax.f32 %v1835, %v1837
          %v1843 = vmax.f32 %v1839, %v1841
          %v1844 = vmax.f32 %v1842, %v1843
          %v1845 = vadd.f32 %v1844, %v1810
          %vm1846 = vcmp.gt.f32.partialorder %v1845, 0.0
          %v1847 = vmul.f32 %v1845, 0.1
          %v1848 = vsel %vm1846, %v1845, %v1847
          %s1849 = scalar_lea.vmem [#allocation4], 16
          %1850 = vst.msk [vmem:[%s1849] sm:$0xff] %vm1765, %v1848
          %s1851 = scalar_lea.vmem [#allocation3], 96
          %v1852 = vld [vmem:[%s1851] ss:$2 sm:$0xff]
          %s1853 = scalar_lea.vmem [#allocation3], 97
          %v1854 = vld [vmem:[%s1853] ss:$2 sm:$0xff]
          %s1855 = scalar_lea.vmem [#allocation3], 112
          %v1856 = vld [vmem:[%s1855] ss:$2 sm:$0xff]
          %s1857 = scalar_lea.vmem [#allocation3], 113
          %v1858 = vld [vmem:[%s1857] ss:$2 sm:$0xff]
          %v1859 = vmax.f32 %v1852, %v1854
          %v1860 = vmax.f32 %v1856, %v1858
          %v1861 = vmax.f32 %v1859, %v1860
          %v1862 = vadd.f32 %v1861, %v1810
          %vm1863 = vcmp.gt.f32.partialorder %v1862, 0.0
          %v1864 = vmul.f32 %v1862, 0.1
          %v1865 = vsel %vm1863, %v1862, %v1864
          %s1866 = scalar_lea.vmem [#allocation4], 24
          %1867 = vst.msk [vmem:[%s1866] sm:$0xff] %vm1765, %v1865
          %s1868 = scalar_lea.vmem [#allocation3], 128
          %v1869 = vld [vmem:[%s1868] ss:$2 sm:$0xff]
          %s1870 = scalar_lea.vmem [#allocation3], 129
          %v1871 = vld [vmem:[%s1870] ss:$2 sm:$0xff]
          %s1872 = scalar_lea.vmem [#allocation3], 144
          %v1873 = vld [vmem:[%s1872] ss:$2 sm:$0xff]
          %s1874 = scalar_lea.vmem [#allocation3], 145
          %v1875 = vld [vmem:[%s1874] ss:$2 sm:$0xff]
          %v1876 = vmax.f32 %v1869, %v1871
          %v1877 = vmax.f32 %v1873, %v1875
          %v1878 = vmax.f32 %v1876, %v1877
          %v1879 = vadd.f32 %v1878, %v1810
          %vm1880 = vcmp.gt.f32.partialorder %v1879, 0.0
          %v1881 = vmul.f32 %v1879, 0.1
          %v1882 = vsel %vm1880, %v1879, %v1881
          %s1883 = scalar_lea.vmem [#allocation4], 32
          %1884 = vst.msk [vmem:[%s1883] sm:$0xff] %vm1765, %v1882
          %s1885 = scalar_lea.vmem [#allocation3], 160
          %v1886 = vld [vmem:[%s1885] ss:$2 sm:$0xff]
          %s1887 = scalar_lea.vmem [#allocation3], 161
          %v1888 = vld [vmem:[%s1887] ss:$2 sm:$0xff]
          %s1889 = scalar_lea.vmem [#allocation3], 176
          %v1890 = vld [vmem:[%s1889] ss:$2 sm:$0xff]
          %s1891 = scalar_lea.vmem [#allocation3], 177
          %v1892 = vld [vmem:[%s1891] ss:$2 sm:$0xff]
          %v1893 = vmax.f32 %v1886, %v1888
          %v1894 = vmax.f32 %v1890, %v1892
          %v1895 = vmax.f32 %v1893, %v1894
          %v1896 = vadd.f32 %v1895, %v1810
          %vm1897 = vcmp.gt.f32.partialorder %v1896, 0.0
          %v1898 = vmul.f32 %v1896, 0.1
          %v1899 = vsel %vm1897, %v1896, %v1898
          %s1900 = scalar_lea.vmem [#allocation4], 40
          %1901 = vst.msk [vmem:[%s1900] sm:$0xff] %vm1765, %v1899
          %s1902 = scalar_lea.vmem [#allocation3], 192
          %v1903 = vld [vmem:[%s1902] ss:$2 sm:$0xff]
          %s1904 = scalar_lea.vmem [#allocation3], 193
          %v1905 = vld [vmem:[%s1904] ss:$2 sm:$0xff]
          %s1906 = scalar_lea.vmem [#allocation3], 208
          %v1907 = vld [vmem:[%s1906] ss:$2 sm:$0xff]
          %s1908 = scalar_lea.vmem [#allocation3], 209
          %v1909 = vld [vmem:[%s1908] ss:$2 sm:$0xff]
          %v1910 = vmax.f32 %v1903, %v1905
          %v1911 = vmax.f32 %v1907, %v1909
          %v1912 = vmax.f32 %v1910, %v1911
          %v1913 = vadd.f32 %v1912, %v1810
          %vm1914 = vcmp.gt.f32.partialorder %v1913, 0.0
          %v1915 = vmul.f32 %v1913, 0.1
          %v1916 = vsel %vm1914, %v1913, %v1915
          %s1917 = scalar_lea.vmem [#allocation4], 48
          %1918 = vst.msk [vmem:[%s1917] sm:$0xff] %vm1765, %v1916
          %s1919 = scalar_lea.vmem [#allocation3], 224
          %v1920 = vld [vmem:[%s1919] ss:$2 sm:$0xff]
          %s1921 = scalar_lea.vmem [#allocation3], 225
          %v1922 = vld [vmem:[%s1921] ss:$2 sm:$0xff]
          %s1923 = scalar_lea.vmem [#allocation3], 240
          %v1924 = vld [vmem:[%s1923] ss:$2 sm:$0xff]
          %s1925 = scalar_lea.vmem [#allocation3], 241
          %v1926 = vld [vmem:[%s1925] ss:$2 sm:$0xff]
          %v1927 = vmax.f32 %v1920, %v1922
          %v1928 = vmax.f32 %v1924, %v1926
          %v1929 = vmax.f32 %v1927, %v1928
          %v1930 = vadd.f32 %v1929, %v1810
          %vm1931 = vcmp.gt.f32.partialorder %v1930, 0.0
          %v1932 = vmul.f32 %v1930, 0.1
          %v1933 = vsel %vm1931, %v1930, %v1932
          %s1934 = scalar_lea.vmem [#allocation4], 56
          %1935 = vst.msk [vmem:[%s1934] sm:$0xff] %vm1765, %v1933
          %v1936 = vld [vmem:[#allocation4] sm:$0xff]
          %v1938 = vrot.slane %v1936, 7
          %vm1940 = vcmask 130049
          %1941 = vst.msk [vmem:[#allocation5 + $0x10] sm:$0xfe] %vm1940, %v1938
          %1942 = vrot.lane.b32.xlu0 %v1936, 16
          %v1943 = vpop.permute.xlu0 %1942
          %vm1945 = vcmask 261248
          %1946 = vst.msk [vmem:[#allocation5 + $0x10] sm:$0xff] %vm1945, %v1943
          %v1947 = vrot.slane %v1936, 1
          %1948 = vrot.lane.b32.xlu0 %v1947, 32
          %v1949 = vpop.permute.xlu0 %1948
          %vm1951 = vcmask 391424
          %1952 = vst.msk [vmem:[#allocation5 + $0x10] sm:$0x7f] %vm1951, %v1949
          %1953 = vrot.lane.b32.xlu0 %v1938, 48
          %v1954 = vpop.permute.xlu0 %1953
          %vm1956 = vcmask 523649
          %1957 = vst.msk [vmem:[#allocation5] sm:$0xfe] %vm1956, %v1954
          %1958 = vrot.lane.b32.xlu0 %v1936, 64
          %v1959 = vpop.permute.xlu0 %1958
          %vm1961 = vcmask 654848
          %1962 = vst.msk [vmem:[#allocation5] sm:$0xff] %vm1961, %v1959
          %1963 = vrot.lane.b32.xlu0 %v1947, 80
          %v1964 = vpop.permute.xlu0 %1963
          %vm1966 = vcmask 785024
          %1967 = vst.msk [vmem:[#allocation5] sm:$0x7f] %vm1966, %v1964
          %v1968 = vld [vmem:[%s1832] sm:$0xff]
          %v1970 = vrot.slane %v1968, 7
          %1972 = vst.msk [vmem:[#allocation5 + $0x20] sm:$0xfe] %vm1940, %v1970
          %1973 = vrot.lane.b32.xlu0 %v1968, 16
          %v1974 = vpop.permute.xlu0 %1973
          %1976 = vst.msk [vmem:[#allocation5 + $0x20] sm:$0xff] %vm1945, %v1974
          %v1977 = vrot.slane %v1968, 1
          %1978 = vrot.lane.b32.xlu0 %v1977, 32
          %v1979 = vpop.permute.xlu0 %1978
          %1981 = vst.msk [vmem:[#allocation5 + $0x20] sm:$0x7f] %vm1951, %v1979
          %1982 = vrot.lane.b32.xlu0 %v1970, 48
          %v1983 = vpop.permute.xlu0 %1982
          %1985 = vst.msk [vmem:[#allocation5 + $0x10] sm:$0xfe] %vm1956, %v1983
          %1986 = vrot.lane.b32.xlu0 %v1968, 64
          %v1987 = vpop.permute.xlu0 %1986
          %1989 = vst.msk [vmem:[#allocation5 + $0x10] sm:$0xff] %vm1961, %v1987
          %1990 = vrot.lane.b32.xlu0 %v1977, 80
          %v1991 = vpop.permute.xlu0 %1990
          %1993 = vst.msk [vmem:[#allocation5 + $0x10] sm:$0x7f] %vm1966, %v1991
          %1994 = vrot.lane.b32.xlu0 %v1970, 96
          %v1995 = vpop.permute.xlu0 %1994
          %vm1997 = vcmask 917249
          %1998 = vst.msk [vmem:[#allocation5] sm:$0xfe] %vm1997, %v1995
          %1999 = vrot.lane.b32.xlu0 %v1968, 112
          %v2000 = vpop.permute.xlu0 %1999
          %vm2002 = vcmask 1048448
          %2003 = vst.msk [vmem:[#allocation5] sm:$0xff] %vm2002, %v2000
          %vm2005 = vcmask 129024
          %2006 = vst.msk [vmem:[#allocation5 + $0x8] sm:$0x7f] %vm2005, %v1977
          %v2007 = vld [vmem:[%s1849] sm:$0xff]
          %v2009 = vrot.slane %v2007, 7
          %2011 = vst.msk [vmem:[#allocation5 + $0x30] sm:$0xfe] %vm1940, %v2009
          %2012 = vrot.lane.b32.xlu0 %v2007, 16
          %v2013 = vpop.permute.xlu0 %2012
          %2015 = vst.msk [vmem:[#allocation5 + $0x30] sm:$0xff] %vm1945, %v2013
          %v2016 = vrot.slane %v2007, 1
          %2017 = vrot.lane.b32.xlu0 %v2016, 32
          %v2018 = vpop.permute.xlu0 %2017
          %2020 = vst.msk [vmem:[#allocation5 + $0x30] sm:$0x7f] %vm1951, %v2018
          %2021 = vrot.lane.b32.xlu0 %v2009, 48
          %v2022 = vpop.permute.xlu0 %2021
          %2024 = vst.msk [vmem:[#allocation5 + $0x20] sm:$0xfe] %vm1956, %v2022
          %2025 = vrot.lane.b32.xlu0 %v2007, 64
          %v2026 = vpop.permute.xlu0 %2025
          %2028 = vst.msk [vmem:[#allocation5 + $0x20] sm:$0xff] %vm1961, %v2026
          %2029 = vrot.lane.b32.xlu0 %v2016, 80
          %v2030 = vpop.permute.xlu0 %2029
          %2032 = vst.msk [vmem:[#allocation5 + $0x20] sm:$0x7f] %vm1966, %v2030
          %2033 = vrot.lane.b32.xlu0 %v2009, 96
          %v2034 = vpop.permute.xlu0 %2033
          %2036 = vst.msk [vmem:[#allocation5 + $0x10] sm:$0xfe] %vm1997, %v2034
          %2037 = vrot.lane.b32.xlu0 %v2007, 112
          %v2038 = vpop.permute.xlu0 %2037
          %2040 = vst.msk [vmem:[#allocation5 + $0x10] sm:$0xff] %vm2002, %v2038
          %2042 = vst.msk [vmem:[#allocation5 + $0x18] sm:$0x7f] %vm2005, %v2016
          %v2043 = vld [vmem:[%s1866] sm:$0xff]
          %v2045 = vrot.slane %v2043, 7
          %2047 = vst.msk [vmem:[#allocation5 + $0x40] sm:$0xfe] %vm1940, %v2045
          %2048 = vrot.lane.b32.xlu0 %v2043, 16
          %v2049 = vpop.permute.xlu0 %2048
          %2051 = vst.msk [vmem:[#allocation5 + $0x40] sm:$0xff] %vm1945, %v2049
          %v2052 = vrot.slane %v2043, 1
          %2053 = vrot.lane.b32.xlu0 %v2052, 32
          %v2054 = vpop.permute.xlu0 %2053
          %2056 = vst.msk [vmem:[#allocation5 + $0x40] sm:$0x7f] %vm1951, %v2054
          %2057 = vrot.lane.b32.xlu0 %v2045, 48
          %v2058 = vpop.permute.xlu0 %2057
          %2060 = vst.msk [vmem:[#allocation5 + $0x30] sm:$0xfe] %vm1956, %v2058
          %2061 = vrot.lane.b32.xlu0 %v2043, 64
          %v2062 = vpop.permute.xlu0 %2061
          %2064 = vst.msk [vmem:[#allocation5 + $0x30] sm:$0xff] %vm1961, %v2062
          %2065 = vrot.lane.b32.xlu0 %v2052, 80
          %v2066 = vpop.permute.xlu0 %2065
          %2068 = vst.msk [vmem:[#allocation5 + $0x30] sm:$0x7f] %vm1966, %v2066
          %2069 = vrot.lane.b32.xlu0 %v2045, 96
          %v2070 = vpop.permute.xlu0 %2069
          %2072 = vst.msk [vmem:[#allocation5 + $0x20] sm:$0xfe] %vm1997, %v2070
          %2073 = vrot.lane.b32.xlu0 %v2043, 112
          %v2074 = vpop.permute.xlu0 %2073
          %2076 = vst.msk [vmem:[#allocation5 + $0x20] sm:$0xff] %vm2002, %v2074
          %2078 = vst.msk [vmem:[#allocation5 + $0x28] sm:$0x7f] %vm2005, %v2052
          %v2079 = vld [vmem:[%s1883] sm:$0xff]
          %v2081 = vrot.slane %v2079, 7
          %2083 = vst.msk [vmem:[#allocation5 + $0x50] sm:$0xfe] %vm1940, %v2081
          %2084 = vrot.lane.b32.xlu0 %v2079, 16
          %v2085 = vpop.permute.xlu0 %2084
          %2087 = vst.msk [vmem:[#allocation5 + $0x50] sm:$0xff] %vm1945, %v2085
          %v2088 = vrot.slane %v2079, 1
          %2089 = vrot.lane.b32.xlu0 %v2088, 32
          %v2090 = vpop.permute.xlu0 %2089
          %2092 = vst.msk [vmem:[#allocation5 + $0x50] sm:$0x7f] %vm1951, %v2090
          %2093 = vrot.lane.b32.xlu0 %v2081, 48
          %v2094 = vpop.permute.xlu0 %2093
          %2096 = vst.msk [vmem:[#allocation5 + $0x40] sm:$0xfe] %vm1956, %v2094
          %2097 = vrot.lane.b32.xlu0 %v2079, 64
          %v2098 = vpop.permute.xlu0 %2097
          %2100 = vst.msk [vmem:[#allocation5 + $0x40] sm:$0xff] %vm1961, %v2098
          %2101 = vrot.lane.b32.xlu0 %v2088, 80
          %v2102 = vpop.permute.xlu0 %2101
          %2104 = vst.msk [vmem:[#allocation5 + $0x40] sm:$0x7f] %vm1966, %v2102
          %2105 = vrot.lane.b32.xlu0 %v2081, 96
          %v2106 = vpop.permute.xlu0 %2105
          %2108 = vst.msk [vmem:[#allocation5 + $0x30] sm:$0xfe] %vm1997, %v2106
          %2109 = vrot.lane.b32.xlu0 %v2079, 112
          %v2110 = vpop.permute.xlu0 %2109
          %2112 = vst.msk [vmem:[#allocation5 + $0x30] sm:$0xff] %vm2002, %v2110
          %2114 = vst.msk [vmem:[#allocation5 + $0x38] sm:$0x7f] %vm2005, %v2088
          %v2115 = vld [vmem:[%s1900] sm:$0xff]
          %v2117 = vrot.slane %v2115, 7
          %2119 = vst.msk [vmem:[#allocation5 + $0x60] sm:$0xfe] %vm1940, %v2117
          %2120 = vrot.lane.b32.xlu0 %v2115, 16
          %v2121 = vpop.permute.xlu0 %2120
          %2123 = vst.msk [vmem:[#allocation5 + $0x60] sm:$0xff] %vm1945, %v2121
          %v2124 = vrot.slane %v2115, 1
          %2125 = vrot.lane.b32.xlu0 %v2124, 32
          %v2126 = vpop.permute.xlu0 %2125
          %2128 = vst.msk [vmem:[#allocation5 + $0x60] sm:$0x7f] %vm1951, %v2126
          %2129 = vrot.lane.b32.xlu0 %v2117, 48
          %v2130 = vpop.permute.xlu0 %2129
          %2132 = vst.msk [vmem:[#allocation5 + $0x50] sm:$0xfe] %vm1956, %v2130
          %2133 = vrot.lane.b32.xlu0 %v2115, 64
          %v2134 = vpop.permute.xlu0 %2133
          %2136 = vst.msk [vmem:[#allocation5 + $0x50] sm:$0xff] %vm1961, %v2134
          %2137 = vrot.lane.b32.xlu0 %v2124, 80
          %v2138 = vpop.permute.xlu0 %2137
          %2140 = vst.msk [vmem:[#allocation5 + $0x50] sm:$0x7f] %vm1966, %v2138
          %2141 = vrot.lane.b32.xlu0 %v2117, 96
          %v2142 = vpop.permute.xlu0 %2141
          %2144 = vst.msk [vmem:[#allocation5 + $0x40] sm:$0xfe] %vm1997, %v2142
          %2145 = vrot.lane.b32.xlu0 %v2115, 112
          %v2146 = vpop.permute.xlu0 %2145
          %2148 = vst.msk [vmem:[#allocation5 + $0x40] sm:$0xff] %vm2002, %v2146
          %2150 = vst.msk [vmem:[#allocation5 + $0x48] sm:$0x7f] %vm2005, %v2124
          %v2151 = vld [vmem:[%s1917] sm:$0xff]
          %v2153 = vrot.slane %v2151, 7
          %2155 = vst.msk [vmem:[#allocation5 + $0x70] sm:$0xfe] %vm1940, %v2153
          %2156 = vrot.lane.b32.xlu0 %v2151, 16
          %v2157 = vpop.permute.xlu0 %2156
          %2159 = vst.msk [vmem:[#allocation5 + $0x70] sm:$0xff] %vm1945, %v2157
          %v2160 = vrot.slane %v2151, 1
          %2161 = vrot.lane.b32.xlu0 %v2160, 32
          %v2162 = vpop.permute.xlu0 %2161
          %2164 = vst.msk [vmem:[#allocation5 + $0x70] sm:$0x7f] %vm1951, %v2162
          %2165 = vrot.lane.b32.xlu0 %v2153, 48
          %v2166 = vpop.permute.xlu0 %2165
          %2168 = vst.msk [vmem:[#allocation5 + $0x60] sm:$0xfe] %vm1956, %v2166
          %2169 = vrot.lane.b32.xlu0 %v2151, 64
          %v2170 = vpop.permute.xlu0 %2169
          %2172 = vst.msk [vmem:[#allocation5 + $0x60] sm:$0xff] %vm1961, %v2170
          %2173 = vrot.lane.b32.xlu0 %v2160, 80
          %v2174 = vpop.permute.xlu0 %2173
          %2176 = vst.msk [vmem:[#allocation5 + $0x60] sm:$0x7f] %vm1966, %v2174
          %2177 = vrot.lane.b32.xlu0 %v2153, 96
          %v2178 = vpop.permute.xlu0 %2177
          %2180 = vst.msk [vmem:[#allocation5 + $0x50] sm:$0xfe] %vm1997, %v2178
          %2181 = vrot.lane.b32.xlu0 %v2151, 112
          %v2182 = vpop.permute.xlu0 %2181
          %2184 = vst.msk [vmem:[#allocation5 + $0x50] sm:$0xff] %vm2002, %v2182
          %2186 = vst.msk [vmem:[#allocation5 + $0x58] sm:$0x7f] %vm2005, %v2160
          %v2187 = vld [vmem:[%s1934] sm:$0xff]
          %v2189 = vrot.slane %v2187, 7
          %2190 = vrot.lane.b32.xlu0 %v2189, 48
          %v2191 = vpop.permute.xlu0 %2190
          %2193 = vst.msk [vmem:[#allocation5 + $0x70] sm:$0xfe] %vm1956, %v2191
          %2194 = vrot.lane.b32.xlu0 %v2187, 64
          %v2195 = vpop.permute.xlu0 %2194
          %2197 = vst.msk [vmem:[#allocation5 + $0x70] sm:$0xff] %vm1961, %v2195
          %v2198 = vrot.slane %v2187, 1
          %2199 = vrot.lane.b32.xlu0 %v2198, 80
          %v2200 = vpop.permute.xlu0 %2199
          %2202 = vst.msk [vmem:[#allocation5 + $0x70] sm:$0x7f] %vm1966, %v2200
          %2203 = vrot.lane.b32.xlu0 %v2189, 96
          %v2204 = vpop.permute.xlu0 %2203
          %2206 = vst.msk [vmem:[#allocation5 + $0x60] sm:$0xfe] %vm1997, %v2204
          %2207 = vrot.lane.b32.xlu0 %v2187, 112
          %v2208 = vpop.permute.xlu0 %2207
          %2210 = vst.msk [vmem:[#allocation5 + $0x60] sm:$0xff] %vm2002, %v2208
          %2212 = vst.msk [vmem:[#allocation5 + $0x68] sm:$0x7f] %vm2005, %v2198
          %v2213 = vld [vmem:[#allocation5] sm:$0xff]
          %v2214 = vld [vmem:[#allocation5 + $0x8] sm:$0xff]
          %v2215 = vld [vmem:[#allocation5 + $0x10] sm:$0xff]
          %v2216 = vld [vmem:[#allocation5 + $0x18] sm:$0xff]
          %v2217 = vld [vmem:[#allocation5 + $0x20] sm:$0xff]
          %v2218 = vld [vmem:[#allocation5 + $0x28] sm:$0xff]
          %v2219 = vld [vmem:[#allocation5 + $0x30] sm:$0xff]
          %v2220 = vld [vmem:[#allocation5 + $0x38] sm:$0xff]
          %v2221 = vld [vmem:[#allocation5 + $0x40] sm:$0xff]
          %v2222 = vld [vmem:[#allocation5 + $0x48] sm:$0xff]
          %v2223 = vld [vmem:[#allocation5 + $0x50] sm:$0xff]
          %v2224 = vld [vmem:[#allocation5 + $0x58] sm:$0xff]
          %v2225 = vld [vmem:[#allocation5 + $0x60] sm:$0xff]
          %v2226 = vld [vmem:[#allocation5 + $0x68] sm:$0xff]
          %v2227 = vld [vmem:[#allocation5 + $0x70] sm:$0xff]
          %v2228 = vld [vmem:[#allocation5 + $0x78] sm:$0xff]
          %v2229 = vpack.c.bf16 %v2215, %v2213
          %v2230 = vpack.c.bf16 %v2216, %v2214
          %v2231 = vpack.c.bf16 %v2219, %v2217
          %v2232 = vpack.c.bf16 %v2220, %v2218
          %v2233 = vpack.c.bf16 %v2223, %v2221
          %v2234 = vpack.c.bf16 %v2224, %v2222
          %v2235 = vpack.c.bf16 %v2227, %v2225
          %v2236 = vpack.c.bf16 %v2228, %v2226
          %v2237 = vld [vmem:[%s3] sm:$0xf]
          %v2238 = vld [vmem:[%s3 + $0x4] sm:$0xf]
          %v2239 = vld [vmem:[%s3 + $0x8] sm:$0xf]
          %v2240 = vld [vmem:[%s3 + $0xc] sm:$0xf]
          %v2241 = vld [vmem:[%s3 + $0x10] sm:$0xf]
          %v2242 = vld [vmem:[%s3 + $0x14] sm:$0xf]
          %v2243 = vld [vmem:[%s3 + $0x18] sm:$0xf]
          %v2244 = vld [vmem:[%s3 + $0x1c] sm:$0xf]
          %v2245 = vld [vmem:[%s3 + $0x20] sm:$0xf]
          %v2246 = vld [vmem:[%s3 + $0x24] sm:$0xf]
          %v2247 = vld [vmem:[%s3 + $0x28] sm:$0xf]
          %v2248 = vld [vmem:[%s3 + $0x2c] sm:$0xf]
          %v2249 = vld [vmem:[%s3 + $0x30] sm:$0xf]
          %v2250 = vld [vmem:[%s3 + $0x34] sm:$0xf]
          %v2251 = vld [vmem:[%s3 + $0x38] sm:$0xf]
          %v2252 = vld [vmem:[%s3 + $0x3c] sm:$0xf]
          %v2253 = vld [vmem:[%s3 + $0x40] sm:$0xf]
          %v2254 = vld [vmem:[%s3 + $0x44] sm:$0xf]
          %v2255 = vld [vmem:[%s3 + $0x48] sm:$0xf]
          %v2256 = vld [vmem:[%s3 + $0x4c] sm:$0xf]
          %v2257 = vld [vmem:[%s3 + $0x50] sm:$0xf]
          %v2258 = vld [vmem:[%s3 + $0x54] sm:$0xf]
          %v2259 = vld [vmem:[%s3 + $0x58] sm:$0xf]
          %v2260 = vld [vmem:[%s3 + $0x5c] sm:$0xf]
          %v2261 = vld [vmem:[%s3 + $0x60] sm:$0xf]
          %v2262 = vld [vmem:[%s3 + $0x64] sm:$0xf]
          %v2263 = vld [vmem:[%s3 + $0x68] sm:$0xf]
          %v2264 = vld [vmem:[%s3 + $0x6c] sm:$0xf]
          %v2265 = vld [vmem:[%s3 + $0x70] sm:$0xf]
          %v2266 = vld [vmem:[%s3 + $0x74] sm:$0xf]
          %v2267 = vld [vmem:[%s3 + $0x78] sm:$0xf]
          %v2268 = vld [vmem:[%s3 + $0x7c] sm:$0xf]
          %v2301 = vunpack.c.l.b16 %v2237
          %v2302 = vunpack.c.l.b16 %v2238
          %v2303 = vunpack.c.l.b16 %v2239
          %v2304 = vunpack.c.l.b16 %v2240
          %v2305 = vunpack.c.l.b16 %v2241
          %v2306 = vunpack.c.l.b16 %v2242
          %v2307 = vunpack.c.l.b16 %v2243
          %v2308 = vunpack.c.l.b16 %v2244
          %v2309 = vunpack.c.l.b16 %v2245
          %v2310 = vunpack.c.l.b16 %v2246
          %v2311 = vunpack.c.l.b16 %v2247
          %v2312 = vunpack.c.l.b16 %v2248
          %v2313 = vunpack.c.l.b16 %v2249
          %v2314 = vunpack.c.l.b16 %v2250
          %v2315 = vunpack.c.l.b16 %v2251
          %v2316 = vunpack.c.l.b16 %v2252
          %v2317 = vunpack.c.l.b16 %v2253
          %v2318 = vunpack.c.l.b16 %v2254
          %v2319 = vunpack.c.l.b16 %v2255
          %v2320 = vunpack.c.l.b16 %v2256
          %v2321 = vunpack.c.l.b16 %v2257
          %v2322 = vunpack.c.l.b16 %v2258
          %v2323 = vunpack.c.l.b16 %v2259
          %v2324 = vunpack.c.l.b16 %v2260
          %v2325 = vunpack.c.l.b16 %v2261
          %v2326 = vunpack.c.l.b16 %v2262
          %v2327 = vunpack.c.l.b16 %v2263
          %v2328 = vunpack.c.l.b16 %v2264
          %v2329 = vunpack.c.l.b16 %v2265
          %v2330 = vunpack.c.l.b16 %v2266
          %v2331 = vunpack.c.l.b16 %v2267
          %v2332 = vunpack.c.l.b16 %v2268
          %v2333 = vpack.c.b16 %v2302, %v2301
          %v2334 = vpack.c.b16 %v2304, %v2303
          %v2335 = vpack.c.b16 %v2306, %v2305
          %v2336 = vpack.c.b16 %v2308, %v2307
          %v2337 = vpack.c.b16 %v2310, %v2309
          %v2338 = vpack.c.b16 %v2312, %v2311
          %v2339 = vpack.c.b16 %v2314, %v2313
          %v2340 = vpack.c.b16 %v2316, %v2315
          %v2341 = vpack.c.b16 %v2318, %v2317
          %v2342 = vpack.c.b16 %v2320, %v2319
          %v2343 = vpack.c.b16 %v2322, %v2321
          %v2344 = vpack.c.b16 %v2324, %v2323
          %v2345 = vpack.c.b16 %v2326, %v2325
          %v2346 = vpack.c.b16 %v2328, %v2327
          %v2347 = vpack.c.b16 %v2330, %v2329
          %v2348 = vpack.c.b16 %v2332, %v2331
          %2365 = vmatpush.bf16.msra.mxu0 %v2340
          %2366 = vmatpush.bf16.msra.mxu0 %v2339
          %2367 = vmatpush.bf16.msra.mxu0 %v2338
          %2368 = vmatpush.bf16.msra.mxu0 %v2337
          %2369 = vmatpush.bf16.msra.mxu0 %v2336
          %2370 = vmatpush.bf16.msra.mxu0 %v2335
          %2371 = vmatpush.bf16.msra.mxu0 %v2334
          %2372 = vmatpush.bf16.msra.mxu0 %v2333
          %2373 = vmatmul.bf16.gmra.mxu0 %v2229
          %v2374 = vpop.f32.mrf.mxu0
          %v2375 = vadd.f32 0.0, %v2374
          %v2376 = vpop.f32.mrf.mxu0
          %v2377 = vadd.f32 0.0, %v2376
          %2378 = vmatmul.bf16.gmra.mxu0 %v2231
          %v2379 = vpop.f32.mrf.mxu0
          %v2380 = vadd.f32 0.0, %v2379
          %v2381 = vpop.f32.mrf.mxu0
          %v2382 = vadd.f32 0.0, %v2381
          %2383 = vmatmul.bf16.gmra.mxu0 %v2233
          %v2384 = vpop.f32.mrf.mxu0
          %v2385 = vadd.f32 0.0, %v2384
          %v2386 = vpop.f32.mrf.mxu0
          %v2387 = vadd.f32 0.0, %v2386
          %2388 = vmatmul.bf16.gmra.mxu0 %v2235
          %v2389 = vpop.f32.mrf.mxu0
          %v2390 = vadd.f32 0.0, %v2389
          %v2391 = vpop.f32.mrf.mxu0
          %v2392 = vadd.f32 0.0, %v2391
          %2393 = vdwg.mxu0
          %2394 = vmatpush.bf16.msra.mxu0 %v2348
          %2395 = vmatpush.bf16.msra.mxu0 %v2347
          %2396 = vmatpush.bf16.msra.mxu0 %v2346
          %2397 = vmatpush.bf16.msra.mxu0 %v2345
          %2398 = vmatpush.bf16.msra.mxu0 %v2344
          %2399 = vmatpush.bf16.msra.mxu0 %v2343
          %2400 = vmatpush.bf16.msra.mxu0 %v2342
          %2401 = vmatpush.bf16.msra.mxu0 %v2341
          %2402 = vmatmul.bf16.gmra.mxu0 %v2230
          %v2403 = vpop.f32.mrf.mxu0
          %v2404 = vadd.f32 %v2375, %v2403
          %v2405 = vpop.f32.mrf.mxu0
          %v2406 = vadd.f32 %v2377, %v2405
          %2407 = vmatmul.bf16.gmra.mxu0 %v2232
          %v2408 = vpop.f32.mrf.mxu0
          %v2409 = vadd.f32 %v2380, %v2408
          %v2410 = vpop.f32.mrf.mxu0
          %v2411 = vadd.f32 %v2382, %v2410
          %2412 = vmatmul.bf16.gmra.mxu0 %v2234
          %v2413 = vpop.f32.mrf.mxu0
          %v2414 = vadd.f32 %v2385, %v2413
          %v2415 = vpop.f32.mrf.mxu0
          %v2416 = vadd.f32 %v2387, %v2415
          %2417 = vmatmul.bf16.gmra.mxu0 %v2236
          %v2418 = vpop.f32.mrf.mxu0
          %v2419 = vadd.f32 %v2390, %v2418
          %v2420 = vpop.f32.mrf.mxu0
          %v2421 = vadd.f32 %v2392, %v2420
          %2422 = vdwg.mxu0
          %vm2423 = vcmask 261120
          %2424 = vst.msk [vmem:[#allocation6] sm:$0xff] %vm2423, %v2404
          %2425 = vst.msk [vmem:[#allocation6 + $0x8] sm:$0xff] %vm2423, %v2406
          %2426 = vst.msk [vmem:[#allocation6 + $0x10] sm:$0xff] %vm2423, %v2409
          %2427 = vst.msk [vmem:[#allocation6 + $0x18] sm:$0xff] %vm2423, %v2411
          %2428 = vst.msk [vmem:[#allocation6 + $0x20] sm:$0xff] %vm2423, %v2414
          %2429 = vst.msk [vmem:[#allocation6 + $0x28] sm:$0xff] %vm2423, %v2416
          %2430 = vst.msk [vmem:[#allocation6 + $0x30] sm:$0xff] %vm2423, %v2419
          %2431 = vst.msk [vmem:[#allocation6 + $0x38] sm:$0xff] %vm2423, %v2421
          %v2432 = vld [vmem:[%s4] sm:$0x1]
          %v2433 = vld [vmem:[#allocation6] ss:$2 sm:$0xf]
          %s2434 = scalar_lea.vmem [#allocation6], 1
          %v2435 = vld [vmem:[%s2434] ss:$2 sm:$0xf]
          %s2436 = scalar_lea.vmem [#allocation6], 8
          %v2437 = vld [vmem:[%s2436] ss:$2 sm:$0xf]
          %s2438 = scalar_lea.vmem [#allocation6], 9
          %v2439 = vld [vmem:[%s2438] ss:$2 sm:$0xf]
          %v2440 = vmax.f32 %v2433, %v2435
          %v2441 = vmax.f32 %v2437, %v2439
          %v2442 = vmax.f32 %v2440, %v2441
          %v2444 = vperm.slane %v2432, 0
          %v2446 = vadd.f32 %v2442, %v2444
          %vm2447 = vcmp.gt.f32.partialorder %v2446, 0.0
          %v2448 = vmul.f32 %v2446, 0.1
          %v2449 = vsel %vm2447, %v2446, %v2448
          %vm2450 = vcmask 257024
          %2451 = vst.msk [vmem:[#allocation7] sm:$0xf] %vm2450, %v2449
          %s2452 = scalar_lea.vmem [#allocation6], 16
          %v2453 = vld [vmem:[%s2452] ss:$2 sm:$0xf]
          %s2454 = scalar_lea.vmem [#allocation6], 17
          %v2455 = vld [vmem:[%s2454] ss:$2 sm:$0xf]
          %s2456 = scalar_lea.vmem [#allocation6], 24
          %v2457 = vld [vmem:[%s2456] ss:$2 sm:$0xf]
          %s2458 = scalar_lea.vmem [#allocation6], 25
          %v2459 = vld [vmem:[%s2458] ss:$2 sm:$0xf]
          %v2460 = vmax.f32 %v2453, %v2455
          %v2461 = vmax.f32 %v2457, %v2459
          %v2462 = vmax.f32 %v2460, %v2461
          %v2463 = vadd.f32 %v2462, %v2444
          %vm2464 = vcmp.gt.f32.partialorder %v2463, 0.0
          %v2465 = vmul.f32 %v2463, 0.1
          %v2466 = vsel %vm2464, %v2463, %v2465
          %s2467 = scalar_lea.vmem [#allocation7], 4
          %2468 = vst.msk [vmem:[%s2467] sm:$0xf] %vm2450, %v2466
          %s2469 = scalar_lea.vmem [#allocation6], 32
          %v2470 = vld [vmem:[%s2469] ss:$2 sm:$0xf]
          %s2471 = scalar_lea.vmem [#allocation6], 33
          %v2472 = vld [vmem:[%s2471] ss:$2 sm:$0xf]
          %s2473 = scalar_lea.vmem [#allocation6], 40
          %v2474 = vld [vmem:[%s2473] ss:$2 sm:$0xf]
          %s2475 = scalar_lea.vmem [#allocation6], 41
          %v2476 = vld [vmem:[%s2475] ss:$2 sm:$0xf]
          %v2477 = vmax.f32 %v2470, %v2472
          %v2478 = vmax.f32 %v2474, %v2476
          %v2479 = vmax.f32 %v2477, %v2478
          %v2480 = vadd.f32 %v2479, %v2444
          %vm2481 = vcmp.gt.f32.partialorder %v2480, 0.0
          %v2482 = vmul.f32 %v2480, 0.1
          %v2483 = vsel %vm2481, %v2480, %v2482
          %s2484 = scalar_lea.vmem [#allocation7], 8
          %2485 = vst.msk [vmem:[%s2484] sm:$0xf] %vm2450, %v2483
          %s2486 = scalar_lea.vmem [#allocation6], 48
          %v2487 = vld [vmem:[%s2486] ss:$2 sm:$0xf]
          %s2488 = scalar_lea.vmem [#allocation6], 49
          %v2489 = vld [vmem:[%s2488] ss:$2 sm:$0xf]
          %s2490 = scalar_lea.vmem [#allocation6], 56
          %v2491 = vld [vmem:[%s2490] ss:$2 sm:$0xf]
          %s2492 = scalar_lea.vmem [#allocation6], 57
          %v2493 = vld [vmem:[%s2492] ss:$2 sm:$0xf]
          %v2494 = vmax.f32 %v2487, %v2489
          %v2495 = vmax.f32 %v2491, %v2493
          %v2496 = vmax.f32 %v2494, %v2495
          %v2497 = vadd.f32 %v2496, %v2444
          %vm2498 = vcmp.gt.f32.partialorder %v2497, 0.0
          %v2499 = vmul.f32 %v2497, 0.1
          %v2500 = vsel %vm2498, %v2497, %v2499
          %s2501 = scalar_lea.vmem [#allocation7], 12
          %2502 = vst.msk [vmem:[%s2501] sm:$0xf] %vm2450, %v2500
          %v2503 = vld [vmem:[#allocation7] sm:$0xf]
          %v2505 = vrot.slane %v2503, 3
          %vm2507 = vcmask 261125
          %2508 = vst.msk [vmem:[#allocation8] sm:$0xe0] %vm2507, %v2505
          %v2509 = vrot.slane %v2503, 4
          %2510 = vrot.lane.b32.xlu0 %v2509, 32
          %v2511 = vpop.permute.xlu0 %2510
          %vm2513 = vcmask 523524
          %2514 = vst.msk [vmem:[#allocation8] sm:$0xf0] %vm2513, %v2511
          %v2515 = vrot.slane %v2503, 5
          %2516 = vrot.lane.b32.xlu0 %v2515, 64
          %v2517 = vpop.permute.xlu0 %2516
          %vm2519 = vcmask 784900
          %2520 = vst.msk [vmem:[#allocation8] sm:$0x70] %vm2519, %v2517
          %v2521 = vrot.slane %v2503, 7
          %2522 = vrot.lane.b32.xlu0 %v2521, 96
          %v2523 = vpop.permute.xlu0 %2522
          %vm2525 = vcmask 1044225
          %2526 = vst.msk [vmem:[#allocation8] sm:$0xe] %vm2525, %v2523
          %2527 = vst.msk [vmem:[#allocation8 + $0x8] sm:$0xf] %vm2450, %v2503
          %v2528 = vrot.slane %v2503, 1
          %2529 = vrot.lane.b32.xlu0 %v2528, 32
          %v2530 = vpop.permute.xlu0 %2529
          %vm2532 = vcmask 518400
          %2533 = vst.msk [vmem:[#allocation8 + $0x8] sm:$0x7] %vm2532, %v2530
          %v2534 = vld [vmem:[%s2467] sm:$0xf]
          %v2536 = vrot.slane %v2534, 7
          %vm2538 = vcmask 257025
          %2539 = vst.msk [vmem:[#allocation8 + $0x18] sm:$0xe] %vm2538, %v2536
          %2540 = vrot.lane.b32.xlu0 %v2534, 32
          %v2541 = vpop.permute.xlu0 %2540
          %vm2543 = vcmask 519424
          %2544 = vst.msk [vmem:[#allocation8 + $0x18] sm:$0xf] %vm2543, %v2541
          %v2545 = vrot.slane %v2534, 1
          %2546 = vrot.lane.b32.xlu0 %v2545, 64
          %v2547 = vpop.permute.xlu0 %2546
          %vm2549 = vcmask 780800
          %2550 = vst.msk [vmem:[#allocation8 + $0x18] sm:$0x7] %vm2549, %v2547
          %v2551 = vrot.slane %v2534, 3
          %2552 = vrot.lane.b32.xlu0 %v2551, 96
          %v2553 = vpop.permute.xlu0 %2552
          %vm2555 = vcmask 1048325
          %2556 = vst.msk [vmem:[#allocation8] sm:$0xe0] %vm2555, %v2553
          %v2557 = vrot.slane %v2534, 4
          %vm2559 = vcmask 261124
          %2560 = vst.msk [vmem:[#allocation8 + $0x8] sm:$0xf0] %vm2559, %v2557
          %v2561 = vrot.slane %v2534, 5
          %2562 = vrot.lane.b32.xlu0 %v2561, 32
          %v2563 = vpop.permute.xlu0 %2562
          %vm2565 = vcmask 522500
          %2566 = vst.msk [vmem:[#allocation8 + $0x8] sm:$0x70] %vm2565, %v2563
          %2567 = vrot.lane.b32.xlu0 %v2536, 64
          %v2568 = vpop.permute.xlu0 %2567
          %vm2570 = vcmask 781825
          %2571 = vst.msk [vmem:[#allocation8 + $0x8] sm:$0xe] %vm2570, %v2568
          %2572 = vrot.lane.b32.xlu0 %v2534, 96
          %v2573 = vpop.permute.xlu0 %2572
          %vm2575 = vcmask 1044224
          %2576 = vst.msk [vmem:[#allocation8 + $0x8] sm:$0xf] %vm2575, %v2573
          %vm2578 = vcmask 256000
          %2579 = vst.msk [vmem:[#allocation8 + $0x10] sm:$0x7] %vm2578, %v2545
          %v2580 = vld [vmem:[%s2484] sm:$0xf]
          %v2582 = vrot.slane %v2580, 3
          %2584 = vst.msk [vmem:[#allocation8 + $0x18] sm:$0xe0] %vm2507, %v2582
          %v2585 = vrot.slane %v2580, 4
          %2586 = vrot.lane.b32.xlu0 %v2585, 32
          %v2587 = vpop.permute.xlu0 %2586
          %2589 = vst.msk [vmem:[#allocation8 + $0x18] sm:$0xf0] %vm2513, %v2587
          %v2590 = vrot.slane %v2580, 5
          %2591 = vrot.lane.b32.xlu0 %v2590, 64
          %v2592 = vpop.permute.xlu0 %2591
          %2594 = vst.msk [vmem:[#allocation8 + $0x18] sm:$0x70] %vm2519, %v2592
          %v2595 = vrot.slane %v2580, 7
          %2596 = vrot.lane.b32.xlu0 %v2595, 96
          %v2597 = vpop.permute.xlu0 %2596
          %2599 = vst.msk [vmem:[#allocation8 + $0x18] sm:$0xe] %vm2525, %v2597
          %2600 = vst.msk [vmem:[#allocation8 + $0x20] sm:$0xf] %vm2450, %v2580
          %v2601 = vrot.slane %v2580, 1
          %2602 = vrot.lane.b32.xlu0 %v2601, 32
          %v2603 = vpop.permute.xlu0 %2602
          %2605 = vst.msk [vmem:[#allocation8 + $0x20] sm:$0x7] %vm2532, %v2603
          %2606 = vrot.lane.b32.xlu0 %v2582, 64
          %v2607 = vpop.permute.xlu0 %2606
          %vm2609 = vcmask 785925
          %2610 = vst.msk [vmem:[#allocation8 + $0x8] sm:$0xe0] %vm2609, %v2607
          %2611 = vrot.lane.b32.xlu0 %v2585, 96
          %v2612 = vpop.permute.xlu0 %2611
          %vm2614 = vcmask 1048324
          %2615 = vst.msk [vmem:[#allocation8 + $0x8] sm:$0xf0] %vm2614, %v2612
          %vm2617 = vcmask 260100
          %2618 = vst.msk [vmem:[#allocation8 + $0x10] sm:$0x70] %vm2617, %v2590
          %v2619 = vld [vmem:[%s2501] sm:$0xf]
          %v2621 = vrot.slane %v2619, 3
          %2622 = vrot.lane.b32.xlu0 %v2621, 96
          %v2623 = vpop.permute.xlu0 %2622
          %2625 = vst.msk [vmem:[#allocation8 + $0x18] sm:$0xe0] %vm2555, %v2623
          %v2626 = vrot.slane %v2619, 4
          %2628 = vst.msk [vmem:[#allocation8 + $0x20] sm:$0xf0] %vm2559, %v2626
          %v2629 = vrot.slane %v2619, 5
          %2630 = vrot.lane.b32.xlu0 %v2629, 32
          %v2631 = vpop.permute.xlu0 %2630
          %2633 = vst.msk [vmem:[#allocation8 + $0x20] sm:$0x70] %vm2565, %v2631
          %v2634 = vrot.slane %v2619, 7
          %2635 = vrot.lane.b32.xlu0 %v2634, 64
          %v2636 = vpop.permute.xlu0 %2635
          %2638 = vst.msk [vmem:[#allocation8 + $0x20] sm:$0xe] %vm2570, %v2636
          %2639 = vrot.lane.b32.xlu0 %v2619, 96
          %v2640 = vpop.permute.xlu0 %2639
          %2642 = vst.msk [vmem:[#allocation8 + $0x20] sm:$0xf] %vm2575, %v2640
          %v2643 = vrot.slane %v2619, 1
          %2645 = vst.msk [vmem:[#allocation8 + $0x28] sm:$0x7] %vm2578, %v2643
          %v2646 = vld [vmem:[#allocation8] sm:$0xff]
          %v2647 = vld [vmem:[#allocation8 + $0x8] sm:$0xff]
          %v2648 = vld [vmem:[#allocation8 + $0x10] sm:$0xff]
          %v2649 = vld [vmem:[#allocation8 + $0x18] sm:$0xff]
          %v2650 = vld [vmem:[#allocation8 + $0x20] sm:$0xff]
          %v2651 = vld [vmem:[#allocation8 + $0x28] sm:$0xff]
          %v2652 = vpack.c.bf16 %v2649, %v2646
          %v2653 = vpack.c.bf16 %v2650, %v2647
          %v2654 = vpack.c.bf16 %v2651, %v2648
          %v2655 = vld [vmem:[%s5] sm:$0xf]
          %v2656 = vld [vmem:[%s5 + $0x4] sm:$0xf]
          %v2657 = vld [vmem:[%s5 + $0x8] sm:$0xf]
          %v2658 = vld [vmem:[%s5 + $0xc] sm:$0xf]
          %v2659 = vld [vmem:[%s5 + $0x10] sm:$0xf]
          %v2660 = vld [vmem:[%s5 + $0x14] sm:$0xf]
          %v2661 = vld [vmem:[%s5 + $0x18] sm:$0xf]
          %v2662 = vld [vmem:[%s5 + $0x1c] sm:$0xf]
          %v2663 = vld [vmem:[%s5 + $0x20] sm:$0xf]
          %v2664 = vld [vmem:[%s5 + $0x24] sm:$0xf]
          %v2665 = vld [vmem:[%s5 + $0x28] sm:$0xf]
          %v2666 = vld [vmem:[%s5 + $0x2c] sm:$0xf]
          %v2667 = vld [vmem:[%s5 + $0x30] sm:$0xf]
          %v2668 = vld [vmem:[%s5 + $0x34] sm:$0xf]
          %v2669 = vld [vmem:[%s5 + $0x38] sm:$0xf]
          %v2670 = vld [vmem:[%s5 + $0x3c] sm:$0xf]
          %v2671 = vld [vmem:[%s5 + $0x40] sm:$0xf]
          %v2672 = vld [vmem:[%s5 + $0x44] sm:$0xf]
          %v2673 = vld [vmem:[%s5 + $0x48] sm:$0xf]
          %v2674 = vld [vmem:[%s5 + $0x4c] sm:$0xf]
          %v2675 = vld [vmem:[%s5 + $0x50] sm:$0xf]
          %v2676 = vld [vmem:[%s5 + $0x54] sm:$0xf]
          %v2677 = vld [vmem:[%s5 + $0x58] sm:$0xf]
          %v2678 = vld [vmem:[%s5 + $0x5c] sm:$0xf]
          %v2679 = vld [vmem:[%s5 + $0x60] sm:$0xf]
          %v2680 = vld [vmem:[%s5 + $0x64] sm:$0xf]
          %v2681 = vld [vmem:[%s5 + $0x68] sm:$0xf]
          %v2682 = vld [vmem:[%s5 + $0x6c] sm:$0xf]
          %v2683 = vld [vmem:[%s5 + $0x70] sm:$0xf]
          %v2684 = vld [vmem:[%s5 + $0x74] sm:$0xf]
          %v2685 = vld [vmem:[%s5 + $0x78] sm:$0xf]
          %v2686 = vld [vmem:[%s5 + $0x7c] sm:$0xf]
          %v2687 = vld [vmem:[%s5 + $0x80] sm:$0xf]
          %v2688 = vld [vmem:[%s5 + $0x84] sm:$0xf]
          %v2689 = vld [vmem:[%s5 + $0x88] sm:$0xf]
          %v2690 = vld [vmem:[%s5 + $0x8c] sm:$0xf]
          %v2691 = vld [vmem:[%s5 + $0x90] sm:$0xf]
          %v2692 = vld [vmem:[%s5 + $0x94] sm:$0xf]
          %v2693 = vld [vmem:[%s5 + $0x98] sm:$0xf]
          %v2694 = vld [vmem:[%s5 + $0x9c] sm:$0xf]
          %v2695 = vld [vmem:[%s5 + $0xa0] sm:$0xf]
          %v2696 = vld [vmem:[%s5 + $0xa4] sm:$0xf]
          %v2697 = vld [vmem:[%s5 + $0xa8] sm:$0xf]
          %v2698 = vld [vmem:[%s5 + $0xac] sm:$0xf]
          %v2699 = vld [vmem:[%s5 + $0xb0] sm:$0xf]
          %v2700 = vld [vmem:[%s5 + $0xb4] sm:$0xf]
          %v2701 = vld [vmem:[%s5 + $0xb8] sm:$0xf]
          %v2702 = vld [vmem:[%s5 + $0xbc] sm:$0xf]
          %v2751 = vunpack.c.l.b16 %v2655
          %v2752 = vunpack.c.l.b16 %v2656
          %v2753 = vunpack.c.l.b16 %v2657
          %v2754 = vunpack.c.l.b16 %v2658
          %v2755 = vunpack.c.l.b16 %v2659
          %v2756 = vunpack.c.l.b16 %v2660
          %v2757 = vunpack.c.l.b16 %v2661
          %v2758 = vunpack.c.l.b16 %v2662
          %v2759 = vunpack.c.l.b16 %v2663
          %v2760 = vunpack.c.l.b16 %v2664
          %v2761 = vunpack.c.l.b16 %v2665
          %v2762 = vunpack.c.l.b16 %v2666
          %v2763 = vunpack.c.l.b16 %v2667
          %v2764 = vunpack.c.l.b16 %v2668
          %v2765 = vunpack.c.l.b16 %v2669
          %v2766 = vunpack.c.l.b16 %v2670
          %v2767 = vunpack.c.l.b16 %v2671
          %v2768 = vunpack.c.l.b16 %v2672
          %v2769 = vunpack.c.l.b16 %v2673
          %v2770 = vunpack.c.l.b16 %v2674
          %v2771 = vunpack.c.l.b16 %v2675
          %v2772 = vunpack.c.l.b16 %v2676
          %v2773 = vunpack.c.l.b16 %v2677
          %v2774 = vunpack.c.l.b16 %v2678
          %v2775 = vunpack.c.l.b16 %v2679
          %v2776 = vunpack.c.l.b16 %v2680
          %v2777 = vunpack.c.l.b16 %v2681
          %v2778 = vunpack.c.l.b16 %v2682
          %v2779 = vunpack.c.l.b16 %v2683
          %v2780 = vunpack.c.l.b16 %v2684
          %v2781 = vunpack.c.l.b16 %v2685
          %v2782 = vunpack.c.l.b16 %v2686
          %v2783 = vunpack.c.l.b16 %v2687
          %v2784 = vunpack.c.l.b16 %v2688
          %v2785 = vunpack.c.l.b16 %v2689
          %v2786 = vunpack.c.l.b16 %v2690
          %v2787 = vunpack.c.l.b16 %v2691
          %v2788 = vunpack.c.l.b16 %v2692
          %v2789 = vunpack.c.l.b16 %v2693
          %v2790 = vunpack.c.l.b16 %v2694
          %v2791 = vunpack.c.l.b16 %v2695
          %v2792 = vunpack.c.l.b16 %v2696
          %v2793 = vunpack.c.l.b16 %v2697
          %v2794 = vunpack.c.l.b16 %v2698
          %v2795 = vunpack.c.l.b16 %v2699
          %v2796 = vunpack.c.l.b16 %v2700
          %v2797 = vunpack.c.l.b16 %v2701
          %v2798 = vunpack.c.l.b16 %v2702
          %v2799 = vpack.c.b16 %v2752, %v2751
          %v2800 = vpack.c.b16 %v2754, %v2753
          %v2801 = vpack.c.b16 %v2756, %v2755
          %v2802 = vpack.c.b16 %v2758, %v2757
          %v2803 = vpack.c.b16 %v2760, %v2759
          %v2804 = vpack.c.b16 %v2762, %v2761
          %v2805 = vpack.c.b16 %v2764, %v2763
          %v2806 = vpack.c.b16 %v2766, %v2765
          %v2807 = vpack.c.b16 %v2768, %v2767
          %v2808 = vpack.c.b16 %v2770, %v2769
          %v2809 = vpack.c.b16 %v2772, %v2771
          %v2810 = vpack.c.b16 %v2774, %v2773
          %v2811 = vpack.c.b16 %v2776, %v2775
          %v2812 = vpack.c.b16 %v2778, %v2777
          %v2813 = vpack.c.b16 %v2780, %v2779
          %v2814 = vpack.c.b16 %v2782, %v2781
          %v2815 = vpack.c.b16 %v2784, %v2783
          %v2816 = vpack.c.b16 %v2786, %v2785
          %v2817 = vpack.c.b16 %v2788, %v2787
          %v2818 = vpack.c.b16 %v2790, %v2789
          %v2819 = vpack.c.b16 %v2792, %v2791
          %v2820 = vpack.c.b16 %v2794, %v2793
          %v2821 = vpack.c.b16 %v2796, %v2795
          %v2822 = vpack.c.b16 %v2798, %v2797
          %2847 = vmatpush.bf16.msra.mxu0 %v2806
          %2848 = vmatpush.bf16.msra.mxu0 %v2805
          %2849 = vmatpush.bf16.msra.mxu0 %v2804
          %2850 = vmatpush.bf16.msra.mxu0 %v2803
          %2851 = vmatpush.bf16.msra.mxu0 %v2802
          %2852 = vmatpush.bf16.msra.mxu0 %v2801
          %2853 = vmatpush.bf16.msra.mxu0 %v2800
          %2854 = vmatpush.bf16.msra.mxu0 %v2799
          %2855 = vmatmul.bf16.gmra.mxu0 %v2652
          %v2856 = vpop.f32.mrf.mxu0
          %v2857 = vadd.f32 0.0, %v2856
          %v2858 = vpop.f32.mrf.mxu0
          %v2859 = vadd.f32 0.0, %v2858
          %2860 = vdwg.mxu0
          %2861 = vmatpush.bf16.msra.mxu0 %v2814
          %2862 = vmatpush.bf16.msra.mxu0 %v2813
          %2863 = vmatpush.bf16.msra.mxu0 %v2812
          %2864 = vmatpush.bf16.msra.mxu0 %v2811
          %2865 = vmatpush.bf16.msra.mxu0 %v2810
          %2866 = vmatpush.bf16.msra.mxu0 %v2809
          %2867 = vmatpush.bf16.msra.mxu0 %v2808
          %2868 = vmatpush.bf16.msra.mxu0 %v2807
          %2869 = vmatmul.bf16.gmra.mxu0 %v2653
          %v2870 = vpop.f32.mrf.mxu0
          %v2871 = vadd.f32 %v2857, %v2870
          %v2872 = vpop.f32.mrf.mxu0
          %v2873 = vadd.f32 %v2859, %v2872
          %2874 = vdwg.mxu0
          %2875 = vmatpush.bf16.msra.mxu0 %v2822
          %2876 = vmatpush.bf16.msra.mxu0 %v2821
          %2877 = vmatpush.bf16.msra.mxu0 %v2820
          %2878 = vmatpush.bf16.msra.mxu0 %v2819
          %2879 = vmatpush.bf16.msra.mxu0 %v2818
          %2880 = vmatpush.bf16.msra.mxu0 %v2817
          %2881 = vmatpush.bf16.msra.mxu0 %v2816
          %2882 = vmatpush.bf16.msra.mxu0 %v2815
          %2883 = vmatmul.bf16.gmra.mxu0 %v2654
          %v2884 = vpop.f32.mrf.mxu0
          %v2885 = vadd.f32 %v2871, %v2884
          %v2886 = vpop.f32.mrf.mxu0
          %v2887 = vadd.f32 %v2873, %v2886
          %2888 = vdwg.mxu0
          %vm2889 = vcmask 523264
          %2890 = vst.msk [vmem:[#allocation9] sm:$0xff] %vm2889, %v2885
          %2891 = vst.msk [vmem:[#allocation9 + $0x8] sm:$0xff] %vm2889, %v2887
          %v2892 = vld [vmem:[%s6] sm:$0x1]
          %v2893 = vld [vmem:[#allocation9] ss:$2 sm:$0x3]
          %s2894 = scalar_lea.vmem [#allocation9], 1
          %v2895 = vld [vmem:[%s2894] ss:$2 sm:$0x3]
          %s2896 = scalar_lea.vmem [#allocation9], 4
          %v2897 = vld [vmem:[%s2896] ss:$2 sm:$0x3]
          %s2898 = scalar_lea.vmem [#allocation9], 5
          %v2899 = vld [vmem:[%s2898] ss:$2 sm:$0x3]
          %v2900 = vmax.f32 %v2893, %v2895
          %v2901 = vmax.f32 %v2897, %v2899
          %v2902 = vmax.f32 %v2900, %v2901
          %v2904 = vperm.slane %v2892, 0
          %v2906 = vadd.f32 %v2902, %v2904
          %vm2907 = vcmp.gt.f32.partialorder %v2906, 0.0
          %v2908 = vmul.f32 %v2906, 0.1
          %v2909 = vsel %vm2907, %v2906, %v2908
          %s2910 = smul.u32 %s434, 4
          %s2911 = scalar_lea.vmem %s359, %s2910 [#allocation12]
          %vm2912 = vcmask 517120
          %2913 = vst.msk [vmem:[%s2911] sm:$0x3] %vm2912, %v2909
          %s2914 = scalar_lea.vmem [#allocation9], 8
          %v2915 = vld [vmem:[%s2914] ss:$2 sm:$0x3]
          %s2916 = scalar_lea.vmem [#allocation9], 9
          %v2917 = vld [vmem:[%s2916] ss:$2 sm:$0x3]
          %s2918 = scalar_lea.vmem [#allocation9], 12
          %v2919 = vld [vmem:[%s2918] ss:$2 sm:$0x3]
          %s2920 = scalar_lea.vmem [#allocation9], 13
          %v2921 = vld [vmem:[%s2920] ss:$2 sm:$0x3]
          %v2922 = vmax.f32 %v2915, %v2917
          %v2923 = vmax.f32 %v2919, %v2921
          %v2924 = vmax.f32 %v2922, %v2923
          %v2925 = vadd.f32 %v2924, %v2904
          %vm2926 = vcmp.gt.f32.partialorder %v2925, 0.0
          %v2927 = vmul.f32 %v2925, 0.1
          %v2928 = vsel %vm2926, %v2925, %v2927
          %s2929 = sadd.s32 2, %s2910
          %s2930 = scalar_lea.vmem %s359, %s2929 [#allocation12]
          %2931 = vst.msk [vmem:[%s2930] sm:$0x3] %vm2912, %v2928
          %v2932 = vld [vmem:[%s2911] sm:$0x3]
          %vm2933 = vcmask 516096
          %2934 = vst.msk [vmem:[#allocation10 + $0x3] sm:$0x1] %vm2933, %v2932
          %v2936 = vrot.slane %v2932, 6
          %2937 = vrot.lane.b32.xlu0 %v2936, 64
          %v2938 = vpop.permute.xlu0 %2937
          %vm2940 = vcmask 1043970
          %2941 = vst.msk [vmem:[#allocation10] sm:$0xc] %vm2940, %v2938
          %v2942 = vrot.slane %v2932, 5
          %v2943 = vrot.slane %v2942, 4
          %2945 = vst.msk [vmem:[#allocation10 + $0x6] sm:$0x1] %vm2933, %v2943
          %2946 = vrot.lane.b32.xlu0 %v2932, 64
          %v2947 = vpop.permute.xlu0 %2946
          %vm2949 = vcmask 1040896
          %2950 = vst.msk [vmem:[#allocation10 + $0x5] sm:$0x1] %vm2949, %v2947
          %2951 = vst.msk [vmem:[#allocation10 + $0x8] sm:$0x3] %vm2912, %v2932
          %2952 = vrot.lane.b32.xlu0 %v2943, 64
          %v2953 = vpop.permute.xlu0 %2952
          %2955 = vst.msk [vmem:[#allocation10 + $0x8] sm:$0x1] %vm2949, %v2953
          %v2956 = vld [vmem:[%s2930] sm:$0x3]
          %2958 = vrot.lane.b32.xlu0 %v2956, 64
          %v2959 = vpop.permute.xlu0 %2958
          %2961 = vst.msk [vmem:[#allocation10 + $0x7] sm:$0x1] %vm2949, %v2959
          %v2962 = vrot.slane %v2956, 6
          %vm2964 = vcmask 519170
          %2965 = vst.msk [vmem:[#allocation10 + $0x8] sm:$0xc] %vm2964, %v2962
          %v2966 = vrot.slane %v2956, 5
          %v2967 = vrot.slane %v2966, 4
          %2968 = vrot.lane.b32.xlu0 %v2967, 64
          %v2969 = vpop.permute.xlu0 %2968
          %2971 = vst.msk [vmem:[#allocation10 + $0xa] sm:$0x1] %vm2949, %v2969
          %2972 = vst.msk [vmem:[#allocation10 + $0xd] sm:$0x1] %vm2933, %v2956
          %vm2973 = vcmask 1041920
          %2974 = vst.msk [vmem:[#allocation10 + $0xc] sm:$0x3] %vm2973, %v2959
          %2976 = vst.msk [vmem:[#allocation10 + $0x10] sm:$0x1] %vm2933, %v2967
          %v2977 = vld [vmem:[#allocation10] sm:$0xff]
          %v2978 = vld [vmem:[#allocation10 + $0x8] sm:$0xff]
          %v2979 = vld [vmem:[#allocation10 + $0x10] sm:$0xf]
          %2983 = vst [vmem:[#allocation1] ss:$2 sm:$0xff] %v2977
          %s2984 = scalar_lea.vmem [#allocation1], 16
          %2985 = vst [vmem:[%s2984] ss:$2 sm:$0xff] %v2978
          %s2986 = scalar_lea.vmem [#allocation1], 32
          %2987 = vst [vmem:[%s2986] ss:$2 sm:$0xff] %v2979
          %v2988 = vld.sshfl [vmem:[#allocation1] sm:$0xff pattern:$0x75316420]
          %v2989 = vld.sshfl [vmem:[#allocation1 + $0x8] sm:$0xff pattern:$0x75316420]
          %v2990 = vld.sshfl [vmem:[#allocation1 + $0x10] sm:$0xff pattern:$0x75316420]
          %v2991 = vld.sshfl [vmem:[#allocation1 + $0x18] sm:$0xff pattern:$0x75316420]
          %v2992 = vld.sshfl [vmem:[#allocation1 + $0x20] sm:$0xff pattern:$0x75316420]
          %v2998 = vpack.c.bf16 %v2988, %v2988
          %v2999 = vpack.c.bf16 %v2989, %v2989
          %v3000 = vpack.c.bf16 %v2990, %v2990
          %v3001 = vpack.c.bf16 %v2991, %v2991
          %v3002 = vpack.c.bf16 %v2992, %v2992
          %v3003 = vld [vmem:[%s7] sm:$0xf]
          %v3004 = vld [vmem:[%s7 + $0x4] sm:$0xf]
          %v3005 = vld [vmem:[%s7 + $0x8] sm:$0xf]
          %v3006 = vld [vmem:[%s7 + $0xc] sm:$0xf]
          %v3007 = vld [vmem:[%s7 + $0x10] sm:$0xf]
          %v3008 = vld [vmem:[%s7 + $0x14] sm:$0xf]
          %v3009 = vld [vmem:[%s7 + $0x18] sm:$0xf]
          %v3010 = vld [vmem:[%s7 + $0x1c] sm:$0xf]
          %v3011 = vld [vmem:[%s7 + $0x20] sm:$0xf]
          %v3012 = vld [vmem:[%s7 + $0x24] sm:$0xf]
          %v3013 = vld [vmem:[%s7 + $0x28] sm:$0xf]
          %v3014 = vld [vmem:[%s7 + $0x2c] sm:$0xf]
          %v3015 = vld [vmem:[%s7 + $0x30] sm:$0xf]
          %v3016 = vld [vmem:[%s7 + $0x34] sm:$0xf]
          %v3017 = vld [vmem:[%s7 + $0x38] sm:$0xf]
          %v3018 = vld [vmem:[%s7 + $0x3c] sm:$0xf]
          %v3019 = vld [vmem:[%s7 + $0x40] sm:$0xf]
          %v3020 = vld [vmem:[%s7 + $0x44] sm:$0xf]
          %v3021 = vld [vmem:[%s7 + $0x48] sm:$0xf]
          %v3022 = vld [vmem:[%s7 + $0x4c] sm:$0xf]
          %v3023 = vld [vmem:[%s7 + $0x50] sm:$0xf]
          %v3024 = vld [vmem:[%s7 + $0x54] sm:$0xf]
          %v3025 = vld [vmem:[%s7 + $0x58] sm:$0xf]
          %v3026 = vld [vmem:[%s7 + $0x5c] sm:$0xf]
          %v3027 = vld [vmem:[%s7 + $0x60] sm:$0xf]
          %v3028 = vld [vmem:[%s7 + $0x64] sm:$0xf]
          %v3029 = vld [vmem:[%s7 + $0x68] sm:$0xf]
          %v3030 = vld [vmem:[%s7 + $0x6c] sm:$0xf]
          %v3031 = vld [vmem:[%s7 + $0x70] sm:$0xf]
          %v3032 = vld [vmem:[%s7 + $0x74] sm:$0xf]
          %v3033 = vld [vmem:[%s7 + $0x78] sm:$0xf]
          %v3034 = vld [vmem:[%s7 + $0x7c] sm:$0xf]
          %v3035 = vld [vmem:[%s7 + $0x80] sm:$0xf]
          %v3036 = vld [vmem:[%s7 + $0x84] sm:$0xf]
          %v3037 = vld [vmem:[%s7 + $0x88] sm:$0xf]
          %v3038 = vld [vmem:[%s7 + $0x8c] sm:$0xf]
          %v3039 = vld [vmem:[%s7 + $0x90] sm:$0xf]
          %v3040 = vld [vmem:[%s7 + $0x94] sm:$0xf]
          %v3041 = vld [vmem:[%s7 + $0x98] sm:$0xf]
          %v3042 = vld [vmem:[%s7 + $0x9c] sm:$0xf]
          %v3043 = vld [vmem:[%s7 + $0xa0] sm:$0xf]
          %v3044 = vld [vmem:[%s7 + $0xa4] sm:$0xf]
          %v3045 = vld [vmem:[%s7 + $0xa8] sm:$0xf]
          %v3046 = vld [vmem:[%s7 + $0xac] sm:$0xf]
          %v3047 = vld [vmem:[%s7 + $0xb0] sm:$0xf]
          %v3048 = vld [vmem:[%s7 + $0xb4] sm:$0xf]
          %v3049 = vld [vmem:[%s7 + $0xb8] sm:$0xf]
          %v3050 = vld [vmem:[%s7 + $0xbc] sm:$0xf]
          %v3051 = vld [vmem:[%s7 + $0xc0] sm:$0xf]
          %v3052 = vld [vmem:[%s7 + $0xc4] sm:$0xf]
          %v3053 = vld [vmem:[%s7 + $0xc8] sm:$0xf]
          %v3054 = vld [vmem:[%s7 + $0xcc] sm:$0xf]
          %v3055 = vld [vmem:[%s7 + $0xd0] sm:$0xf]
          %v3056 = vld [vmem:[%s7 + $0xd4] sm:$0xf]
          %v3057 = vld [vmem:[%s7 + $0xd8] sm:$0xf]
          %v3058 = vld [vmem:[%s7 + $0xdc] sm:$0xf]
          %v3059 = vld [vmem:[%s7 + $0xe0] sm:$0xf]
          %v3060 = vld [vmem:[%s7 + $0xe4] sm:$0xf]
          %v3061 = vld [vmem:[%s7 + $0xe8] sm:$0xf]
          %v3062 = vld [vmem:[%s7 + $0xec] sm:$0xf]
          %v3063 = vld [vmem:[%s7 + $0xf0] sm:$0xf]
          %v3064 = vld [vmem:[%s7 + $0xf4] sm:$0xf]
          %v3065 = vld [vmem:[%s7 + $0xf8] sm:$0xf]
          %v3066 = vld [vmem:[%s7 + $0xfc] sm:$0xf]
          %v3067 = vld [vmem:[%s7 + $0x100] sm:$0xf]
          %v3068 = vld [vmem:[%s7 + $0x104] sm:$0xf]
          %v3069 = vld [vmem:[%s7 + $0x108] sm:$0xf]
          %v3070 = vld [vmem:[%s7 + $0x10c] sm:$0xf]
          %v3071 = vld [vmem:[%s7 + $0x110] sm:$0xf]
          %v3072 = vld [vmem:[%s7 + $0x114] sm:$0xf]
          %v3073 = vld [vmem:[%s7 + $0x118] sm:$0xf]
          %v3074 = vld [vmem:[%s7 + $0x11c] sm:$0xf]
          %v3075 = vld [vmem:[%s7 + $0x120] sm:$0xf]
          %v3076 = vld [vmem:[%s7 + $0x124] sm:$0xf]
          %v3077 = vld [vmem:[%s7 + $0x128] sm:$0xf]
          %v3078 = vld [vmem:[%s7 + $0x12c] sm:$0xf]
          %v3079 = vld [vmem:[%s7 + $0x130] sm:$0xf]
          %v3080 = vld [vmem:[%s7 + $0x134] sm:$0xf]
          %v3081 = vld [vmem:[%s7 + $0x138] sm:$0xf]
          %v3082 = vld [vmem:[%s7 + $0x13c] sm:$0xf]
          %v3163 = vunpack.c.l.b16 %v3003
          %v3164 = vunpack.c.l.b16 %v3004
          %v3165 = vunpack.c.l.b16 %v3005
          %v3166 = vunpack.c.l.b16 %v3006
          %v3167 = vunpack.c.l.b16 %v3007
          %v3168 = vunpack.c.l.b16 %v3008
          %v3169 = vunpack.c.l.b16 %v3009
          %v3170 = vunpack.c.l.b16 %v3010
          %v3171 = vunpack.c.l.b16 %v3011
          %v3172 = vunpack.c.l.b16 %v3012
          %v3173 = vunpack.c.l.b16 %v3013
          %v3174 = vunpack.c.l.b16 %v3014
          %v3175 = vunpack.c.l.b16 %v3015
          %v3176 = vunpack.c.l.b16 %v3016
          %v3177 = vunpack.c.l.b16 %v3017
          %v3178 = vunpack.c.l.b16 %v3018
          %v3179 = vunpack.c.l.b16 %v3019
          %v3180 = vunpack.c.l.b16 %v3020
          %v3181 = vunpack.c.l.b16 %v3021
          %v3182 = vunpack.c.l.b16 %v3022
          %v3183 = vunpack.c.l.b16 %v3023
          %v3184 = vunpack.c.l.b16 %v3024
          %v3185 = vunpack.c.l.b16 %v3025
          %v3186 = vunpack.c.l.b16 %v3026
          %v3187 = vunpack.c.l.b16 %v3027
          %v3188 = vunpack.c.l.b16 %v3028
          %v3189 = vunpack.c.l.b16 %v3029
          %v3190 = vunpack.c.l.b16 %v3030
          %v3191 = vunpack.c.l.b16 %v3031
          %v3192 = vunpack.c.l.b16 %v3032
          %v3193 = vunpack.c.l.b16 %v3033
          %v3194 = vunpack.c.l.b16 %v3034
          %v3195 = vunpack.c.l.b16 %v3035
          %v3196 = vunpack.c.l.b16 %v3036
          %v3197 = vunpack.c.l.b16 %v3037
          %v3198 = vunpack.c.l.b16 %v3038
          %v3199 = vunpack.c.l.b16 %v3039
          %v3200 = vunpack.c.l.b16 %v3040
          %v3201 = vunpack.c.l.b16 %v3041
          %v3202 = vunpack.c.l.b16 %v3042
          %v3203 = vunpack.c.l.b16 %v3043
          %v3204 = vunpack.c.l.b16 %v3044
          %v3205 = vunpack.c.l.b16 %v3045
          %v3206 = vunpack.c.l.b16 %v3046
          %v3207 = vunpack.c.l.b16 %v3047
          %v3208 = vunpack.c.l.b16 %v3048
          %v3209 = vunpack.c.l.b16 %v3049
          %v3210 = vunpack.c.l.b16 %v3050
          %v3211 = vunpack.c.l.b16 %v3051
          %v3212 = vunpack.c.l.b16 %v3052
          %v3213 = vunpack.c.l.b16 %v3053
          %v3214 = vunpack.c.l.b16 %v3054
          %v3215 = vunpack.c.l.b16 %v3055
          %v3216 = vunpack.c.l.b16 %v3056
          %v3217 = vunpack.c.l.b16 %v3057
          %v3218 = vunpack.c.l.b16 %v3058
          %v3219 = vunpack.c.l.b16 %v3059
          %v3220 = vunpack.c.l.b16 %v3060
          %v3221 = vunpack.c.l.b16 %v3061
          %v3222 = vunpack.c.l.b16 %v3062
          %v3223 = vunpack.c.l.b16 %v3063
          %v3224 = vunpack.c.l.b16 %v3064
          %v3225 = vunpack.c.l.b16 %v3065
          %v3226 = vunpack.c.l.b16 %v3066
          %v3227 = vunpack.c.l.b16 %v3067
          %v3228 = vunpack.c.l.b16 %v3068
          %v3229 = vunpack.c.l.b16 %v3069
          %v3230 = vunpack.c.l.b16 %v3070
          %v3231 = vunpack.c.l.b16 %v3071
          %v3232 = vunpack.c.l.b16 %v3072
          %v3233 = vunpack.c.l.b16 %v3073
          %v3234 = vunpack.c.l.b16 %v3074
          %v3235 = vunpack.c.l.b16 %v3075
          %v3236 = vunpack.c.l.b16 %v3076
          %v3237 = vunpack.c.l.b16 %v3077
          %v3238 = vunpack.c.l.b16 %v3078
          %v3239 = vunpack.c.l.b16 %v3079
          %v3240 = vunpack.c.l.b16 %v3080
          %v3241 = vunpack.c.l.b16 %v3081
          %v3242 = vunpack.c.l.b16 %v3082
          %v3243 = vpack.c.b16 %v3164, %v3163
          %v3244 = vpack.c.b16 %v3166, %v3165
          %v3245 = vpack.c.b16 %v3168, %v3167
          %v3246 = vpack.c.b16 %v3170, %v3169
          %v3247 = vpack.c.b16 %v3172, %v3171
          %v3248 = vpack.c.b16 %v3174, %v3173
          %v3249 = vpack.c.b16 %v3176, %v3175
          %v3250 = vpack.c.b16 %v3178, %v3177
          %v3251 = vpack.c.b16 %v3180, %v3179
          %v3252 = vpack.c.b16 %v3182, %v3181
          %v3253 = vpack.c.b16 %v3184, %v3183
          %v3254 = vpack.c.b16 %v3186, %v3185
          %v3255 = vpack.c.b16 %v3188, %v3187
          %v3256 = vpack.c.b16 %v3190, %v3189
          %v3257 = vpack.c.b16 %v3192, %v3191
          %v3258 = vpack.c.b16 %v3194, %v3193
          %v3259 = vpack.c.b16 %v3196, %v3195
          %v3260 = vpack.c.b16 %v3198, %v3197
          %v3261 = vpack.c.b16 %v3200, %v3199
          %v3262 = vpack.c.b16 %v3202, %v3201
          %v3263 = vpack.c.b16 %v3204, %v3203
          %v3264 = vpack.c.b16 %v3206, %v3205
          %v3265 = vpack.c.b16 %v3208, %v3207
          %v3266 = vpack.c.b16 %v3210, %v3209
          %v3267 = vpack.c.b16 %v3212, %v3211
          %v3268 = vpack.c.b16 %v3214, %v3213
          %v3269 = vpack.c.b16 %v3216, %v3215
          %v3270 = vpack.c.b16 %v3218, %v3217
          %v3271 = vpack.c.b16 %v3220, %v3219
          %v3272 = vpack.c.b16 %v3222, %v3221
          %v3273 = vpack.c.b16 %v3224, %v3223
          %v3274 = vpack.c.b16 %v3226, %v3225
          %v3275 = vpack.c.b16 %v3228, %v3227
          %v3276 = vpack.c.b16 %v3230, %v3229
          %v3277 = vpack.c.b16 %v3232, %v3231
          %v3278 = vpack.c.b16 %v3234, %v3233
          %v3279 = vpack.c.b16 %v3236, %v3235
          %v3280 = vpack.c.b16 %v3238, %v3237
          %v3281 = vpack.c.b16 %v3240, %v3239
          %v3282 = vpack.c.b16 %v3242, %v3241
          %3323 = vmatpush.bf16.msra.mxu0 %v3250
          %3324 = vmatpush.bf16.msra.mxu0 %v3249
          %3325 = vmatpush.bf16.msra.mxu0 %v3248
          %3326 = vmatpush.bf16.msra.mxu0 %v3247
          %3327 = vmatpush.bf16.msra.mxu0 %v3246
          %3328 = vmatpush.bf16.msra.mxu0 %v3245
          %3329 = vmatpush.bf16.msra.mxu0 %v3244
          %3330 = vmatpush.bf16.msra.mxu0 %v3243
          %3331 = vmatmul.bf16.gmra.mxu0 %v2998
          %v3332 = vpop.f32.mrf.mxu0
          %v3333 = vadd.f32 0.0, %v3332
          %v3334 = vpop.f32.mrf.mxu0
          %3335 = vdwg.mxu0
          %3336 = vmatpush.bf16.msra.mxu0 %v3258
          %3337 = vmatpush.bf16.msra.mxu0 %v3257
          %3338 = vmatpush.bf16.msra.mxu0 %v3256
          %3339 = vmatpush.bf16.msra.mxu0 %v3255
          %3340 = vmatpush.bf16.msra.mxu0 %v3254
          %3341 = vmatpush.bf16.msra.mxu0 %v3253
          %3342 = vmatpush.bf16.msra.mxu0 %v3252
          %3343 = vmatpush.bf16.msra.mxu0 %v3251
          %3344 = vmatmul.bf16.gmra.mxu0 %v2999
          %v3345 = vpop.f32.mrf.mxu0
          %v3346 = vadd.f32 %v3333, %v3345
          %v3347 = vpop.f32.mrf.mxu0
          %3348 = vdwg.mxu0
          %3349 = vmatpush.bf16.msra.mxu0 %v3266
          %3350 = vmatpush.bf16.msra.mxu0 %v3265
          %3351 = vmatpush.bf16.msra.mxu0 %v3264
          %3352 = vmatpush.bf16.msra.mxu0 %v3263
          %3353 = vmatpush.bf16.msra.mxu0 %v3262
          %3354 = vmatpush.bf16.msra.mxu0 %v3261
          %3355 = vmatpush.bf16.msra.mxu0 %v3260
          %3356 = vmatpush.bf16.msra.mxu0 %v3259
          %3357 = vmatmul.bf16.gmra.mxu0 %v3000
          %v3358 = vpop.f32.mrf.mxu0
          %v3359 = vadd.f32 %v3346, %v3358
          %v3360 = vpop.f32.mrf.mxu0
          %3361 = vdwg.mxu0
          %3362 = vmatpush.bf16.msra.mxu0 %v3274
          %3363 = vmatpush.bf16.msra.mxu0 %v3273
          %3364 = vmatpush.bf16.msra.mxu0 %v3272
          %3365 = vmatpush.bf16.msra.mxu0 %v3271
          %3366 = vmatpush.bf16.msra.mxu0 %v3270
          %3367 = vmatpush.bf16.msra.mxu0 %v3269
          %3368 = vmatpush.bf16.msra.mxu0 %v3268
          %3369 = vmatpush.bf16.msra.mxu0 %v3267
          %3370 = vmatmul.bf16.gmra.mxu0 %v3001
          %v3371 = vpop.f32.mrf.mxu0
          %v3372 = vadd.f32 %v3359, %v3371
          %v3373 = vpop.f32.mrf.mxu0
          %3374 = vdwg.mxu0
          %3375 = vmatpush.bf16.msra.mxu0 %v3282
          %3376 = vmatpush.bf16.msra.mxu0 %v3281
          %3377 = vmatpush.bf16.msra.mxu0 %v3280
          %3378 = vmatpush.bf16.msra.mxu0 %v3279
          %3379 = vmatpush.bf16.msra.mxu0 %v3278
          %3380 = vmatpush.bf16.msra.mxu0 %v3277
          %3381 = vmatpush.bf16.msra.mxu0 %v3276
          %3382 = vmatpush.bf16.msra.mxu0 %v3275
          %3383 = vmatmul.bf16.gmra.mxu0 %v3002
          %v3384 = vpop.f32.mrf.mxu0
          %v3385 = vadd.f32 %v3372, %v3384
          %v3386 = vpop.f32.mrf.mxu0
          %3387 = vdwg.mxu0
          %3388 = vst [vmem:[#allocation11] sm:$0xf] %v3385
          %v3389 = vld [vmem:[%s8] sm:$0x1]
          %v3390 = vld [vmem:[#allocation11] ss:$2 sm:$0x1]
          %s3391 = scalar_lea.vmem [#allocation11], 1
          %v3392 = vld [vmem:[%s3391] ss:$2 sm:$0x1]
          %s3393 = scalar_lea.vmem [#allocation11], 2
          %v3394 = vld [vmem:[%s3393] ss:$2 sm:$0x1]
          %s3395 = scalar_lea.vmem [#allocation11], 3
          %v3396 = vld [vmem:[%s3395] ss:$2 sm:$0x1]
          %v3397 = vmax.f32 %v3390, %v3392
          %v3398 = vmax.f32 %v3394, %v3396
          %v3399 = vmax.f32 %v3397, %v3398
          %v3400 = vadd.f32 %v3399, %v3389
          %s3401 = scalar_lea.vmem %s366, %s434 [#allocation14]
          %3402 = vst [vmem:[%s3401] sm:$0x1] %v3400
        $region61: #{tpu_custom_call.1} parent=55 // loop_footer
          %s438 = sadd.s32 1, %s434
        $region62: #{tpu_custom_call.1} parent=55 // loop_footer_branch
          %433 = sbr.rel target = $region58
        $region63: #{tpu_custom_call.1} parent=55 // loop_exit
          _
        %s3403 = sand.u32 %s230, 1
        %s3404 = scalar_lea.sflag [#allocation13], %s3403
        %s3405 = sand.u32 %s230, 1
        %s3406 = smul.addr %s3405, 16
        %s3407 = scalar_lea.vmem [#allocation12], %s3406
        %s3408 = sand.u32 %s256, 1
        %s3409 = scalar_lea.sflag [#allocation15], %s3408
        %s3410 = sand.u32 %s256, 1
        %s3411 = smul.addr %s3410, 4
        %s3412 = scalar_lea.vmem [#allocation14], %s3411
        // Predicated region
        $region64: #{tpu_custom_call.1} parent=55 // pred_check
          %p3413 = pneg %p240
        $region65: #{tpu_custom_call.1} parent=55 // pred_check_branch
          %3415 = sbr.rel (%p3413) target = $region67
        $region66: #{tpu_custom_call.1} parent=55 // pred_region
          %s3416 = smul.u32 4, %s28
          %3418 = vsyncadd %s3404, 0
          %s3419 = smul.addr %s3416, 2
          %s3420 = smul.addr %s3419, 2
          %s3421 = scalar_lea.hbm %s9, %s3420
          %s3422 = sshll.u32 %s3407, 4
          %s3423 = int_to_ptr.vmem [resolvable:$true] %s3422
          %s3424 = sshll.u32 %s3421, 4
          %s3425 = int_to_ptr.hbm [resolvable:$true] %s3424
          %3430 = dma.vmem_to_hbm [thread:$0]  %s3423, 256, %s3425, %s3404, 32, 32, 2
        $region67: #{tpu_custom_call.1} parent=55 // pred_fallthru
          _
        // Predicated region
        $region68: #{tpu_custom_call.1} parent=55 // pred_check
          %p3431 = pneg %p266
        $region69: #{tpu_custom_call.1} parent=55 // pred_check_branch
          %3433 = sbr.rel (%p3431) target = $region71
        $region70: #{tpu_custom_call.1} parent=55 // pred_region
          %s3434 = smul.u32 4, %s28
          %3436 = vsyncadd %s3409, 0
          %s3437 = scalar_lea.hbm %s10, %s3434
          %s3438 = sshll.u32 %s3412, 4
          %s3439 = int_to_ptr.vmem [resolvable:$true] %s3438
          %s3440 = sshll.u32 %s3437, 4
          %s3441 = int_to_ptr.hbm [resolvable:$true] %s3440
          %3446 = dma.vmem_to_hbm [thread:$0]  %s3439, 64, %s3441, %s3409, 16, 16, 1
        $region71: #{tpu_custom_call.1} parent=55 // pred_fallthru
          _
      $region56: #{tpu_custom_call.1} parent=5 // pred_fallthru
        _
      %p3447 = scmp.le.s32.totalorder 2, %s23
      // Predicated region
      $region72: #{tpu_custom_call.1} parent=5 // pred_check
        %p3448 = pneg %p3447
      $region73: #{tpu_custom_call.1} parent=5 // pred_check_branch
        %3450 = sbr.rel (%p3448) target = $region75
      $region74: #{tpu_custom_call.1} parent=5 // pred_region
        %s3451 = ssub.s32 %s23, 2
        // Predicated region
        $region76: #{tpu_custom_call.1} parent=74 // pred_check
          %p3452 = pneg %p246
        $region77: #{tpu_custom_call.1} parent=74 // pred_check_branch
          %3454 = sbr.rel (%p3452) target = $region79
        $region78: #{tpu_custom_call.1} parent=74 // pred_region
          %s3455 = sand.u32 %s231, 1
          %s3456 = scalar_lea.sflag [#allocation13], %s3455
          %s3457 = sand.u32 %s231, 1
          %s3458 = smul.addr %s3457, 16
          %s3459 = scalar_lea.vmem [#allocation12], %s3458
          %3461 = dma.done %s3456, 256
        $region79: #{tpu_custom_call.1} parent=74 // pred_fallthru
          _
        // Predicated region
        $region80: #{tpu_custom_call.1} parent=74 // pred_check
          %p3462 = pneg %p272
        $region81: #{tpu_custom_call.1} parent=74 // pred_check_branch
          %3464 = sbr.rel (%p3462) target = $region83
        $region82: #{tpu_custom_call.1} parent=74 // pred_region
          %s3465 = sand.u32 %s257, 1
          %s3466 = scalar_lea.sflag [#allocation15], %s3465
          %s3467 = sand.u32 %s257, 1
          %s3468 = smul.addr %s3467, 4
          %s3469 = scalar_lea.vmem [#allocation14], %s3468
          %3471 = dma.done %s3466, 64
        $region83: #{tpu_custom_call.1} parent=74 // pred_fallthru
          _
      $region75: #{tpu_custom_call.1} parent=5 // pred_fallthru
        _
    $region6: #{tpu_custom_call.1} parent=1 // loop_footer
      %s27 = sadd.s32 1, %s23
    $region7: #{tpu_custom_call.1} parent=1 // loop_footer_branch
      %22 = sbr.rel target = $region3
    $region8: #{tpu_custom_call.1} parent=1 // loop_exit
      _
    %3472 = vsyncpa [#allocation13], 1
    %s3473 = scalar_lea.sflag [#allocation13], 1
    %3474 = vsyncpa %s3473, 1
    %3475 = vsyncpa [#allocation15], 1
    %s3476 = scalar_lea.sflag [#allocation15], 1
    %3477 = vsyncpa %s3476, 1

</llo_original>
